<compile_context>
chip_gen: v7x
topology: tpu7x:2x2x1
jax: 0.10.0
libtpu: 0.0.40
codegen_flags: <defaults>
</compile_context>

<pallas_src>
import functools

import numpy as np
import jax
import jax.numpy as jnp
from jax.experimental import pallas as pl
from jax.experimental.pallas import tpu as pltpu


def mha_kernel(q_ref, k_ref, v_ref,
               wq_ref, bq_ref, wk_ref, bk_ref, wv_ref, bv_ref, wp_ref, bp_ref,
               out_ref, *rest,
               num_head, head_dim, batch_block, t_q, t_k, need_weights):
    """One batch block: fused QKV projections + per-(batch, head) softmax attention +
    head merge (VMEM scratch) + output projection.  Activations, projections and the
    final output are channel-major (C, T) so every large load/store is lane-dense on T."""
    if need_weights:
        attn_ref, pre_ref = rest
    else:
        (pre_ref,) = rest

    f32 = jnp.float32
    bf16 = jnp.bfloat16

    # Fused all-heads projections, channel-major: (C, C) @ (C, Bb*T) -> (C, Bb*T).
    # Operands arrive in bf16 from the wrapper; accumulation is f32 on the MXU.
    # 1/temperature is already folded into wq_ref / bq_ref.
    q_lin = jnp.dot(wq_ref[...], q_ref[...], preferred_element_type=f32) + bq_ref[...]
    k_lin = jnp.dot(wk_ref[...], k_ref[...], preferred_element_type=f32) + bk_ref[...]
    v_lin = jnp.dot(wv_ref[...], v_ref[...], preferred_element_type=f32) + bv_ref[...]

    # Static loops: all batch elements of this block and all heads fused in one program.
    for b in range(batch_block):
        qs = slice(b * t_q, (b + 1) * t_q)
        ks = slice(b * t_k, (b + 1) * t_k)
        for h in range(num_head):
            rs = slice(h * head_dim, (h + 1) * head_dim)
            # Per-head operands are sublane slices of the channel-major projections.
            # Only the tiny (head_dim, T) slices are transposed (one vreg of data);
            # the (Tq, Tk) attention tile itself is never transposed.
            qh_row = q_lin[rs, qs].T.astype(bf16)        # (Tq, hd)
            kh = k_lin[rs, ks].astype(bf16)              # (hd, Tk)
            vh_row = v_lin[rs, ks].T.astype(bf16)        # (Tk, hd)

            s = jnp.dot(qh_row, kh, preferred_element_type=f32)   # (Tq, Tk)
            s = s - jnp.max(s, axis=-1, keepdims=True)            # f32 softmax stats
            e = jnp.exp(s)
            p = e * pl.reciprocal(jnp.sum(e, axis=-1, keepdims=True), approx=True)

            if need_weights:
                attn_ref[b, h, :, :] = p.astype(attn_ref.dtype)   # lane-dense bf16 store

            # (Tq, Tk) @ (Tk, hd) -> (Tq, hd): standard MXU matmul (no big transpose).
            o_bh = jnp.dot(p.astype(bf16), vh_row, preferred_element_type=f32)
            pre_ref[qs, rs] = o_bh            # head merge into VMEM scratch (no concat)

    # Output projection: out[c, t] = sum_j Wp[c, j] * pre[t, j].  rhs-transposed MXU
    # form; the transposed operand is the small (Bb*Tq, C) pre block, never the attn tile.
    pre = pre_ref[...].astype(bf16)
    out = jax.lax.dot_general(wp_ref[...], pre, (((1,), (1,)), ((), ())),
                              preferred_element_type=f32) + bp_ref[...]
    out_ref[...] = out                        # (C, Bb*Tq) channel-major, lane-dense store


@functools.partial(jax.jit, static_argnums=(4, 5, 6))
def multihead_attention(Q, K, V, params, num_head, batch_block=1, need_weights=True):
    """Q, K, V: (T, bs, d_model) float32.  Returns (out (Tq, bs, d_model) f32,
    attn (bs, num_head, Tq, Tk) bf16 or None), matching the PyTorch module in eval mode."""
    Tq, bs, C = Q.shape
    Tk = K.shape[0]
    assert C % num_head == 0
    assert bs % batch_block == 0
    hd = C // num_head
    # Alignment assumptions of this kernel (128-lane attention tiles, 8-sublane heads).
    assert Tq % 128 == 0 and Tk % 128 == 0 and hd % 8 == 0
    inv_temp = 1.0 / float(hd) ** 0.5         # T = d_att ** 0.5, d_att = hidden_dim default
    f32, bf16 = jnp.float32, jnp.bfloat16

    # Host-side layout plumbing only: channel-major (C, bs*T) bf16 activations, batches
    # stacked along the lane axis so each grid step processes `batch_block` of them.
    q_cm = jnp.transpose(Q, (2, 1, 0)).reshape(C, bs * Tq).astype(bf16)
    k_cm = jnp.transpose(K, (2, 1, 0)).reshape(C, bs * Tk).astype(bf16)
    v_cm = jnp.transpose(V, (2, 1, 0)).reshape(C, bs * Tk).astype(bf16)

    # 1/temperature folded into the Q projection; weights bf16, biases f32 columns.
    wq = (params['wq'] * inv_temp).astype(bf16)
    bq = (params['bq'] * inv_temp).reshape(C, 1).astype(f32)
    wk = params['wk'].astype(bf16)
    bk = params['bk'].reshape(C, 1).astype(f32)
    wv = params['wv'].astype(bf16)
    bv = params['bv'].reshape(C, 1).astype(f32)
    wp = params['wp'].astype(bf16)
    bp = params['bp'].reshape(C, 1).astype(f32)

    nb = bs // batch_block
    kernel = functools.partial(
        mha_kernel, num_head=num_head, head_dim=hd, batch_block=batch_block,
        t_q=Tq, t_k=Tk, need_weights=need_weights)

    out_shape = [jax.ShapeDtypeStruct((C, bs * Tq), f32)]
    out_specs = [pl.BlockSpec((C, batch_block * Tq), lambda i: (0, i))]
    if need_weights:
        out_shape.append(jax.ShapeDtypeStruct((bs, num_head, Tq, Tk), bf16))
        out_specs.append(pl.BlockSpec((batch_block, num_head, Tq, Tk),
                                      lambda i: (i, 0, 0, 0)))

    res = pl.pallas_call(
        kernel,
        grid=(nb,),                            # batch-block axis, parallel (megacore on v7x)
        in_specs=[
            pl.BlockSpec((C, batch_block * Tq), lambda i: (0, i)),   # Q  (channel-major)
            pl.BlockSpec((C, batch_block * Tk), lambda i: (0, i)),   # K
            pl.BlockSpec((C, batch_block * Tk), lambda i: (0, i)),   # V
            pl.BlockSpec((C, C), lambda i: (0, 0)),                  # Wq (pre-scaled)
            pl.BlockSpec((C, 1), lambda i: (0, 0)),                  # bq (pre-scaled)
            pl.BlockSpec((C, C), lambda i: (0, 0)),                  # Wk
            pl.BlockSpec((C, 1), lambda i: (0, 0)),                  # bk
            pl.BlockSpec((C, C), lambda i: (0, 0)),                  # Wv
            pl.BlockSpec((C, 1), lambda i: (0, 0)),                  # bv
            pl.BlockSpec((C, C), lambda i: (0, 0)),                  # Wp
            pl.BlockSpec((C, 1), lambda i: (0, 0)),                  # bp
        ],
        out_specs=out_specs,
        out_shape=out_shape,
        scratch_shapes=[pltpu.VMEM((batch_block * Tq, C), f32)],     # head-merge scratch
        compiler_params=pltpu.CompilerParams(dimension_semantics=("parallel",)),
    )(q_cm, k_cm, v_cm, wq, bq, wk, bk, wv, bv, wp, bp)

    out_cm = res[0]
    attn = res[1] if need_weights else None
    out = out_cm.reshape(C, bs, Tq).transpose(2, 1, 0)   # (Tq, bs, C)
    return out, attn


def reference_numpy(Q, K, V, params, num_head):
    """Direct numpy port of the PyTorch forward (eval mode, defaults) for verification."""
    Q = np.asarray(Q, np.float64)
    K = np.asarray(K, np.float64)
    V = np.asarray(V, np.float64)
    P = {k: np.asarray(v, np.float64) for k, v in params.items()}
    Tq, bs, C = Q.shape
    Tk = K.shape[0]
    hd = C // num_head
    temp = hd ** 0.5

    q = Q @ P['wq'].T + P['bq']
    k = K @ P['wk'].T + P['bk']
    v = V @ P['wv'].T + P['bv']
    q = q / temp
    q = q.reshape(Tq, bs, num_head, hd).transpose(1, 2, 0, 3)   # (bs, nh, Tq, hd)
    k = k.reshape(Tk, bs, num_head, hd).transpose(1, 2, 3, 0)   # (bs, nh, hd, Tk)
    v = v.reshape(Tk, bs, num_head, hd).transpose(1, 2, 0, 3)   # (bs, nh, Tk, hd)
    qk = q @ k
    qk = qk - qk.max(-1, keepdims=True)
    e = np.exp(qk)
    attn = e / e.sum(-1, keepdims=True)
    out = (attn @ v).transpose(2, 0, 1, 3).reshape(Tq, bs, C)
    out = out @ P['wp'].T + P['bp']
    return out.astype(np.float32), attn.astype(np.float32)


if __name__ == "__main__":
    # T = 128 keeps attention tiles aligned to the 128-lane vregs; bs=4 with
    # batch_block=2 gives 2 parallel grid steps (v7x) of 2 stacked batches each (v5e/v6e).
    Tq = Tk = 128
    bs = 4
    d_model = 32
    num_head = 4
    batch_block = 2

    key = jax.random.PRNGKey(0)
    ks = jax.random.split(key, 16)
    s = 0.15
    params = {
        'wq': jax.random.normal(ks[0], (d_model, d_model), jnp.float32) * s,
        'bq': jax.random.normal(ks[1], (d_model,), jnp.float32) * 0.1,
        'wk': jax.random.normal(ks[2], (d_model, d_model), jnp.float32) * s,
        'bk': jax.random.normal(ks[3], (d_model,), jnp.float32) * 0.1,
        'wv': jax.random.normal(ks[4], (d_model, d_model), jnp.float32) * s,
        'bv': jax.random.normal(ks[5], (d_model,), jnp.float32) * 0.1,
        'wp': jax.random.normal(ks[6], (d_model, d_model), jnp.float32) * s,
        'bp': jax.random.normal(ks[7], (d_model,), jnp.float32) * 0.1,
    }
    Q = jax.random.normal(ks[8], (Tq, bs, d_model), jnp.float32)
    K = jax.random.normal(ks[9], (Tk, bs, d_model), jnp.float32)
    V = jax.random.normal(ks[10], (Tk, bs, d_model), jnp.float32)

    ref_out, ref_attn = reference_numpy(Q, K, V, params, num_head)

    # Path with attention weights (bf16 writeback).
    out, attn = multihead_attention(Q, K, V, params, num_head, batch_block, True)
    out = jax.block_until_ready(out)
    attn = jax.block_until_ready(attn)
    np.testing.assert_allclose(np.asarray(out), ref_out, atol=3e-2, rtol=3e-2)
    np.testing.assert_allclose(np.asarray(attn.astype(jnp.float32)), ref_attn,
                               atol=2e-2, rtol=5e-2)

    # Path without the attention-weights writeback (bandwidth-optimal).
    out_nw, attn_nw = multihead_attention(Q, K, V, params, num_head, batch_block, False)
    out_nw = jax.block_until_ready(out_nw)
    assert attn_nw is None
    np.testing.assert_allclose(np.asarray(out_nw), ref_out, atol=3e-2, rtol=3e-2)

    print("KERNEL_OK")
</pallas_src>

<mosaic_0001>
module attributes {stable_mosaic.version = 11 : i64} {
  func.func @mha_kernel(%arg0: i32, %arg1: memref<32x256xbf16, #tpu.memory_space<vmem>>, %arg2: memref<32x256xbf16, #tpu.memory_space<vmem>>, %arg3: memref<32x256xbf16, #tpu.memory_space<vmem>>, %arg4: memref<32x32xbf16, #tpu.memory_space<vmem>>, %arg5: memref<32x1xf32, #tpu.memory_space<vmem>>, %arg6: memref<32x32xbf16, #tpu.memory_space<vmem>>, %arg7: memref<32x1xf32, #tpu.memory_space<vmem>>, %arg8: memref<32x32xbf16, #tpu.memory_space<vmem>>, %arg9: memref<32x1xf32, #tpu.memory_space<vmem>>, %arg10: memref<32x32xbf16, #tpu.memory_space<vmem>>, %arg11: memref<32x1xf32, #tpu.memory_space<vmem>>, %arg12: memref<32x256xf32, #tpu.memory_space<vmem>>, %arg13: memref<2x4x128x128xbf16, #tpu.memory_space<vmem>>, %arg14: memref<256x32xf32, #tpu.memory_space<vmem>>) attributes {dimension_semantics = [#tpu.dimension_semantics<parallel>], iteration_bounds = array<i64: 2>, scalar_prefetch = 0 : i64, scratch_operands = 1 : i64, tpu.core_type = #tpu.core_type<tc>, window_params = [{transform_indices = @transform_0, window_bounds = array<i64: 32, 256>}, {transform_indices = @transform_1, window_bounds = array<i64: 32, 256>}, {transform_indices = @transform_2, window_bounds = array<i64: 32, 256>}, {pipeline_mode = #tpu.pipeline_mode<synchronous>, transform_indices = @transform_3, window_bounds = array<i64: 32, 32>}, {pipeline_mode = #tpu.pipeline_mode<synchronous>, transform_indices = @transform_4, window_bounds = array<i64: 32, 1>}, {pipeline_mode = #tpu.pipeline_mode<synchronous>, transform_indices = @transform_5, window_bounds = array<i64: 32, 32>}, {pipeline_mode = #tpu.pipeline_mode<synchronous>, transform_indices = @transform_6, window_bounds = array<i64: 32, 1>}, {pipeline_mode = #tpu.pipeline_mode<synchronous>, transform_indices = @transform_7, window_bounds = array<i64: 32, 32>}, {pipeline_mode = #tpu.pipeline_mode<synchronous>, transform_indices = @transform_8, window_bounds = array<i64: 32, 1>}, {pipeline_mode = #tpu.pipeline_mode<synchronous>, transform_indices = @transform_9, window_bounds = array<i64: 32, 32>}, {pipeline_mode = #tpu.pipeline_mode<synchronous>, transform_indices = @transform_10, window_bounds = array<i64: 32, 1>}, {transform_indices = @transform_11, window_bounds = array<i64: 32, 256>}, {transform_indices = @transform_12, window_bounds = array<i64: 2, 4, 128, 128>}]} {
    %c0 = arith.constant 0 : index
    %c0_0 = arith.constant 0 : index
    %0 = vector.load %arg4[%c0, %c0_0] : memref<32x32xbf16, #tpu.memory_space<vmem>>, vector<32x32xbf16>
    %c0_1 = arith.constant 0 : index
    %c0_2 = arith.constant 0 : index
    %1 = vector.load %arg1[%c0_1, %c0_2] : memref<32x256xbf16, #tpu.memory_space<vmem>>, vector<32x256xbf16>
    %cst = arith.constant dense<0.000000e+00> : vector<32x256xf32>
    %2 = tpu.matmul %0, %1, %cst {dimension_numbers = #tpu.dot_dimension_numbers<[1], [0], [0], [1], [0, 0, 1, 1], [], []>} : vector<32x32xbf16>, vector<32x256xbf16>, vector<32x256xf32> -> vector<32x256xf32>
    %c0_3 = arith.constant 0 : index
    %c0_4 = arith.constant 0 : index
    %3 = vector.load %arg5[%c0_3, %c0_4] : memref<32x1xf32, #tpu.memory_space<vmem>>, vector<32x1xf32>
    %4 = vector.broadcast %3 : vector<32x1xf32> to vector<32x256xf32>
    %5 = arith.addf %2, %4 : vector<32x256xf32>
    %c0_5 = arith.constant 0 : index
    %c0_6 = arith.constant 0 : index
    %6 = vector.load %arg6[%c0_5, %c0_6] : memref<32x32xbf16, #tpu.memory_space<vmem>>, vector<32x32xbf16>
    %c0_7 = arith.constant 0 : index
    %c0_8 = arith.constant 0 : index
    %7 = vector.load %arg2[%c0_7, %c0_8] : memref<32x256xbf16, #tpu.memory_space<vmem>>, vector<32x256xbf16>
    %cst_9 = arith.constant dense<0.000000e+00> : vector<32x256xf32>
    %8 = tpu.matmul %6, %7, %cst_9 {dimension_numbers = #tpu.dot_dimension_numbers<[1], [0], [0], [1], [0, 0, 1, 1], [], []>} : vector<32x32xbf16>, vector<32x256xbf16>, vector<32x256xf32> -> vector<32x256xf32>
    %c0_10 = arith.constant 0 : index
    %c0_11 = arith.constant 0 : index
    %9 = vector.load %arg7[%c0_10, %c0_11] : memref<32x1xf32, #tpu.memory_space<vmem>>, vector<32x1xf32>
    %10 = vector.broadcast %9 : vector<32x1xf32> to vector<32x256xf32>
    %11 = arith.addf %8, %10 : vector<32x256xf32>
    %c0_12 = arith.constant 0 : index
    %c0_13 = arith.constant 0 : index
    %12 = vector.load %arg8[%c0_12, %c0_13] : memref<32x32xbf16, #tpu.memory_space<vmem>>, vector<32x32xbf16>
    %c0_14 = arith.constant 0 : index
    %c0_15 = arith.constant 0 : index
    %13 = vector.load %arg3[%c0_14, %c0_15] : memref<32x256xbf16, #tpu.memory_space<vmem>>, vector<32x256xbf16>
    %cst_16 = arith.constant dense<0.000000e+00> : vector<32x256xf32>
    %14 = tpu.matmul %12, %13, %cst_16 {dimension_numbers = #tpu.dot_dimension_numbers<[1], [0], [0], [1], [0, 0, 1, 1], [], []>} : vector<32x32xbf16>, vector<32x256xbf16>, vector<32x256xf32> -> vector<32x256xf32>
    %c0_17 = arith.constant 0 : index
    %c0_18 = arith.constant 0 : index
    %15 = vector.load %arg9[%c0_17, %c0_18] : memref<32x1xf32, #tpu.memory_space<vmem>>, vector<32x1xf32>
    %16 = vector.broadcast %15 : vector<32x1xf32> to vector<32x256xf32>
    %17 = arith.addf %14, %16 : vector<32x256xf32>
    %18 = vector.extract_strided_slice %5 {offsets = [0, 0], sizes = [8, 128], strides = [1, 1]} : vector<32x256xf32> to vector<8x128xf32>
    %19 = tpu.transpose %18, [1, 0] : vector<8x128xf32> -> vector<128x8xf32>
    %20 = arith.truncf %19 : vector<128x8xf32> to vector<128x8xbf16>
    %21 = vector.extract_strided_slice %11 {offsets = [0, 0], sizes = [8, 128], strides = [1, 1]} : vector<32x256xf32> to vector<8x128xf32>
    %22 = arith.truncf %21 : vector<8x128xf32> to vector<8x128xbf16>
    %23 = vector.extract_strided_slice %17 {offsets = [0, 0], sizes = [8, 128], strides = [1, 1]} : vector<32x256xf32> to vector<8x128xf32>
    %24 = tpu.transpose %23, [1, 0] : vector<8x128xf32> -> vector<128x8xf32>
    %25 = arith.truncf %24 : vector<128x8xf32> to vector<128x8xbf16>
    %cst_19 = arith.constant dense<0.000000e+00> : vector<128x128xf32>
    %26 = tpu.matmul %20, %22, %cst_19 {dimension_numbers = #tpu.dot_dimension_numbers<[1], [0], [0], [1], [0, 0, 1, 1], [], []>} : vector<128x8xbf16>, vector<8x128xbf16>, vector<128x128xf32> -> vector<128x128xf32>
    %cst_20 = arith.constant dense<0xFF800000> : vector<128xf32>
    %27 = vector.multi_reduction <maximumf>, %26, %cst_20 [1] : vector<128x128xf32> to vector<128xf32>
    %28 = vector.shape_cast %27 : vector<128xf32> to vector<128x1xf32>
    %29 = vector.broadcast %28 : vector<128x1xf32> to vector<128x128xf32>
    %30 = arith.subf %26, %29 : vector<128x128xf32>
    %31 = math.exp %30 : vector<128x128xf32>
    %cst_21 = arith.constant dense<0.000000e+00> : vector<128xf32>
    %32 = vector.multi_reduction <add>, %31, %cst_21 [1] : vector<128x128xf32> to vector<128xf32>
    %33 = vector.shape_cast %32 : vector<128xf32> to vector<128x1xf32>
    %34 = tpu.reciprocal %33 {approx = true} : vector<128x1xf32> -> vector<128x1xf32>
    %35 = vector.broadcast %34 : vector<128x1xf32> to vector<128x128xf32>
    %36 = arith.mulf %31, %35 : vector<128x128xf32>
    %37 = arith.truncf %36 : vector<128x128xf32> to vector<128x128xbf16>
    %c0_22 = arith.constant 0 : index
    %c0_23 = arith.constant 0 : index
    %c0_24 = arith.constant 0 : index
    %c0_25 = arith.constant 0 : index
    %38 = vector.load %arg13[%c0_22, %c0_23, %c0_24, %c0_25] : memref<2x4x128x128xbf16, #tpu.memory_space<vmem>>, vector<1x1x128x128xbf16>
    %39 = vector.shape_cast %38 : vector<1x1x128x128xbf16> to vector<128x128xbf16>
    %40 = vector.shape_cast %37 : vector<128x128xbf16> to vector<1x1x128x128xbf16>
    tpu.vector_store %arg13[%c0_22, %c0_23, %c0_24, %c0_25], %40 {strides = array<i32>} : memref<2x4x128x128xbf16, #tpu.memory_space<vmem>>, vector<1x1x128x128xbf16>,
    %41 = arith.truncf %36 : vector<128x128xf32> to vector<128x128xbf16>
    %cst_26 = arith.constant dense<0.000000e+00> : vector<128x8xf32>
    %42 = tpu.matmul %41, %25, %cst_26 {dimension_numbers = #tpu.dot_dimension_numbers<[1], [0], [0], [1], [0, 0, 1, 1], [], []>} : vector<128x128xbf16>, vector<128x8xbf16>, vector<128x8xf32> -> vector<128x8xf32>
    %c0_27 = arith.constant 0 : index
    %c0_28 = arith.constant 0 : index
    %43 = vector.load %arg14[%c0_27, %c0_28] : memref<256x32xf32, #tpu.memory_space<vmem>>, vector<128x8xf32>
    tpu.vector_store %arg14[%c0_27, %c0_28], %42 {strides = array<i32>} : memref<256x32xf32, #tpu.memory_space<vmem>>, vector<128x8xf32>,
    %44 = vector.extract_strided_slice %5 {offsets = [8, 0], sizes = [8, 128], strides = [1, 1]} : vector<32x256xf32> to vector<8x128xf32>
    %45 = tpu.transpose %44, [1, 0] : vector<8x128xf32> -> vector<128x8xf32>
    %46 = arith.truncf %45 : vector<128x8xf32> to vector<128x8xbf16>
    %47 = vector.extract_strided_slice %11 {offsets = [8, 0], sizes = [8, 128], strides = [1, 1]} : vector<32x256xf32> to vector<8x128xf32>
    %48 = arith.truncf %47 : vector<8x128xf32> to vector<8x128xbf16>
    %49 = vector.extract_strided_slice %17 {offsets = [8, 0], sizes = [8, 128], strides = [1, 1]} : vector<32x256xf32> to vector<8x128xf32>
    %50 = tpu.transpose %49, [1, 0] : vector<8x128xf32> -> vector<128x8xf32>
    %51 = arith.truncf %50 : vector<128x8xf32> to vector<128x8xbf16>
    %cst_29 = arith.constant dense<0.000000e+00> : vector<128x128xf32>
    %52 = tpu.matmul %46, %48, %cst_29 {dimension_numbers = #tpu.dot_dimension_numbers<[1], [0], [0], [1], [0, 0, 1, 1], [], []>} : vector<128x8xbf16>, vector<8x128xbf16>, vector<128x128xf32> -> vector<128x128xf32>
    %cst_30 = arith.constant dense<0xFF800000> : vector<128xf32>
    %53 = vector.multi_reduction <maximumf>, %52, %cst_30 [1] : vector<128x128xf32> to vector<128xf32>
    %54 = vector.shape_cast %53 : vector<128xf32> to vector<128x1xf32>
    %55 = vector.broadcast %54 : vector<128x1xf32> to vector<128x128xf32>
    %56 = arith.subf %52, %55 : vector<128x128xf32>
    %57 = math.exp %56 : vector<128x128xf32>
    %cst_31 = arith.constant dense<0.000000e+00> : vector<128xf32>
    %58 = vector.multi_reduction <add>, %57, %cst_31 [1] : vector<128x128xf32> to vector<128xf32>
    %59 = vector.shape_cast %58 : vector<128xf32> to vector<128x1xf32>
    %60 = tpu.reciprocal %59 {approx = true} : vector<128x1xf32> -> vector<128x1xf32>
    %61 = vector.broadcast %60 : vector<128x1xf32> to vector<128x128xf32>
    %62 = arith.mulf %57, %61 : vector<128x128xf32>
    %63 = arith.truncf %62 : vector<128x128xf32> to vector<128x128xbf16>
    %c0_32 = arith.constant 0 : index
    %c1 = arith.constant 1 : index
    %c0_33 = arith.constant 0 : index
    %c0_34 = arith.constant 0 : index
    %64 = vector.load %arg13[%c0_32, %c1, %c0_33, %c0_34] : memref<2x4x128x128xbf16, #tpu.memory_space<vmem>>, vector<1x1x128x128xbf16>
    %65 = vector.shape_cast %64 : vector<1x1x128x128xbf16> to vector<128x128xbf16>
    %66 = vector.shape_cast %63 : vector<128x128xbf16> to vector<1x1x128x128xbf16>
    tpu.vector_store %arg13[%c0_32, %c1, %c0_33, %c0_34], %66 {strides = array<i32>} : memref<2x4x128x128xbf16, #tpu.memory_space<vmem>>, vector<1x1x128x128xbf16>,
    %67 = arith.truncf %62 : vector<128x128xf32> to vector<128x128xbf16>
    %cst_35 = arith.constant dense<0.000000e+00> : vector<128x8xf32>
    %68 = tpu.matmul %67, %51, %cst_35 {dimension_numbers = #tpu.dot_dimension_numbers<[1], [0], [0], [1], [0, 0, 1, 1], [], []>} : vector<128x128xbf16>, vector<128x8xbf16>, vector<128x8xf32> -> vector<128x8xf32>
    %c0_36 = arith.constant 0 : index
    %c8 = arith.constant 8 : index
    %69 = vector.load %arg14[%c0_36, %c8] : memref<256x32xf32, #tpu.memory_space<vmem>>, vector<128x8xf32>
    tpu.vector_store %arg14[%c0_36, %c8], %68 {strides = array<i32>} : memref<256x32xf32, #tpu.memory_space<vmem>>, vector<128x8xf32>,
    %70 = vector.extract_strided_slice %5 {offsets = [16, 0], sizes = [8, 128], strides = [1, 1]} : vector<32x256xf32> to vector<8x128xf32>
    %71 = tpu.transpose %70, [1, 0] : vector<8x128xf32> -> vector<128x8xf32>
    %72 = arith.truncf %71 : vector<128x8xf32> to vector<128x8xbf16>
    %73 = vector.extract_strided_slice %11 {offsets = [16, 0], sizes = [8, 128], strides = [1, 1]} : vector<32x256xf32> to vector<8x128xf32>
    %74 = arith.truncf %73 : vector<8x128xf32> to vector<8x128xbf16>
    %75 = vector.extract_strided_slice %17 {offsets = [16, 0], sizes = [8, 128], strides = [1, 1]} : vector<32x256xf32> to vector<8x128xf32>
    %76 = tpu.transpose %75, [1, 0] : vector<8x128xf32> -> vector<128x8xf32>
    %77 = arith.truncf %76 : vector<128x8xf32> to vector<128x8xbf16>
    %cst_37 = arith.constant dense<0.000000e+00> : vector<128x128xf32>
    %78 = tpu.matmul %72, %74, %cst_37 {dimension_numbers = #tpu.dot_dimension_numbers<[1], [0], [0], [1], [0, 0, 1, 1], [], []>} : vector<128x8xbf16>, vector<8x128xbf16>, vector<128x128xf32> -> vector<128x128xf32>
    %cst_38 = arith.constant dense<0xFF800000> : vector<128xf32>
    %79 = vector.multi_reduction <maximumf>, %78, %cst_38 [1] : vector<128x128xf32> to vector<128xf32>
    %80 = vector.shape_cast %79 : vector<128xf32> to vector<128x1xf32>
    %81 = vector.broadcast %80 : vector<128x1xf32> to vector<128x128xf32>
    %82 = arith.subf %78, %81 : vector<128x128xf32>
    %83 = math.exp %82 : vector<128x128xf32>
    %cst_39 = arith.constant dense<0.000000e+00> : vector<128xf32>
    %84 = vector.multi_reduction <add>, %83, %cst_39 [1] : vector<128x128xf32> to vector<128xf32>
    %85 = vector.shape_cast %84 : vector<128xf32> to vector<128x1xf32>
    %86 = tpu.reciprocal %85 {approx = true} : vector<128x1xf32> -> vector<128x1xf32>
    %87 = vector.broadcast %86 : vector<128x1xf32> to vector<128x128xf32>
    %88 = arith.mulf %83, %87 : vector<128x128xf32>
    %89 = arith.truncf %88 : vector<128x128xf32> to vector<128x128xbf16>
    %c0_40 = arith.constant 0 : index
    %c2 = arith.constant 2 : index
    %c0_41 = arith.constant 0 : index
    %c0_42 = arith.constant 0 : index
    %90 = vector.load %arg13[%c0_40, %c2, %c0_41, %c0_42] : memref<2x4x128x128xbf16, #tpu.memory_space<vmem>>, vector<1x1x128x128xbf16>
    %91 = vector.shape_cast %90 : vector<1x1x128x128xbf16> to vector<128x128xbf16>
    %92 = vector.shape_cast %89 : vector<128x128xbf16> to vector<1x1x128x128xbf16>
    tpu.vector_store %arg13[%c0_40, %c2, %c0_41, %c0_42], %92 {strides = array<i32>} : memref<2x4x128x128xbf16, #tpu.memory_space<vmem>>, vector<1x1x128x128xbf16>,
    %93 = arith.truncf %88 : vector<128x128xf32> to vector<128x128xbf16>
    %cst_43 = arith.constant dense<0.000000e+00> : vector<128x8xf32>
    %94 = tpu.matmul %93, %77, %cst_43 {dimension_numbers = #tpu.dot_dimension_numbers<[1], [0], [0], [1], [0, 0, 1, 1], [], []>} : vector<128x128xbf16>, vector<128x8xbf16>, vector<128x8xf32> -> vector<128x8xf32>
    %c0_44 = arith.constant 0 : index
    %c16 = arith.constant 16 : index
    %95 = vector.load %arg14[%c0_44, %c16] : memref<256x32xf32, #tpu.memory_space<vmem>>, vector<128x8xf32>
    tpu.vector_store %arg14[%c0_44, %c16], %94 {strides = array<i32>} : memref<256x32xf32, #tpu.memory_space<vmem>>, vector<128x8xf32>,
    %96 = vector.extract_strided_slice %5 {offsets = [24, 0], sizes = [8, 128], strides = [1, 1]} : vector<32x256xf32> to vector<8x128xf32>
    %97 = tpu.transpose %96, [1, 0] : vector<8x128xf32> -> vector<128x8xf32>
    %98 = arith.truncf %97 : vector<128x8xf32> to vector<128x8xbf16>
    %99 = vector.extract_strided_slice %11 {offsets = [24, 0], sizes = [8, 128], strides = [1, 1]} : vector<32x256xf32> to vector<8x128xf32>
    %100 = arith.truncf %99 : vector<8x128xf32> to vector<8x128xbf16>
    %101 = vector.extract_strided_slice %17 {offsets = [24, 0], sizes = [8, 128], strides = [1, 1]} : vector<32x256xf32> to vector<8x128xf32>
    %102 = tpu.transpose %101, [1, 0] : vector<8x128xf32> -> vector<128x8xf32>
    %103 = arith.truncf %102 : vector<128x8xf32> to vector<128x8xbf16>
    %cst_45 = arith.constant dense<0.000000e+00> : vector<128x128xf32>
    %104 = tpu.matmul %98, %100, %cst_45 {dimension_numbers = #tpu.dot_dimension_numbers<[1], [0], [0], [1], [0, 0, 1, 1], [], []>} : vector<128x8xbf16>, vector<8x128xbf16>, vector<128x128xf32> -> vector<128x128xf32>
    %cst_46 = arith.constant dense<0xFF800000> : vector<128xf32>
    %105 = vector.multi_reduction <maximumf>, %104, %cst_46 [1] : vector<128x128xf32> to vector<128xf32>
    %106 = vector.shape_cast %105 : vector<128xf32> to vector<128x1xf32>
    %107 = vector.broadcast %106 : vector<128x1xf32> to vector<128x128xf32>
    %108 = arith.subf %104, %107 : vector<128x128xf32>
    %109 = math.exp %108 : vector<128x128xf32>
    %cst_47 = arith.constant dense<0.000000e+00> : vector<128xf32>
    %110 = vector.multi_reduction <add>, %109, %cst_47 [1] : vector<128x128xf32> to vector<128xf32>
    %111 = vector.shape_cast %110 : vector<128xf32> to vector<128x1xf32>
    %112 = tpu.reciprocal %111 {approx = true} : vector<128x1xf32> -> vector<128x1xf32>
    %113 = vector.broadcast %112 : vector<128x1xf32> to vector<128x128xf32>
    %114 = arith.mulf %109, %113 : vector<128x128xf32>
    %115 = arith.truncf %114 : vector<128x128xf32> to vector<128x128xbf16>
    %c0_48 = arith.constant 0 : index
    %c3 = arith.constant 3 : index
    %c0_49 = arith.constant 0 : index
    %c0_50 = arith.constant 0 : index
    %116 = vector.load %arg13[%c0_48, %c3, %c0_49, %c0_50] : memref<2x4x128x128xbf16, #tpu.memory_space<vmem>>, vector<1x1x128x128xbf16>
    %117 = vector.shape_cast %116 : vector<1x1x128x128xbf16> to vector<128x128xbf16>
    %118 = vector.shape_cast %115 : vector<128x128xbf16> to vector<1x1x128x128xbf16>
    tpu.vector_store %arg13[%c0_48, %c3, %c0_49, %c0_50], %118 {strides = array<i32>} : memref<2x4x128x128xbf16, #tpu.memory_space<vmem>>, vector<1x1x128x128xbf16>,
    %119 = arith.truncf %114 : vector<128x128xf32> to vector<128x128xbf16>
    %cst_51 = arith.constant dense<0.000000e+00> : vector<128x8xf32>
    %120 = tpu.matmul %119, %103, %cst_51 {dimension_numbers = #tpu.dot_dimension_numbers<[1], [0], [0], [1], [0, 0, 1, 1], [], []>} : vector<128x128xbf16>, vector<128x8xbf16>, vector<128x8xf32> -> vector<128x8xf32>
    %c0_52 = arith.constant 0 : index
    %c24 = arith.constant 24 : index
    %121 = vector.load %arg14[%c0_52, %c24] : memref<256x32xf32, #tpu.memory_space<vmem>>, vector<128x8xf32>
    tpu.vector_store %arg14[%c0_52, %c24], %120 {strides = array<i32>} : memref<256x32xf32, #tpu.memory_space<vmem>>, vector<128x8xf32>,
    %122 = vector.extract_strided_slice %5 {offsets = [0, 128], sizes = [8, 128], strides = [1, 1]} : vector<32x256xf32> to vector<8x128xf32>
    %123 = tpu.transpose %122, [1, 0] : vector<8x128xf32> -> vector<128x8xf32>
    %124 = arith.truncf %123 : vector<128x8xf32> to vector<128x8xbf16>
    %125 = vector.extract_strided_slice %11 {offsets = [0, 128], sizes = [8, 128], strides = [1, 1]} : vector<32x256xf32> to vector<8x128xf32>
    %126 = arith.truncf %125 : vector<8x128xf32> to vector<8x128xbf16>
    %127 = vector.extract_strided_slice %17 {offsets = [0, 128], sizes = [8, 128], strides = [1, 1]} : vector<32x256xf32> to vector<8x128xf32>
    %128 = tpu.transpose %127, [1, 0] : vector<8x128xf32> -> vector<128x8xf32>
    %129 = arith.truncf %128 : vector<128x8xf32> to vector<128x8xbf16>
    %cst_53 = arith.constant dense<0.000000e+00> : vector<128x128xf32>
    %130 = tpu.matmul %124, %126, %cst_53 {dimension_numbers = #tpu.dot_dimension_numbers<[1], [0], [0], [1], [0, 0, 1, 1], [], []>} : vector<128x8xbf16>, vector<8x128xbf16>, vector<128x128xf32> -> vector<128x128xf32>
    %cst_54 = arith.constant dense<0xFF800000> : vector<128xf32>
    %131 = vector.multi_reduction <maximumf>, %130, %cst_54 [1] : vector<128x128xf32> to vector<128xf32>
    %132 = vector.shape_cast %131 : vector<128xf32> to vector<128x1xf32>
    %133 = vector.broadcast %132 : vector<128x1xf32> to vector<128x128xf32>
    %134 = arith.subf %130, %133 : vector<128x128xf32>
    %135 = math.exp %134 : vector<128x128xf32>
    %cst_55 = arith.constant dense<0.000000e+00> : vector<128xf32>
    %136 = vector.multi_reduction <add>, %135, %cst_55 [1] : vector<128x128xf32> to vector<128xf32>
    %137 = vector.shape_cast %136 : vector<128xf32> to vector<128x1xf32>
    %138 = tpu.reciprocal %137 {approx = true} : vector<128x1xf32> -> vector<128x1xf32>
    %139 = vector.broadcast %138 : vector<128x1xf32> to vector<128x128xf32>
    %140 = arith.mulf %135, %139 : vector<128x128xf32>
    %141 = arith.truncf %140 : vector<128x128xf32> to vector<128x128xbf16>
    %c1_56 = arith.constant 1 : index
    %c0_57 = arith.constant 0 : index
    %c0_58 = arith.constant 0 : index
    %c0_59 = arith.constant 0 : index
    %142 = vector.load %arg13[%c1_56, %c0_57, %c0_58, %c0_59] : memref<2x4x128x128xbf16, #tpu.memory_space<vmem>>, vector<1x1x128x128xbf16>
    %143 = vector.shape_cast %142 : vector<1x1x128x128xbf16> to vector<128x128xbf16>
    %144 = vector.shape_cast %141 : vector<128x128xbf16> to vector<1x1x128x128xbf16>
    tpu.vector_store %arg13[%c1_56, %c0_57, %c0_58, %c0_59], %144 {strides = array<i32>} : memref<2x4x128x128xbf16, #tpu.memory_space<vmem>>, vector<1x1x128x128xbf16>,
    %145 = arith.truncf %140 : vector<128x128xf32> to vector<128x128xbf16>
    %cst_60 = arith.constant dense<0.000000e+00> : vector<128x8xf32>
    %146 = tpu.matmul %145, %129, %cst_60 {dimension_numbers = #tpu.dot_dimension_numbers<[1], [0], [0], [1], [0, 0, 1, 1], [], []>} : vector<128x128xbf16>, vector<128x8xbf16>, vector<128x8xf32> -> vector<128x8xf32>
    %c128 = arith.constant 128 : index
    %c0_61 = arith.constant 0 : index
    %147 = vector.load %arg14[%c128, %c0_61] : memref<256x32xf32, #tpu.memory_space<vmem>>, vector<128x8xf32>
    tpu.vector_store %arg14[%c128, %c0_61], %146 {strides = array<i32>} : memref<256x32xf32, #tpu.memory_space<vmem>>, vector<128x8xf32>,
    %148 = vector.extract_strided_slice %5 {offsets = [8, 128], sizes = [8, 128], strides = [1, 1]} : vector<32x256xf32> to vector<8x128xf32>
    %149 = tpu.transpose %148, [1, 0] : vector<8x128xf32> -> vector<128x8xf32>
    %150 = arith.truncf %149 : vector<128x8xf32> to vector<128x8xbf16>
    %151 = vector.extract_strided_slice %11 {offsets = [8, 128], sizes = [8, 128], strides = [1, 1]} : vector<32x256xf32> to vector<8x128xf32>
    %152 = arith.truncf %151 : vector<8x128xf32> to vector<8x128xbf16>
    %153 = vector.extract_strided_slice %17 {offsets = [8, 128], sizes = [8, 128], strides = [1, 1]} : vector<32x256xf32> to vector<8x128xf32>
    %154 = tpu.transpose %153, [1, 0] : vector<8x128xf32> -> vector<128x8xf32>
    %155 = arith.truncf %154 : vector<128x8xf32> to vector<128x8xbf16>
    %cst_62 = arith.constant dense<0.000000e+00> : vector<128x128xf32>
    %156 = tpu.matmul %150, %152, %cst_62 {dimension_numbers = #tpu.dot_dimension_numbers<[1], [0], [0], [1], [0, 0, 1, 1], [], []>} : vector<128x8xbf16>, vector<8x128xbf16>, vector<128x128xf32> -> vector<128x128xf32>
    %cst_63 = arith.constant dense<0xFF800000> : vector<128xf32>
    %157 = vector.multi_reduction <maximumf>, %156, %cst_63 [1] : vector<128x128xf32> to vector<128xf32>
    %158 = vector.shape_cast %157 : vector<128xf32> to vector<128x1xf32>
    %159 = vector.broadcast %158 : vector<128x1xf32> to vector<128x128xf32>
    %160 = arith.subf %156, %159 : vector<128x128xf32>
    %161 = math.exp %160 : vector<128x128xf32>
    %cst_64 = arith.constant dense<0.000000e+00> : vector<128xf32>
    %162 = vector.multi_reduction <add>, %161, %cst_64 [1] : vector<128x128xf32> to vector<128xf32>
    %163 = vector.shape_cast %162 : vector<128xf32> to vector<128x1xf32>
    %164 = tpu.reciprocal %163 {approx = true} : vector<128x1xf32> -> vector<128x1xf32>
    %165 = vector.broadcast %164 : vector<128x1xf32> to vector<128x128xf32>
    %166 = arith.mulf %161, %165 : vector<128x128xf32>
    %167 = arith.truncf %166 : vector<128x128xf32> to vector<128x128xbf16>
    %c1_65 = arith.constant 1 : index
    %c1_66 = arith.constant 1 : index
    %c0_67 = arith.constant 0 : index
    %c0_68 = arith.constant 0 : index
    %168 = vector.load %arg13[%c1_65, %c1_66, %c0_67, %c0_68] : memref<2x4x128x128xbf16, #tpu.memory_space<vmem>>, vector<1x1x128x128xbf16>
    %169 = vector.shape_cast %168 : vector<1x1x128x128xbf16> to vector<128x128xbf16>
    %170 = vector.shape_cast %167 : vector<128x128xbf16> to vector<1x1x128x128xbf16>
    tpu.vector_store %arg13[%c1_65, %c1_66, %c0_67, %c0_68], %170 {strides = array<i32>} : memref<2x4x128x128xbf16, #tpu.memory_space<vmem>>, vector<1x1x128x128xbf16>,
    %171 = arith.truncf %166 : vector<128x128xf32> to vector<128x128xbf16>
    %cst_69 = arith.constant dense<0.000000e+00> : vector<128x8xf32>
    %172 = tpu.matmul %171, %155, %cst_69 {dimension_numbers = #tpu.dot_dimension_numbers<[1], [0], [0], [1], [0, 0, 1, 1], [], []>} : vector<128x128xbf16>, vector<128x8xbf16>, vector<128x8xf32> -> vector<128x8xf32>
    %c128_70 = arith.constant 128 : index
    %c8_71 = arith.constant 8 : index
    %173 = vector.load %arg14[%c128_70, %c8_71] : memref<256x32xf32, #tpu.memory_space<vmem>>, vector<128x8xf32>
    tpu.vector_store %arg14[%c128_70, %c8_71], %172 {strides = array<i32>} : memref<256x32xf32, #tpu.memory_space<vmem>>, vector<128x8xf32>,
    %174 = vector.extract_strided_slice %5 {offsets = [16, 128], sizes = [8, 128], strides = [1, 1]} : vector<32x256xf32> to vector<8x128xf32>
    %175 = tpu.transpose %174, [1, 0] : vector<8x128xf32> -> vector<128x8xf32>
    %176 = arith.truncf %175 : vector<128x8xf32> to vector<128x8xbf16>
    %177 = vector.extract_strided_slice %11 {offsets = [16, 128], sizes = [8, 128], strides = [1, 1]} : vector<32x256xf32> to vector<8x128xf32>
    %178 = arith.truncf %177 : vector<8x128xf32> to vector<8x128xbf16>
    %179 = vector.extract_strided_slice %17 {offsets = [16, 128], sizes = [8, 128], strides = [1, 1]} : vector<32x256xf32> to vector<8x128xf32>
    %180 = tpu.transpose %179, [1, 0] : vector<8x128xf32> -> vector<128x8xf32>
    %181 = arith.truncf %180 : vector<128x8xf32> to vector<128x8xbf16>
    %cst_72 = arith.constant dense<0.000000e+00> : vector<128x128xf32>
    %182 = tpu.matmul %176, %178, %cst_72 {dimension_numbers = #tpu.dot_dimension_numbers<[1], [0], [0], [1], [0, 0, 1, 1], [], []>} : vector<128x8xbf16>, vector<8x128xbf16>, vector<128x128xf32> -> vector<128x128xf32>
    %cst_73 = arith.constant dense<0xFF800000> : vector<128xf32>
    %183 = vector.multi_reduction <maximumf>, %182, %cst_73 [1] : vector<128x128xf32> to vector<128xf32>
    %184 = vector.shape_cast %183 : vector<128xf32> to vector<128x1xf32>
    %185 = vector.broadcast %184 : vector<128x1xf32> to vector<128x128xf32>
    %186 = arith.subf %182, %185 : vector<128x128xf32>
    %187 = math.exp %186 : vector<128x128xf32>
    %cst_74 = arith.constant dense<0.000000e+00> : vector<128xf32>
    %188 = vector.multi_reduction <add>, %187, %cst_74 [1] : vector<128x128xf32> to vector<128xf32>
    %189 = vector.shape_cast %188 : vector<128xf32> to vector<128x1xf32>
    %190 = tpu.reciprocal %189 {approx = true} : vector<128x1xf32> -> vector<128x1xf32>
    %191 = vector.broadcast %190 : vector<128x1xf32> to vector<128x128xf32>
    %192 = arith.mulf %187, %191 : vector<128x128xf32>
    %193 = arith.truncf %192 : vector<128x128xf32> to vector<128x128xbf16>
    %c1_75 = arith.constant 1 : index
    %c2_76 = arith.constant 2 : index
    %c0_77 = arith.constant 0 : index
    %c0_78 = arith.constant 0 : index
    %194 = vector.load %arg13[%c1_75, %c2_76, %c0_77, %c0_78] : memref<2x4x128x128xbf16, #tpu.memory_space<vmem>>, vector<1x1x128x128xbf16>
    %195 = vector.shape_cast %194 : vector<1x1x128x128xbf16> to vector<128x128xbf16>
    %196 = vector.shape_cast %193 : vector<128x128xbf16> to vector<1x1x128x128xbf16>
    tpu.vector_store %arg13[%c1_75, %c2_76, %c0_77, %c0_78], %196 {strides = array<i32>} : memref<2x4x128x128xbf16, #tpu.memory_space<vmem>>, vector<1x1x128x128xbf16>,
    %197 = arith.truncf %192 : vector<128x128xf32> to vector<128x128xbf16>
    %cst_79 = arith.constant dense<0.000000e+00> : vector<128x8xf32>
    %198 = tpu.matmul %197, %181, %cst_79 {dimension_numbers = #tpu.dot_dimension_numbers<[1], [0], [0], [1], [0, 0, 1, 1], [], []>} : vector<128x128xbf16>, vector<128x8xbf16>, vector<128x8xf32> -> vector<128x8xf32>
    %c128_80 = arith.constant 128 : index
    %c16_81 = arith.constant 16 : index
    %199 = vector.load %arg14[%c128_80, %c16_81] : memref<256x32xf32, #tpu.memory_space<vmem>>, vector<128x8xf32>
    tpu.vector_store %arg14[%c128_80, %c16_81], %198 {strides = array<i32>} : memref<256x32xf32, #tpu.memory_space<vmem>>, vector<128x8xf32>,
    %200 = vector.extract_strided_slice %5 {offsets = [24, 128], sizes = [8, 128], strides = [1, 1]} : vector<32x256xf32> to vector<8x128xf32>
    %201 = tpu.transpose %200, [1, 0] : vector<8x128xf32> -> vector<128x8xf32>
    %202 = arith.truncf %201 : vector<128x8xf32> to vector<128x8xbf16>
    %203 = vector.extract_strided_slice %11 {offsets = [24, 128], sizes = [8, 128], strides = [1, 1]} : vector<32x256xf32> to vector<8x128xf32>
    %204 = arith.truncf %203 : vector<8x128xf32> to vector<8x128xbf16>
    %205 = vector.extract_strided_slice %17 {offsets = [24, 128], sizes = [8, 128], strides = [1, 1]} : vector<32x256xf32> to vector<8x128xf32>
    %206 = tpu.transpose %205, [1, 0] : vector<8x128xf32> -> vector<128x8xf32>
    %207 = arith.truncf %206 : vector<128x8xf32> to vector<128x8xbf16>
    %cst_82 = arith.constant dense<0.000000e+00> : vector<128x128xf32>
    %208 = tpu.matmul %202, %204, %cst_82 {dimension_numbers = #tpu.dot_dimension_numbers<[1], [0], [0], [1], [0, 0, 1, 1], [], []>} : vector<128x8xbf16>, vector<8x128xbf16>, vector<128x128xf32> -> vector<128x128xf32>
    %cst_83 = arith.constant dense<0xFF800000> : vector<128xf32>
    %209 = vector.multi_reduction <maximumf>, %208, %cst_83 [1] : vector<128x128xf32> to vector<128xf32>
    %210 = vector.shape_cast %209 : vector<128xf32> to vector<128x1xf32>
    %211 = vector.broadcast %210 : vector<128x1xf32> to vector<128x128xf32>
    %212 = arith.subf %208, %211 : vector<128x128xf32>
    %213 = math.exp %212 : vector<128x128xf32>
    %cst_84 = arith.constant dense<0.000000e+00> : vector<128xf32>
    %214 = vector.multi_reduction <add>, %213, %cst_84 [1] : vector<128x128xf32> to vector<128xf32>
    %215 = vector.shape_cast %214 : vector<128xf32> to vector<128x1xf32>
    %216 = tpu.reciprocal %215 {approx = true} : vector<128x1xf32> -> vector<128x1xf32>
    %217 = vector.broadcast %216 : vector<128x1xf32> to vector<128x128xf32>
    %218 = arith.mulf %213, %217 : vector<128x128xf32>
    %219 = arith.truncf %218 : vector<128x128xf32> to vector<128x128xbf16>
    %c1_85 = arith.constant 1 : index
    %c3_86 = arith.constant 3 : index
    %c0_87 = arith.constant 0 : index
    %c0_88 = arith.constant 0 : index
    %220 = vector.load %arg13[%c1_85, %c3_86, %c0_87, %c0_88] : memref<2x4x128x128xbf16, #tpu.memory_space<vmem>>, vector<1x1x128x128xbf16>
    %221 = vector.shape_cast %220 : vector<1x1x128x128xbf16> to vector<128x128xbf16>
    %222 = vector.shape_cast %219 : vector<128x128xbf16> to vector<1x1x128x128xbf16>
    tpu.vector_store %arg13[%c1_85, %c3_86, %c0_87, %c0_88], %222 {strides = array<i32>} : memref<2x4x128x128xbf16, #tpu.memory_space<vmem>>, vector<1x1x128x128xbf16>,
    %223 = arith.truncf %218 : vector<128x128xf32> to vector<128x128xbf16>
    %cst_89 = arith.constant dense<0.000000e+00> : vector<128x8xf32>
    %224 = tpu.matmul %223, %207, %cst_89 {dimension_numbers = #tpu.dot_dimension_numbers<[1], [0], [0], [1], [0, 0, 1, 1], [], []>} : vector<128x128xbf16>, vector<128x8xbf16>, vector<128x8xf32> -> vector<128x8xf32>
    %c128_90 = arith.constant 128 : index
    %c24_91 = arith.constant 24 : index
    %225 = vector.load %arg14[%c128_90, %c24_91] : memref<256x32xf32, #tpu.memory_space<vmem>>, vector<128x8xf32>
    tpu.vector_store %arg14[%c128_90, %c24_91], %224 {strides = array<i32>} : memref<256x32xf32, #tpu.memory_space<vmem>>, vector<128x8xf32>,
    %c0_92 = arith.constant 0 : index
    %c0_93 = arith.constant 0 : index
    %226 = vector.load %arg14[%c0_92, %c0_93] : memref<256x32xf32, #tpu.memory_space<vmem>>, vector<256x32xf32>
    %227 = arith.truncf %226 : vector<256x32xf32> to vector<256x32xbf16>
    %c0_94 = arith.constant 0 : index
    %c0_95 = arith.constant 0 : index
    %228 = vector.load %arg10[%c0_94, %c0_95] : memref<32x32xbf16, #tpu.memory_space<vmem>>, vector<32x32xbf16>
    %cst_96 = arith.constant dense<0.000000e+00> : vector<32x256xf32>
    %229 = tpu.matmul %228, %227, %cst_96 {dimension_numbers = #tpu.dot_dimension_numbers<[1], [1], [0], [0], [0, 0, 1, 0], [], []>} : vector<32x32xbf16>, vector<256x32xbf16>, vector<32x256xf32> -> vector<32x256xf32>
    %c0_97 = arith.constant 0 : index
    %c0_98 = arith.constant 0 : index
    %230 = vector.load %arg11[%c0_97, %c0_98] : memref<32x1xf32, #tpu.memory_space<vmem>>, vector<32x1xf32>
    %231 = vector.broadcast %230 : vector<32x1xf32> to vector<32x256xf32>
    %232 = arith.addf %229, %231 : vector<32x256xf32>
    %c0_99 = arith.constant 0 : index
    %c0_100 = arith.constant 0 : index
    %233 = vector.load %arg12[%c0_99, %c0_100] : memref<32x256xf32, #tpu.memory_space<vmem>>, vector<32x256xf32>
    tpu.vector_store %arg12[%c0_99, %c0_100], %232 {strides = array<i32>} : memref<32x256xf32, #tpu.memory_space<vmem>>, vector<32x256xf32>,
    return
  }
  func.func @transform_0(%arg0: i32) -> (i32, i32) {
    %c0_i32 = arith.constant 0 : i32
    %c0_i32_0 = arith.constant 0 : i32
    return %c0_i32, %arg0 : i32, i32
  }
  func.func @transform_1(%arg0: i32) -> (i32, i32) {
    %c0_i32 = arith.constant 0 : i32
    %c0_i32_0 = arith.constant 0 : i32
    return %c0_i32, %arg0 : i32, i32
  }
  func.func @transform_2(%arg0: i32) -> (i32, i32) {
    %c0_i32 = arith.constant 0 : i32
    %c0_i32_0 = arith.constant 0 : i32
    return %c0_i32, %arg0 : i32, i32
  }
  func.func @transform_3(%arg0: i32) -> (i32, i32) {
    %c0_i32 = arith.constant 0 : i32
    %c0_i32_0 = arith.constant 0 : i32
    %c0_i32_1 = arith.constant 0 : i32
    return %c0_i32, %c0_i32_0 : i32, i32
  }
  func.func @transform_4(%arg0: i32) -> (i32, i32) {
    %c0_i32 = arith.constant 0 : i32
    %c0_i32_0 = arith.constant 0 : i32
    %c0_i32_1 = arith.constant 0 : i32
    return %c0_i32, %c0_i32_0 : i32, i32
  }
  func.func @transform_5(%arg0: i32) -> (i32, i32) {
    %c0_i32 = arith.constant 0 : i32
    %c0_i32_0 = arith.constant 0 : i32
    %c0_i32_1 = arith.constant 0 : i32
    return %c0_i32, %c0_i32_0 : i32, i32
  }
  func.func @transform_6(%arg0: i32) -> (i32, i32) {
    %c0_i32 = arith.constant 0 : i32
    %c0_i32_0 = arith.constant 0 : i32
    %c0_i32_1 = arith.constant 0 : i32
    return %c0_i32, %c0_i32_0 : i32, i32
  }
  func.func @transform_7(%arg0: i32) -> (i32, i32) {
    %c0_i32 = arith.constant 0 : i32
    %c0_i32_0 = arith.constant 0 : i32
    %c0_i32_1 = arith.constant 0 : i32
    return %c0_i32, %c0_i32_0 : i32, i32
  }
  func.func @transform_8(%arg0: i32) -> (i32, i32) {
    %c0_i32 = arith.constant 0 : i32
    %c0_i32_0 = arith.constant 0 : i32
    %c0_i32_1 = arith.constant 0 : i32
    return %c0_i32, %c0_i32_0 : i32, i32
  }
  func.func @transform_9(%arg0: i32) -> (i32, i32) {
    %c0_i32 = arith.constant 0 : i32
    %c0_i32_0 = arith.constant 0 : i32
    %c0_i32_1 = arith.constant 0 : i32
    return %c0_i32, %c0_i32_0 : i32, i32
  }
  func.func @transform_10(%arg0: i32) -> (i32, i32) {
    %c0_i32 = arith.constant 0 : i32
    %c0_i32_0 = arith.constant 0 : i32
    %c0_i32_1 = arith.constant 0 : i32
    return %c0_i32, %c0_i32_0 : i32, i32
  }
  func.func @transform_11(%arg0: i32) -> (i32, i32) {
    %c0_i32 = arith.constant 0 : i32
    %c0_i32_0 = arith.constant 0 : i32
    return %c0_i32, %arg0 : i32, i32
  }
  func.func @transform_12(%arg0: i32) -> (i32, i32, i32, i32) {
    %c0_i32 = arith.constant 0 : i32
    %c0_i32_0 = arith.constant 0 : i32
    %c0_i32_1 = arith.constant 0 : i32
    %c0_i32_2 = arith.constant 0 : i32
    return %arg0, %c0_i32, %c0_i32_0, %c0_i32_1 : i32, i32, i32, i32
  }
}

</mosaic_0001>

<llo_original>
// kernel: multihead_attention.1
$region0: #{multihead_attention.1}
  #allocation0 [shape = 'u32[]', space=smem, size = 0x4, offset = 0x4, fixed_abs, tag = 'smem constant byte address 0x4 - core index']
  #allocation1 [shape = 'u32[144,128]{1,0:T(1,128)}', space=vmem, size = 0x12000, scoped, tag = 'internal scratch']
  #allocation2 [shape = 'f32[256,32]{1,0:T(8,128)}', space=vmem, size = 0x20000, scoped, tag = 'scratch operand']
  %s0 = inlined_call_operand.vmem [shape: bf16[32,512], index: 0, kind: input, shape index: {}]
  %s1 = inlined_call_operand.vmem [shape: bf16[32,512], index: 1, kind: input, shape index: {}]
  %s2 = inlined_call_operand.vmem [shape: bf16[32,512], index: 2, kind: input, shape index: {}]
  %s3 = inlined_call_operand.vmem [shape: bf16[32,32], index: 3, kind: input, shape index: {}]
  %s4 = inlined_call_operand.vmem [shape: f32[32,1], index: 4, kind: input, shape index: {}]
  %s5 = inlined_call_operand.vmem [shape: bf16[32,32], index: 5, kind: input, shape index: {}]
  %s6 = inlined_call_operand.vmem [shape: f32[32,1], index: 6, kind: input, shape index: {}]
  %s7 = inlined_call_operand.vmem [shape: bf16[32,32], index: 7, kind: input, shape index: {}]
  %s8 = inlined_call_operand.vmem [shape: f32[32,1], index: 8, kind: input, shape index: {}]
  %s9 = inlined_call_operand.vmem [shape: bf16[32,32], index: 9, kind: input, shape index: {}]
  %s10 = inlined_call_operand.vmem [shape: f32[32,1], index: 10, kind: input, shape index: {}]
  %s11 = inlined_call_operand.vmem [shape: f32[32,512], index: 11, kind: output, shape index: {0}]
  %s12 = inlined_call_operand.hbm [shape: bf16[4,4,128,128], index: 12, kind: output, shape index: {1}]
  %13 = xla_tuple %s11, %s12
  %s14 = sld [smem:[#allocation0]]
  $region218: #{multihead_attention.1} parent=0
    _
  %s16 = ssub.s32 1, %s14
  %s17 = scalar_select 0, %s16, %s14
  $region1: #{multihead_attention.1} parent=0
    #allocation3 [shape = 'u8[32768]{0}', space=vmem, size = 0x8000, scoped, tag = 'input window, operand 0']
    #allocation4 [shape = 'u8[32768]{0}', space=vmem, size = 0x8000, scoped, tag = 'input window, operand 1']
    #allocation5 [shape = 'u8[32768]{0}', space=vmem, size = 0x8000, scoped, tag = 'input window, operand 2']
    #allocation6 [shape = 'u8[65536]{0}', space=vmem, size = 0x10000, scoped, tag = 'output window, operand 0']
    #allocation7 [shape = 'u8[524288]{0}', space=vmem, size = 0x80000, scoped, tag = 'output window, operand 1']
    #allocation8 [shape = 's32[2]{0}', space=sflag, size = 0x8, scoped, tag = 'scoped memory for multihead_attention.1']
    %18 = vsyncpa [#allocation8], 0
    %s19 = scalar_lea.sflag [#allocation8], 1
    %20 = vsyncpa %s19, 0
    loop: start=0, step=1, limit=4
    $region2: #{multihead_attention.1} parent=1 // loop_pre_header
      _
    $region3: #{multihead_attention.1} parent=1 // loop_header
      %s22 = sphi 0, %s26
      %p23 = scmp.ge.s32.totalorder %s22, 4
      %s32 = sphi 0, %s34
      %s35 = sphi 0, %s32
      %s36 = sphi 0, %s35
      %s52 = sphi 0, %s36
      %s58 = sphi 0, %s60
      %s61 = sphi 0, %s58
      %s62 = sphi 0, %s61
      %s78 = sphi 0, %s62
      %s84 = sphi 0, %s86
      %s87 = sphi 0, %s84
      %s88 = sphi 0, %s87
      %s104 = sphi 0, %s88
      %s108 = sphi 0, %s108
      %s110 = sphi 0, %s108
      %s111 = sphi 0, %s110
      %s125 = sphi 0, %s111
      %s129 = sphi 0, %s129
      %s131 = sphi 0, %s129
      %s132 = sphi 0, %s131
      %s146 = sphi 0, %s132
      %s150 = sphi 0, %s150
      %s152 = sphi 0, %s150
      %s153 = sphi 0, %s152
      %s167 = sphi 0, %s153
      %s171 = sphi 0, %s171
      %s173 = sphi 0, %s171
      %s174 = sphi 0, %s173
      %s188 = sphi 0, %s174
      %s192 = sphi 0, %s192
      %s194 = sphi 0, %s192
      %s195 = sphi 0, %s194
      %s209 = sphi 0, %s195
      %s213 = sphi 0, %s213
      %s215 = sphi 0, %s213
      %s216 = sphi 0, %s215
      %s230 = sphi 0, %s216
      %s234 = sphi 0, %s234
      %s236 = sphi 0, %s234
      %s237 = sphi 0, %s236
      %s251 = sphi 0, %s237
      %s255 = sphi 0, %s255
      %s257 = sphi 0, %s255
      %s258 = sphi 0, %s257
      %s272 = sphi 0, %s258
      %s278 = sphi 0, %s280
      %s281 = sphi 0, %s278
      %s282 = sphi 0, %s281
      %s298 = sphi 0, %s282
      %s304 = sphi 0, %s306
      %s307 = sphi 0, %s304
      %s308 = sphi 0, %s307
      %s324 = sphi 0, %s308
    $region4: #{multihead_attention.1} parent=1 // loop_header_branch
      %25 = sbr.rel (%p23) target = $region8
    $region5: #{multihead_attention.1} parent=1 // loop_body
      %s27 = ssub.s32 %s22, 1
      %s28 = ssub.s32 %s22, 2
      %s29 = sadd.s32 %s22, 1
      %s30 = ssub.s32 %s22, %s29
      %p31 = scmp.eq.s32.totalorder %s30, 0
      %s33 = sadd.s32 %s32, 1
      %s34 = scalar_select %p31, %s32, %s33
      %p37 = pneg %p31
      %p38 = scmp.eq.s32.totalorder %s22, 1
      %p39 = por %p37, %p38
      %p40 = scmp.ne.s32.totalorder %s32, %s35
      %p41 = scmp.eq.s32.totalorder %s22, 0
      %p42 = por %p40, %p41
      %p43 = scmp.ne.s32.totalorder %s32, %s35
      %p44 = scmp.eq.s32.totalorder %s27, 1
      %p45 = por %p43, %p44
      %p46 = scmp.ne.s32.totalorder %s35, %s36
      %p47 = scmp.eq.s32.totalorder %s27, 0
      %p48 = por %p46, %p47
      %p49 = scmp.ne.s32.totalorder %s35, %s36
      %p50 = scmp.eq.s32.totalorder %s28, 1
      %p51 = por %p49, %p50
      %p53 = scmp.ne.s32.totalorder %s36, %s52
      %p54 = scmp.eq.s32.totalorder %s28, 0
      %p55 = por %p53, %p54
      %s56 = ssub.s32 %s22, %s29
      %p57 = scmp.eq.s32.totalorder %s56, 0
      %s59 = sadd.s32 %s58, 1
      %s60 = scalar_select %p57, %s58, %s59
      %p63 = pneg %p57
      %p64 = scmp.eq.s32.totalorder %s22, 1
      %p65 = por %p63, %p64
      %p66 = scmp.ne.s32.totalorder %s58, %s61
      %p67 = scmp.eq.s32.totalorder %s22, 0
      %p68 = por %p66, %p67
      %p69 = scmp.ne.s32.totalorder %s58, %s61
      %p70 = scmp.eq.s32.totalorder %s27, 1
      %p71 = por %p69, %p70
      %p72 = scmp.ne.s32.totalorder %s61, %s62
      %p73 = scmp.eq.s32.totalorder %s27, 0
      %p74 = por %p72, %p73
      %p75 = scmp.ne.s32.totalorder %s61, %s62
      %p76 = scmp.eq.s32.totalorder %s28, 1
      %p77 = por %p75, %p76
      %p79 = scmp.ne.s32.totalorder %s62, %s78
      %p80 = scmp.eq.s32.totalorder %s28, 0
      %p81 = por %p79, %p80
      %s82 = ssub.s32 %s22, %s29
      %p83 = scmp.eq.s32.totalorder %s82, 0
      %s85 = sadd.s32 %s84, 1
      %s86 = scalar_select %p83, %s84, %s85
      %p89 = pneg %p83
      %p90 = scmp.eq.s32.totalorder %s22, 1
      %p91 = por %p89, %p90
      %p92 = scmp.ne.s32.totalorder %s84, %s87
      %p93 = scmp.eq.s32.totalorder %s22, 0
      %p94 = por %p92, %p93
      %p95 = scmp.ne.s32.totalorder %s84, %s87
      %p96 = scmp.eq.s32.totalorder %s27, 1
      %p97 = por %p95, %p96
      %p98 = scmp.ne.s32.totalorder %s87, %s88
      %p99 = scmp.eq.s32.totalorder %s27, 0
      %p100 = por %p98, %p99
      %p101 = scmp.ne.s32.totalorder %s87, %s88
      %p102 = scmp.eq.s32.totalorder %s28, 1
      %p103 = por %p101, %p102
      %p105 = scmp.ne.s32.totalorder %s88, %s104
      %p106 = scmp.eq.s32.totalorder %s28, 0
      %p107 = por %p105, %p106
      %s109 = sadd.s32 %s108, 1
      %p112 = scmp.eq.s32.totalorder %s22, 1
      %p113 = scmp.ne.s32.totalorder %s108, %s110
      %p114 = scmp.eq.s32.totalorder %s22, 0
      %p115 = por %p113, %p114
      %p116 = scmp.ne.s32.totalorder %s108, %s110
      %p117 = scmp.eq.s32.totalorder %s27, 1
      %p118 = por %p116, %p117
      %p119 = scmp.ne.s32.totalorder %s110, %s111
      %p120 = scmp.eq.s32.totalorder %s27, 0
      %p121 = por %p119, %p120
      %p122 = scmp.ne.s32.totalorder %s110, %s111
      %p123 = scmp.eq.s32.totalorder %s28, 1
      %p124 = por %p122, %p123
      %p126 = scmp.ne.s32.totalorder %s111, %s125
      %p127 = scmp.eq.s32.totalorder %s28, 0
      %p128 = por %p126, %p127
      %s130 = sadd.s32 %s129, 1
      %p133 = scmp.eq.s32.totalorder %s22, 1
      %p134 = scmp.ne.s32.totalorder %s129, %s131
      %p135 = scmp.eq.s32.totalorder %s22, 0
      %p136 = por %p134, %p135
      %p137 = scmp.ne.s32.totalorder %s129, %s131
      %p138 = scmp.eq.s32.totalorder %s27, 1
      %p139 = por %p137, %p138
      %p140 = scmp.ne.s32.totalorder %s131, %s132
      %p141 = scmp.eq.s32.totalorder %s27, 0
      %p142 = por %p140, %p141
      %p143 = scmp.ne.s32.totalorder %s131, %s132
      %p144 = scmp.eq.s32.totalorder %s28, 1
      %p145 = por %p143, %p144
      %p147 = scmp.ne.s32.totalorder %s132, %s146
      %p148 = scmp.eq.s32.totalorder %s28, 0
      %p149 = por %p147, %p148
      %s151 = sadd.s32 %s150, 1
      %p154 = scmp.eq.s32.totalorder %s22, 1
      %p155 = scmp.ne.s32.totalorder %s150, %s152
      %p156 = scmp.eq.s32.totalorder %s22, 0
      %p157 = por %p155, %p156
      %p158 = scmp.ne.s32.totalorder %s150, %s152
      %p159 = scmp.eq.s32.totalorder %s27, 1
      %p160 = por %p158, %p159
      %p161 = scmp.ne.s32.totalorder %s152, %s153
      %p162 = scmp.eq.s32.totalorder %s27, 0
      %p163 = por %p161, %p162
      %p164 = scmp.ne.s32.totalorder %s152, %s153
      %p165 = scmp.eq.s32.totalorder %s28, 1
      %p166 = por %p164, %p165
      %p168 = scmp.ne.s32.totalorder %s153, %s167
      %p169 = scmp.eq.s32.totalorder %s28, 0
      %p170 = por %p168, %p169
      %s172 = sadd.s32 %s171, 1
      %p175 = scmp.eq.s32.totalorder %s22, 1
      %p176 = scmp.ne.s32.totalorder %s171, %s173
      %p177 = scmp.eq.s32.totalorder %s22, 0
      %p178 = por %p176, %p177
      %p179 = scmp.ne.s32.totalorder %s171, %s173
      %p180 = scmp.eq.s32.totalorder %s27, 1
      %p181 = por %p179, %p180
      %p182 = scmp.ne.s32.totalorder %s173, %s174
      %p183 = scmp.eq.s32.totalorder %s27, 0
      %p184 = por %p182, %p183
      %p185 = scmp.ne.s32.totalorder %s173, %s174
      %p186 = scmp.eq.s32.totalorder %s28, 1
      %p187 = por %p185, %p186
      %p189 = scmp.ne.s32.totalorder %s174, %s188
      %p190 = scmp.eq.s32.totalorder %s28, 0
      %p191 = por %p189, %p190
      %s193 = sadd.s32 %s192, 1
      %p196 = scmp.eq.s32.totalorder %s22, 1
      %p197 = scmp.ne.s32.totalorder %s192, %s194
      %p198 = scmp.eq.s32.totalorder %s22, 0
      %p199 = por %p197, %p198
      %p200 = scmp.ne.s32.totalorder %s192, %s194
      %p201 = scmp.eq.s32.totalorder %s27, 1
      %p202 = por %p200, %p201
      %p203 = scmp.ne.s32.totalorder %s194, %s195
      %p204 = scmp.eq.s32.totalorder %s27, 0
      %p205 = por %p203, %p204
      %p206 = scmp.ne.s32.totalorder %s194, %s195
      %p207 = scmp.eq.s32.totalorder %s28, 1
      %p208 = por %p206, %p207
      %p210 = scmp.ne.s32.totalorder %s195, %s209
      %p211 = scmp.eq.s32.totalorder %s28, 0
      %p212 = por %p210, %p211
      %s214 = sadd.s32 %s213, 1
      %p217 = scmp.eq.s32.totalorder %s22, 1
      %p218 = scmp.ne.s32.totalorder %s213, %s215
      %p219 = scmp.eq.s32.totalorder %s22, 0
      %p220 = por %p218, %p219
      %p221 = scmp.ne.s32.totalorder %s213, %s215
      %p222 = scmp.eq.s32.totalorder %s27, 1
      %p223 = por %p221, %p222
      %p224 = scmp.ne.s32.totalorder %s215, %s216
      %p225 = scmp.eq.s32.totalorder %s27, 0
      %p226 = por %p224, %p225
      %p227 = scmp.ne.s32.totalorder %s215, %s216
      %p228 = scmp.eq.s32.totalorder %s28, 1
      %p229 = por %p227, %p228
      %p231 = scmp.ne.s32.totalorder %s216, %s230
      %p232 = scmp.eq.s32.totalorder %s28, 0
      %p233 = por %p231, %p232
      %s235 = sadd.s32 %s234, 1
      %p238 = scmp.eq.s32.totalorder %s22, 1
      %p239 = scmp.ne.s32.totalorder %s234, %s236
      %p240 = scmp.eq.s32.totalorder %s22, 0
      %p241 = por %p239, %p240
      %p242 = scmp.ne.s32.totalorder %s234, %s236
      %p243 = scmp.eq.s32.totalorder %s27, 1
      %p244 = por %p242, %p243
      %p245 = scmp.ne.s32.totalorder %s236, %s237
      %p246 = scmp.eq.s32.totalorder %s27, 0
      %p247 = por %p245, %p246
      %p248 = scmp.ne.s32.totalorder %s236, %s237
      %p249 = scmp.eq.s32.totalorder %s28, 1
      %p250 = por %p248, %p249
      %p252 = scmp.ne.s32.totalorder %s237, %s251
      %p253 = scmp.eq.s32.totalorder %s28, 0
      %p254 = por %p252, %p253
      %s256 = sadd.s32 %s255, 1
      %p259 = scmp.eq.s32.totalorder %s22, 1
      %p260 = scmp.ne.s32.totalorder %s255, %s257
      %p261 = scmp.eq.s32.totalorder %s22, 0
      %p262 = por %p260, %p261
      %p263 = scmp.ne.s32.totalorder %s255, %s257
      %p264 = scmp.eq.s32.totalorder %s27, 1
      %p265 = por %p263, %p264
      %p266 = scmp.ne.s32.totalorder %s257, %s258
      %p267 = scmp.eq.s32.totalorder %s27, 0
      %p268 = por %p266, %p267
      %p269 = scmp.ne.s32.totalorder %s257, %s258
      %p270 = scmp.eq.s32.totalorder %s28, 1
      %p271 = por %p269, %p270
      %p273 = scmp.ne.s32.totalorder %s258, %s272
      %p274 = scmp.eq.s32.totalorder %s28, 0
      %p275 = por %p273, %p274
      %s276 = ssub.s32 %s22, %s29
      %p277 = scmp.eq.s32.totalorder %s276, 0
      %s279 = sadd.s32 %s278, 1
      %s280 = scalar_select %p277, %s278, %s279
      %p283 = pneg %p277
      %p284 = scmp.eq.s32.totalorder %s22, 1
      %p285 = por %p283, %p284
      %p286 = scmp.ne.s32.totalorder %s278, %s281
      %p287 = scmp.eq.s32.totalorder %s22, 0
      %p288 = por %p286, %p287
      %p289 = scmp.ne.s32.totalorder %s278, %s281
      %p290 = scmp.eq.s32.totalorder %s27, 1
      %p291 = por %p289, %p290
      %p292 = scmp.ne.s32.totalorder %s281, %s282
      %p293 = scmp.eq.s32.totalorder %s27, 0
      %p294 = por %p292, %p293
      %p295 = scmp.ne.s32.totalorder %s281, %s282
      %p296 = scmp.eq.s32.totalorder %s28, 1
      %p297 = por %p295, %p296
      %p299 = scmp.ne.s32.totalorder %s282, %s298
      %p300 = scmp.eq.s32.totalorder %s28, 0
      %p301 = por %p299, %p300
      %s302 = ssub.s32 %s22, %s29
      %p303 = scmp.eq.s32.totalorder %s302, 0
      %s305 = sadd.s32 %s304, 1
      %s306 = scalar_select %p303, %s304, %s305
      %p309 = pneg %p303
      %p310 = scmp.eq.s32.totalorder %s22, 1
      %p311 = por %p309, %p310
      %p312 = scmp.ne.s32.totalorder %s304, %s307
      %p313 = scmp.eq.s32.totalorder %s22, 0
      %p314 = por %p312, %p313
      %p315 = scmp.ne.s32.totalorder %s304, %s307
      %p316 = scmp.eq.s32.totalorder %s27, 1
      %p317 = por %p315, %p316
      %p318 = scmp.ne.s32.totalorder %s307, %s308
      %p319 = scmp.eq.s32.totalorder %s27, 0
      %p320 = por %p318, %p319
      %p321 = scmp.ne.s32.totalorder %s307, %s308
      %p322 = scmp.eq.s32.totalorder %s28, 1
      %p323 = por %p321, %p322
      %p325 = scmp.ne.s32.totalorder %s308, %s324
      %p326 = scmp.eq.s32.totalorder %s28, 0
      %p327 = por %p325, %p326
      %p328 = scmp.le.s32.totalorder 1, %s22
      %p329 = scmp.lt.s32.totalorder %s22, 3
      %p330 = pnand %p328, %p329
      %p331 = pneg %p330
      // Predicated region
      $region9: #{multihead_attention.1} parent=5 // pred_check
        _
      $region10: #{multihead_attention.1} parent=5 // pred_check_branch
        %333 = sbr.rel (%p330) target = $region12
      $region11: #{multihead_attention.1} parent=5 // pred_region
        %s334 = ssub.s32 %s22, 1
        // Predicated region
        $region13: #{multihead_attention.1} parent=11 // pred_check
          %p335 = pneg %p121
        $region14: #{multihead_attention.1} parent=11 // pred_check_branch
          %337 = sbr.rel (%p335) target = $region16
        $region15: #{multihead_attention.1} parent=11 // pred_region
          _
        $region16: #{multihead_attention.1} parent=11 // pred_fallthru
          _
        // Predicated region
        $region17: #{multihead_attention.1} parent=11 // pred_check
          %p338 = pneg %p142
        $region18: #{multihead_attention.1} parent=11 // pred_check_branch
          %340 = sbr.rel (%p338) target = $region20
        $region19: #{multihead_attention.1} parent=11 // pred_region
          _
        $region20: #{multihead_attention.1} parent=11 // pred_fallthru
          _
        // Predicated region
        $region21: #{multihead_attention.1} parent=11 // pred_check
          %p341 = pneg %p163
        $region22: #{multihead_attention.1} parent=11 // pred_check_branch
          %343 = sbr.rel (%p341) target = $region24
        $region23: #{multihead_attention.1} parent=11 // pred_region
          _
        $region24: #{multihead_attention.1} parent=11 // pred_fallthru
          _
        // Predicated region
        $region25: #{multihead_attention.1} parent=11 // pred_check
          %p344 = pneg %p184
        $region26: #{multihead_attention.1} parent=11 // pred_check_branch
          %346 = sbr.rel (%p344) target = $region28
        $region27: #{multihead_attention.1} parent=11 // pred_region
          _
        $region28: #{multihead_attention.1} parent=11 // pred_fallthru
          _
        // Predicated region
        $region29: #{multihead_attention.1} parent=11 // pred_check
          %p347 = pneg %p205
        $region30: #{multihead_attention.1} parent=11 // pred_check_branch
          %349 = sbr.rel (%p347) target = $region32
        $region31: #{multihead_attention.1} parent=11 // pred_region
          _
        $region32: #{multihead_attention.1} parent=11 // pred_fallthru
          _
        // Predicated region
        $region33: #{multihead_attention.1} parent=11 // pred_check
          %p350 = pneg %p226
        $region34: #{multihead_attention.1} parent=11 // pred_check_branch
          %352 = sbr.rel (%p350) target = $region36
        $region35: #{multihead_attention.1} parent=11 // pred_region
          _
        $region36: #{multihead_attention.1} parent=11 // pred_fallthru
          _
        // Predicated region
        $region37: #{multihead_attention.1} parent=11 // pred_check
          %p353 = pneg %p247
        $region38: #{multihead_attention.1} parent=11 // pred_check_branch
          %355 = sbr.rel (%p353) target = $region40
        $region39: #{multihead_attention.1} parent=11 // pred_region
          _
        $region40: #{multihead_attention.1} parent=11 // pred_fallthru
          _
        // Predicated region
        $region41: #{multihead_attention.1} parent=11 // pred_check
          %p356 = pneg %p268
        $region42: #{multihead_attention.1} parent=11 // pred_check_branch
          %358 = sbr.rel (%p356) target = $region44
        $region43: #{multihead_attention.1} parent=11 // pred_region
          _
        $region44: #{multihead_attention.1} parent=11 // pred_fallthru
          _
      $region12: #{multihead_attention.1} parent=5 // pred_fallthru
        _
      %p359 = scmp.lt.s32.totalorder %s22, 2
      // Predicated region
      $region45: #{multihead_attention.1} parent=5 // pred_check
        %p360 = pneg %p359
      $region46: #{multihead_attention.1} parent=5 // pred_check_branch
        %362 = sbr.rel (%p360) target = $region48
      $region47: #{multihead_attention.1} parent=5 // pred_region
        // Predicated region
        $region49: #{multihead_attention.1} parent=47 // pred_check
          %p363 = pneg %p42
        $region50: #{multihead_attention.1} parent=47 // pred_check_branch
          %365 = sbr.rel (%p363) target = $region52
        $region51: #{multihead_attention.1} parent=47 // pred_region
          %s366 = sand.u32 %s32, 1
          %s367 = sand.u32 %s32, 1
          %s368 = smul.addr %s367, 32
          %s369 = scalar_lea.vmem [#allocation3], %s368
          %s370 = smul.u32 2, %s22
          %s371 = smul.addr %s370, 4
          %s372 = scalar_lea.vmem %s0, %s371
          // Predicated region
          $region53: #{multihead_attention.1} parent=51 // pred_check
            _
          $region54: #{multihead_attention.1} parent=51 // pred_check_branch
            %374 = sbr.rel (0) target = $region56
          $region55: #{multihead_attention.1} parent=51 // pred_region
            // Predicated region
            $region57: #{multihead_attention.1} parent=55 // pred_check
              _
            $region58: #{multihead_attention.1} parent=55 // pred_check_branch
              %376 = sbr.rel (0) target = $region60
            $region59: #{multihead_attention.1} parent=55 // pred_region
              // Predicated region
              $region72: #{multihead_attention.1} parent=59 // pred_check
                _
              $region73: #{multihead_attention.1} parent=59 // pred_check_branch
                %397 = sbr.rel (0) target = $region75
              $region74: #{multihead_attention.1} parent=59 // pred_region
                loop: start=0, step=1, limit=1
                $region76: #{multihead_attention.1} parent=74 // loop_pre_header
                  _
                $region77: #{multihead_attention.1} parent=74 // loop_header
                  %s399 = sphi 0, %s403
                  %p400 = scmp.ge.s32.totalorder %s399, 1
                  %s404 = sphi %s372, %s372
                  %s405 = sphi %s369, %s369
                $region78: #{multihead_attention.1} parent=74 // loop_header_branch
                  %402 = sbr.rel (%p400) target = $region82
                $region79: #{multihead_attention.1} parent=74 // loop_body
                  %v406 = vld [vmem:[%s404] sm:$0xff]
                  %407 = vst [vmem:[%s405] sm:$0xff] %v406
                  %v408 = vld [vmem:[%s404 + $0x10] sm:$0xff]
                  %409 = vst [vmem:[%s405 + $0x8] sm:$0xff] %v408
                  %v410 = vld [vmem:[%s404 + $0x20] sm:$0xff]
                  %411 = vst [vmem:[%s405 + $0x10] sm:$0xff] %v410
                  %v412 = vld [vmem:[%s404 + $0x30] sm:$0xff]
                  %413 = vst [vmem:[%s405 + $0x18] sm:$0xff] %v412
                $region80: #{multihead_attention.1} parent=74 // loop_footer
                  %s403 = sadd.s32 1, %s399
                $region81: #{multihead_attention.1} parent=74 // loop_footer_branch
                  %398 = sbr.rel target = $region77
                $region82: #{multihead_attention.1} parent=74 // loop_exit
                  _
              $region75: #{multihead_attention.1} parent=59 // pred_fallthru
                _
              // Predicated region
              $region83: #{multihead_attention.1} parent=59 // pred_check
                _
              $region84: #{multihead_attention.1} parent=59 // pred_check_branch
                %415 = sbr.rel target = $region86
              $region85: #{multihead_attention.1} parent=59 // pred_region
                _
              $region86: #{multihead_attention.1} parent=59 // pred_fallthru
                _
            $region60: #{multihead_attention.1} parent=55 // pred_fallthru
              _
            // Predicated region
            $region61: #{multihead_attention.1} parent=55 // pred_check
              _
            $region62: #{multihead_attention.1} parent=55 // pred_check_branch
              %378 = sbr.rel target = $region64
            $region63: #{multihead_attention.1} parent=55 // pred_region
              loop: start=0, step=1, limit=1
              $region65: #{multihead_attention.1} parent=63 // loop_pre_header
                _
              $region66: #{multihead_attention.1} parent=63 // loop_header
                %s381 = sphi 0, %s385
                %p382 = scmp.ge.s32.totalorder %s381, 1
                %s386 = sphi %s372, %s372
                %s387 = sphi %s369, %s369
              $region67: #{multihead_attention.1} parent=63 // loop_header_branch
                %384 = sbr.rel (%p382) target = $region71
              $region68: #{multihead_attention.1} parent=63 // loop_body
                %v388 = vld [vmem:[%s386] sm:$0xff]
                %389 = vst [vmem:[%s387] sm:$0xff] %v388
                %v390 = vld [vmem:[%s386 + $0x10] sm:$0xff]
                %391 = vst [vmem:[%s387 + $0x8] sm:$0xff] %v390
                %v392 = vld [vmem:[%s386 + $0x20] sm:$0xff]
                %393 = vst [vmem:[%s387 + $0x10] sm:$0xff] %v392
                %v394 = vld [vmem:[%s386 + $0x30] sm:$0xff]
                %395 = vst [vmem:[%s387 + $0x18] sm:$0xff] %v394
              $region69: #{multihead_attention.1} parent=63 // loop_footer
                %s385 = sadd.s32 1, %s381
              $region70: #{multihead_attention.1} parent=63 // loop_footer_branch
                %380 = sbr.rel target = $region66
              $region71: #{multihead_attention.1} parent=63 // loop_exit
                _
            $region64: #{multihead_attention.1} parent=55 // pred_fallthru
              _
          $region56: #{multihead_attention.1} parent=51 // pred_fallthru
            _
          %416 = vnop
        $region52: #{multihead_attention.1} parent=47 // pred_fallthru
          _
        // Predicated region
        $region87: #{multihead_attention.1} parent=47 // pred_check
          %p417 = pneg %p68
        $region88: #{multihead_attention.1} parent=47 // pred_check_branch
          %419 = sbr.rel (%p417) target = $region90
        $region89: #{multihead_attention.1} parent=47 // pred_region
          %s420 = sand.u32 %s58, 1
          %s421 = sand.u32 %s58, 1
          %s422 = smul.addr %s421, 32
          %s423 = scalar_lea.vmem [#allocation4], %s422
          %s424 = smul.u32 2, %s22
          %s425 = smul.addr %s424, 4
          %s426 = scalar_lea.vmem %s1, %s425
          // Predicated region
          $region91: #{multihead_attention.1} parent=89 // pred_check
            _
          $region92: #{multihead_attention.1} parent=89 // pred_check_branch
            %428 = sbr.rel (0) target = $region94
          $region93: #{multihead_attention.1} parent=89 // pred_region
            // Predicated region
            $region95: #{multihead_attention.1} parent=93 // pred_check
              _
            $region96: #{multihead_attention.1} parent=93 // pred_check_branch
              %430 = sbr.rel (0) target = $region98
            $region97: #{multihead_attention.1} parent=93 // pred_region
              // Predicated region
              $region110: #{multihead_attention.1} parent=97 // pred_check
                _
              $region111: #{multihead_attention.1} parent=97 // pred_check_branch
                %451 = sbr.rel (0) target = $region113
              $region112: #{multihead_attention.1} parent=97 // pred_region
                loop: start=0, step=1, limit=1
                $region114: #{multihead_attention.1} parent=112 // loop_pre_header
                  _
                $region115: #{multihead_attention.1} parent=112 // loop_header
                  %s453 = sphi 0, %s457
                  %p454 = scmp.ge.s32.totalorder %s453, 1
                  %s458 = sphi %s426, %s426
                  %s459 = sphi %s423, %s423
                $region116: #{multihead_attention.1} parent=112 // loop_header_branch
                  %456 = sbr.rel (%p454) target = $region120
                $region117: #{multihead_attention.1} parent=112 // loop_body
                  %v460 = vld [vmem:[%s458] sm:$0xff]
                  %461 = vst [vmem:[%s459] sm:$0xff] %v460
                  %v462 = vld [vmem:[%s458 + $0x10] sm:$0xff]
                  %463 = vst [vmem:[%s459 + $0x8] sm:$0xff] %v462
                  %v464 = vld [vmem:[%s458 + $0x20] sm:$0xff]
                  %465 = vst [vmem:[%s459 + $0x10] sm:$0xff] %v464
                  %v466 = vld [vmem:[%s458 + $0x30] sm:$0xff]
                  %467 = vst [vmem:[%s459 + $0x18] sm:$0xff] %v466
                $region118: #{multihead_attention.1} parent=112 // loop_footer
                  %s457 = sadd.s32 1, %s453
                $region119: #{multihead_attention.1} parent=112 // loop_footer_branch
                  %452 = sbr.rel target = $region115
                $region120: #{multihead_attention.1} parent=112 // loop_exit
                  _
              $region113: #{multihead_attention.1} parent=97 // pred_fallthru
                _
              // Predicated region
              $region121: #{multihead_attention.1} parent=97 // pred_check
                _
              $region122: #{multihead_attention.1} parent=97 // pred_check_branch
                %469 = sbr.rel target = $region124
              $region123: #{multihead_attention.1} parent=97 // pred_region
                _
              $region124: #{multihead_attention.1} parent=97 // pred_fallthru
                _
            $region98: #{multihead_attention.1} parent=93 // pred_fallthru
              _
            // Predicated region
            $region99: #{multihead_attention.1} parent=93 // pred_check
              _
            $region100: #{multihead_attention.1} parent=93 // pred_check_branch
              %432 = sbr.rel target = $region102
            $region101: #{multihead_attention.1} parent=93 // pred_region
              loop: start=0, step=1, limit=1
              $region103: #{multihead_attention.1} parent=101 // loop_pre_header
                _
              $region104: #{multihead_attention.1} parent=101 // loop_header
                %s435 = sphi 0, %s439
                %p436 = scmp.ge.s32.totalorder %s435, 1
                %s440 = sphi %s426, %s426
                %s441 = sphi %s423, %s423
              $region105: #{multihead_attention.1} parent=101 // loop_header_branch
                %438 = sbr.rel (%p436) target = $region109
              $region106: #{multihead_attention.1} parent=101 // loop_body
                %v442 = vld [vmem:[%s440] sm:$0xff]
                %443 = vst [vmem:[%s441] sm:$0xff] %v442
                %v444 = vld [vmem:[%s440 + $0x10] sm:$0xff]
                %445 = vst [vmem:[%s441 + $0x8] sm:$0xff] %v444
                %v446 = vld [vmem:[%s440 + $0x20] sm:$0xff]
                %447 = vst [vmem:[%s441 + $0x10] sm:$0xff] %v446
                %v448 = vld [vmem:[%s440 + $0x30] sm:$0xff]
                %449 = vst [vmem:[%s441 + $0x18] sm:$0xff] %v448
              $region107: #{multihead_attention.1} parent=101 // loop_footer
                %s439 = sadd.s32 1, %s435
              $region108: #{multihead_attention.1} parent=101 // loop_footer_branch
                %434 = sbr.rel target = $region104
              $region109: #{multihead_attention.1} parent=101 // loop_exit
                _
            $region102: #{multihead_attention.1} parent=93 // pred_fallthru
              _
          $region94: #{multihead_attention.1} parent=89 // pred_fallthru
            _
          %470 = vnop
        $region90: #{multihead_attention.1} parent=47 // pred_fallthru
          _
        // Predicated region
        $region125: #{multihead_attention.1} parent=47 // pred_check
          %p471 = pneg %p94
        $region126: #{multihead_attention.1} parent=47 // pred_check_branch
          %473 = sbr.rel (%p471) target = $region128
        $region127: #{multihead_attention.1} parent=47 // pred_region
          %s474 = sand.u32 %s84, 1
          %s475 = sand.u32 %s84, 1
          %s476 = smul.addr %s475, 32
          %s477 = scalar_lea.vmem [#allocation5], %s476
          %s478 = smul.u32 2, %s22
          %s479 = smul.addr %s478, 4
          %s480 = scalar_lea.vmem %s2, %s479
          // Predicated region
          $region129: #{multihead_attention.1} parent=127 // pred_check
            _
          $region130: #{multihead_attention.1} parent=127 // pred_check_branch
            %482 = sbr.rel (0) target = $region132
          $region131: #{multihead_attention.1} parent=127 // pred_region
            // Predicated region
            $region133: #{multihead_attention.1} parent=131 // pred_check
              _
            $region134: #{multihead_attention.1} parent=131 // pred_check_branch
              %484 = sbr.rel (0) target = $region136
            $region135: #{multihead_attention.1} parent=131 // pred_region
              // Predicated region
              $region148: #{multihead_attention.1} parent=135 // pred_check
                _
              $region149: #{multihead_attention.1} parent=135 // pred_check_branch
                %505 = sbr.rel (0) target = $region151
              $region150: #{multihead_attention.1} parent=135 // pred_region
                loop: start=0, step=1, limit=1
                $region152: #{multihead_attention.1} parent=150 // loop_pre_header
                  _
                $region153: #{multihead_attention.1} parent=150 // loop_header
                  %s507 = sphi 0, %s511
                  %p508 = scmp.ge.s32.totalorder %s507, 1
                  %s512 = sphi %s480, %s480
                  %s513 = sphi %s477, %s477
                $region154: #{multihead_attention.1} parent=150 // loop_header_branch
                  %510 = sbr.rel (%p508) target = $region158
                $region155: #{multihead_attention.1} parent=150 // loop_body
                  %v514 = vld [vmem:[%s512] sm:$0xff]
                  %515 = vst [vmem:[%s513] sm:$0xff] %v514
                  %v516 = vld [vmem:[%s512 + $0x10] sm:$0xff]
                  %517 = vst [vmem:[%s513 + $0x8] sm:$0xff] %v516
                  %v518 = vld [vmem:[%s512 + $0x20] sm:$0xff]
                  %519 = vst [vmem:[%s513 + $0x10] sm:$0xff] %v518
                  %v520 = vld [vmem:[%s512 + $0x30] sm:$0xff]
                  %521 = vst [vmem:[%s513 + $0x18] sm:$0xff] %v520
                $region156: #{multihead_attention.1} parent=150 // loop_footer
                  %s511 = sadd.s32 1, %s507
                $region157: #{multihead_attention.1} parent=150 // loop_footer_branch
                  %506 = sbr.rel target = $region153
                $region158: #{multihead_attention.1} parent=150 // loop_exit
                  _
              $region151: #{multihead_attention.1} parent=135 // pred_fallthru
                _
              // Predicated region
              $region159: #{multihead_attention.1} parent=135 // pred_check
                _
              $region160: #{multihead_attention.1} parent=135 // pred_check_branch
                %523 = sbr.rel target = $region162
              $region161: #{multihead_attention.1} parent=135 // pred_region
                _
              $region162: #{multihead_attention.1} parent=135 // pred_fallthru
                _
            $region136: #{multihead_attention.1} parent=131 // pred_fallthru
              _
            // Predicated region
            $region137: #{multihead_attention.1} parent=131 // pred_check
              _
            $region138: #{multihead_attention.1} parent=131 // pred_check_branch
              %486 = sbr.rel target = $region140
            $region139: #{multihead_attention.1} parent=131 // pred_region
              loop: start=0, step=1, limit=1
              $region141: #{multihead_attention.1} parent=139 // loop_pre_header
                _
              $region142: #{multihead_attention.1} parent=139 // loop_header
                %s489 = sphi 0, %s493
                %p490 = scmp.ge.s32.totalorder %s489, 1
                %s494 = sphi %s480, %s480
                %s495 = sphi %s477, %s477
              $region143: #{multihead_attention.1} parent=139 // loop_header_branch
                %492 = sbr.rel (%p490) target = $region147
              $region144: #{multihead_attention.1} parent=139 // loop_body
                %v496 = vld [vmem:[%s494] sm:$0xff]
                %497 = vst [vmem:[%s495] sm:$0xff] %v496
                %v498 = vld [vmem:[%s494 + $0x10] sm:$0xff]
                %499 = vst [vmem:[%s495 + $0x8] sm:$0xff] %v498
                %v500 = vld [vmem:[%s494 + $0x20] sm:$0xff]
                %501 = vst [vmem:[%s495 + $0x10] sm:$0xff] %v500
                %v502 = vld [vmem:[%s494 + $0x30] sm:$0xff]
                %503 = vst [vmem:[%s495 + $0x18] sm:$0xff] %v502
              $region145: #{multihead_attention.1} parent=139 // loop_footer
                %s493 = sadd.s32 1, %s489
              $region146: #{multihead_attention.1} parent=139 // loop_footer_branch
                %488 = sbr.rel target = $region142
              $region147: #{multihead_attention.1} parent=139 // loop_exit
                _
            $region140: #{multihead_attention.1} parent=131 // pred_fallthru
              _
          $region132: #{multihead_attention.1} parent=127 // pred_fallthru
            _
          %524 = vnop
        $region128: #{multihead_attention.1} parent=47 // pred_fallthru
          _
      $region48: #{multihead_attention.1} parent=5 // pred_fallthru
        _
      %p525 = scmp.le.s32.totalorder 1, %s22
      %p526 = scmp.lt.s32.totalorder %s22, 3
      %p527 = pnand %p525, %p526
      %p528 = pneg %p527
      // Predicated region
      $region163: #{multihead_attention.1} parent=5 // pred_check
        _
      $region164: #{multihead_attention.1} parent=5 // pred_check_branch
        %530 = sbr.rel (%p527) target = $region166
      $region165: #{multihead_attention.1} parent=5 // pred_region
        %s531 = ssub.s32 %s22, 1
        %s532 = sand.u32 %s35, 1
        %s533 = sand.u32 %s35, 1
        %s534 = smul.addr %s533, 32
        %s535 = scalar_lea.vmem [#allocation3], %s534
        // Predicated region
        $region167: #{multihead_attention.1} parent=165 // pred_check
          %p536 = pneg %p48
        $region168: #{multihead_attention.1} parent=165 // pred_check_branch
          %538 = sbr.rel (%p536) target = $region170
        $region169: #{multihead_attention.1} parent=165 // pred_region
          _
        $region170: #{multihead_attention.1} parent=165 // pred_fallthru
          _
        %s539 = sand.u32 %s61, 1
        %s540 = sand.u32 %s61, 1
        %s541 = smul.addr %s540, 32
        %s542 = scalar_lea.vmem [#allocation4], %s541
        // Predicated region
        $region171: #{multihead_attention.1} parent=165 // pred_check
          %p543 = pneg %p74
        $region172: #{multihead_attention.1} parent=165 // pred_check_branch
          %545 = sbr.rel (%p543) target = $region174
        $region173: #{multihead_attention.1} parent=165 // pred_region
          _
        $region174: #{multihead_attention.1} parent=165 // pred_fallthru
          _
        %s546 = sand.u32 %s87, 1
        %s547 = sand.u32 %s87, 1
        %s548 = smul.addr %s547, 32
        %s549 = scalar_lea.vmem [#allocation5], %s548
        // Predicated region
        $region175: #{multihead_attention.1} parent=165 // pred_check
          %p550 = pneg %p100
        $region176: #{multihead_attention.1} parent=165 // pred_check_branch
          %552 = sbr.rel (%p550) target = $region178
        $region177: #{multihead_attention.1} parent=165 // pred_region
          _
        $region178: #{multihead_attention.1} parent=165 // pred_fallthru
          _
        %s553 = sand.u32 %s35, 1
        %s554 = sand.u32 %s35, 1
        %s555 = smul.addr %s554, 32
        %s556 = scalar_lea.vmem [#allocation3], %s555
        %p557 = pneg %p48
        %p558 = pneg %p45
        %s559 = sand.u32 %s61, 1
        %s560 = sand.u32 %s61, 1
        %s561 = smul.addr %s560, 32
        %s562 = scalar_lea.vmem [#allocation4], %s561
        %p563 = pneg %p74
        %p564 = pneg %p71
        %s565 = sand.u32 %s87, 1
        %s566 = sand.u32 %s87, 1
        %s567 = smul.addr %s566, 32
        %s568 = scalar_lea.vmem [#allocation5], %s567
        %p569 = pneg %p100
        %p570 = pneg %p97
        %p571 = pneg %p121
        %p572 = pneg %p118
        %p573 = pneg %p142
        %p574 = pneg %p139
        %p575 = pneg %p163
        %p576 = pneg %p160
        %p577 = pneg %p184
        %p578 = pneg %p181
        %p579 = pneg %p205
        %p580 = pneg %p202
        %p581 = pneg %p226
        %p582 = pneg %p223
        %p583 = pneg %p247
        %p584 = pneg %p244
        %p585 = pneg %p268
        %p586 = pneg %p265
        %p587 = pneg %p294
        %p588 = pneg %p291
        %s589 = sand.u32 %s281, 1
        %s590 = sand.u32 %s281, 1
        %s591 = smul.addr %s590, 64
        %s592 = scalar_lea.vmem [#allocation6], %s591
        %p593 = pneg %p320
        %p594 = pneg %p317
        %s595 = sand.u32 %s307, 1
        %s596 = scalar_lea.sflag [#allocation8], %s595
        %s597 = sand.u32 %s307, 1
        %s598 = smul.addr %s597, 512
        %s599 = scalar_lea.vmem [#allocation7], %s598
        %s600 = smul.u32 2, %s27
        %s601 = smul.u32 2, %s27
        %s602 = smul.u32 2, %s27
        %s603 = smul.u32 2, %s27
        %s604 = smul.u32 2, %s27
        %v606 = vld [vmem:[%s3] sm:$0xf]
        %v607 = vld [vmem:[%s3 + $0x4] sm:$0xf]
        %v608 = vld [vmem:[%s3 + $0x8] sm:$0xf]
        %v609 = vld [vmem:[%s3 + $0xc] sm:$0xf]
        %v610 = vld [vmem:[%s535] sm:$0xff]
        %v611 = vld [vmem:[%s535 + $0x8] sm:$0xff]
        %v612 = vld [vmem:[%s535 + $0x10] sm:$0xff]
        %v613 = vld [vmem:[%s535 + $0x18] sm:$0xff]
        %v614 = vld [vmem:[%s4] sm:$0xff]
        %v615 = vld [vmem:[%s4 + $0x8] sm:$0xff]
        %v616 = vld [vmem:[%s4 + $0x10] sm:$0xff]
        %v617 = vld [vmem:[%s4 + $0x18] sm:$0xff]
        %619 = vset.pattern.permute.xlu0 0
        %620 = vperm.xlu0 %619, %v614
        %v621 = vpop.permute.xlu0 %620
        %624 = vset.pattern.permute.xlu0 0
        %625 = vperm.xlu0 %624, %v615
        %v626 = vpop.permute.xlu0 %625
        %629 = vset.pattern.permute.xlu0 0
        %630 = vperm.xlu0 %629, %v616
        %v631 = vpop.permute.xlu0 %630
        %634 = vset.pattern.permute.xlu0 0
        %635 = vperm.xlu0 %634, %v617
        %v636 = vpop.permute.xlu0 %635
        %v642 = vunpack.c.l.b16 %v606
        %v643 = vunpack.c.l.b16 %v607
        %v644 = vunpack.c.l.b16 %v608
        %v645 = vunpack.c.l.b16 %v609
        %v646 = vpack.c.b16 %v643, %v642
        %v647 = vpack.c.b16 %v645, %v644
        %v652 = vunpack.c.l.b16 %v610
        %v653 = vunpack.c.h.b16 %v610
        %v654 = vunpack.c.l.b16 %v611
        %v655 = vunpack.c.h.b16 %v611
        %v656 = vunpack.c.l.b16 %v612
        %v657 = vunpack.c.h.b16 %v612
        %v658 = vunpack.c.l.b16 %v613
        %v659 = vunpack.c.h.b16 %v613
        %v660 = vpack.c.b16 %v654, %v652
        %v661 = vpack.c.b16 %v655, %v653
        %v662 = vpack.c.b16 %v658, %v656
        %v663 = vpack.c.b16 %v659, %v657
        %vm668 = vcmask 261120
        %v670 = vsel %vm668, %v646, 0
        %v673 = vsel %vm668, %v647, 0
        %675 = vmatprep.subr.bf16.mxu0 %v661
        %676 = vmatpush1.bf16.msra.mxu0 %v660
        %677 = vmatprep.subr.bf16.mxu0 %v663
        %678 = vmatpush1.bf16.msra.mxu0 %v662
        %679 = vmatprep.subr.bf16.mxu0 0
        %680 = vmatpush1.bf16.msra.mxu0 0
        %681 = vmatprep.subr.bf16.mxu0 0
        %682 = vmatpush1.bf16.msra.mxu0 0
        %683 = vmatprep.subr.bf16.mxu0 0
        %684 = vmatpush1.bf16.msra.mxu0 0
        %685 = vmatprep.subr.bf16.mxu0 0
        %686 = vmatpush1.bf16.msra.mxu0 0
        %687 = vmatprep.subr.bf16.mxu0 0
        %688 = vmatpush1.bf16.msra.mxu0 0
        %689 = vmatprep.subr.bf16.mxu0 0
        %690 = vmatpush1.bf16.msra.mxu0 0
        %691 = vmatprep.subr.bf16.mxu0 0
        %692 = vmatpush1.bf16.msra.mxu0 0
        %693 = vmatprep.subr.bf16.mxu0 0
        %694 = vmatpush1.bf16.msra.mxu0 0
        %695 = vmatprep.subr.bf16.mxu0 0
        %696 = vmatpush1.bf16.msra.mxu0 0
        %697 = vmatprep.subr.bf16.mxu0 0
        %698 = vmatpush1.bf16.msra.mxu0 0
        %699 = vmatprep.subr.bf16.mxu0 0
        %700 = vmatpush1.bf16.msra.mxu0 0
        %701 = vmatprep.subr.bf16.mxu0 0
        %702 = vmatpush1.bf16.msra.mxu0 0
        %703 = vmatprep.subr.bf16.mxu0 0
        %704 = vmatpush1.bf16.msra.mxu0 0
        %705 = vmatprep.subr.bf16.mxu0 0
        %706 = vmatpush1.bf16.msra.mxu0 0
        %707 = vmatprep.mubr.bf16.mxu0 0
        %708 = vmatmul.mubr.bf16.gmra.mrb[0].mxu0 %v670
        %v709 = vpop.f32.mrb[0].mxu0
        %v710 = vadd.f32 %v621, %v709
        %v711 = vpop.f32.mrb[0].mxu0
        %v712 = vadd.f32 %v621, %v711
        %v713 = vpop.f32.mrb[0].mxu0
        %v714 = vadd.f32 %v626, %v713
        %v715 = vpop.f32.mrb[0].mxu0
        %v716 = vadd.f32 %v626, %v715
        %717 = vmatprep.mubr.bf16.mxu0 0
        %718 = vmatmul.mubr.bf16.gmra.mrb[0].mxu0 %v673
        %v719 = vpop.f32.mrb[0].mxu0
        %v720 = vadd.f32 %v631, %v719
        %v721 = vpop.f32.mrb[0].mxu0
        %v722 = vadd.f32 %v631, %v721
        %v723 = vpop.f32.mrb[0].mxu0
        %v724 = vadd.f32 %v636, %v723
        %v725 = vpop.f32.mrb[0].mxu0
        %v726 = vadd.f32 %v636, %v725
        %727 = vdwg.mxu0
        %v728 = vld [vmem:[%s5] sm:$0xf]
        %v729 = vld [vmem:[%s5 + $0x4] sm:$0xf]
        %v730 = vld [vmem:[%s5 + $0x8] sm:$0xf]
        %v731 = vld [vmem:[%s5 + $0xc] sm:$0xf]
        %v732 = vld [vmem:[%s542] sm:$0xff]
        %v733 = vld [vmem:[%s542 + $0x8] sm:$0xff]
        %v734 = vld [vmem:[%s542 + $0x10] sm:$0xff]
        %v735 = vld [vmem:[%s542 + $0x18] sm:$0xff]
        %v736 = vld [vmem:[%s6] sm:$0xff]
        %v737 = vld [vmem:[%s6 + $0x8] sm:$0xff]
        %v738 = vld [vmem:[%s6 + $0x10] sm:$0xff]
        %v739 = vld [vmem:[%s6 + $0x18] sm:$0xff]
        %741 = vset.pattern.permute.xlu0 0
        %742 = vperm.xlu0 %741, %v736
        %v743 = vpop.permute.xlu0 %742
        %746 = vset.pattern.permute.xlu0 0
        %747 = vperm.xlu0 %746, %v737
        %v748 = vpop.permute.xlu0 %747
        %751 = vset.pattern.permute.xlu0 0
        %752 = vperm.xlu0 %751, %v738
        %v753 = vpop.permute.xlu0 %752
        %756 = vset.pattern.permute.xlu0 0
        %757 = vperm.xlu0 %756, %v739
        %v758 = vpop.permute.xlu0 %757
        %v764 = vunpack.c.l.b16 %v728
        %v765 = vunpack.c.l.b16 %v729
        %v766 = vunpack.c.l.b16 %v730
        %v767 = vunpack.c.l.b16 %v731
        %v768 = vpack.c.b16 %v765, %v764
        %v769 = vpack.c.b16 %v767, %v766
        %v774 = vunpack.c.l.b16 %v732
        %v775 = vunpack.c.h.b16 %v732
        %v776 = vunpack.c.l.b16 %v733
        %v777 = vunpack.c.h.b16 %v733
        %v778 = vunpack.c.l.b16 %v734
        %v779 = vunpack.c.h.b16 %v734
        %v780 = vunpack.c.l.b16 %v735
        %v781 = vunpack.c.h.b16 %v735
        %v782 = vpack.c.b16 %v776, %v774
        %v783 = vpack.c.b16 %v777, %v775
        %v784 = vpack.c.b16 %v780, %v778
        %v785 = vpack.c.b16 %v781, %v779
        %v791 = vsel %vm668, %v768, 0
        %v794 = vsel %vm668, %v769, 0
        %796 = vmatprep.subr.bf16.mxu0 %v783
        %797 = vmatpush1.bf16.msra.mxu0 %v782
        %798 = vmatprep.subr.bf16.mxu0 %v785
        %799 = vmatpush1.bf16.msra.mxu0 %v784
        %800 = vmatprep.subr.bf16.mxu0 0
        %801 = vmatpush1.bf16.msra.mxu0 0
        %802 = vmatprep.subr.bf16.mxu0 0
        %803 = vmatpush1.bf16.msra.mxu0 0
        %804 = vmatprep.subr.bf16.mxu0 0
        %805 = vmatpush1.bf16.msra.mxu0 0
        %806 = vmatprep.subr.bf16.mxu0 0
        %807 = vmatpush1.bf16.msra.mxu0 0
        %808 = vmatprep.subr.bf16.mxu0 0
        %809 = vmatpush1.bf16.msra.mxu0 0
        %810 = vmatprep.subr.bf16.mxu0 0
        %811 = vmatpush1.bf16.msra.mxu0 0
        %812 = vmatprep.subr.bf16.mxu0 0
        %813 = vmatpush1.bf16.msra.mxu0 0
        %814 = vmatprep.subr.bf16.mxu0 0
        %815 = vmatpush1.bf16.msra.mxu0 0
        %816 = vmatprep.subr.bf16.mxu0 0
        %817 = vmatpush1.bf16.msra.mxu0 0
        %818 = vmatprep.subr.bf16.mxu0 0
        %819 = vmatpush1.bf16.msra.mxu0 0
        %820 = vmatprep.subr.bf16.mxu0 0
        %821 = vmatpush1.bf16.msra.mxu0 0
        %822 = vmatprep.subr.bf16.mxu0 0
        %823 = vmatpush1.bf16.msra.mxu0 0
        %824 = vmatprep.subr.bf16.mxu0 0
        %825 = vmatpush1.bf16.msra.mxu0 0
        %826 = vmatprep.subr.bf16.mxu0 0
        %827 = vmatpush1.bf16.msra.mxu0 0
        %828 = vmatprep.mubr.bf16.mxu0 0
        %829 = vmatmul.mubr.bf16.gmra.mrb[0].mxu0 %v791
        %v830 = vpop.f32.mrb[0].mxu0
        %v831 = vadd.f32 %v743, %v830
        %v832 = vpop.f32.mrb[0].mxu0
        %v833 = vadd.f32 %v743, %v832
        %v834 = vpop.f32.mrb[0].mxu0
        %v835 = vadd.f32 %v748, %v834
        %v836 = vpop.f32.mrb[0].mxu0
        %v837 = vadd.f32 %v748, %v836
        %838 = vmatprep.mubr.bf16.mxu0 0
        %839 = vmatmul.mubr.bf16.gmra.mrb[0].mxu0 %v794
        %v840 = vpop.f32.mrb[0].mxu0
        %v841 = vadd.f32 %v753, %v840
        %v842 = vpop.f32.mrb[0].mxu0
        %v843 = vadd.f32 %v753, %v842
        %v844 = vpop.f32.mrb[0].mxu0
        %v845 = vadd.f32 %v758, %v844
        %v846 = vpop.f32.mrb[0].mxu0
        %v847 = vadd.f32 %v758, %v846
        %848 = vdwg.mxu0
        %v849 = vld [vmem:[%s7] sm:$0xf]
        %v850 = vld [vmem:[%s7 + $0x4] sm:$0xf]
        %v851 = vld [vmem:[%s7 + $0x8] sm:$0xf]
        %v852 = vld [vmem:[%s7 + $0xc] sm:$0xf]
        %v853 = vld [vmem:[%s549] sm:$0xff]
        %v854 = vld [vmem:[%s549 + $0x8] sm:$0xff]
        %v855 = vld [vmem:[%s549 + $0x10] sm:$0xff]
        %v856 = vld [vmem:[%s549 + $0x18] sm:$0xff]
        %v857 = vld [vmem:[%s8] sm:$0xff]
        %v858 = vld [vmem:[%s8 + $0x8] sm:$0xff]
        %v859 = vld [vmem:[%s8 + $0x10] sm:$0xff]
        %v860 = vld [vmem:[%s8 + $0x18] sm:$0xff]
        %862 = vset.pattern.permute.xlu0 0
        %863 = vperm.xlu0 %862, %v857
        %v864 = vpop.permute.xlu0 %863
        %867 = vset.pattern.permute.xlu0 0
        %868 = vperm.xlu0 %867, %v858
        %v869 = vpop.permute.xlu0 %868
        %872 = vset.pattern.permute.xlu0 0
        %873 = vperm.xlu0 %872, %v859
        %v874 = vpop.permute.xlu0 %873
        %877 = vset.pattern.permute.xlu0 0
        %878 = vperm.xlu0 %877, %v860
        %v879 = vpop.permute.xlu0 %878
        %v885 = vunpack.c.l.b16 %v849
        %v886 = vunpack.c.l.b16 %v850
        %v887 = vunpack.c.l.b16 %v851
        %v888 = vunpack.c.l.b16 %v852
        %v889 = vpack.c.b16 %v886, %v885
        %v890 = vpack.c.b16 %v888, %v887
        %v895 = vunpack.c.l.b16 %v853
        %v896 = vunpack.c.h.b16 %v853
        %v897 = vunpack.c.l.b16 %v854
        %v898 = vunpack.c.h.b16 %v854
        %v899 = vunpack.c.l.b16 %v855
        %v900 = vunpack.c.h.b16 %v855
        %v901 = vunpack.c.l.b16 %v856
        %v902 = vunpack.c.h.b16 %v856
        %v903 = vpack.c.b16 %v897, %v895
        %v904 = vpack.c.b16 %v898, %v896
        %v905 = vpack.c.b16 %v901, %v899
        %v906 = vpack.c.b16 %v902, %v900
        %v912 = vsel %vm668, %v889, 0
        %v915 = vsel %vm668, %v890, 0
        %917 = vmatprep.subr.bf16.mxu0 %v904
        %918 = vmatpush1.bf16.msra.mxu0 %v903
        %919 = vmatprep.subr.bf16.mxu0 %v906
        %920 = vmatpush1.bf16.msra.mxu0 %v905
        %921 = vmatprep.subr.bf16.mxu0 0
        %922 = vmatpush1.bf16.msra.mxu0 0
        %923 = vmatprep.subr.bf16.mxu0 0
        %924 = vmatpush1.bf16.msra.mxu0 0
        %925 = vmatprep.subr.bf16.mxu0 0
        %926 = vmatpush1.bf16.msra.mxu0 0
        %927 = vmatprep.subr.bf16.mxu0 0
        %928 = vmatpush1.bf16.msra.mxu0 0
        %929 = vmatprep.subr.bf16.mxu0 0
        %930 = vmatpush1.bf16.msra.mxu0 0
        %931 = vmatprep.subr.bf16.mxu0 0
        %932 = vmatpush1.bf16.msra.mxu0 0
        %933 = vmatprep.subr.bf16.mxu0 0
        %934 = vmatpush1.bf16.msra.mxu0 0
        %935 = vmatprep.subr.bf16.mxu0 0
        %936 = vmatpush1.bf16.msra.mxu0 0
        %937 = vmatprep.subr.bf16.mxu0 0
        %938 = vmatpush1.bf16.msra.mxu0 0
        %939 = vmatprep.subr.bf16.mxu0 0
        %940 = vmatpush1.bf16.msra.mxu0 0
        %941 = vmatprep.subr.bf16.mxu0 0
        %942 = vmatpush1.bf16.msra.mxu0 0
        %943 = vmatprep.subr.bf16.mxu0 0
        %944 = vmatpush1.bf16.msra.mxu0 0
        %945 = vmatprep.subr.bf16.mxu0 0
        %946 = vmatpush1.bf16.msra.mxu0 0
        %947 = vmatprep.subr.bf16.mxu0 0
        %948 = vmatpush1.bf16.msra.mxu0 0
        %949 = vmatprep.mubr.bf16.mxu0 0
        %950 = vmatmul.mubr.bf16.gmra.mrb[0].mxu0 %v912
        %v951 = vpop.f32.mrb[0].mxu0
        %v952 = vadd.f32 %v864, %v951
        %v953 = vpop.f32.mrb[0].mxu0
        %v954 = vadd.f32 %v864, %v953
        %v955 = vpop.f32.mrb[0].mxu0
        %v956 = vadd.f32 %v869, %v955
        %v957 = vpop.f32.mrb[0].mxu0
        %v958 = vadd.f32 %v869, %v957
        %959 = vmatprep.mubr.bf16.mxu0 0
        %960 = vmatmul.mubr.bf16.gmra.mrb[0].mxu0 %v915
        %v961 = vpop.f32.mrb[0].mxu0
        %v962 = vadd.f32 %v874, %v961
        %v963 = vpop.f32.mrb[0].mxu0
        %v964 = vadd.f32 %v874, %v963
        %v965 = vpop.f32.mrb[0].mxu0
        %v966 = vadd.f32 %v879, %v965
        %v967 = vpop.f32.mrb[0].mxu0
        %v968 = vadd.f32 %v879, %v967
        %969 = vdwg.mxu0
        %970 = vxpose.xlu0.b32.start [1/16] %v710, 128
        %971 = vxpose.xlu0.b32.cont [2/16] 0.0, 128
        %972 = vxpose.xlu0.b32.cont [3/16] 0.0, 128
        %973 = vxpose.xlu0.b32.cont [4/16] 0.0, 128
        %974 = vxpose.xlu0.b32.cont [5/16] 0.0, 128
        %975 = vxpose.xlu0.b32.cont [6/16] 0.0, 128
        %976 = vxpose.xlu0.b32.cont [7/16] 0.0, 128
        %977 = vxpose.xlu0.b32.cont [8/16] 0.0, 128
        %978 = vxpose.xlu0.b32.cont [9/16] 0.0, 128
        %979 = vxpose.xlu0.b32.cont [10/16] 0.0, 128
        %980 = vxpose.xlu0.b32.cont [11/16] 0.0, 128
        %981 = vxpose.xlu0.b32.cont [12/16] 0.0, 128
        %982 = vxpose.xlu0.b32.cont [13/16] 0.0, 128
        %983 = vxpose.xlu0.b32.cont [14/16] 0.0, 128
        %984 = vxpose.xlu0.b32.cont [15/16] 0.0, 128
        %985 = vxpose.xlu0.b32.end [16/16] 0.0, 128
        %v986 = vpop.trf.xlu0
        %v987 = vpop.trf.xlu0
        %v988 = vpop.trf.xlu0
        %v989 = vpop.trf.xlu0
        %v990 = vpop.trf.xlu0
        %v991 = vpop.trf.xlu0
        %v992 = vpop.trf.xlu0
        %v993 = vpop.trf.xlu0
        %v994 = vpop.trf.xlu0
        %v995 = vpop.trf.xlu0
        %v996 = vpop.trf.xlu0
        %v997 = vpop.trf.xlu0
        %v998 = vpop.trf.xlu0
        %v999 = vpop.trf.xlu0
        %v1000 = vpop.trf.xlu0
        %v1001 = vpop.trf.xlu0
        %v1002 = vpack.c.bf16 %v987, %v986
        %v1003 = vpack.c.bf16 %v989, %v988
        %v1004 = vpack.c.bf16 %v991, %v990
        %v1005 = vpack.c.bf16 %v993, %v992
        %v1006 = vpack.c.bf16 %v995, %v994
        %v1007 = vpack.c.bf16 %v997, %v996
        %v1008 = vpack.c.bf16 %v999, %v998
        %v1009 = vpack.c.bf16 %v1001, %v1000
        %v1010 = vpack.c.bf16 %v831, %v831
        %1011 = vxpose.xlu0.b32.start [1/16] %v952, 128
        %1012 = vxpose.xlu0.b32.cont [2/16] 0.0, 128
        %1013 = vxpose.xlu0.b32.cont [3/16] 0.0, 128
        %1014 = vxpose.xlu0.b32.cont [4/16] 0.0, 128
        %1015 = vxpose.xlu0.b32.cont [5/16] 0.0, 128
        %1016 = vxpose.xlu0.b32.cont [6/16] 0.0, 128
        %1017 = vxpose.xlu0.b32.cont [7/16] 0.0, 128
        %1018 = vxpose.xlu0.b32.cont [8/16] 0.0, 128
        %1019 = vxpose.xlu0.b32.cont [9/16] 0.0, 128
        %1020 = vxpose.xlu0.b32.cont [10/16] 0.0, 128
        %1021 = vxpose.xlu0.b32.cont [11/16] 0.0, 128
        %1022 = vxpose.xlu0.b32.cont [12/16] 0.0, 128
        %1023 = vxpose.xlu0.b32.cont [13/16] 0.0, 128
        %1024 = vxpose.xlu0.b32.cont [14/16] 0.0, 128
        %1025 = vxpose.xlu0.b32.cont [15/16] 0.0, 128
        %1026 = vxpose.xlu0.b32.end [16/16] 0.0, 128
        %v1027 = vpop.trf.xlu0
        %v1028 = vpop.trf.xlu0
        %v1029 = vpop.trf.xlu0
        %v1030 = vpop.trf.xlu0
        %v1031 = vpop.trf.xlu0
        %v1032 = vpop.trf.xlu0
        %v1033 = vpop.trf.xlu0
        %v1034 = vpop.trf.xlu0
        %v1035 = vpop.trf.xlu0
        %v1036 = vpop.trf.xlu0
        %v1037 = vpop.trf.xlu0
        %v1038 = vpop.trf.xlu0
        %v1039 = vpop.trf.xlu0
        %v1040 = vpop.trf.xlu0
        %v1041 = vpop.trf.xlu0
        %v1042 = vpop.trf.xlu0
        %v1043 = vpack.c.bf16 %v1028, %v1027
        %v1044 = vpack.c.bf16 %v1030, %v1029
        %v1045 = vpack.c.bf16 %v1032, %v1031
        %v1046 = vpack.c.bf16 %v1034, %v1033
        %v1047 = vpack.c.bf16 %v1036, %v1035
        %v1048 = vpack.c.bf16 %v1038, %v1037
        %v1049 = vpack.c.bf16 %v1040, %v1039
        %v1050 = vpack.c.bf16 %v1042, %v1041
        %vm1051 = vcmask 64512
        %v1053 = vsel %vm1051, %v1002, 0
        %v1056 = vsel %vm1051, %v1003, 0
        %v1059 = vsel %vm1051, %v1004, 0
        %v1062 = vsel %vm1051, %v1005, 0
        %v1065 = vsel %vm1051, %v1006, 0
        %v1068 = vsel %vm1051, %v1007, 0
        %v1071 = vsel %vm1051, %v1008, 0
        %v1074 = vsel %vm1051, %v1009, 0
        %vm1076 = vcmask 1043456
        %v1078 = vsel %vm1076, %v1010, 0
        %1080 = vmatprep.subr.bf16.mxu0 0
        %1081 = vmatpush1.bf16.msra.mxu0 %v1078
        %1082 = vmatprep.subr.bf16.mxu0 0
        %1083 = vmatpush1.bf16.msra.mxu0 0
        %1084 = vmatprep.subr.bf16.mxu0 0
        %1085 = vmatpush1.bf16.msra.mxu0 0
        %1086 = vmatprep.subr.bf16.mxu0 0
        %1087 = vmatpush1.bf16.msra.mxu0 0
        %1088 = vmatprep.subr.bf16.mxu0 0
        %1089 = vmatpush1.bf16.msra.mxu0 0
        %1090 = vmatprep.subr.bf16.mxu0 0
        %1091 = vmatpush1.bf16.msra.mxu0 0
        %1092 = vmatprep.subr.bf16.mxu0 0
        %1093 = vmatpush1.bf16.msra.mxu0 0
        %1094 = vmatprep.subr.bf16.mxu0 0
        %1095 = vmatpush1.bf16.msra.mxu0 0
        %1096 = vmatprep.subr.bf16.mxu0 0
        %1097 = vmatpush1.bf16.msra.mxu0 0
        %1098 = vmatprep.subr.bf16.mxu0 0
        %1099 = vmatpush1.bf16.msra.mxu0 0
        %1100 = vmatprep.subr.bf16.mxu0 0
        %1101 = vmatpush1.bf16.msra.mxu0 0
        %1102 = vmatprep.subr.bf16.mxu0 0
        %1103 = vmatpush1.bf16.msra.mxu0 0
        %1104 = vmatprep.subr.bf16.mxu0 0
        %1105 = vmatpush1.bf16.msra.mxu0 0
        %1106 = vmatprep.subr.bf16.mxu0 0
        %1107 = vmatpush1.bf16.msra.mxu0 0
        %1108 = vmatprep.subr.bf16.mxu0 0
        %1109 = vmatpush1.bf16.msra.mxu0 0
        %1110 = vmatprep.subr.bf16.mxu0 0
        %1111 = vmatpush1.bf16.msra.mxu0 0
        %1112 = vmatprep.mubr.bf16.mxu0 0
        %1113 = vmatmul.mubr.bf16.gmra.mrb[0].mxu0 %v1053
        %v1114 = vpop.f32.mrb[0].mxu0
        %v1115 = vadd.f32 0.0, %v1114
        %v1116 = vpop.f32.mrb[0].mxu0
        %v1117 = vpop.f32.mrb[0].mxu0
        %v1118 = vadd.f32 0.0, %v1117
        %v1119 = vpop.f32.mrb[0].mxu0
        %1120 = vmatprep.mubr.bf16.mxu0 0
        %1121 = vmatmul.mubr.bf16.gmra.mrb[0].mxu0 %v1056
        %v1122 = vpop.f32.mrb[0].mxu0
        %v1123 = vadd.f32 0.0, %v1122
        %v1124 = vpop.f32.mrb[0].mxu0
        %v1125 = vpop.f32.mrb[0].mxu0
        %v1126 = vadd.f32 0.0, %v1125
        %v1127 = vpop.f32.mrb[0].mxu0
        %1128 = vmatprep.mubr.bf16.mxu0 0
        %1129 = vmatmul.mubr.bf16.gmra.mrb[0].mxu0 %v1059
        %v1130 = vpop.f32.mrb[0].mxu0
        %v1131 = vadd.f32 0.0, %v1130
        %v1132 = vpop.f32.mrb[0].mxu0
        %v1133 = vpop.f32.mrb[0].mxu0
        %v1134 = vadd.f32 0.0, %v1133
        %v1135 = vpop.f32.mrb[0].mxu0
        %1136 = vmatprep.mubr.bf16.mxu0 0
        %1137 = vmatmul.mubr.bf16.gmra.mrb[0].mxu0 %v1062
        %v1138 = vpop.f32.mrb[0].mxu0
        %v1139 = vadd.f32 0.0, %v1138
        %v1140 = vpop.f32.mrb[0].mxu0
        %v1141 = vpop.f32.mrb[0].mxu0
        %v1142 = vadd.f32 0.0, %v1141
        %v1143 = vpop.f32.mrb[0].mxu0
        %1144 = vmatprep.mubr.bf16.mxu0 0
        %1145 = vmatmul.mubr.bf16.gmra.mrb[0].mxu0 %v1065
        %v1146 = vpop.f32.mrb[0].mxu0
        %v1147 = vadd.f32 0.0, %v1146
        %v1148 = vpop.f32.mrb[0].mxu0
        %v1149 = vpop.f32.mrb[0].mxu0
        %v1150 = vadd.f32 0.0, %v1149
        %v1151 = vpop.f32.mrb[0].mxu0
        %1152 = vmatprep.mubr.bf16.mxu0 0
        %1153 = vmatmul.mubr.bf16.gmra.mrb[0].mxu0 %v1068
        %v1154 = vpop.f32.mrb[0].mxu0
        %v1155 = vadd.f32 0.0, %v1154
        %v1156 = vpop.f32.mrb[0].mxu0
        %v1157 = vpop.f32.mrb[0].mxu0
        %v1158 = vadd.f32 0.0, %v1157
        %v1159 = vpop.f32.mrb[0].mxu0
        %1160 = vmatprep.mubr.bf16.mxu0 0
        %1161 = vmatmul.mubr.bf16.gmra.mrb[0].mxu0 %v1071
        %v1162 = vpop.f32.mrb[0].mxu0
        %v1163 = vadd.f32 0.0, %v1162
        %v1164 = vpop.f32.mrb[0].mxu0
        %v1165 = vpop.f32.mrb[0].mxu0
        %v1166 = vadd.f32 0.0, %v1165
        %v1167 = vpop.f32.mrb[0].mxu0
        %1168 = vmatprep.mubr.bf16.mxu0 0
        %1169 = vmatmul.mubr.bf16.gmra.mrb[0].mxu0 %v1074
        %v1170 = vpop.f32.mrb[0].mxu0
        %v1171 = vadd.f32 0.0, %v1170
        %v1172 = vpop.f32.mrb[0].mxu0
        %v1173 = vpop.f32.mrb[0].mxu0
        %v1174 = vadd.f32 0.0, %v1173
        %v1175 = vpop.f32.mrb[0].mxu0
        %1176 = vdwg.mxu0
        %1177 = vmax.xlane.f32.xlu0 %v1115
        %v1178 = vpop.xlane.xlu0 %1177
        %1179 = vmax.xlane.f32.xlu0 %v1118
        %v1180 = vpop.xlane.xlu0 %1179
        %1181 = vmax.xlane.f32.xlu0 %v1123
        %v1182 = vpop.xlane.xlu0 %1181
        %1183 = vmax.xlane.f32.xlu0 %v1126
        %v1184 = vpop.xlane.xlu0 %1183
        %1185 = vmax.xlane.f32.xlu0 %v1131
        %v1186 = vpop.xlane.xlu0 %1185
        %1187 = vmax.xlane.f32.xlu0 %v1134
        %v1188 = vpop.xlane.xlu0 %1187
        %1189 = vmax.xlane.f32.xlu0 %v1139
        %v1190 = vpop.xlane.xlu0 %1189
        %1191 = vmax.xlane.f32.xlu0 %v1142
        %v1192 = vpop.xlane.xlu0 %1191
        %1193 = vmax.xlane.f32.xlu0 %v1147
        %v1194 = vpop.xlane.xlu0 %1193
        %1195 = vmax.xlane.f32.xlu0 %v1150
        %v1196 = vpop.xlane.xlu0 %1195
        %1197 = vmax.xlane.f32.xlu0 %v1155
        %v1198 = vpop.xlane.xlu0 %1197
        %1199 = vmax.xlane.f32.xlu0 %v1158
        %v1200 = vpop.xlane.xlu0 %1199
        %1201 = vmax.xlane.f32.xlu0 %v1163
        %v1202 = vpop.xlane.xlu0 %1201
        %1203 = vmax.xlane.f32.xlu0 %v1166
        %v1204 = vpop.xlane.xlu0 %1203
        %1205 = vmax.xlane.f32.xlu0 %v1171
        %v1206 = vpop.xlane.xlu0 %1205
        %1207 = vmax.xlane.f32.xlu0 %v1174
        %v1208 = vpop.xlane.xlu0 %1207
        %v1209 = vsub.f32 %v1115, %v1178
        %v1210 = vsub.f32 %v1118, %v1180
        %v1211 = vsub.f32 %v1123, %v1182
        %v1212 = vsub.f32 %v1126, %v1184
        %v1213 = vsub.f32 %v1131, %v1186
        %v1214 = vsub.f32 %v1134, %v1188
        %v1215 = vsub.f32 %v1139, %v1190
        %v1216 = vsub.f32 %v1142, %v1192
        %v1217 = vsub.f32 %v1147, %v1194
        %v1218 = vsub.f32 %v1150, %v1196
        %v1219 = vsub.f32 %v1155, %v1198
        %v1220 = vsub.f32 %v1158, %v1200
        %v1221 = vsub.f32 %v1163, %v1202
        %v1222 = vsub.f32 %v1166, %v1204
        %v1223 = vsub.f32 %v1171, %v1206
        %v1224 = vsub.f32 %v1174, %v1208
        %v1225 = vmul.f32 %v1209, 1.442695
        %v1226 = vpow.pop %v1225
        %v1227 = vmul.f32 %v1210, 1.442695
        %v1228 = vpow.pop %v1227
        %v1229 = vmul.f32 %v1211, 1.442695
        %v1230 = vpow.pop %v1229
        %v1231 = vmul.f32 %v1212, 1.442695
        %v1232 = vpow.pop %v1231
        %v1233 = vmul.f32 %v1213, 1.442695
        %v1234 = vpow.pop %v1233
        %v1235 = vmul.f32 %v1214, 1.442695
        %v1236 = vpow.pop %v1235
        %v1237 = vmul.f32 %v1215, 1.442695
        %v1238 = vpow.pop %v1237
        %v1239 = vmul.f32 %v1216, 1.442695
        %v1240 = vpow.pop %v1239
        %v1241 = vmul.f32 %v1217, 1.442695
        %v1242 = vpow.pop %v1241
        %v1243 = vmul.f32 %v1218, 1.442695
        %v1244 = vpow.pop %v1243
        %v1245 = vmul.f32 %v1219, 1.442695
        %v1246 = vpow.pop %v1245
        %v1247 = vmul.f32 %v1220, 1.442695
        %v1248 = vpow.pop %v1247
        %v1249 = vmul.f32 %v1221, 1.442695
        %v1250 = vpow.pop %v1249
        %v1251 = vmul.f32 %v1222, 1.442695
        %v1252 = vpow.pop %v1251
        %v1253 = vmul.f32 %v1223, 1.442695
        %v1254 = vpow.pop %v1253
        %v1255 = vmul.f32 %v1224, 1.442695
        %v1256 = vpow.pop %v1255
        %1257 = vadd.xlane.f32.xlu0 %v1226
        %v1258 = vpop.xlane.xlu0 %1257
        %1259 = vadd.xlane.f32.xlu0 %v1228
        %v1260 = vpop.xlane.xlu0 %1259
        %1261 = vadd.xlane.f32.xlu0 %v1230
        %v1262 = vpop.xlane.xlu0 %1261
        %1263 = vadd.xlane.f32.xlu0 %v1232
        %v1264 = vpop.xlane.xlu0 %1263
        %1265 = vadd.xlane.f32.xlu0 %v1234
        %v1266 = vpop.xlane.xlu0 %1265
        %1267 = vadd.xlane.f32.xlu0 %v1236
        %v1268 = vpop.xlane.xlu0 %1267
        %1269 = vadd.xlane.f32.xlu0 %v1238
        %v1270 = vpop.xlane.xlu0 %1269
        %1271 = vadd.xlane.f32.xlu0 %v1240
        %v1272 = vpop.xlane.xlu0 %1271
        %1273 = vadd.xlane.f32.xlu0 %v1242
        %v1274 = vpop.xlane.xlu0 %1273
        %1275 = vadd.xlane.f32.xlu0 %v1244
        %v1276 = vpop.xlane.xlu0 %1275
        %1277 = vadd.xlane.f32.xlu0 %v1246
        %v1278 = vpop.xlane.xlu0 %1277
        %1279 = vadd.xlane.f32.xlu0 %v1248
        %v1280 = vpop.xlane.xlu0 %1279
        %1281 = vadd.xlane.f32.xlu0 %v1250
        %v1282 = vpop.xlane.xlu0 %1281
        %1283 = vadd.xlane.f32.xlu0 %v1252
        %v1284 = vpop.xlane.xlu0 %1283
        %1285 = vadd.xlane.f32.xlu0 %v1254
        %v1286 = vpop.xlane.xlu0 %1285
        %1287 = vadd.xlane.f32.xlu0 %v1256
        %v1288 = vpop.xlane.xlu0 %1287
        %v1289 = vrcp.pop %v1258
        %v1290 = vrcp.pop %v1260
        %v1291 = vrcp.pop %v1262
        %v1292 = vrcp.pop %v1264
        %v1293 = vrcp.pop %v1266
        %v1294 = vrcp.pop %v1268
        %v1295 = vrcp.pop %v1270
        %v1296 = vrcp.pop %v1272
        %v1297 = vrcp.pop %v1274
        %v1298 = vrcp.pop %v1276
        %v1299 = vrcp.pop %v1278
        %v1300 = vrcp.pop %v1280
        %v1301 = vrcp.pop %v1282
        %v1302 = vrcp.pop %v1284
        %v1303 = vrcp.pop %v1286
        %v1304 = vrcp.pop %v1288
        %v1305 = vmul.f32 %v1226, %v1289
        %v1306 = vmul.f32 %v1228, %v1290
        %v1307 = vmul.f32 %v1230, %v1291
        %v1308 = vmul.f32 %v1232, %v1292
        %v1309 = vmul.f32 %v1234, %v1293
        %v1310 = vmul.f32 %v1236, %v1294
        %v1311 = vmul.f32 %v1238, %v1295
        %v1312 = vmul.f32 %v1240, %v1296
        %v1313 = vmul.f32 %v1242, %v1297
        %v1314 = vmul.f32 %v1244, %v1298
        %v1315 = vmul.f32 %v1246, %v1299
        %v1316 = vmul.f32 %v1248, %v1300
        %v1317 = vmul.f32 %v1250, %v1301
        %v1318 = vmul.f32 %v1252, %v1302
        %v1319 = vmul.f32 %v1254, %v1303
        %v1320 = vmul.f32 %v1256, %v1304
        %v1321 = vpack.c.bf16 %v1306, %v1305
        %v1322 = vpack.c.bf16 %v1308, %v1307
        %v1323 = vpack.c.bf16 %v1310, %v1309
        %v1324 = vpack.c.bf16 %v1312, %v1311
        %v1325 = vpack.c.bf16 %v1314, %v1313
        %v1326 = vpack.c.bf16 %v1316, %v1315
        %v1327 = vpack.c.bf16 %v1318, %v1317
        %v1328 = vpack.c.bf16 %v1320, %v1319
        %v1337 = vunpack.c.l.b16 %v1321
        %v1338 = vunpack.c.h.b16 %v1321
        %v1339 = vunpack.c.l.b16 %v1322
        %v1340 = vunpack.c.h.b16 %v1322
        %v1341 = vunpack.c.l.b16 %v1323
        %v1342 = vunpack.c.h.b16 %v1323
        %v1343 = vunpack.c.l.b16 %v1324
        %v1344 = vunpack.c.h.b16 %v1324
        %v1345 = vunpack.c.l.b16 %v1325
        %v1346 = vunpack.c.h.b16 %v1325
        %v1347 = vunpack.c.l.b16 %v1326
        %v1348 = vunpack.c.h.b16 %v1326
        %v1349 = vunpack.c.l.b16 %v1327
        %v1350 = vunpack.c.h.b16 %v1327
        %v1351 = vunpack.c.l.b16 %v1328
        %v1352 = vunpack.c.h.b16 %v1328
        %v1353 = vpack.c.b16 %v1337, %v1337
        %v1354 = vpack.c.b16 %v1338, %v1338
        %v1355 = vpack.c.b16 %v1339, %v1339
        %v1356 = vpack.c.b16 %v1340, %v1340
        %v1357 = vpack.c.b16 %v1341, %v1341
        %v1358 = vpack.c.b16 %v1342, %v1342
        %v1359 = vpack.c.b16 %v1343, %v1343
        %v1360 = vpack.c.b16 %v1344, %v1344
        %v1361 = vpack.c.b16 %v1345, %v1345
        %v1362 = vpack.c.b16 %v1346, %v1346
        %v1363 = vpack.c.b16 %v1347, %v1347
        %v1364 = vpack.c.b16 %v1348, %v1348
        %v1365 = vpack.c.b16 %v1349, %v1349
        %v1366 = vpack.c.b16 %v1350, %v1350
        %v1367 = vpack.c.b16 %v1351, %v1351
        %v1368 = vpack.c.b16 %v1352, %v1352
        %1385 = vst [vmem:[%s599] sm:$0xf] %v1353
        %1386 = vst [vmem:[%s599 + $0x4] sm:$0xf] %v1354
        %1387 = vst [vmem:[%s599 + $0x8] sm:$0xf] %v1355
        %1388 = vst [vmem:[%s599 + $0xc] sm:$0xf] %v1356
        %1389 = vst [vmem:[%s599 + $0x10] sm:$0xf] %v1357
        %1390 = vst [vmem:[%s599 + $0x14] sm:$0xf] %v1358
        %1391 = vst [vmem:[%s599 + $0x18] sm:$0xf] %v1359
        %1392 = vst [vmem:[%s599 + $0x1c] sm:$0xf] %v1360
        %1393 = vst [vmem:[%s599 + $0x20] sm:$0xf] %v1361
        %1394 = vst [vmem:[%s599 + $0x24] sm:$0xf] %v1362
        %1395 = vst [vmem:[%s599 + $0x28] sm:$0xf] %v1363
        %1396 = vst [vmem:[%s599 + $0x2c] sm:$0xf] %v1364
        %1397 = vst [vmem:[%s599 + $0x30] sm:$0xf] %v1365
        %1398 = vst [vmem:[%s599 + $0x34] sm:$0xf] %v1366
        %1399 = vst [vmem:[%s599 + $0x38] sm:$0xf] %v1367
        %1400 = vst [vmem:[%s599 + $0x3c] sm:$0xf] %v1368
        %1401 = vmatprep.subr.bf16.mxu0 0
        %1402 = vmatpush1.bf16.msra.mxu0 %v1043
        %1403 = vmatprep.subr.bf16.mxu0 0
        %1404 = vmatpush1.bf16.msra.mxu0 %v1044
        %1405 = vmatprep.subr.bf16.mxu0 0
        %1406 = vmatpush1.bf16.msra.mxu0 %v1045
        %1407 = vmatprep.subr.bf16.mxu0 0
        %1408 = vmatpush1.bf16.msra.mxu0 %v1046
        %1409 = vmatprep.subr.bf16.mxu0 0
        %1410 = vmatpush1.bf16.msra.mxu0 %v1047
        %1411 = vmatprep.subr.bf16.mxu0 0
        %1412 = vmatpush1.bf16.msra.mxu0 %v1048
        %1413 = vmatprep.subr.bf16.mxu0 0
        %1414 = vmatpush1.bf16.msra.mxu0 %v1049
        %1415 = vmatprep.subr.bf16.mxu0 0
        %1416 = vmatpush1.bf16.msra.mxu0 %v1050
        %1417 = vmatprep.subr.bf16.mxu0 0
        %1418 = vmatpush1.bf16.msra.mxu0 0
        %1419 = vmatprep.subr.bf16.mxu0 0
        %1420 = vmatpush1.bf16.msra.mxu0 0
        %1421 = vmatprep.subr.bf16.mxu0 0
        %1422 = vmatpush1.bf16.msra.mxu0 0
        %1423 = vmatprep.subr.bf16.mxu0 0
        %1424 = vmatpush1.bf16.msra.mxu0 0
        %1425 = vmatprep.subr.bf16.mxu0 0
        %1426 = vmatpush1.bf16.msra.mxu0 0
        %1427 = vmatprep.subr.bf16.mxu0 0
        %1428 = vmatpush1.bf16.msra.mxu0 0
        %1429 = vmatprep.subr.bf16.mxu0 0
        %1430 = vmatpush1.bf16.msra.mxu0 0
        %1431 = vmatprep.subr.bf16.mxu0 0
        %1432 = vmatpush1.bf16.msra.mxu0 0
        %1433 = vmatprep.mubr.bf16.mxu0 0
        %1434 = vmatmul.mubr.bf16.gmra.mrb[0].mxu0 %v1321
        %v1435 = vpop.f32.mrb[0].mxu0
        %v1436 = vadd.f32 0.0, %v1435
        %v1437 = vpop.f32.mrb[0].mxu0
        %v1438 = vpop.f32.mrb[0].mxu0
        %v1439 = vadd.f32 0.0, %v1438
        %v1440 = vpop.f32.mrb[0].mxu0
        %1441 = vmatprep.mubr.bf16.mxu0 0
        %1442 = vmatmul.mubr.bf16.gmra.mrb[0].mxu0 %v1322
        %v1443 = vpop.f32.mrb[0].mxu0
        %v1444 = vadd.f32 0.0, %v1443
        %v1445 = vpop.f32.mrb[0].mxu0
        %v1446 = vpop.f32.mrb[0].mxu0
        %v1447 = vadd.f32 0.0, %v1446
        %v1448 = vpop.f32.mrb[0].mxu0
        %1449 = vmatprep.mubr.bf16.mxu0 0
        %1450 = vmatmul.mubr.bf16.gmra.mrb[0].mxu0 %v1323
        %v1451 = vpop.f32.mrb[0].mxu0
        %v1452 = vadd.f32 0.0, %v1451
        %v1453 = vpop.f32.mrb[0].mxu0
        %v1454 = vpop.f32.mrb[0].mxu0
        %v1455 = vadd.f32 0.0, %v1454
        %v1456 = vpop.f32.mrb[0].mxu0
        %1457 = vmatprep.mubr.bf16.mxu0 0
        %1458 = vmatmul.mubr.bf16.gmra.mrb[0].mxu0 %v1324
        %v1459 = vpop.f32.mrb[0].mxu0
        %v1460 = vadd.f32 0.0, %v1459
        %v1461 = vpop.f32.mrb[0].mxu0
        %v1462 = vpop.f32.mrb[0].mxu0
        %v1463 = vadd.f32 0.0, %v1462
        %v1464 = vpop.f32.mrb[0].mxu0
        %1465 = vmatprep.mubr.bf16.mxu0 0
        %1466 = vmatmul.mubr.bf16.gmra.mrb[0].mxu0 %v1325
        %v1467 = vpop.f32.mrb[0].mxu0
        %v1468 = vadd.f32 0.0, %v1467
        %v1469 = vpop.f32.mrb[0].mxu0
        %v1470 = vpop.f32.mrb[0].mxu0
        %v1471 = vadd.f32 0.0, %v1470
        %v1472 = vpop.f32.mrb[0].mxu0
        %1473 = vmatprep.mubr.bf16.mxu0 0
        %1474 = vmatmul.mubr.bf16.gmra.mrb[0].mxu0 %v1326
        %v1475 = vpop.f32.mrb[0].mxu0
        %v1476 = vadd.f32 0.0, %v1475
        %v1477 = vpop.f32.mrb[0].mxu0
        %v1478 = vpop.f32.mrb[0].mxu0
        %v1479 = vadd.f32 0.0, %v1478
        %v1480 = vpop.f32.mrb[0].mxu0
        %1481 = vmatprep.mubr.bf16.mxu0 0
        %1482 = vmatmul.mubr.bf16.gmra.mrb[0].mxu0 %v1327
        %v1483 = vpop.f32.mrb[0].mxu0
        %v1484 = vadd.f32 0.0, %v1483
        %v1485 = vpop.f32.mrb[0].mxu0
        %v1486 = vpop.f32.mrb[0].mxu0
        %v1487 = vadd.f32 0.0, %v1486
        %v1488 = vpop.f32.mrb[0].mxu0
        %1489 = vmatprep.mubr.bf16.mxu0 0
        %1490 = vmatmul.mubr.bf16.gmra.mrb[0].mxu0 %v1328
        %v1491 = vpop.f32.mrb[0].mxu0
        %v1492 = vadd.f32 0.0, %v1491
        %v1493 = vpop.f32.mrb[0].mxu0
        %v1494 = vpop.f32.mrb[0].mxu0
        %v1495 = vadd.f32 0.0, %v1494
        %v1496 = vpop.f32.mrb[0].mxu0
        %1497 = vdwg.mxu0
        %1498 = vst.msk [vmem:[#allocation2] sm:$0xff] %vm1051, %v1436
        %1499 = vst.msk [vmem:[#allocation2 + $0x8] sm:$0xff] %vm1051, %v1439
        %1500 = vst.msk [vmem:[#allocation2 + $0x10] sm:$0xff] %vm1051, %v1444
        %1501 = vst.msk [vmem:[#allocation2 + $0x18] sm:$0xff] %vm1051, %v1447
        %1502 = vst.msk [vmem:[#allocation2 + $0x20] sm:$0xff] %vm1051, %v1452
        %1503 = vst.msk [vmem:[#allocation2 + $0x28] sm:$0xff] %vm1051, %v1455
        %1504 = vst.msk [vmem:[#allocation2 + $0x30] sm:$0xff] %vm1051, %v1460
        %1505 = vst.msk [vmem:[#allocation2 + $0x38] sm:$0xff] %vm1051, %v1463
        %1506 = vst.msk [vmem:[#allocation2 + $0x40] sm:$0xff] %vm1051, %v1468
        %1507 = vst.msk [vmem:[#allocation2 + $0x48] sm:$0xff] %vm1051, %v1471
        %1508 = vst.msk [vmem:[#allocation2 + $0x50] sm:$0xff] %vm1051, %v1476
        %1509 = vst.msk [vmem:[#allocation2 + $0x58] sm:$0xff] %vm1051, %v1479
        %1510 = vst.msk [vmem:[#allocation2 + $0x60] sm:$0xff] %vm1051, %v1484
        %1511 = vst.msk [vmem:[#allocation2 + $0x68] sm:$0xff] %vm1051, %v1487
        %1512 = vst.msk [vmem:[#allocation2 + $0x70] sm:$0xff] %vm1051, %v1492
        %1513 = vst.msk [vmem:[#allocation2 + $0x78] sm:$0xff] %vm1051, %v1495
        %1514 = vxpose.xlu0.b32.start [1/16] %v714, 128
        %1515 = vxpose.xlu0.b32.cont [2/16] 0.0, 128
        %1516 = vxpose.xlu0.b32.cont [3/16] 0.0, 128
        %1517 = vxpose.xlu0.b32.cont [4/16] 0.0, 128
        %1518 = vxpose.xlu0.b32.cont [5/16] 0.0, 128
        %1519 = vxpose.xlu0.b32.cont [6/16] 0.0, 128
        %1520 = vxpose.xlu0.b32.cont [7/16] 0.0, 128
        %1521 = vxpose.xlu0.b32.cont [8/16] 0.0, 128
        %1522 = vxpose.xlu0.b32.cont [9/16] 0.0, 128
        %1523 = vxpose.xlu0.b32.cont [10/16] 0.0, 128
        %1524 = vxpose.xlu0.b32.cont [11/16] 0.0, 128
        %1525 = vxpose.xlu0.b32.cont [12/16] 0.0, 128
        %1526 = vxpose.xlu0.b32.cont [13/16] 0.0, 128
        %1527 = vxpose.xlu0.b32.cont [14/16] 0.0, 128
        %1528 = vxpose.xlu0.b32.cont [15/16] 0.0, 128
        %1529 = vxpose.xlu0.b32.end [16/16] 0.0, 128
        %v1530 = vpop.trf.xlu0
        %v1531 = vpop.trf.xlu0
        %v1532 = vpop.trf.xlu0
        %v1533 = vpop.trf.xlu0
        %v1534 = vpop.trf.xlu0
        %v1535 = vpop.trf.xlu0
        %v1536 = vpop.trf.xlu0
        %v1537 = vpop.trf.xlu0
        %v1538 = vpop.trf.xlu0
        %v1539 = vpop.trf.xlu0
        %v1540 = vpop.trf.xlu0
        %v1541 = vpop.trf.xlu0
        %v1542 = vpop.trf.xlu0
        %v1543 = vpop.trf.xlu0
        %v1544 = vpop.trf.xlu0
        %v1545 = vpop.trf.xlu0
        %v1546 = vpack.c.bf16 %v1531, %v1530
        %v1547 = vpack.c.bf16 %v1533, %v1532
        %v1548 = vpack.c.bf16 %v1535, %v1534
        %v1549 = vpack.c.bf16 %v1537, %v1536
        %v1550 = vpack.c.bf16 %v1539, %v1538
        %v1551 = vpack.c.bf16 %v1541, %v1540
        %v1552 = vpack.c.bf16 %v1543, %v1542
        %v1553 = vpack.c.bf16 %v1545, %v1544
        %v1554 = vpack.c.bf16 %v835, %v835
        %1555 = vxpose.xlu0.b32.start [1/16] %v956, 128
        %1556 = vxpose.xlu0.b32.cont [2/16] 0.0, 128
        %1557 = vxpose.xlu0.b32.cont [3/16] 0.0, 128
        %1558 = vxpose.xlu0.b32.cont [4/16] 0.0, 128
        %1559 = vxpose.xlu0.b32.cont [5/16] 0.0, 128
        %1560 = vxpose.xlu0.b32.cont [6/16] 0.0, 128
        %1561 = vxpose.xlu0.b32.cont [7/16] 0.0, 128
        %1562 = vxpose.xlu0.b32.cont [8/16] 0.0, 128
        %1563 = vxpose.xlu0.b32.cont [9/16] 0.0, 128
        %1564 = vxpose.xlu0.b32.cont [10/16] 0.0, 128
        %1565 = vxpose.xlu0.b32.cont [11/16] 0.0, 128
        %1566 = vxpose.xlu0.b32.cont [12/16] 0.0, 128
        %1567 = vxpose.xlu0.b32.cont [13/16] 0.0, 128
        %1568 = vxpose.xlu0.b32.cont [14/16] 0.0, 128
        %1569 = vxpose.xlu0.b32.cont [15/16] 0.0, 128
        %1570 = vxpose.xlu0.b32.end [16/16] 0.0, 128
        %v1571 = vpop.trf.xlu0
        %v1572 = vpop.trf.xlu0
        %v1573 = vpop.trf.xlu0
        %v1574 = vpop.trf.xlu0
        %v1575 = vpop.trf.xlu0
        %v1576 = vpop.trf.xlu0
        %v1577 = vpop.trf.xlu0
        %v1578 = vpop.trf.xlu0
        %v1579 = vpop.trf.xlu0
        %v1580 = vpop.trf.xlu0
        %v1581 = vpop.trf.xlu0
        %v1582 = vpop.trf.xlu0
        %v1583 = vpop.trf.xlu0
        %v1584 = vpop.trf.xlu0
        %v1585 = vpop.trf.xlu0
        %v1586 = vpop.trf.xlu0
        %v1587 = vpack.c.bf16 %v1572, %v1571
        %v1588 = vpack.c.bf16 %v1574, %v1573
        %v1589 = vpack.c.bf16 %v1576, %v1575
        %v1590 = vpack.c.bf16 %v1578, %v1577
        %v1591 = vpack.c.bf16 %v1580, %v1579
        %v1592 = vpack.c.bf16 %v1582, %v1581
        %v1593 = vpack.c.bf16 %v1584, %v1583
        %v1594 = vpack.c.bf16 %v1586, %v1585
        %v1596 = vsel %vm1051, %v1546, 0
        %v1599 = vsel %vm1051, %v1547, 0
        %v1602 = vsel %vm1051, %v1548, 0
        %v1605 = vsel %vm1051, %v1549, 0
        %v1608 = vsel %vm1051, %v1550, 0
        %v1611 = vsel %vm1051, %v1551, 0
        %v1614 = vsel %vm1051, %v1552, 0
        %v1617 = vsel %vm1051, %v1553, 0
        %v1620 = vsel %vm1076, %v1554, 0
        %1622 = vmatprep.subr.bf16.mxu0 0
        %1623 = vmatpush1.bf16.msra.mxu0 %v1620
        %1624 = vmatprep.subr.bf16.mxu0 0
        %1625 = vmatpush1.bf16.msra.mxu0 0
        %1626 = vmatprep.subr.bf16.mxu0 0
        %1627 = vmatpush1.bf16.msra.mxu0 0
        %1628 = vmatprep.subr.bf16.mxu0 0
        %1629 = vmatpush1.bf16.msra.mxu0 0
        %1630 = vmatprep.subr.bf16.mxu0 0
        %1631 = vmatpush1.bf16.msra.mxu0 0
        %1632 = vmatprep.subr.bf16.mxu0 0
        %1633 = vmatpush1.bf16.msra.mxu0 0
        %1634 = vmatprep.subr.bf16.mxu0 0
        %1635 = vmatpush1.bf16.msra.mxu0 0
        %1636 = vmatprep.subr.bf16.mxu0 0
        %1637 = vmatpush1.bf16.msra.mxu0 0
        %1638 = vmatprep.subr.bf16.mxu0 0
        %1639 = vmatpush1.bf16.msra.mxu0 0
        %1640 = vmatprep.subr.bf16.mxu0 0
        %1641 = vmatpush1.bf16.msra.mxu0 0
        %1642 = vmatprep.subr.bf16.mxu0 0
        %1643 = vmatpush1.bf16.msra.mxu0 0
        %1644 = vmatprep.subr.bf16.mxu0 0
        %1645 = vmatpush1.bf16.msra.mxu0 0
        %1646 = vmatprep.subr.bf16.mxu0 0
        %1647 = vmatpush1.bf16.msra.mxu0 0
        %1648 = vmatprep.subr.bf16.mxu0 0
        %1649 = vmatpush1.bf16.msra.mxu0 0
        %1650 = vmatprep.subr.bf16.mxu0 0
        %1651 = vmatpush1.bf16.msra.mxu0 0
        %1652 = vmatprep.subr.bf16.mxu0 0
        %1653 = vmatpush1.bf16.msra.mxu0 0
        %1654 = vmatprep.mubr.bf16.mxu0 0
        %1655 = vmatmul.mubr.bf16.gmra.mrb[0].mxu0 %v1596
        %v1656 = vpop.f32.mrb[0].mxu0
        %v1657 = vadd.f32 0.0, %v1656
        %v1658 = vpop.f32.mrb[0].mxu0
        %v1659 = vpop.f32.mrb[0].mxu0
        %v1660 = vadd.f32 0.0, %v1659
        %v1661 = vpop.f32.mrb[0].mxu0
        %1662 = vmatprep.mubr.bf16.mxu0 0
        %1663 = vmatmul.mubr.bf16.gmra.mrb[0].mxu0 %v1599
        %v1664 = vpop.f32.mrb[0].mxu0
        %v1665 = vadd.f32 0.0, %v1664
        %v1666 = vpop.f32.mrb[0].mxu0
        %v1667 = vpop.f32.mrb[0].mxu0
        %v1668 = vadd.f32 0.0, %v1667
        %v1669 = vpop.f32.mrb[0].mxu0
        %1670 = vmatprep.mubr.bf16.mxu0 0
        %1671 = vmatmul.mubr.bf16.gmra.mrb[0].mxu0 %v1602
        %v1672 = vpop.f32.mrb[0].mxu0
        %v1673 = vadd.f32 0.0, %v1672
        %v1674 = vpop.f32.mrb[0].mxu0
        %v1675 = vpop.f32.mrb[0].mxu0
        %v1676 = vadd.f32 0.0, %v1675
        %v1677 = vpop.f32.mrb[0].mxu0
        %1678 = vmatprep.mubr.bf16.mxu0 0
        %1679 = vmatmul.mubr.bf16.gmra.mrb[0].mxu0 %v1605
        %v1680 = vpop.f32.mrb[0].mxu0
        %v1681 = vadd.f32 0.0, %v1680
        %v1682 = vpop.f32.mrb[0].mxu0
        %v1683 = vpop.f32.mrb[0].mxu0
        %v1684 = vadd.f32 0.0, %v1683
        %v1685 = vpop.f32.mrb[0].mxu0
        %1686 = vmatprep.mubr.bf16.mxu0 0
        %1687 = vmatmul.mubr.bf16.gmra.mrb[0].mxu0 %v1608
        %v1688 = vpop.f32.mrb[0].mxu0
        %v1689 = vadd.f32 0.0, %v1688
        %v1690 = vpop.f32.mrb[0].mxu0
        %v1691 = vpop.f32.mrb[0].mxu0
        %v1692 = vadd.f32 0.0, %v1691
        %v1693 = vpop.f32.mrb[0].mxu0
        %1694 = vmatprep.mubr.bf16.mxu0 0
        %1695 = vmatmul.mubr.bf16.gmra.mrb[0].mxu0 %v1611
        %v1696 = vpop.f32.mrb[0].mxu0
        %v1697 = vadd.f32 0.0, %v1696
        %v1698 = vpop.f32.mrb[0].mxu0
        %v1699 = vpop.f32.mrb[0].mxu0
        %v1700 = vadd.f32 0.0, %v1699
        %v1701 = vpop.f32.mrb[0].mxu0
        %1702 = vmatprep.mubr.bf16.mxu0 0
        %1703 = vmatmul.mubr.bf16.gmra.mrb[0].mxu0 %v1614
        %v1704 = vpop.f32.mrb[0].mxu0
        %v1705 = vadd.f32 0.0, %v1704
        %v1706 = vpop.f32.mrb[0].mxu0
        %v1707 = vpop.f32.mrb[0].mxu0
        %v1708 = vadd.f32 0.0, %v1707
        %v1709 = vpop.f32.mrb[0].mxu0
        %1710 = vmatprep.mubr.bf16.mxu0 0
        %1711 = vmatmul.mubr.bf16.gmra.mrb[0].mxu0 %v1617
        %v1712 = vpop.f32.mrb[0].mxu0
        %v1713 = vadd.f32 0.0, %v1712
        %v1714 = vpop.f32.mrb[0].mxu0
        %v1715 = vpop.f32.mrb[0].mxu0
        %v1716 = vadd.f32 0.0, %v1715
        %v1717 = vpop.f32.mrb[0].mxu0
        %1718 = vdwg.mxu0
        %1719 = vmax.xlane.f32.xlu0 %v1657
        %v1720 = vpop.xlane.xlu0 %1719
        %1721 = vmax.xlane.f32.xlu0 %v1660
        %v1722 = vpop.xlane.xlu0 %1721
        %1723 = vmax.xlane.f32.xlu0 %v1665
        %v1724 = vpop.xlane.xlu0 %1723
        %1725 = vmax.xlane.f32.xlu0 %v1668
        %v1726 = vpop.xlane.xlu0 %1725
        %1727 = vmax.xlane.f32.xlu0 %v1673
        %v1728 = vpop.xlane.xlu0 %1727
        %1729 = vmax.xlane.f32.xlu0 %v1676
        %v1730 = vpop.xlane.xlu0 %1729
        %1731 = vmax.xlane.f32.xlu0 %v1681
        %v1732 = vpop.xlane.xlu0 %1731
        %1733 = vmax.xlane.f32.xlu0 %v1684
        %v1734 = vpop.xlane.xlu0 %1733
        %1735 = vmax.xlane.f32.xlu0 %v1689
        %v1736 = vpop.xlane.xlu0 %1735
        %1737 = vmax.xlane.f32.xlu0 %v1692
        %v1738 = vpop.xlane.xlu0 %1737
        %1739 = vmax.xlane.f32.xlu0 %v1697
        %v1740 = vpop.xlane.xlu0 %1739
        %1741 = vmax.xlane.f32.xlu0 %v1700
        %v1742 = vpop.xlane.xlu0 %1741
        %1743 = vmax.xlane.f32.xlu0 %v1705
        %v1744 = vpop.xlane.xlu0 %1743
        %1745 = vmax.xlane.f32.xlu0 %v1708
        %v1746 = vpop.xlane.xlu0 %1745
        %1747 = vmax.xlane.f32.xlu0 %v1713
        %v1748 = vpop.xlane.xlu0 %1747
        %1749 = vmax.xlane.f32.xlu0 %v1716
        %v1750 = vpop.xlane.xlu0 %1749
        %v1751 = vsub.f32 %v1657, %v1720
        %v1752 = vsub.f32 %v1660, %v1722
        %v1753 = vsub.f32 %v1665, %v1724
        %v1754 = vsub.f32 %v1668, %v1726
        %v1755 = vsub.f32 %v1673, %v1728
        %v1756 = vsub.f32 %v1676, %v1730
        %v1757 = vsub.f32 %v1681, %v1732
        %v1758 = vsub.f32 %v1684, %v1734
        %v1759 = vsub.f32 %v1689, %v1736
        %v1760 = vsub.f32 %v1692, %v1738
        %v1761 = vsub.f32 %v1697, %v1740
        %v1762 = vsub.f32 %v1700, %v1742
        %v1763 = vsub.f32 %v1705, %v1744
        %v1764 = vsub.f32 %v1708, %v1746
        %v1765 = vsub.f32 %v1713, %v1748
        %v1766 = vsub.f32 %v1716, %v1750
        %v1767 = vmul.f32 %v1751, 1.442695
        %v1768 = vpow.pop %v1767
        %v1769 = vmul.f32 %v1752, 1.442695
        %v1770 = vpow.pop %v1769
        %v1771 = vmul.f32 %v1753, 1.442695
        %v1772 = vpow.pop %v1771
        %v1773 = vmul.f32 %v1754, 1.442695
        %v1774 = vpow.pop %v1773
        %v1775 = vmul.f32 %v1755, 1.442695
        %v1776 = vpow.pop %v1775
        %v1777 = vmul.f32 %v1756, 1.442695
        %v1778 = vpow.pop %v1777
        %v1779 = vmul.f32 %v1757, 1.442695
        %v1780 = vpow.pop %v1779
        %v1781 = vmul.f32 %v1758, 1.442695
        %v1782 = vpow.pop %v1781
        %v1783 = vmul.f32 %v1759, 1.442695
        %v1784 = vpow.pop %v1783
        %v1785 = vmul.f32 %v1760, 1.442695
        %v1786 = vpow.pop %v1785
        %v1787 = vmul.f32 %v1761, 1.442695
        %v1788 = vpow.pop %v1787
        %v1789 = vmul.f32 %v1762, 1.442695
        %v1790 = vpow.pop %v1789
        %v1791 = vmul.f32 %v1763, 1.442695
        %v1792 = vpow.pop %v1791
        %v1793 = vmul.f32 %v1764, 1.442695
        %v1794 = vpow.pop %v1793
        %v1795 = vmul.f32 %v1765, 1.442695
        %v1796 = vpow.pop %v1795
        %v1797 = vmul.f32 %v1766, 1.442695
        %v1798 = vpow.pop %v1797
        %1799 = vadd.xlane.f32.xlu0 %v1768
        %v1800 = vpop.xlane.xlu0 %1799
        %1801 = vadd.xlane.f32.xlu0 %v1770
        %v1802 = vpop.xlane.xlu0 %1801
        %1803 = vadd.xlane.f32.xlu0 %v1772
        %v1804 = vpop.xlane.xlu0 %1803
        %1805 = vadd.xlane.f32.xlu0 %v1774
        %v1806 = vpop.xlane.xlu0 %1805
        %1807 = vadd.xlane.f32.xlu0 %v1776
        %v1808 = vpop.xlane.xlu0 %1807
        %1809 = vadd.xlane.f32.xlu0 %v1778
        %v1810 = vpop.xlane.xlu0 %1809
        %1811 = vadd.xlane.f32.xlu0 %v1780
        %v1812 = vpop.xlane.xlu0 %1811
        %1813 = vadd.xlane.f32.xlu0 %v1782
        %v1814 = vpop.xlane.xlu0 %1813
        %1815 = vadd.xlane.f32.xlu0 %v1784
        %v1816 = vpop.xlane.xlu0 %1815
        %1817 = vadd.xlane.f32.xlu0 %v1786
        %v1818 = vpop.xlane.xlu0 %1817
        %1819 = vadd.xlane.f32.xlu0 %v1788
        %v1820 = vpop.xlane.xlu0 %1819
        %1821 = vadd.xlane.f32.xlu0 %v1790
        %v1822 = vpop.xlane.xlu0 %1821
        %1823 = vadd.xlane.f32.xlu0 %v1792
        %v1824 = vpop.xlane.xlu0 %1823
        %1825 = vadd.xlane.f32.xlu0 %v1794
        %v1826 = vpop.xlane.xlu0 %1825
        %1827 = vadd.xlane.f32.xlu0 %v1796
        %v1828 = vpop.xlane.xlu0 %1827
        %1829 = vadd.xlane.f32.xlu0 %v1798
        %v1830 = vpop.xlane.xlu0 %1829
        %v1831 = vrcp.pop %v1800
        %v1832 = vrcp.pop %v1802
        %v1833 = vrcp.pop %v1804
        %v1834 = vrcp.pop %v1806
        %v1835 = vrcp.pop %v1808
        %v1836 = vrcp.pop %v1810
        %v1837 = vrcp.pop %v1812
        %v1838 = vrcp.pop %v1814
        %v1839 = vrcp.pop %v1816
        %v1840 = vrcp.pop %v1818
        %v1841 = vrcp.pop %v1820
        %v1842 = vrcp.pop %v1822
        %v1843 = vrcp.pop %v1824
        %v1844 = vrcp.pop %v1826
        %v1845 = vrcp.pop %v1828
        %v1846 = vrcp.pop %v1830
        %v1847 = vmul.f32 %v1768, %v1831
        %v1848 = vmul.f32 %v1770, %v1832
        %v1849 = vmul.f32 %v1772, %v1833
        %v1850 = vmul.f32 %v1774, %v1834
        %v1851 = vmul.f32 %v1776, %v1835
        %v1852 = vmul.f32 %v1778, %v1836
        %v1853 = vmul.f32 %v1780, %v1837
        %v1854 = vmul.f32 %v1782, %v1838
        %v1855 = vmul.f32 %v1784, %v1839
        %v1856 = vmul.f32 %v1786, %v1840
        %v1857 = vmul.f32 %v1788, %v1841
        %v1858 = vmul.f32 %v1790, %v1842
        %v1859 = vmul.f32 %v1792, %v1843
        %v1860 = vmul.f32 %v1794, %v1844
        %v1861 = vmul.f32 %v1796, %v1845
        %v1862 = vmul.f32 %v1798, %v1846
        %v1863 = vpack.c.bf16 %v1848, %v1847
        %v1864 = vpack.c.bf16 %v1850, %v1849
        %v1865 = vpack.c.bf16 %v1852, %v1851
        %v1866 = vpack.c.bf16 %v1854, %v1853
        %v1867 = vpack.c.bf16 %v1856, %v1855
        %v1868 = vpack.c.bf16 %v1858, %v1857
        %v1869 = vpack.c.bf16 %v1860, %v1859
        %v1870 = vpack.c.bf16 %v1862, %v1861
        %v1879 = vunpack.c.l.b16 %v1863
        %v1880 = vunpack.c.h.b16 %v1863
        %v1881 = vunpack.c.l.b16 %v1864
        %v1882 = vunpack.c.h.b16 %v1864
        %v1883 = vunpack.c.l.b16 %v1865
        %v1884 = vunpack.c.h.b16 %v1865
        %v1885 = vunpack.c.l.b16 %v1866
        %v1886 = vunpack.c.h.b16 %v1866
        %v1887 = vunpack.c.l.b16 %v1867
        %v1888 = vunpack.c.h.b16 %v1867
        %v1889 = vunpack.c.l.b16 %v1868
        %v1890 = vunpack.c.h.b16 %v1868
        %v1891 = vunpack.c.l.b16 %v1869
        %v1892 = vunpack.c.h.b16 %v1869
        %v1893 = vunpack.c.l.b16 %v1870
        %v1894 = vunpack.c.h.b16 %v1870
        %v1895 = vpack.c.b16 %v1879, %v1879
        %v1896 = vpack.c.b16 %v1880, %v1880
        %v1897 = vpack.c.b16 %v1881, %v1881
        %v1898 = vpack.c.b16 %v1882, %v1882
        %v1899 = vpack.c.b16 %v1883, %v1883
        %v1900 = vpack.c.b16 %v1884, %v1884
        %v1901 = vpack.c.b16 %v1885, %v1885
        %v1902 = vpack.c.b16 %v1886, %v1886
        %v1903 = vpack.c.b16 %v1887, %v1887
        %v1904 = vpack.c.b16 %v1888, %v1888
        %v1905 = vpack.c.b16 %v1889, %v1889
        %v1906 = vpack.c.b16 %v1890, %v1890
        %v1907 = vpack.c.b16 %v1891, %v1891
        %v1908 = vpack.c.b16 %v1892, %v1892
        %v1909 = vpack.c.b16 %v1893, %v1893
        %v1910 = vpack.c.b16 %v1894, %v1894
        %s1927 = scalar_lea.vmem %s599, 64 [#allocation7]
        %1928 = vst [vmem:[%s1927] sm:$0xf] %v1895
        %1929 = vst [vmem:[%s1927 + $0x4] sm:$0xf] %v1896
        %1930 = vst [vmem:[%s1927 + $0x8] sm:$0xf] %v1897
        %1931 = vst [vmem:[%s1927 + $0xc] sm:$0xf] %v1898
        %1932 = vst [vmem:[%s1927 + $0x10] sm:$0xf] %v1899
        %1933 = vst [vmem:[%s1927 + $0x14] sm:$0xf] %v1900
        %1934 = vst [vmem:[%s1927 + $0x18] sm:$0xf] %v1901
        %1935 = vst [vmem:[%s1927 + $0x1c] sm:$0xf] %v1902
        %1936 = vst [vmem:[%s1927 + $0x20] sm:$0xf] %v1903
        %1937 = vst [vmem:[%s1927 + $0x24] sm:$0xf] %v1904
        %1938 = vst [vmem:[%s1927 + $0x28] sm:$0xf] %v1905
        %1939 = vst [vmem:[%s1927 + $0x2c] sm:$0xf] %v1906
        %1940 = vst [vmem:[%s1927 + $0x30] sm:$0xf] %v1907
        %1941 = vst [vmem:[%s1927 + $0x34] sm:$0xf] %v1908
        %1942 = vst [vmem:[%s1927 + $0x38] sm:$0xf] %v1909
        %1943 = vst [vmem:[%s1927 + $0x3c] sm:$0xf] %v1910
        %1944 = vmatprep.subr.bf16.mxu0 0
        %1945 = vmatpush1.bf16.msra.mxu0 %v1587
        %1946 = vmatprep.subr.bf16.mxu0 0
        %1947 = vmatpush1.bf16.msra.mxu0 %v1588
        %1948 = vmatprep.subr.bf16.mxu0 0
        %1949 = vmatpush1.bf16.msra.mxu0 %v1589
        %1950 = vmatprep.subr.bf16.mxu0 0
        %1951 = vmatpush1.bf16.msra.mxu0 %v1590
        %1952 = vmatprep.subr.bf16.mxu0 0
        %1953 = vmatpush1.bf16.msra.mxu0 %v1591
        %1954 = vmatprep.subr.bf16.mxu0 0
        %1955 = vmatpush1.bf16.msra.mxu0 %v1592
        %1956 = vmatprep.subr.bf16.mxu0 0
        %1957 = vmatpush1.bf16.msra.mxu0 %v1593
        %1958 = vmatprep.subr.bf16.mxu0 0
        %1959 = vmatpush1.bf16.msra.mxu0 %v1594
        %1960 = vmatprep.subr.bf16.mxu0 0
        %1961 = vmatpush1.bf16.msra.mxu0 0
        %1962 = vmatprep.subr.bf16.mxu0 0
        %1963 = vmatpush1.bf16.msra.mxu0 0
        %1964 = vmatprep.subr.bf16.mxu0 0
        %1965 = vmatpush1.bf16.msra.mxu0 0
        %1966 = vmatprep.subr.bf16.mxu0 0
        %1967 = vmatpush1.bf16.msra.mxu0 0
        %1968 = vmatprep.subr.bf16.mxu0 0
        %1969 = vmatpush1.bf16.msra.mxu0 0
        %1970 = vmatprep.subr.bf16.mxu0 0
        %1971 = vmatpush1.bf16.msra.mxu0 0
        %1972 = vmatprep.subr.bf16.mxu0 0
        %1973 = vmatpush1.bf16.msra.mxu0 0
        %1974 = vmatprep.subr.bf16.mxu0 0
        %1975 = vmatpush1.bf16.msra.mxu0 0
        %1976 = vmatprep.mubr.bf16.mxu0 0
        %1977 = vmatmul.mubr.bf16.gmra.mrb[0].mxu0 %v1863
        %v1978 = vpop.f32.mrb[0].mxu0
        %v1979 = vadd.f32 0.0, %v1978
        %v1980 = vpop.f32.mrb[0].mxu0
        %v1981 = vpop.f32.mrb[0].mxu0
        %v1982 = vadd.f32 0.0, %v1981
        %v1983 = vpop.f32.mrb[0].mxu0
        %1984 = vmatprep.mubr.bf16.mxu0 0
        %1985 = vmatmul.mubr.bf16.gmra.mrb[0].mxu0 %v1864
        %v1986 = vpop.f32.mrb[0].mxu0
        %v1987 = vadd.f32 0.0, %v1986
        %v1988 = vpop.f32.mrb[0].mxu0
        %v1989 = vpop.f32.mrb[0].mxu0
        %v1990 = vadd.f32 0.0, %v1989
        %v1991 = vpop.f32.mrb[0].mxu0
        %1992 = vmatprep.mubr.bf16.mxu0 0
        %1993 = vmatmul.mubr.bf16.gmra.mrb[0].mxu0 %v1865
        %v1994 = vpop.f32.mrb[0].mxu0
        %v1995 = vadd.f32 0.0, %v1994
        %v1996 = vpop.f32.mrb[0].mxu0
        %v1997 = vpop.f32.mrb[0].mxu0
        %v1998 = vadd.f32 0.0, %v1997
        %v1999 = vpop.f32.mrb[0].mxu0
        %2000 = vmatprep.mubr.bf16.mxu0 0
        %2001 = vmatmul.mubr.bf16.gmra.mrb[0].mxu0 %v1866
        %v2002 = vpop.f32.mrb[0].mxu0
        %v2003 = vadd.f32 0.0, %v2002
        %v2004 = vpop.f32.mrb[0].mxu0
        %v2005 = vpop.f32.mrb[0].mxu0
        %v2006 = vadd.f32 0.0, %v2005
        %v2007 = vpop.f32.mrb[0].mxu0
        %2008 = vmatprep.mubr.bf16.mxu0 0
        %2009 = vmatmul.mubr.bf16.gmra.mrb[0].mxu0 %v1867
        %v2010 = vpop.f32.mrb[0].mxu0
        %v2011 = vadd.f32 0.0, %v2010
        %v2012 = vpop.f32.mrb[0].mxu0
        %v2013 = vpop.f32.mrb[0].mxu0
        %v2014 = vadd.f32 0.0, %v2013
        %v2015 = vpop.f32.mrb[0].mxu0
        %2016 = vmatprep.mubr.bf16.mxu0 0
        %2017 = vmatmul.mubr.bf16.gmra.mrb[0].mxu0 %v1868
        %v2018 = vpop.f32.mrb[0].mxu0
        %v2019 = vadd.f32 0.0, %v2018
        %v2020 = vpop.f32.mrb[0].mxu0
        %v2021 = vpop.f32.mrb[0].mxu0
        %v2022 = vadd.f32 0.0, %v2021
        %v2023 = vpop.f32.mrb[0].mxu0
        %2024 = vmatprep.mubr.bf16.mxu0 0
        %2025 = vmatmul.mubr.bf16.gmra.mrb[0].mxu0 %v1869
        %v2026 = vpop.f32.mrb[0].mxu0
        %v2027 = vadd.f32 0.0, %v2026
        %v2028 = vpop.f32.mrb[0].mxu0
        %v2029 = vpop.f32.mrb[0].mxu0
        %v2030 = vadd.f32 0.0, %v2029
        %v2031 = vpop.f32.mrb[0].mxu0
        %2032 = vmatprep.mubr.bf16.mxu0 0
        %2033 = vmatmul.mubr.bf16.gmra.mrb[0].mxu0 %v1870
        %v2034 = vpop.f32.mrb[0].mxu0
        %v2035 = vadd.f32 0.0, %v2034
        %v2036 = vpop.f32.mrb[0].mxu0
        %v2037 = vpop.f32.mrb[0].mxu0
        %v2038 = vadd.f32 0.0, %v2037
        %v2039 = vpop.f32.mrb[0].mxu0
        %2040 = vdwg.mxu0
        %2057 = vrot.lane.b32.xlu0 %v1979, 8
        %v2058 = vpop.permute.xlu0 %2057
        %2059 = vrot.lane.b32.xlu0 %v1982, 8
        %v2060 = vpop.permute.xlu0 %2059
        %2061 = vrot.lane.b32.xlu0 %v1987, 8
        %v2062 = vpop.permute.xlu0 %2061
        %2063 = vrot.lane.b32.xlu0 %v1990, 8
        %v2064 = vpop.permute.xlu0 %2063
        %2065 = vrot.lane.b32.xlu0 %v1995, 8
        %v2066 = vpop.permute.xlu0 %2065
        %2067 = vrot.lane.b32.xlu0 %v1998, 8
        %v2068 = vpop.permute.xlu0 %2067
        %2069 = vrot.lane.b32.xlu0 %v2003, 8
        %v2070 = vpop.permute.xlu0 %2069
        %2071 = vrot.lane.b32.xlu0 %v2006, 8
        %v2072 = vpop.permute.xlu0 %2071
        %2073 = vrot.lane.b32.xlu0 %v2011, 8
        %v2074 = vpop.permute.xlu0 %2073
        %2075 = vrot.lane.b32.xlu0 %v2014, 8
        %v2076 = vpop.permute.xlu0 %2075
        %2077 = vrot.lane.b32.xlu0 %v2019, 8
        %v2078 = vpop.permute.xlu0 %2077
        %2079 = vrot.lane.b32.xlu0 %v2022, 8
        %v2080 = vpop.permute.xlu0 %2079
        %2081 = vrot.lane.b32.xlu0 %v2027, 8
        %v2082 = vpop.permute.xlu0 %2081
        %2083 = vrot.lane.b32.xlu0 %v2030, 8
        %v2084 = vpop.permute.xlu0 %2083
        %2085 = vrot.lane.b32.xlu0 %v2035, 8
        %v2086 = vpop.permute.xlu0 %2085
        %2087 = vrot.lane.b32.xlu0 %v2038, 8
        %v2088 = vpop.permute.xlu0 %2087
        %vm2105 = vcmask 130112
        %2106 = vst.msk [vmem:[#allocation2] sm:$0xff] %vm2105, %v2058
        %2107 = vst.msk [vmem:[#allocation2 + $0x8] sm:$0xff] %vm2105, %v2060
        %2108 = vst.msk [vmem:[#allocation2 + $0x10] sm:$0xff] %vm2105, %v2062
        %2109 = vst.msk [vmem:[#allocation2 + $0x18] sm:$0xff] %vm2105, %v2064
        %2110 = vst.msk [vmem:[#allocation2 + $0x20] sm:$0xff] %vm2105, %v2066
        %2111 = vst.msk [vmem:[#allocation2 + $0x28] sm:$0xff] %vm2105, %v2068
        %2112 = vst.msk [vmem:[#allocation2 + $0x30] sm:$0xff] %vm2105, %v2070
        %2113 = vst.msk [vmem:[#allocation2 + $0x38] sm:$0xff] %vm2105, %v2072
        %2114 = vst.msk [vmem:[#allocation2 + $0x40] sm:$0xff] %vm2105, %v2074
        %2115 = vst.msk [vmem:[#allocation2 + $0x48] sm:$0xff] %vm2105, %v2076
        %2116 = vst.msk [vmem:[#allocation2 + $0x50] sm:$0xff] %vm2105, %v2078
        %2117 = vst.msk [vmem:[#allocation2 + $0x58] sm:$0xff] %vm2105, %v2080
        %2118 = vst.msk [vmem:[#allocation2 + $0x60] sm:$0xff] %vm2105, %v2082
        %2119 = vst.msk [vmem:[#allocation2 + $0x68] sm:$0xff] %vm2105, %v2084
        %2120 = vst.msk [vmem:[#allocation2 + $0x70] sm:$0xff] %vm2105, %v2086
        %2121 = vst.msk [vmem:[#allocation2 + $0x78] sm:$0xff] %vm2105, %v2088
        %2122 = vxpose.xlu0.b32.start [1/16] %v720, 128
        %2123 = vxpose.xlu0.b32.cont [2/16] 0.0, 128
        %2124 = vxpose.xlu0.b32.cont [3/16] 0.0, 128
        %2125 = vxpose.xlu0.b32.cont [4/16] 0.0, 128
        %2126 = vxpose.xlu0.b32.cont [5/16] 0.0, 128
        %2127 = vxpose.xlu0.b32.cont [6/16] 0.0, 128
        %2128 = vxpose.xlu0.b32.cont [7/16] 0.0, 128
        %2129 = vxpose.xlu0.b32.cont [8/16] 0.0, 128
        %2130 = vxpose.xlu0.b32.cont [9/16] 0.0, 128
        %2131 = vxpose.xlu0.b32.cont [10/16] 0.0, 128
        %2132 = vxpose.xlu0.b32.cont [11/16] 0.0, 128
        %2133 = vxpose.xlu0.b32.cont [12/16] 0.0, 128
        %2134 = vxpose.xlu0.b32.cont [13/16] 0.0, 128
        %2135 = vxpose.xlu0.b32.cont [14/16] 0.0, 128
        %2136 = vxpose.xlu0.b32.cont [15/16] 0.0, 128
        %2137 = vxpose.xlu0.b32.end [16/16] 0.0, 128
        %v2138 = vpop.trf.xlu0
        %v2139 = vpop.trf.xlu0
        %v2140 = vpop.trf.xlu0
        %v2141 = vpop.trf.xlu0
        %v2142 = vpop.trf.xlu0
        %v2143 = vpop.trf.xlu0
        %v2144 = vpop.trf.xlu0
        %v2145 = vpop.trf.xlu0
        %v2146 = vpop.trf.xlu0
        %v2147 = vpop.trf.xlu0
        %v2148 = vpop.trf.xlu0
        %v2149 = vpop.trf.xlu0
        %v2150 = vpop.trf.xlu0
        %v2151 = vpop.trf.xlu0
        %v2152 = vpop.trf.xlu0
        %v2153 = vpop.trf.xlu0
        %v2154 = vpack.c.bf16 %v2139, %v2138
        %v2155 = vpack.c.bf16 %v2141, %v2140
        %v2156 = vpack.c.bf16 %v2143, %v2142
        %v2157 = vpack.c.bf16 %v2145, %v2144
        %v2158 = vpack.c.bf16 %v2147, %v2146
        %v2159 = vpack.c.bf16 %v2149, %v2148
        %v2160 = vpack.c.bf16 %v2151, %v2150
        %v2161 = vpack.c.bf16 %v2153, %v2152
        %v2162 = vpack.c.bf16 %v841, %v841
        %2163 = vxpose.xlu0.b32.start [1/16] %v962, 128
        %2164 = vxpose.xlu0.b32.cont [2/16] 0.0, 128
        %2165 = vxpose.xlu0.b32.cont [3/16] 0.0, 128
        %2166 = vxpose.xlu0.b32.cont [4/16] 0.0, 128
        %2167 = vxpose.xlu0.b32.cont [5/16] 0.0, 128
        %2168 = vxpose.xlu0.b32.cont [6/16] 0.0, 128
        %2169 = vxpose.xlu0.b32.cont [7/16] 0.0, 128
        %2170 = vxpose.xlu0.b32.cont [8/16] 0.0, 128
        %2171 = vxpose.xlu0.b32.cont [9/16] 0.0, 128
        %2172 = vxpose.xlu0.b32.cont [10/16] 0.0, 128
        %2173 = vxpose.xlu0.b32.cont [11/16] 0.0, 128
        %2174 = vxpose.xlu0.b32.cont [12/16] 0.0, 128
        %2175 = vxpose.xlu0.b32.cont [13/16] 0.0, 128
        %2176 = vxpose.xlu0.b32.cont [14/16] 0.0, 128
        %2177 = vxpose.xlu0.b32.cont [15/16] 0.0, 128
        %2178 = vxpose.xlu0.b32.end [16/16] 0.0, 128
        %v2179 = vpop.trf.xlu0
        %v2180 = vpop.trf.xlu0
        %v2181 = vpop.trf.xlu0
        %v2182 = vpop.trf.xlu0
        %v2183 = vpop.trf.xlu0
        %v2184 = vpop.trf.xlu0
        %v2185 = vpop.trf.xlu0
        %v2186 = vpop.trf.xlu0
        %v2187 = vpop.trf.xlu0
        %v2188 = vpop.trf.xlu0
        %v2189 = vpop.trf.xlu0
        %v2190 = vpop.trf.xlu0
        %v2191 = vpop.trf.xlu0
        %v2192 = vpop.trf.xlu0
        %v2193 = vpop.trf.xlu0
        %v2194 = vpop.trf.xlu0
        %v2195 = vpack.c.bf16 %v2180, %v2179
        %v2196 = vpack.c.bf16 %v2182, %v2181
        %v2197 = vpack.c.bf16 %v2184, %v2183
        %v2198 = vpack.c.bf16 %v2186, %v2185
        %v2199 = vpack.c.bf16 %v2188, %v2187
        %v2200 = vpack.c.bf16 %v2190, %v2189
        %v2201 = vpack.c.bf16 %v2192, %v2191
        %v2202 = vpack.c.bf16 %v2194, %v2193
        %v2204 = vsel %vm1051, %v2154, 0
        %v2207 = vsel %vm1051, %v2155, 0
        %v2210 = vsel %vm1051, %v2156, 0
        %v2213 = vsel %vm1051, %v2157, 0
        %v2216 = vsel %vm1051, %v2158, 0
        %v2219 = vsel %vm1051, %v2159, 0
        %v2222 = vsel %vm1051, %v2160, 0
        %v2225 = vsel %vm1051, %v2161, 0
        %v2228 = vsel %vm1076, %v2162, 0
        %2230 = vmatprep.subr.bf16.mxu0 0
        %2231 = vmatpush1.bf16.msra.mxu0 %v2228
        %2232 = vmatprep.subr.bf16.mxu0 0
        %2233 = vmatpush1.bf16.msra.mxu0 0
        %2234 = vmatprep.subr.bf16.mxu0 0
        %2235 = vmatpush1.bf16.msra.mxu0 0
        %2236 = vmatprep.subr.bf16.mxu0 0
        %2237 = vmatpush1.bf16.msra.mxu0 0
        %2238 = vmatprep.subr.bf16.mxu0 0
        %2239 = vmatpush1.bf16.msra.mxu0 0
        %2240 = vmatprep.subr.bf16.mxu0 0
        %2241 = vmatpush1.bf16.msra.mxu0 0
        %2242 = vmatprep.subr.bf16.mxu0 0
        %2243 = vmatpush1.bf16.msra.mxu0 0
        %2244 = vmatprep.subr.bf16.mxu0 0
        %2245 = vmatpush1.bf16.msra.mxu0 0
        %2246 = vmatprep.subr.bf16.mxu0 0
        %2247 = vmatpush1.bf16.msra.mxu0 0
        %2248 = vmatprep.subr.bf16.mxu0 0
        %2249 = vmatpush1.bf16.msra.mxu0 0
        %2250 = vmatprep.subr.bf16.mxu0 0
        %2251 = vmatpush1.bf16.msra.mxu0 0
        %2252 = vmatprep.subr.bf16.mxu0 0
        %2253 = vmatpush1.bf16.msra.mxu0 0
        %2254 = vmatprep.subr.bf16.mxu0 0
        %2255 = vmatpush1.bf16.msra.mxu0 0
        %2256 = vmatprep.subr.bf16.mxu0 0
        %2257 = vmatpush1.bf16.msra.mxu0 0
        %2258 = vmatprep.subr.bf16.mxu0 0
        %2259 = vmatpush1.bf16.msra.mxu0 0
        %2260 = vmatprep.subr.bf16.mxu0 0
        %2261 = vmatpush1.bf16.msra.mxu0 0
        %2262 = vmatprep.mubr.bf16.mxu0 0
        %2263 = vmatmul.mubr.bf16.gmra.mrb[0].mxu0 %v2204
        %v2264 = vpop.f32.mrb[0].mxu0
        %v2265 = vadd.f32 0.0, %v2264
        %v2266 = vpop.f32.mrb[0].mxu0
        %v2267 = vpop.f32.mrb[0].mxu0
        %v2268 = vadd.f32 0.0, %v2267
        %v2269 = vpop.f32.mrb[0].mxu0
        %2270 = vmatprep.mubr.bf16.mxu0 0
        %2271 = vmatmul.mubr.bf16.gmra.mrb[0].mxu0 %v2207
        %v2272 = vpop.f32.mrb[0].mxu0
        %v2273 = vadd.f32 0.0, %v2272
        %v2274 = vpop.f32.mrb[0].mxu0
        %v2275 = vpop.f32.mrb[0].mxu0
        %v2276 = vadd.f32 0.0, %v2275
        %v2277 = vpop.f32.mrb[0].mxu0
        %2278 = vmatprep.mubr.bf16.mxu0 0
        %2279 = vmatmul.mubr.bf16.gmra.mrb[0].mxu0 %v2210
        %v2280 = vpop.f32.mrb[0].mxu0
        %v2281 = vadd.f32 0.0, %v2280
        %v2282 = vpop.f32.mrb[0].mxu0
        %v2283 = vpop.f32.mrb[0].mxu0
        %v2284 = vadd.f32 0.0, %v2283
        %v2285 = vpop.f32.mrb[0].mxu0
        %2286 = vmatprep.mubr.bf16.mxu0 0
        %2287 = vmatmul.mubr.bf16.gmra.mrb[0].mxu0 %v2213
        %v2288 = vpop.f32.mrb[0].mxu0
        %v2289 = vadd.f32 0.0, %v2288
        %v2290 = vpop.f32.mrb[0].mxu0
        %v2291 = vpop.f32.mrb[0].mxu0
        %v2292 = vadd.f32 0.0, %v2291
        %v2293 = vpop.f32.mrb[0].mxu0
        %2294 = vmatprep.mubr.bf16.mxu0 0
        %2295 = vmatmul.mubr.bf16.gmra.mrb[0].mxu0 %v2216
        %v2296 = vpop.f32.mrb[0].mxu0
        %v2297 = vadd.f32 0.0, %v2296
        %v2298 = vpop.f32.mrb[0].mxu0
        %v2299 = vpop.f32.mrb[0].mxu0
        %v2300 = vadd.f32 0.0, %v2299
        %v2301 = vpop.f32.mrb[0].mxu0
        %2302 = vmatprep.mubr.bf16.mxu0 0
        %2303 = vmatmul.mubr.bf16.gmra.mrb[0].mxu0 %v2219
        %v2304 = vpop.f32.mrb[0].mxu0
        %v2305 = vadd.f32 0.0, %v2304
        %v2306 = vpop.f32.mrb[0].mxu0
        %v2307 = vpop.f32.mrb[0].mxu0
        %v2308 = vadd.f32 0.0, %v2307
        %v2309 = vpop.f32.mrb[0].mxu0
        %2310 = vmatprep.mubr.bf16.mxu0 0
        %2311 = vmatmul.mubr.bf16.gmra.mrb[0].mxu0 %v2222
        %v2312 = vpop.f32.mrb[0].mxu0
        %v2313 = vadd.f32 0.0, %v2312
        %v2314 = vpop.f32.mrb[0].mxu0
        %v2315 = vpop.f32.mrb[0].mxu0
        %v2316 = vadd.f32 0.0, %v2315
        %v2317 = vpop.f32.mrb[0].mxu0
        %2318 = vmatprep.mubr.bf16.mxu0 0
        %2319 = vmatmul.mubr.bf16.gmra.mrb[0].mxu0 %v2225
        %v2320 = vpop.f32.mrb[0].mxu0
        %v2321 = vadd.f32 0.0, %v2320
        %v2322 = vpop.f32.mrb[0].mxu0
        %v2323 = vpop.f32.mrb[0].mxu0
        %v2324 = vadd.f32 0.0, %v2323
        %v2325 = vpop.f32.mrb[0].mxu0
        %2326 = vdwg.mxu0
        %2327 = vmax.xlane.f32.xlu0 %v2265
        %v2328 = vpop.xlane.xlu0 %2327
        %2329 = vmax.xlane.f32.xlu0 %v2268
        %v2330 = vpop.xlane.xlu0 %2329
        %2331 = vmax.xlane.f32.xlu0 %v2273
        %v2332 = vpop.xlane.xlu0 %2331
        %2333 = vmax.xlane.f32.xlu0 %v2276
        %v2334 = vpop.xlane.xlu0 %2333
        %2335 = vmax.xlane.f32.xlu0 %v2281
        %v2336 = vpop.xlane.xlu0 %2335
        %2337 = vmax.xlane.f32.xlu0 %v2284
        %v2338 = vpop.xlane.xlu0 %2337
        %2339 = vmax.xlane.f32.xlu0 %v2289
        %v2340 = vpop.xlane.xlu0 %2339
        %2341 = vmax.xlane.f32.xlu0 %v2292
        %v2342 = vpop.xlane.xlu0 %2341
        %2343 = vmax.xlane.f32.xlu0 %v2297
        %v2344 = vpop.xlane.xlu0 %2343
        %2345 = vmax.xlane.f32.xlu0 %v2300
        %v2346 = vpop.xlane.xlu0 %2345
        %2347 = vmax.xlane.f32.xlu0 %v2305
        %v2348 = vpop.xlane.xlu0 %2347
        %2349 = vmax.xlane.f32.xlu0 %v2308
        %v2350 = vpop.xlane.xlu0 %2349
        %2351 = vmax.xlane.f32.xlu0 %v2313
        %v2352 = vpop.xlane.xlu0 %2351
        %2353 = vmax.xlane.f32.xlu0 %v2316
        %v2354 = vpop.xlane.xlu0 %2353
        %2355 = vmax.xlane.f32.xlu0 %v2321
        %v2356 = vpop.xlane.xlu0 %2355
        %2357 = vmax.xlane.f32.xlu0 %v2324
        %v2358 = vpop.xlane.xlu0 %2357
        %v2359 = vsub.f32 %v2265, %v2328
        %v2360 = vsub.f32 %v2268, %v2330
        %v2361 = vsub.f32 %v2273, %v2332
        %v2362 = vsub.f32 %v2276, %v2334
        %v2363 = vsub.f32 %v2281, %v2336
        %v2364 = vsub.f32 %v2284, %v2338
        %v2365 = vsub.f32 %v2289, %v2340
        %v2366 = vsub.f32 %v2292, %v2342
        %v2367 = vsub.f32 %v2297, %v2344
        %v2368 = vsub.f32 %v2300, %v2346
        %v2369 = vsub.f32 %v2305, %v2348
        %v2370 = vsub.f32 %v2308, %v2350
        %v2371 = vsub.f32 %v2313, %v2352
        %v2372 = vsub.f32 %v2316, %v2354
        %v2373 = vsub.f32 %v2321, %v2356
        %v2374 = vsub.f32 %v2324, %v2358
        %v2375 = vmul.f32 %v2359, 1.442695
        %v2376 = vpow.pop %v2375
        %v2377 = vmul.f32 %v2360, 1.442695
        %v2378 = vpow.pop %v2377
        %v2379 = vmul.f32 %v2361, 1.442695
        %v2380 = vpow.pop %v2379
        %v2381 = vmul.f32 %v2362, 1.442695
        %v2382 = vpow.pop %v2381
        %v2383 = vmul.f32 %v2363, 1.442695
        %v2384 = vpow.pop %v2383
        %v2385 = vmul.f32 %v2364, 1.442695
        %v2386 = vpow.pop %v2385
        %v2387 = vmul.f32 %v2365, 1.442695
        %v2388 = vpow.pop %v2387
        %v2389 = vmul.f32 %v2366, 1.442695
        %v2390 = vpow.pop %v2389
        %v2391 = vmul.f32 %v2367, 1.442695
        %v2392 = vpow.pop %v2391
        %v2393 = vmul.f32 %v2368, 1.442695
        %v2394 = vpow.pop %v2393
        %v2395 = vmul.f32 %v2369, 1.442695
        %v2396 = vpow.pop %v2395
        %v2397 = vmul.f32 %v2370, 1.442695
        %v2398 = vpow.pop %v2397
        %v2399 = vmul.f32 %v2371, 1.442695
        %v2400 = vpow.pop %v2399
        %v2401 = vmul.f32 %v2372, 1.442695
        %v2402 = vpow.pop %v2401
        %v2403 = vmul.f32 %v2373, 1.442695
        %v2404 = vpow.pop %v2403
        %v2405 = vmul.f32 %v2374, 1.442695
        %v2406 = vpow.pop %v2405
        %2407 = vadd.xlane.f32.xlu0 %v2376
        %v2408 = vpop.xlane.xlu0 %2407
        %2409 = vadd.xlane.f32.xlu0 %v2378
        %v2410 = vpop.xlane.xlu0 %2409
        %2411 = vadd.xlane.f32.xlu0 %v2380
        %v2412 = vpop.xlane.xlu0 %2411
        %2413 = vadd.xlane.f32.xlu0 %v2382
        %v2414 = vpop.xlane.xlu0 %2413
        %2415 = vadd.xlane.f32.xlu0 %v2384
        %v2416 = vpop.xlane.xlu0 %2415
        %2417 = vadd.xlane.f32.xlu0 %v2386
        %v2418 = vpop.xlane.xlu0 %2417
        %2419 = vadd.xlane.f32.xlu0 %v2388
        %v2420 = vpop.xlane.xlu0 %2419
        %2421 = vadd.xlane.f32.xlu0 %v2390
        %v2422 = vpop.xlane.xlu0 %2421
        %2423 = vadd.xlane.f32.xlu0 %v2392
        %v2424 = vpop.xlane.xlu0 %2423
        %2425 = vadd.xlane.f32.xlu0 %v2394
        %v2426 = vpop.xlane.xlu0 %2425
        %2427 = vadd.xlane.f32.xlu0 %v2396
        %v2428 = vpop.xlane.xlu0 %2427
        %2429 = vadd.xlane.f32.xlu0 %v2398
        %v2430 = vpop.xlane.xlu0 %2429
        %2431 = vadd.xlane.f32.xlu0 %v2400
        %v2432 = vpop.xlane.xlu0 %2431
        %2433 = vadd.xlane.f32.xlu0 %v2402
        %v2434 = vpop.xlane.xlu0 %2433
        %2435 = vadd.xlane.f32.xlu0 %v2404
        %v2436 = vpop.xlane.xlu0 %2435
        %2437 = vadd.xlane.f32.xlu0 %v2406
        %v2438 = vpop.xlane.xlu0 %2437
        %v2439 = vrcp.pop %v2408
        %v2440 = vrcp.pop %v2410
        %v2441 = vrcp.pop %v2412
        %v2442 = vrcp.pop %v2414
        %v2443 = vrcp.pop %v2416
        %v2444 = vrcp.pop %v2418
        %v2445 = vrcp.pop %v2420
        %v2446 = vrcp.pop %v2422
        %v2447 = vrcp.pop %v2424
        %v2448 = vrcp.pop %v2426
        %v2449 = vrcp.pop %v2428
        %v2450 = vrcp.pop %v2430
        %v2451 = vrcp.pop %v2432
        %v2452 = vrcp.pop %v2434
        %v2453 = vrcp.pop %v2436
        %v2454 = vrcp.pop %v2438
        %v2455 = vmul.f32 %v2376, %v2439
        %v2456 = vmul.f32 %v2378, %v2440
        %v2457 = vmul.f32 %v2380, %v2441
        %v2458 = vmul.f32 %v2382, %v2442
        %v2459 = vmul.f32 %v2384, %v2443
        %v2460 = vmul.f32 %v2386, %v2444
        %v2461 = vmul.f32 %v2388, %v2445
        %v2462 = vmul.f32 %v2390, %v2446
        %v2463 = vmul.f32 %v2392, %v2447
        %v2464 = vmul.f32 %v2394, %v2448
        %v2465 = vmul.f32 %v2396, %v2449
        %v2466 = vmul.f32 %v2398, %v2450
        %v2467 = vmul.f32 %v2400, %v2451
        %v2468 = vmul.f32 %v2402, %v2452
        %v2469 = vmul.f32 %v2404, %v2453
        %v2470 = vmul.f32 %v2406, %v2454
        %v2471 = vpack.c.bf16 %v2456, %v2455
        %v2472 = vpack.c.bf16 %v2458, %v2457
        %v2473 = vpack.c.bf16 %v2460, %v2459
        %v2474 = vpack.c.bf16 %v2462, %v2461
        %v2475 = vpack.c.bf16 %v2464, %v2463
        %v2476 = vpack.c.bf16 %v2466, %v2465
        %v2477 = vpack.c.bf16 %v2468, %v2467
        %v2478 = vpack.c.bf16 %v2470, %v2469
        %v2487 = vunpack.c.l.b16 %v2471
        %v2488 = vunpack.c.h.b16 %v2471
        %v2489 = vunpack.c.l.b16 %v2472
        %v2490 = vunpack.c.h.b16 %v2472
        %v2491 = vunpack.c.l.b16 %v2473
        %v2492 = vunpack.c.h.b16 %v2473
        %v2493 = vunpack.c.l.b16 %v2474
        %v2494 = vunpack.c.h.b16 %v2474
        %v2495 = vunpack.c.l.b16 %v2475
        %v2496 = vunpack.c.h.b16 %v2475
        %v2497 = vunpack.c.l.b16 %v2476
        %v2498 = vunpack.c.h.b16 %v2476
        %v2499 = vunpack.c.l.b16 %v2477
        %v2500 = vunpack.c.h.b16 %v2477
        %v2501 = vunpack.c.l.b16 %v2478
        %v2502 = vunpack.c.h.b16 %v2478
        %v2503 = vpack.c.b16 %v2487, %v2487
        %v2504 = vpack.c.b16 %v2488, %v2488
        %v2505 = vpack.c.b16 %v2489, %v2489
        %v2506 = vpack.c.b16 %v2490, %v2490
        %v2507 = vpack.c.b16 %v2491, %v2491
        %v2508 = vpack.c.b16 %v2492, %v2492
        %v2509 = vpack.c.b16 %v2493, %v2493
        %v2510 = vpack.c.b16 %v2494, %v2494
        %v2511 = vpack.c.b16 %v2495, %v2495
        %v2512 = vpack.c.b16 %v2496, %v2496
        %v2513 = vpack.c.b16 %v2497, %v2497
        %v2514 = vpack.c.b16 %v2498, %v2498
        %v2515 = vpack.c.b16 %v2499, %v2499
        %v2516 = vpack.c.b16 %v2500, %v2500
        %v2517 = vpack.c.b16 %v2501, %v2501
        %v2518 = vpack.c.b16 %v2502, %v2502
        %s2535 = scalar_lea.vmem %s599, 128 [#allocation7]
        %2536 = vst [vmem:[%s2535] sm:$0xf] %v2503
        %2537 = vst [vmem:[%s2535 + $0x4] sm:$0xf] %v2504
        %2538 = vst [vmem:[%s2535 + $0x8] sm:$0xf] %v2505
        %2539 = vst [vmem:[%s2535 + $0xc] sm:$0xf] %v2506
        %2540 = vst [vmem:[%s2535 + $0x10] sm:$0xf] %v2507
        %2541 = vst [vmem:[%s2535 + $0x14] sm:$0xf] %v2508
        %2542 = vst [vmem:[%s2535 + $0x18] sm:$0xf] %v2509
        %2543 = vst [vmem:[%s2535 + $0x1c] sm:$0xf] %v2510
        %2544 = vst [vmem:[%s2535 + $0x20] sm:$0xf] %v2511
        %2545 = vst [vmem:[%s2535 + $0x24] sm:$0xf] %v2512
        %2546 = vst [vmem:[%s2535 + $0x28] sm:$0xf] %v2513
        %2547 = vst [vmem:[%s2535 + $0x2c] sm:$0xf] %v2514
        %2548 = vst [vmem:[%s2535 + $0x30] sm:$0xf] %v2515
        %2549 = vst [vmem:[%s2535 + $0x34] sm:$0xf] %v2516
        %2550 = vst [vmem:[%s2535 + $0x38] sm:$0xf] %v2517
        %2551 = vst [vmem:[%s2535 + $0x3c] sm:$0xf] %v2518
        %2552 = vmatprep.subr.bf16.mxu0 0
        %2553 = vmatpush1.bf16.msra.mxu0 %v2195
        %2554 = vmatprep.subr.bf16.mxu0 0
        %2555 = vmatpush1.bf16.msra.mxu0 %v2196
        %2556 = vmatprep.subr.bf16.mxu0 0
        %2557 = vmatpush1.bf16.msra.mxu0 %v2197
        %2558 = vmatprep.subr.bf16.mxu0 0
        %2559 = vmatpush1.bf16.msra.mxu0 %v2198
        %2560 = vmatprep.subr.bf16.mxu0 0
        %2561 = vmatpush1.bf16.msra.mxu0 %v2199
        %2562 = vmatprep.subr.bf16.mxu0 0
        %2563 = vmatpush1.bf16.msra.mxu0 %v2200
        %2564 = vmatprep.subr.bf16.mxu0 0
        %2565 = vmatpush1.bf16.msra.mxu0 %v2201
        %2566 = vmatprep.subr.bf16.mxu0 0
        %2567 = vmatpush1.bf16.msra.mxu0 %v2202
        %2568 = vmatprep.subr.bf16.mxu0 0
        %2569 = vmatpush1.bf16.msra.mxu0 0
        %2570 = vmatprep.subr.bf16.mxu0 0
        %2571 = vmatpush1.bf16.msra.mxu0 0
        %2572 = vmatprep.subr.bf16.mxu0 0
        %2573 = vmatpush1.bf16.msra.mxu0 0
        %2574 = vmatprep.subr.bf16.mxu0 0
        %2575 = vmatpush1.bf16.msra.mxu0 0
        %2576 = vmatprep.subr.bf16.mxu0 0
        %2577 = vmatpush1.bf16.msra.mxu0 0
        %2578 = vmatprep.subr.bf16.mxu0 0
        %2579 = vmatpush1.bf16.msra.mxu0 0
        %2580 = vmatprep.subr.bf16.mxu0 0
        %2581 = vmatpush1.bf16.msra.mxu0 0
        %2582 = vmatprep.subr.bf16.mxu0 0
        %2583 = vmatpush1.bf16.msra.mxu0 0
        %2584 = vmatprep.mubr.bf16.mxu0 0
        %2585 = vmatmul.mubr.bf16.gmra.mrb[0].mxu0 %v2471
        %v2586 = vpop.f32.mrb[0].mxu0
        %v2587 = vadd.f32 0.0, %v2586
        %v2588 = vpop.f32.mrb[0].mxu0
        %v2589 = vpop.f32.mrb[0].mxu0
        %v2590 = vadd.f32 0.0, %v2589
        %v2591 = vpop.f32.mrb[0].mxu0
        %2592 = vmatprep.mubr.bf16.mxu0 0
        %2593 = vmatmul.mubr.bf16.gmra.mrb[0].mxu0 %v2472
        %v2594 = vpop.f32.mrb[0].mxu0
        %v2595 = vadd.f32 0.0, %v2594
        %v2596 = vpop.f32.mrb[0].mxu0
        %v2597 = vpop.f32.mrb[0].mxu0
        %v2598 = vadd.f32 0.0, %v2597
        %v2599 = vpop.f32.mrb[0].mxu0
        %2600 = vmatprep.mubr.bf16.mxu0 0
        %2601 = vmatmul.mubr.bf16.gmra.mrb[0].mxu0 %v2473
        %v2602 = vpop.f32.mrb[0].mxu0
        %v2603 = vadd.f32 0.0, %v2602
        %v2604 = vpop.f32.mrb[0].mxu0
        %v2605 = vpop.f32.mrb[0].mxu0
        %v2606 = vadd.f32 0.0, %v2605
        %v2607 = vpop.f32.mrb[0].mxu0
        %2608 = vmatprep.mubr.bf16.mxu0 0
        %2609 = vmatmul.mubr.bf16.gmra.mrb[0].mxu0 %v2474
        %v2610 = vpop.f32.mrb[0].mxu0
        %v2611 = vadd.f32 0.0, %v2610
        %v2612 = vpop.f32.mrb[0].mxu0
        %v2613 = vpop.f32.mrb[0].mxu0
        %v2614 = vadd.f32 0.0, %v2613
        %v2615 = vpop.f32.mrb[0].mxu0
        %2616 = vmatprep.mubr.bf16.mxu0 0
        %2617 = vmatmul.mubr.bf16.gmra.mrb[0].mxu0 %v2475
        %v2618 = vpop.f32.mrb[0].mxu0
        %v2619 = vadd.f32 0.0, %v2618
        %v2620 = vpop.f32.mrb[0].mxu0
        %v2621 = vpop.f32.mrb[0].mxu0
        %v2622 = vadd.f32 0.0, %v2621
        %v2623 = vpop.f32.mrb[0].mxu0
        %2624 = vmatprep.mubr.bf16.mxu0 0
        %2625 = vmatmul.mubr.bf16.gmra.mrb[0].mxu0 %v2476
        %v2626 = vpop.f32.mrb[0].mxu0
        %v2627 = vadd.f32 0.0, %v2626
        %v2628 = vpop.f32.mrb[0].mxu0
        %v2629 = vpop.f32.mrb[0].mxu0
        %v2630 = vadd.f32 0.0, %v2629
        %v2631 = vpop.f32.mrb[0].mxu0
        %2632 = vmatprep.mubr.bf16.mxu0 0
        %2633 = vmatmul.mubr.bf16.gmra.mrb[0].mxu0 %v2477
        %v2634 = vpop.f32.mrb[0].mxu0
        %v2635 = vadd.f32 0.0, %v2634
        %v2636 = vpop.f32.mrb[0].mxu0
        %v2637 = vpop.f32.mrb[0].mxu0
        %v2638 = vadd.f32 0.0, %v2637
        %v2639 = vpop.f32.mrb[0].mxu0
        %2640 = vmatprep.mubr.bf16.mxu0 0
        %2641 = vmatmul.mubr.bf16.gmra.mrb[0].mxu0 %v2478
        %v2642 = vpop.f32.mrb[0].mxu0
        %v2643 = vadd.f32 0.0, %v2642
        %v2644 = vpop.f32.mrb[0].mxu0
        %v2645 = vpop.f32.mrb[0].mxu0
        %v2646 = vadd.f32 0.0, %v2645
        %v2647 = vpop.f32.mrb[0].mxu0
        %2648 = vdwg.mxu0
        %2665 = vrot.lane.b32.xlu0 %v2587, 16
        %v2666 = vpop.permute.xlu0 %2665
        %2667 = vrot.lane.b32.xlu0 %v2590, 16
        %v2668 = vpop.permute.xlu0 %2667
        %2669 = vrot.lane.b32.xlu0 %v2595, 16
        %v2670 = vpop.permute.xlu0 %2669
        %2671 = vrot.lane.b32.xlu0 %v2598, 16
        %v2672 = vpop.permute.xlu0 %2671
        %2673 = vrot.lane.b32.xlu0 %v2603, 16
        %v2674 = vpop.permute.xlu0 %2673
        %2675 = vrot.lane.b32.xlu0 %v2606, 16
        %v2676 = vpop.permute.xlu0 %2675
        %2677 = vrot.lane.b32.xlu0 %v2611, 16
        %v2678 = vpop.permute.xlu0 %2677
        %2679 = vrot.lane.b32.xlu0 %v2614, 16
        %v2680 = vpop.permute.xlu0 %2679
        %2681 = vrot.lane.b32.xlu0 %v2619, 16
        %v2682 = vpop.permute.xlu0 %2681
        %2683 = vrot.lane.b32.xlu0 %v2622, 16
        %v2684 = vpop.permute.xlu0 %2683
        %2685 = vrot.lane.b32.xlu0 %v2627, 16
        %v2686 = vpop.permute.xlu0 %2685
        %2687 = vrot.lane.b32.xlu0 %v2630, 16
        %v2688 = vpop.permute.xlu0 %2687
        %2689 = vrot.lane.b32.xlu0 %v2635, 16
        %v2690 = vpop.permute.xlu0 %2689
        %2691 = vrot.lane.b32.xlu0 %v2638, 16
        %v2692 = vpop.permute.xlu0 %2691
        %2693 = vrot.lane.b32.xlu0 %v2643, 16
        %v2694 = vpop.permute.xlu0 %2693
        %2695 = vrot.lane.b32.xlu0 %v2646, 16
        %v2696 = vpop.permute.xlu0 %2695
        %vm2713 = vcmask 195712
        %2714 = vst.msk [vmem:[#allocation2] sm:$0xff] %vm2713, %v2666
        %2715 = vst.msk [vmem:[#allocation2 + $0x8] sm:$0xff] %vm2713, %v2668
        %2716 = vst.msk [vmem:[#allocation2 + $0x10] sm:$0xff] %vm2713, %v2670
        %2717 = vst.msk [vmem:[#allocation2 + $0x18] sm:$0xff] %vm2713, %v2672
        %2718 = vst.msk [vmem:[#allocation2 + $0x20] sm:$0xff] %vm2713, %v2674
        %2719 = vst.msk [vmem:[#allocation2 + $0x28] sm:$0xff] %vm2713, %v2676
        %2720 = vst.msk [vmem:[#allocation2 + $0x30] sm:$0xff] %vm2713, %v2678
        %2721 = vst.msk [vmem:[#allocation2 + $0x38] sm:$0xff] %vm2713, %v2680
        %2722 = vst.msk [vmem:[#allocation2 + $0x40] sm:$0xff] %vm2713, %v2682
        %2723 = vst.msk [vmem:[#allocation2 + $0x48] sm:$0xff] %vm2713, %v2684
        %2724 = vst.msk [vmem:[#allocation2 + $0x50] sm:$0xff] %vm2713, %v2686
        %2725 = vst.msk [vmem:[#allocation2 + $0x58] sm:$0xff] %vm2713, %v2688
        %2726 = vst.msk [vmem:[#allocation2 + $0x60] sm:$0xff] %vm2713, %v2690
        %2727 = vst.msk [vmem:[#allocation2 + $0x68] sm:$0xff] %vm2713, %v2692
        %2728 = vst.msk [vmem:[#allocation2 + $0x70] sm:$0xff] %vm2713, %v2694
        %2729 = vst.msk [vmem:[#allocation2 + $0x78] sm:$0xff] %vm2713, %v2696
        %2730 = vxpose.xlu0.b32.start [1/16] %v724, 128
        %2731 = vxpose.xlu0.b32.cont [2/16] 0.0, 128
        %2732 = vxpose.xlu0.b32.cont [3/16] 0.0, 128
        %2733 = vxpose.xlu0.b32.cont [4/16] 0.0, 128
        %2734 = vxpose.xlu0.b32.cont [5/16] 0.0, 128
        %2735 = vxpose.xlu0.b32.cont [6/16] 0.0, 128
        %2736 = vxpose.xlu0.b32.cont [7/16] 0.0, 128
        %2737 = vxpose.xlu0.b32.cont [8/16] 0.0, 128
        %2738 = vxpose.xlu0.b32.cont [9/16] 0.0, 128
        %2739 = vxpose.xlu0.b32.cont [10/16] 0.0, 128
        %2740 = vxpose.xlu0.b32.cont [11/16] 0.0, 128
        %2741 = vxpose.xlu0.b32.cont [12/16] 0.0, 128
        %2742 = vxpose.xlu0.b32.cont [13/16] 0.0, 128
        %2743 = vxpose.xlu0.b32.cont [14/16] 0.0, 128
        %2744 = vxpose.xlu0.b32.cont [15/16] 0.0, 128
        %2745 = vxpose.xlu0.b32.end [16/16] 0.0, 128
        %v2746 = vpop.trf.xlu0
        %v2747 = vpop.trf.xlu0
        %v2748 = vpop.trf.xlu0
        %v2749 = vpop.trf.xlu0
        %v2750 = vpop.trf.xlu0
        %v2751 = vpop.trf.xlu0
        %v2752 = vpop.trf.xlu0
        %v2753 = vpop.trf.xlu0
        %v2754 = vpop.trf.xlu0
        %v2755 = vpop.trf.xlu0
        %v2756 = vpop.trf.xlu0
        %v2757 = vpop.trf.xlu0
        %v2758 = vpop.trf.xlu0
        %v2759 = vpop.trf.xlu0
        %v2760 = vpop.trf.xlu0
        %v2761 = vpop.trf.xlu0
        %v2762 = vpack.c.bf16 %v2747, %v2746
        %v2763 = vpack.c.bf16 %v2749, %v2748
        %v2764 = vpack.c.bf16 %v2751, %v2750
        %v2765 = vpack.c.bf16 %v2753, %v2752
        %v2766 = vpack.c.bf16 %v2755, %v2754
        %v2767 = vpack.c.bf16 %v2757, %v2756
        %v2768 = vpack.c.bf16 %v2759, %v2758
        %v2769 = vpack.c.bf16 %v2761, %v2760
        %v2770 = vpack.c.bf16 %v845, %v845
        %2771 = vxpose.xlu0.b32.start [1/16] %v966, 128
        %2772 = vxpose.xlu0.b32.cont [2/16] 0.0, 128
        %2773 = vxpose.xlu0.b32.cont [3/16] 0.0, 128
        %2774 = vxpose.xlu0.b32.cont [4/16] 0.0, 128
        %2775 = vxpose.xlu0.b32.cont [5/16] 0.0, 128
        %2776 = vxpose.xlu0.b32.cont [6/16] 0.0, 128
        %2777 = vxpose.xlu0.b32.cont [7/16] 0.0, 128
        %2778 = vxpose.xlu0.b32.cont [8/16] 0.0, 128
        %2779 = vxpose.xlu0.b32.cont [9/16] 0.0, 128
        %2780 = vxpose.xlu0.b32.cont [10/16] 0.0, 128
        %2781 = vxpose.xlu0.b32.cont [11/16] 0.0, 128
        %2782 = vxpose.xlu0.b32.cont [12/16] 0.0, 128
        %2783 = vxpose.xlu0.b32.cont [13/16] 0.0, 128
        %2784 = vxpose.xlu0.b32.cont [14/16] 0.0, 128
        %2785 = vxpose.xlu0.b32.cont [15/16] 0.0, 128
        %2786 = vxpose.xlu0.b32.end [16/16] 0.0, 128
        %v2787 = vpop.trf.xlu0
        %v2788 = vpop.trf.xlu0
        %v2789 = vpop.trf.xlu0
        %v2790 = vpop.trf.xlu0
        %v2791 = vpop.trf.xlu0
        %v2792 = vpop.trf.xlu0
        %v2793 = vpop.trf.xlu0
        %v2794 = vpop.trf.xlu0
        %v2795 = vpop.trf.xlu0
        %v2796 = vpop.trf.xlu0
        %v2797 = vpop.trf.xlu0
        %v2798 = vpop.trf.xlu0
        %v2799 = vpop.trf.xlu0
        %v2800 = vpop.trf.xlu0
        %v2801 = vpop.trf.xlu0
        %v2802 = vpop.trf.xlu0
        %v2803 = vpack.c.bf16 %v2788, %v2787
        %v2804 = vpack.c.bf16 %v2790, %v2789
        %v2805 = vpack.c.bf16 %v2792, %v2791
        %v2806 = vpack.c.bf16 %v2794, %v2793
        %v2807 = vpack.c.bf16 %v2796, %v2795
        %v2808 = vpack.c.bf16 %v2798, %v2797
        %v2809 = vpack.c.bf16 %v2800, %v2799
        %v2810 = vpack.c.bf16 %v2802, %v2801
        %v2812 = vsel %vm1051, %v2762, 0
        %v2815 = vsel %vm1051, %v2763, 0
        %v2818 = vsel %vm1051, %v2764, 0
        %v2821 = vsel %vm1051, %v2765, 0
        %v2824 = vsel %vm1051, %v2766, 0
        %v2827 = vsel %vm1051, %v2767, 0
        %v2830 = vsel %vm1051, %v2768, 0
        %v2833 = vsel %vm1051, %v2769, 0
        %v2836 = vsel %vm1076, %v2770, 0
        %2838 = vmatprep.subr.bf16.mxu0 0
        %2839 = vmatpush1.bf16.msra.mxu0 %v2836
        %2840 = vmatprep.subr.bf16.mxu0 0
        %2841 = vmatpush1.bf16.msra.mxu0 0
        %2842 = vmatprep.subr.bf16.mxu0 0
        %2843 = vmatpush1.bf16.msra.mxu0 0
        %2844 = vmatprep.subr.bf16.mxu0 0
        %2845 = vmatpush1.bf16.msra.mxu0 0
        %2846 = vmatprep.subr.bf16.mxu0 0
        %2847 = vmatpush1.bf16.msra.mxu0 0
        %2848 = vmatprep.subr.bf16.mxu0 0
        %2849 = vmatpush1.bf16.msra.mxu0 0
        %2850 = vmatprep.subr.bf16.mxu0 0
        %2851 = vmatpush1.bf16.msra.mxu0 0
        %2852 = vmatprep.subr.bf16.mxu0 0
        %2853 = vmatpush1.bf16.msra.mxu0 0
        %2854 = vmatprep.subr.bf16.mxu0 0
        %2855 = vmatpush1.bf16.msra.mxu0 0
        %2856 = vmatprep.subr.bf16.mxu0 0
        %2857 = vmatpush1.bf16.msra.mxu0 0
        %2858 = vmatprep.subr.bf16.mxu0 0
        %2859 = vmatpush1.bf16.msra.mxu0 0
        %2860 = vmatprep.subr.bf16.mxu0 0
        %2861 = vmatpush1.bf16.msra.mxu0 0
        %2862 = vmatprep.subr.bf16.mxu0 0
        %2863 = vmatpush1.bf16.msra.mxu0 0
        %2864 = vmatprep.subr.bf16.mxu0 0
        %2865 = vmatpush1.bf16.msra.mxu0 0
        %2866 = vmatprep.subr.bf16.mxu0 0
        %2867 = vmatpush1.bf16.msra.mxu0 0
        %2868 = vmatprep.subr.bf16.mxu0 0
        %2869 = vmatpush1.bf16.msra.mxu0 0
        %2870 = vmatprep.mubr.bf16.mxu0 0
        %2871 = vmatmul.mubr.bf16.gmra.mrb[0].mxu0 %v2812
        %v2872 = vpop.f32.mrb[0].mxu0
        %v2873 = vadd.f32 0.0, %v2872
        %v2874 = vpop.f32.mrb[0].mxu0
        %v2875 = vpop.f32.mrb[0].mxu0
        %v2876 = vadd.f32 0.0, %v2875
        %v2877 = vpop.f32.mrb[0].mxu0
        %2878 = vmatprep.mubr.bf16.mxu0 0
        %2879 = vmatmul.mubr.bf16.gmra.mrb[0].mxu0 %v2815
        %v2880 = vpop.f32.mrb[0].mxu0
        %v2881 = vadd.f32 0.0, %v2880
        %v2882 = vpop.f32.mrb[0].mxu0
        %v2883 = vpop.f32.mrb[0].mxu0
        %v2884 = vadd.f32 0.0, %v2883
        %v2885 = vpop.f32.mrb[0].mxu0
        %2886 = vmatprep.mubr.bf16.mxu0 0
        %2887 = vmatmul.mubr.bf16.gmra.mrb[0].mxu0 %v2818
        %v2888 = vpop.f32.mrb[0].mxu0
        %v2889 = vadd.f32 0.0, %v2888
        %v2890 = vpop.f32.mrb[0].mxu0
        %v2891 = vpop.f32.mrb[0].mxu0
        %v2892 = vadd.f32 0.0, %v2891
        %v2893 = vpop.f32.mrb[0].mxu0
        %2894 = vmatprep.mubr.bf16.mxu0 0
        %2895 = vmatmul.mubr.bf16.gmra.mrb[0].mxu0 %v2821
        %v2896 = vpop.f32.mrb[0].mxu0
        %v2897 = vadd.f32 0.0, %v2896
        %v2898 = vpop.f32.mrb[0].mxu0
        %v2899 = vpop.f32.mrb[0].mxu0
        %v2900 = vadd.f32 0.0, %v2899
        %v2901 = vpop.f32.mrb[0].mxu0
        %2902 = vmatprep.mubr.bf16.mxu0 0
        %2903 = vmatmul.mubr.bf16.gmra.mrb[0].mxu0 %v2824
        %v2904 = vpop.f32.mrb[0].mxu0
        %v2905 = vadd.f32 0.0, %v2904
        %v2906 = vpop.f32.mrb[0].mxu0
        %v2907 = vpop.f32.mrb[0].mxu0
        %v2908 = vadd.f32 0.0, %v2907
        %v2909 = vpop.f32.mrb[0].mxu0
        %2910 = vmatprep.mubr.bf16.mxu0 0
        %2911 = vmatmul.mubr.bf16.gmra.mrb[0].mxu0 %v2827
        %v2912 = vpop.f32.mrb[0].mxu0
        %v2913 = vadd.f32 0.0, %v2912
        %v2914 = vpop.f32.mrb[0].mxu0
        %v2915 = vpop.f32.mrb[0].mxu0
        %v2916 = vadd.f32 0.0, %v2915
        %v2917 = vpop.f32.mrb[0].mxu0
        %2918 = vmatprep.mubr.bf16.mxu0 0
        %2919 = vmatmul.mubr.bf16.gmra.mrb[0].mxu0 %v2830
        %v2920 = vpop.f32.mrb[0].mxu0
        %v2921 = vadd.f32 0.0, %v2920
        %v2922 = vpop.f32.mrb[0].mxu0
        %v2923 = vpop.f32.mrb[0].mxu0
        %v2924 = vadd.f32 0.0, %v2923
        %v2925 = vpop.f32.mrb[0].mxu0
        %2926 = vmatprep.mubr.bf16.mxu0 0
        %2927 = vmatmul.mubr.bf16.gmra.mrb[0].mxu0 %v2833
        %v2928 = vpop.f32.mrb[0].mxu0
        %v2929 = vadd.f32 0.0, %v2928
        %v2930 = vpop.f32.mrb[0].mxu0
        %v2931 = vpop.f32.mrb[0].mxu0
        %v2932 = vadd.f32 0.0, %v2931
        %v2933 = vpop.f32.mrb[0].mxu0
        %2934 = vdwg.mxu0
        %2935 = vmax.xlane.f32.xlu0 %v2873
        %v2936 = vpop.xlane.xlu0 %2935
        %2937 = vmax.xlane.f32.xlu0 %v2876
        %v2938 = vpop.xlane.xlu0 %2937
        %2939 = vmax.xlane.f32.xlu0 %v2881
        %v2940 = vpop.xlane.xlu0 %2939
        %2941 = vmax.xlane.f32.xlu0 %v2884
        %v2942 = vpop.xlane.xlu0 %2941
        %2943 = vmax.xlane.f32.xlu0 %v2889
        %v2944 = vpop.xlane.xlu0 %2943
        %2945 = vmax.xlane.f32.xlu0 %v2892
        %v2946 = vpop.xlane.xlu0 %2945
        %2947 = vmax.xlane.f32.xlu0 %v2897
        %v2948 = vpop.xlane.xlu0 %2947
        %2949 = vmax.xlane.f32.xlu0 %v2900
        %v2950 = vpop.xlane.xlu0 %2949
        %2951 = vmax.xlane.f32.xlu0 %v2905
        %v2952 = vpop.xlane.xlu0 %2951
        %2953 = vmax.xlane.f32.xlu0 %v2908
        %v2954 = vpop.xlane.xlu0 %2953
        %2955 = vmax.xlane.f32.xlu0 %v2913
        %v2956 = vpop.xlane.xlu0 %2955
        %2957 = vmax.xlane.f32.xlu0 %v2916
        %v2958 = vpop.xlane.xlu0 %2957
        %2959 = vmax.xlane.f32.xlu0 %v2921
        %v2960 = vpop.xlane.xlu0 %2959
        %2961 = vmax.xlane.f32.xlu0 %v2924
        %v2962 = vpop.xlane.xlu0 %2961
        %2963 = vmax.xlane.f32.xlu0 %v2929
        %v2964 = vpop.xlane.xlu0 %2963
        %2965 = vmax.xlane.f32.xlu0 %v2932
        %v2966 = vpop.xlane.xlu0 %2965
        %v2967 = vsub.f32 %v2873, %v2936
        %v2968 = vsub.f32 %v2876, %v2938
        %v2969 = vsub.f32 %v2881, %v2940
        %v2970 = vsub.f32 %v2884, %v2942
        %v2971 = vsub.f32 %v2889, %v2944
        %v2972 = vsub.f32 %v2892, %v2946
        %v2973 = vsub.f32 %v2897, %v2948
        %v2974 = vsub.f32 %v2900, %v2950
        %v2975 = vsub.f32 %v2905, %v2952
        %v2976 = vsub.f32 %v2908, %v2954
        %v2977 = vsub.f32 %v2913, %v2956
        %v2978 = vsub.f32 %v2916, %v2958
        %v2979 = vsub.f32 %v2921, %v2960
        %v2980 = vsub.f32 %v2924, %v2962
        %v2981 = vsub.f32 %v2929, %v2964
        %v2982 = vsub.f32 %v2932, %v2966
        %v2983 = vmul.f32 %v2967, 1.442695
        %v2984 = vpow.pop %v2983
        %v2985 = vmul.f32 %v2968, 1.442695
        %v2986 = vpow.pop %v2985
        %v2987 = vmul.f32 %v2969, 1.442695
        %v2988 = vpow.pop %v2987
        %v2989 = vmul.f32 %v2970, 1.442695
        %v2990 = vpow.pop %v2989
        %v2991 = vmul.f32 %v2971, 1.442695
        %v2992 = vpow.pop %v2991
        %v2993 = vmul.f32 %v2972, 1.442695
        %v2994 = vpow.pop %v2993
        %v2995 = vmul.f32 %v2973, 1.442695
        %v2996 = vpow.pop %v2995
        %v2997 = vmul.f32 %v2974, 1.442695
        %v2998 = vpow.pop %v2997
        %v2999 = vmul.f32 %v2975, 1.442695
        %v3000 = vpow.pop %v2999
        %v3001 = vmul.f32 %v2976, 1.442695
        %v3002 = vpow.pop %v3001
        %v3003 = vmul.f32 %v2977, 1.442695
        %v3004 = vpow.pop %v3003
        %v3005 = vmul.f32 %v2978, 1.442695
        %v3006 = vpow.pop %v3005
        %v3007 = vmul.f32 %v2979, 1.442695
        %v3008 = vpow.pop %v3007
        %v3009 = vmul.f32 %v2980, 1.442695
        %v3010 = vpow.pop %v3009
        %v3011 = vmul.f32 %v2981, 1.442695
        %v3012 = vpow.pop %v3011
        %v3013 = vmul.f32 %v2982, 1.442695
        %v3014 = vpow.pop %v3013
        %3015 = vadd.xlane.f32.xlu0 %v2984
        %v3016 = vpop.xlane.xlu0 %3015
        %3017 = vadd.xlane.f32.xlu0 %v2986
        %v3018 = vpop.xlane.xlu0 %3017
        %3019 = vadd.xlane.f32.xlu0 %v2988
        %v3020 = vpop.xlane.xlu0 %3019
        %3021 = vadd.xlane.f32.xlu0 %v2990
        %v3022 = vpop.xlane.xlu0 %3021
        %3023 = vadd.xlane.f32.xlu0 %v2992
        %v3024 = vpop.xlane.xlu0 %3023
        %3025 = vadd.xlane.f32.xlu0 %v2994
        %v3026 = vpop.xlane.xlu0 %3025
        %3027 = vadd.xlane.f32.xlu0 %v2996
        %v3028 = vpop.xlane.xlu0 %3027
        %3029 = vadd.xlane.f32.xlu0 %v2998
        %v3030 = vpop.xlane.xlu0 %3029
        %3031 = vadd.xlane.f32.xlu0 %v3000
        %v3032 = vpop.xlane.xlu0 %3031
        %3033 = vadd.xlane.f32.xlu0 %v3002
        %v3034 = vpop.xlane.xlu0 %3033
        %3035 = vadd.xlane.f32.xlu0 %v3004
        %v3036 = vpop.xlane.xlu0 %3035
        %3037 = vadd.xlane.f32.xlu0 %v3006
        %v3038 = vpop.xlane.xlu0 %3037
        %3039 = vadd.xlane.f32.xlu0 %v3008
        %v3040 = vpop.xlane.xlu0 %3039
        %3041 = vadd.xlane.f32.xlu0 %v3010
        %v3042 = vpop.xlane.xlu0 %3041
        %3043 = vadd.xlane.f32.xlu0 %v3012
        %v3044 = vpop.xlane.xlu0 %3043
        %3045 = vadd.xlane.f32.xlu0 %v3014
        %v3046 = vpop.xlane.xlu0 %3045
        %v3047 = vrcp.pop %v3016
        %v3048 = vrcp.pop %v3018
        %v3049 = vrcp.pop %v3020
        %v3050 = vrcp.pop %v3022
        %v3051 = vrcp.pop %v3024
        %v3052 = vrcp.pop %v3026
        %v3053 = vrcp.pop %v3028
        %v3054 = vrcp.pop %v3030
        %v3055 = vrcp.pop %v3032
        %v3056 = vrcp.pop %v3034
        %v3057 = vrcp.pop %v3036
        %v3058 = vrcp.pop %v3038
        %v3059 = vrcp.pop %v3040
        %v3060 = vrcp.pop %v3042
        %v3061 = vrcp.pop %v3044
        %v3062 = vrcp.pop %v3046
        %v3063 = vmul.f32 %v2984, %v3047
        %v3064 = vmul.f32 %v2986, %v3048
        %v3065 = vmul.f32 %v2988, %v3049
        %v3066 = vmul.f32 %v2990, %v3050
        %v3067 = vmul.f32 %v2992, %v3051
        %v3068 = vmul.f32 %v2994, %v3052
        %v3069 = vmul.f32 %v2996, %v3053
        %v3070 = vmul.f32 %v2998, %v3054
        %v3071 = vmul.f32 %v3000, %v3055
        %v3072 = vmul.f32 %v3002, %v3056
        %v3073 = vmul.f32 %v3004, %v3057
        %v3074 = vmul.f32 %v3006, %v3058
        %v3075 = vmul.f32 %v3008, %v3059
        %v3076 = vmul.f32 %v3010, %v3060
        %v3077 = vmul.f32 %v3012, %v3061
        %v3078 = vmul.f32 %v3014, %v3062
        %v3079 = vpack.c.bf16 %v3064, %v3063
        %v3080 = vpack.c.bf16 %v3066, %v3065
        %v3081 = vpack.c.bf16 %v3068, %v3067
        %v3082 = vpack.c.bf16 %v3070, %v3069
        %v3083 = vpack.c.bf16 %v3072, %v3071
        %v3084 = vpack.c.bf16 %v3074, %v3073
        %v3085 = vpack.c.bf16 %v3076, %v3075
        %v3086 = vpack.c.bf16 %v3078, %v3077
        %v3095 = vunpack.c.l.b16 %v3079
        %v3096 = vunpack.c.h.b16 %v3079
        %v3097 = vunpack.c.l.b16 %v3080
        %v3098 = vunpack.c.h.b16 %v3080
        %v3099 = vunpack.c.l.b16 %v3081
        %v3100 = vunpack.c.h.b16 %v3081
        %v3101 = vunpack.c.l.b16 %v3082
        %v3102 = vunpack.c.h.b16 %v3082
        %v3103 = vunpack.c.l.b16 %v3083
        %v3104 = vunpack.c.h.b16 %v3083
        %v3105 = vunpack.c.l.b16 %v3084
        %v3106 = vunpack.c.h.b16 %v3084
        %v3107 = vunpack.c.l.b16 %v3085
        %v3108 = vunpack.c.h.b16 %v3085
        %v3109 = vunpack.c.l.b16 %v3086
        %v3110 = vunpack.c.h.b16 %v3086
        %v3111 = vpack.c.b16 %v3095, %v3095
        %v3112 = vpack.c.b16 %v3096, %v3096
        %v3113 = vpack.c.b16 %v3097, %v3097
        %v3114 = vpack.c.b16 %v3098, %v3098
        %v3115 = vpack.c.b16 %v3099, %v3099
        %v3116 = vpack.c.b16 %v3100, %v3100
        %v3117 = vpack.c.b16 %v3101, %v3101
        %v3118 = vpack.c.b16 %v3102, %v3102
        %v3119 = vpack.c.b16 %v3103, %v3103
        %v3120 = vpack.c.b16 %v3104, %v3104
        %v3121 = vpack.c.b16 %v3105, %v3105
        %v3122 = vpack.c.b16 %v3106, %v3106
        %v3123 = vpack.c.b16 %v3107, %v3107
        %v3124 = vpack.c.b16 %v3108, %v3108
        %v3125 = vpack.c.b16 %v3109, %v3109
        %v3126 = vpack.c.b16 %v3110, %v3110
        %s3143 = scalar_lea.vmem %s599, 192 [#allocation7]
        %3144 = vst [vmem:[%s3143] sm:$0xf] %v3111
        %3145 = vst [vmem:[%s3143 + $0x4] sm:$0xf] %v3112
        %3146 = vst [vmem:[%s3143 + $0x8] sm:$0xf] %v3113
        %3147 = vst [vmem:[%s3143 + $0xc] sm:$0xf] %v3114
        %3148 = vst [vmem:[%s3143 + $0x10] sm:$0xf] %v3115
        %3149 = vst [vmem:[%s3143 + $0x14] sm:$0xf] %v3116
        %3150 = vst [vmem:[%s3143 + $0x18] sm:$0xf] %v3117
        %3151 = vst [vmem:[%s3143 + $0x1c] sm:$0xf] %v3118
        %3152 = vst [vmem:[%s3143 + $0x20] sm:$0xf] %v3119
        %3153 = vst [vmem:[%s3143 + $0x24] sm:$0xf] %v3120
        %3154 = vst [vmem:[%s3143 + $0x28] sm:$0xf] %v3121
        %3155 = vst [vmem:[%s3143 + $0x2c] sm:$0xf] %v3122
        %3156 = vst [vmem:[%s3143 + $0x30] sm:$0xf] %v3123
        %3157 = vst [vmem:[%s3143 + $0x34] sm:$0xf] %v3124
        %3158 = vst [vmem:[%s3143 + $0x38] sm:$0xf] %v3125
        %3159 = vst [vmem:[%s3143 + $0x3c] sm:$0xf] %v3126
        %3160 = vmatprep.subr.bf16.mxu0 0
        %3161 = vmatpush1.bf16.msra.mxu0 %v2803
        %3162 = vmatprep.subr.bf16.mxu0 0
        %3163 = vmatpush1.bf16.msra.mxu0 %v2804
        %3164 = vmatprep.subr.bf16.mxu0 0
        %3165 = vmatpush1.bf16.msra.mxu0 %v2805
        %3166 = vmatprep.subr.bf16.mxu0 0
        %3167 = vmatpush1.bf16.msra.mxu0 %v2806
        %3168 = vmatprep.subr.bf16.mxu0 0
        %3169 = vmatpush1.bf16.msra.mxu0 %v2807
        %3170 = vmatprep.subr.bf16.mxu0 0
        %3171 = vmatpush1.bf16.msra.mxu0 %v2808
        %3172 = vmatprep.subr.bf16.mxu0 0
        %3173 = vmatpush1.bf16.msra.mxu0 %v2809
        %3174 = vmatprep.subr.bf16.mxu0 0
        %3175 = vmatpush1.bf16.msra.mxu0 %v2810
        %3176 = vmatprep.subr.bf16.mxu0 0
        %3177 = vmatpush1.bf16.msra.mxu0 0
        %3178 = vmatprep.subr.bf16.mxu0 0
        %3179 = vmatpush1.bf16.msra.mxu0 0
        %3180 = vmatprep.subr.bf16.mxu0 0
        %3181 = vmatpush1.bf16.msra.mxu0 0
        %3182 = vmatprep.subr.bf16.mxu0 0
        %3183 = vmatpush1.bf16.msra.mxu0 0
        %3184 = vmatprep.subr.bf16.mxu0 0
        %3185 = vmatpush1.bf16.msra.mxu0 0
        %3186 = vmatprep.subr.bf16.mxu0 0
        %3187 = vmatpush1.bf16.msra.mxu0 0
        %3188 = vmatprep.subr.bf16.mxu0 0
        %3189 = vmatpush1.bf16.msra.mxu0 0
        %3190 = vmatprep.subr.bf16.mxu0 0
        %3191 = vmatpush1.bf16.msra.mxu0 0
        %3192 = vmatprep.mubr.bf16.mxu0 0
        %3193 = vmatmul.mubr.bf16.gmra.mrb[0].mxu0 %v3079
        %v3194 = vpop.f32.mrb[0].mxu0
        %v3195 = vadd.f32 0.0, %v3194
        %v3196 = vpop.f32.mrb[0].mxu0
        %v3197 = vpop.f32.mrb[0].mxu0
        %v3198 = vadd.f32 0.0, %v3197
        %v3199 = vpop.f32.mrb[0].mxu0
        %3200 = vmatprep.mubr.bf16.mxu0 0
        %3201 = vmatmul.mubr.bf16.gmra.mrb[0].mxu0 %v3080
        %v3202 = vpop.f32.mrb[0].mxu0
        %v3203 = vadd.f32 0.0, %v3202
        %v3204 = vpop.f32.mrb[0].mxu0
        %v3205 = vpop.f32.mrb[0].mxu0
        %v3206 = vadd.f32 0.0, %v3205
        %v3207 = vpop.f32.mrb[0].mxu0
        %3208 = vmatprep.mubr.bf16.mxu0 0
        %3209 = vmatmul.mubr.bf16.gmra.mrb[0].mxu0 %v3081
        %v3210 = vpop.f32.mrb[0].mxu0
        %v3211 = vadd.f32 0.0, %v3210
        %v3212 = vpop.f32.mrb[0].mxu0
        %v3213 = vpop.f32.mrb[0].mxu0
        %v3214 = vadd.f32 0.0, %v3213
        %v3215 = vpop.f32.mrb[0].mxu0
        %3216 = vmatprep.mubr.bf16.mxu0 0
        %3217 = vmatmul.mubr.bf16.gmra.mrb[0].mxu0 %v3082
        %v3218 = vpop.f32.mrb[0].mxu0
        %v3219 = vadd.f32 0.0, %v3218
        %v3220 = vpop.f32.mrb[0].mxu0
        %v3221 = vpop.f32.mrb[0].mxu0
        %v3222 = vadd.f32 0.0, %v3221
        %v3223 = vpop.f32.mrb[0].mxu0
        %3224 = vmatprep.mubr.bf16.mxu0 0
        %3225 = vmatmul.mubr.bf16.gmra.mrb[0].mxu0 %v3083
        %v3226 = vpop.f32.mrb[0].mxu0
        %v3227 = vadd.f32 0.0, %v3226
        %v3228 = vpop.f32.mrb[0].mxu0
        %v3229 = vpop.f32.mrb[0].mxu0
        %v3230 = vadd.f32 0.0, %v3229
        %v3231 = vpop.f32.mrb[0].mxu0
        %3232 = vmatprep.mubr.bf16.mxu0 0
        %3233 = vmatmul.mubr.bf16.gmra.mrb[0].mxu0 %v3084
        %v3234 = vpop.f32.mrb[0].mxu0
        %v3235 = vadd.f32 0.0, %v3234
        %v3236 = vpop.f32.mrb[0].mxu0
        %v3237 = vpop.f32.mrb[0].mxu0
        %v3238 = vadd.f32 0.0, %v3237
        %v3239 = vpop.f32.mrb[0].mxu0
        %3240 = vmatprep.mubr.bf16.mxu0 0
        %3241 = vmatmul.mubr.bf16.gmra.mrb[0].mxu0 %v3085
        %v3242 = vpop.f32.mrb[0].mxu0
        %v3243 = vadd.f32 0.0, %v3242
        %v3244 = vpop.f32.mrb[0].mxu0
        %v3245 = vpop.f32.mrb[0].mxu0
        %v3246 = vadd.f32 0.0, %v3245
        %v3247 = vpop.f32.mrb[0].mxu0
        %3248 = vmatprep.mubr.bf16.mxu0 0
        %3249 = vmatmul.mubr.bf16.gmra.mrb[0].mxu0 %v3086
        %v3250 = vpop.f32.mrb[0].mxu0
        %v3251 = vadd.f32 0.0, %v3250
        %v3252 = vpop.f32.mrb[0].mxu0
        %v3253 = vpop.f32.mrb[0].mxu0
        %v3254 = vadd.f32 0.0, %v3253
        %v3255 = vpop.f32.mrb[0].mxu0
        %3256 = vdwg.mxu0
        %3273 = vrot.lane.b32.xlu0 %v3195, 24
        %v3274 = vpop.permute.xlu0 %3273
        %3275 = vrot.lane.b32.xlu0 %v3198, 24
        %v3276 = vpop.permute.xlu0 %3275
        %3277 = vrot.lane.b32.xlu0 %v3203, 24
        %v3278 = vpop.permute.xlu0 %3277
        %3279 = vrot.lane.b32.xlu0 %v3206, 24
        %v3280 = vpop.permute.xlu0 %3279
        %3281 = vrot.lane.b32.xlu0 %v3211, 24
        %v3282 = vpop.permute.xlu0 %3281
        %3283 = vrot.lane.b32.xlu0 %v3214, 24
        %v3284 = vpop.permute.xlu0 %3283
        %3285 = vrot.lane.b32.xlu0 %v3219, 24
        %v3286 = vpop.permute.xlu0 %3285
        %3287 = vrot.lane.b32.xlu0 %v3222, 24
        %v3288 = vpop.permute.xlu0 %3287
        %3289 = vrot.lane.b32.xlu0 %v3227, 24
        %v3290 = vpop.permute.xlu0 %3289
        %3291 = vrot.lane.b32.xlu0 %v3230, 24
        %v3292 = vpop.permute.xlu0 %3291
        %3293 = vrot.lane.b32.xlu0 %v3235, 24
        %v3294 = vpop.permute.xlu0 %3293
        %3295 = vrot.lane.b32.xlu0 %v3238, 24
        %v3296 = vpop.permute.xlu0 %3295
        %3297 = vrot.lane.b32.xlu0 %v3243, 24
        %v3298 = vpop.permute.xlu0 %3297
        %3299 = vrot.lane.b32.xlu0 %v3246, 24
        %v3300 = vpop.permute.xlu0 %3299
        %3301 = vrot.lane.b32.xlu0 %v3251, 24
        %v3302 = vpop.permute.xlu0 %3301
        %3303 = vrot.lane.b32.xlu0 %v3254, 24
        %v3304 = vpop.permute.xlu0 %3303
        %vm3321 = vcmask 261312
        %3322 = vst.msk [vmem:[#allocation2] sm:$0xff] %vm3321, %v3274
        %3323 = vst.msk [vmem:[#allocation2 + $0x8] sm:$0xff] %vm3321, %v3276
        %3324 = vst.msk [vmem:[#allocation2 + $0x10] sm:$0xff] %vm3321, %v3278
        %3325 = vst.msk [vmem:[#allocation2 + $0x18] sm:$0xff] %vm3321, %v3280
        %3326 = vst.msk [vmem:[#allocation2 + $0x20] sm:$0xff] %vm3321, %v3282
        %3327 = vst.msk [vmem:[#allocation2 + $0x28] sm:$0xff] %vm3321, %v3284
        %3328 = vst.msk [vmem:[#allocation2 + $0x30] sm:$0xff] %vm3321, %v3286
        %3329 = vst.msk [vmem:[#allocation2 + $0x38] sm:$0xff] %vm3321, %v3288
        %3330 = vst.msk [vmem:[#allocation2 + $0x40] sm:$0xff] %vm3321, %v3290
        %3331 = vst.msk [vmem:[#allocation2 + $0x48] sm:$0xff] %vm3321, %v3292
        %3332 = vst.msk [vmem:[#allocation2 + $0x50] sm:$0xff] %vm3321, %v3294
        %3333 = vst.msk [vmem:[#allocation2 + $0x58] sm:$0xff] %vm3321, %v3296
        %3334 = vst.msk [vmem:[#allocation2 + $0x60] sm:$0xff] %vm3321, %v3298
        %3335 = vst.msk [vmem:[#allocation2 + $0x68] sm:$0xff] %vm3321, %v3300
        %3336 = vst.msk [vmem:[#allocation2 + $0x70] sm:$0xff] %vm3321, %v3302
        %3337 = vst.msk [vmem:[#allocation2 + $0x78] sm:$0xff] %vm3321, %v3304
        %3338 = vxpose.xlu0.b32.start [1/16] %v712, 128
        %3339 = vxpose.xlu0.b32.cont [2/16] 0.0, 128
        %3340 = vxpose.xlu0.b32.cont [3/16] 0.0, 128
        %3341 = vxpose.xlu0.b32.cont [4/16] 0.0, 128
        %3342 = vxpose.xlu0.b32.cont [5/16] 0.0, 128
        %3343 = vxpose.xlu0.b32.cont [6/16] 0.0, 128
        %3344 = vxpose.xlu0.b32.cont [7/16] 0.0, 128
        %3345 = vxpose.xlu0.b32.cont [8/16] 0.0, 128
        %3346 = vxpose.xlu0.b32.cont [9/16] 0.0, 128
        %3347 = vxpose.xlu0.b32.cont [10/16] 0.0, 128
        %3348 = vxpose.xlu0.b32.cont [11/16] 0.0, 128
        %3349 = vxpose.xlu0.b32.cont [12/16] 0.0, 128
        %3350 = vxpose.xlu0.b32.cont [13/16] 0.0, 128
        %3351 = vxpose.xlu0.b32.cont [14/16] 0.0, 128
        %3352 = vxpose.xlu0.b32.cont [15/16] 0.0, 128
        %3353 = vxpose.xlu0.b32.end [16/16] 0.0, 128
        %v3354 = vpop.trf.xlu0
        %v3355 = vpop.trf.xlu0
        %v3356 = vpop.trf.xlu0
        %v3357 = vpop.trf.xlu0
        %v3358 = vpop.trf.xlu0
        %v3359 = vpop.trf.xlu0
        %v3360 = vpop.trf.xlu0
        %v3361 = vpop.trf.xlu0
        %v3362 = vpop.trf.xlu0
        %v3363 = vpop.trf.xlu0
        %v3364 = vpop.trf.xlu0
        %v3365 = vpop.trf.xlu0
        %v3366 = vpop.trf.xlu0
        %v3367 = vpop.trf.xlu0
        %v3368 = vpop.trf.xlu0
        %v3369 = vpop.trf.xlu0
        %v3370 = vpack.c.bf16 %v3355, %v3354
        %v3371 = vpack.c.bf16 %v3357, %v3356
        %v3372 = vpack.c.bf16 %v3359, %v3358
        %v3373 = vpack.c.bf16 %v3361, %v3360
        %v3374 = vpack.c.bf16 %v3363, %v3362
        %v3375 = vpack.c.bf16 %v3365, %v3364
        %v3376 = vpack.c.bf16 %v3367, %v3366
        %v3377 = vpack.c.bf16 %v3369, %v3368
        %v3378 = vpack.c.bf16 %v833, %v833
        %3379 = vxpose.xlu0.b32.start [1/16] %v954, 128
        %3380 = vxpose.xlu0.b32.cont [2/16] 0.0, 128
        %3381 = vxpose.xlu0.b32.cont [3/16] 0.0, 128
        %3382 = vxpose.xlu0.b32.cont [4/16] 0.0, 128
        %3383 = vxpose.xlu0.b32.cont [5/16] 0.0, 128
        %3384 = vxpose.xlu0.b32.cont [6/16] 0.0, 128
        %3385 = vxpose.xlu0.b32.cont [7/16] 0.0, 128
        %3386 = vxpose.xlu0.b32.cont [8/16] 0.0, 128
        %3387 = vxpose.xlu0.b32.cont [9/16] 0.0, 128
        %3388 = vxpose.xlu0.b32.cont [10/16] 0.0, 128
        %3389 = vxpose.xlu0.b32.cont [11/16] 0.0, 128
        %3390 = vxpose.xlu0.b32.cont [12/16] 0.0, 128
        %3391 = vxpose.xlu0.b32.cont [13/16] 0.0, 128
        %3392 = vxpose.xlu0.b32.cont [14/16] 0.0, 128
        %3393 = vxpose.xlu0.b32.cont [15/16] 0.0, 128
        %3394 = vxpose.xlu0.b32.end [16/16] 0.0, 128
        %v3395 = vpop.trf.xlu0
        %v3396 = vpop.trf.xlu0
        %v3397 = vpop.trf.xlu0
        %v3398 = vpop.trf.xlu0
        %v3399 = vpop.trf.xlu0
        %v3400 = vpop.trf.xlu0
        %v3401 = vpop.trf.xlu0
        %v3402 = vpop.trf.xlu0
        %v3403 = vpop.trf.xlu0
        %v3404 = vpop.trf.xlu0
        %v3405 = vpop.trf.xlu0
        %v3406 = vpop.trf.xlu0
        %v3407 = vpop.trf.xlu0
        %v3408 = vpop.trf.xlu0
        %v3409 = vpop.trf.xlu0
        %v3410 = vpop.trf.xlu0
        %v3411 = vpack.c.bf16 %v3396, %v3395
        %v3412 = vpack.c.bf16 %v3398, %v3397
        %v3413 = vpack.c.bf16 %v3400, %v3399
        %v3414 = vpack.c.bf16 %v3402, %v3401
        %v3415 = vpack.c.bf16 %v3404, %v3403
        %v3416 = vpack.c.bf16 %v3406, %v3405
        %v3417 = vpack.c.bf16 %v3408, %v3407
        %v3418 = vpack.c.bf16 %v3410, %v3409
        %v3420 = vsel %vm1051, %v3370, 0
        %v3423 = vsel %vm1051, %v3371, 0
        %v3426 = vsel %vm1051, %v3372, 0
        %v3429 = vsel %vm1051, %v3373, 0
        %v3432 = vsel %vm1051, %v3374, 0
        %v3435 = vsel %vm1051, %v3375, 0
        %v3438 = vsel %vm1051, %v3376, 0
        %v3441 = vsel %vm1051, %v3377, 0
        %v3444 = vsel %vm1076, %v3378, 0
        %3446 = vmatprep.subr.bf16.mxu0 0
        %3447 = vmatpush1.bf16.msra.mxu0 %v3444
        %3448 = vmatprep.subr.bf16.mxu0 0
        %3449 = vmatpush1.bf16.msra.mxu0 0
        %3450 = vmatprep.subr.bf16.mxu0 0
        %3451 = vmatpush1.bf16.msra.mxu0 0
        %3452 = vmatprep.subr.bf16.mxu0 0
        %3453 = vmatpush1.bf16.msra.mxu0 0
        %3454 = vmatprep.subr.bf16.mxu0 0
        %3455 = vmatpush1.bf16.msra.mxu0 0
        %3456 = vmatprep.subr.bf16.mxu0 0
        %3457 = vmatpush1.bf16.msra.mxu0 0
        %3458 = vmatprep.subr.bf16.mxu0 0
        %3459 = vmatpush1.bf16.msra.mxu0 0
        %3460 = vmatprep.subr.bf16.mxu0 0
        %3461 = vmatpush1.bf16.msra.mxu0 0
        %3462 = vmatprep.subr.bf16.mxu0 0
        %3463 = vmatpush1.bf16.msra.mxu0 0
        %3464 = vmatprep.subr.bf16.mxu0 0
        %3465 = vmatpush1.bf16.msra.mxu0 0
        %3466 = vmatprep.subr.bf16.mxu0 0
        %3467 = vmatpush1.bf16.msra.mxu0 0
        %3468 = vmatprep.subr.bf16.mxu0 0
        %3469 = vmatpush1.bf16.msra.mxu0 0
        %3470 = vmatprep.subr.bf16.mxu0 0
        %3471 = vmatpush1.bf16.msra.mxu0 0
        %3472 = vmatprep.subr.bf16.mxu0 0
        %3473 = vmatpush1.bf16.msra.mxu0 0
        %3474 = vmatprep.subr.bf16.mxu0 0
        %3475 = vmatpush1.bf16.msra.mxu0 0
        %3476 = vmatprep.subr.bf16.mxu0 0
        %3477 = vmatpush1.bf16.msra.mxu0 0
        %3478 = vmatprep.mubr.bf16.mxu0 0
        %3479 = vmatmul.mubr.bf16.gmra.mrb[0].mxu0 %v3420
        %v3480 = vpop.f32.mrb[0].mxu0
        %v3481 = vadd.f32 0.0, %v3480
        %v3482 = vpop.f32.mrb[0].mxu0
        %v3483 = vpop.f32.mrb[0].mxu0
        %v3484 = vadd.f32 0.0, %v3483
        %v3485 = vpop.f32.mrb[0].mxu0
        %3486 = vmatprep.mubr.bf16.mxu0 0
        %3487 = vmatmul.mubr.bf16.gmra.mrb[0].mxu0 %v3423
        %v3488 = vpop.f32.mrb[0].mxu0
        %v3489 = vadd.f32 0.0, %v3488
        %v3490 = vpop.f32.mrb[0].mxu0
        %v3491 = vpop.f32.mrb[0].mxu0
        %v3492 = vadd.f32 0.0, %v3491
        %v3493 = vpop.f32.mrb[0].mxu0
        %3494 = vmatprep.mubr.bf16.mxu0 0
        %3495 = vmatmul.mubr.bf16.gmra.mrb[0].mxu0 %v3426
        %v3496 = vpop.f32.mrb[0].mxu0
        %v3497 = vadd.f32 0.0, %v3496
        %v3498 = vpop.f32.mrb[0].mxu0
        %v3499 = vpop.f32.mrb[0].mxu0
        %v3500 = vadd.f32 0.0, %v3499
        %v3501 = vpop.f32.mrb[0].mxu0
        %3502 = vmatprep.mubr.bf16.mxu0 0
        %3503 = vmatmul.mubr.bf16.gmra.mrb[0].mxu0 %v3429
        %v3504 = vpop.f32.mrb[0].mxu0
        %v3505 = vadd.f32 0.0, %v3504
        %v3506 = vpop.f32.mrb[0].mxu0
        %v3507 = vpop.f32.mrb[0].mxu0
        %v3508 = vadd.f32 0.0, %v3507
        %v3509 = vpop.f32.mrb[0].mxu0
        %3510 = vmatprep.mubr.bf16.mxu0 0
        %3511 = vmatmul.mubr.bf16.gmra.mrb[0].mxu0 %v3432
        %v3512 = vpop.f32.mrb[0].mxu0
        %v3513 = vadd.f32 0.0, %v3512
        %v3514 = vpop.f32.mrb[0].mxu0
        %v3515 = vpop.f32.mrb[0].mxu0
        %v3516 = vadd.f32 0.0, %v3515
        %v3517 = vpop.f32.mrb[0].mxu0
        %3518 = vmatprep.mubr.bf16.mxu0 0
        %3519 = vmatmul.mubr.bf16.gmra.mrb[0].mxu0 %v3435
        %v3520 = vpop.f32.mrb[0].mxu0
        %v3521 = vadd.f32 0.0, %v3520
        %v3522 = vpop.f32.mrb[0].mxu0
        %v3523 = vpop.f32.mrb[0].mxu0
        %v3524 = vadd.f32 0.0, %v3523
        %v3525 = vpop.f32.mrb[0].mxu0
        %3526 = vmatprep.mubr.bf16.mxu0 0
        %3527 = vmatmul.mubr.bf16.gmra.mrb[0].mxu0 %v3438
        %v3528 = vpop.f32.mrb[0].mxu0
        %v3529 = vadd.f32 0.0, %v3528
        %v3530 = vpop.f32.mrb[0].mxu0
        %v3531 = vpop.f32.mrb[0].mxu0
        %v3532 = vadd.f32 0.0, %v3531
        %v3533 = vpop.f32.mrb[0].mxu0
        %3534 = vmatprep.mubr.bf16.mxu0 0
        %3535 = vmatmul.mubr.bf16.gmra.mrb[0].mxu0 %v3441
        %v3536 = vpop.f32.mrb[0].mxu0
        %v3537 = vadd.f32 0.0, %v3536
        %v3538 = vpop.f32.mrb[0].mxu0
        %v3539 = vpop.f32.mrb[0].mxu0
        %v3540 = vadd.f32 0.0, %v3539
        %v3541 = vpop.f32.mrb[0].mxu0
        %3542 = vdwg.mxu0
        %3543 = vmax.xlane.f32.xlu0 %v3481
        %v3544 = vpop.xlane.xlu0 %3543
        %3545 = vmax.xlane.f32.xlu0 %v3484
        %v3546 = vpop.xlane.xlu0 %3545
        %3547 = vmax.xlane.f32.xlu0 %v3489
        %v3548 = vpop.xlane.xlu0 %3547
        %3549 = vmax.xlane.f32.xlu0 %v3492
        %v3550 = vpop.xlane.xlu0 %3549
        %3551 = vmax.xlane.f32.xlu0 %v3497
        %v3552 = vpop.xlane.xlu0 %3551
        %3553 = vmax.xlane.f32.xlu0 %v3500
        %v3554 = vpop.xlane.xlu0 %3553
        %3555 = vmax.xlane.f32.xlu0 %v3505
        %v3556 = vpop.xlane.xlu0 %3555
        %3557 = vmax.xlane.f32.xlu0 %v3508
        %v3558 = vpop.xlane.xlu0 %3557
        %3559 = vmax.xlane.f32.xlu0 %v3513
        %v3560 = vpop.xlane.xlu0 %3559
        %3561 = vmax.xlane.f32.xlu0 %v3516
        %v3562 = vpop.xlane.xlu0 %3561
        %3563 = vmax.xlane.f32.xlu0 %v3521
        %v3564 = vpop.xlane.xlu0 %3563
        %3565 = vmax.xlane.f32.xlu0 %v3524
        %v3566 = vpop.xlane.xlu0 %3565
        %3567 = vmax.xlane.f32.xlu0 %v3529
        %v3568 = vpop.xlane.xlu0 %3567
        %3569 = vmax.xlane.f32.xlu0 %v3532
        %v3570 = vpop.xlane.xlu0 %3569
        %3571 = vmax.xlane.f32.xlu0 %v3537
        %v3572 = vpop.xlane.xlu0 %3571
        %3573 = vmax.xlane.f32.xlu0 %v3540
        %v3574 = vpop.xlane.xlu0 %3573
        %v3575 = vsub.f32 %v3481, %v3544
        %v3576 = vsub.f32 %v3484, %v3546
        %v3577 = vsub.f32 %v3489, %v3548
        %v3578 = vsub.f32 %v3492, %v3550
        %v3579 = vsub.f32 %v3497, %v3552
        %v3580 = vsub.f32 %v3500, %v3554
        %v3581 = vsub.f32 %v3505, %v3556
        %v3582 = vsub.f32 %v3508, %v3558
        %v3583 = vsub.f32 %v3513, %v3560
        %v3584 = vsub.f32 %v3516, %v3562
        %v3585 = vsub.f32 %v3521, %v3564
        %v3586 = vsub.f32 %v3524, %v3566
        %v3587 = vsub.f32 %v3529, %v3568
        %v3588 = vsub.f32 %v3532, %v3570
        %v3589 = vsub.f32 %v3537, %v3572
        %v3590 = vsub.f32 %v3540, %v3574
        %v3591 = vmul.f32 %v3575, 1.442695
        %v3592 = vpow.pop %v3591
        %v3593 = vmul.f32 %v3576, 1.442695
        %v3594 = vpow.pop %v3593
        %v3595 = vmul.f32 %v3577, 1.442695
        %v3596 = vpow.pop %v3595
        %v3597 = vmul.f32 %v3578, 1.442695
        %v3598 = vpow.pop %v3597
        %v3599 = vmul.f32 %v3579, 1.442695
        %v3600 = vpow.pop %v3599
        %v3601 = vmul.f32 %v3580, 1.442695
        %v3602 = vpow.pop %v3601
        %v3603 = vmul.f32 %v3581, 1.442695
        %v3604 = vpow.pop %v3603
        %v3605 = vmul.f32 %v3582, 1.442695
        %v3606 = vpow.pop %v3605
        %v3607 = vmul.f32 %v3583, 1.442695
        %v3608 = vpow.pop %v3607
        %v3609 = vmul.f32 %v3584, 1.442695
        %v3610 = vpow.pop %v3609
        %v3611 = vmul.f32 %v3585, 1.442695
        %v3612 = vpow.pop %v3611
        %v3613 = vmul.f32 %v3586, 1.442695
        %v3614 = vpow.pop %v3613
        %v3615 = vmul.f32 %v3587, 1.442695
        %v3616 = vpow.pop %v3615
        %v3617 = vmul.f32 %v3588, 1.442695
        %v3618 = vpow.pop %v3617
        %v3619 = vmul.f32 %v3589, 1.442695
        %v3620 = vpow.pop %v3619
        %v3621 = vmul.f32 %v3590, 1.442695
        %v3622 = vpow.pop %v3621
        %3623 = vadd.xlane.f32.xlu0 %v3592
        %v3624 = vpop.xlane.xlu0 %3623
        %3625 = vadd.xlane.f32.xlu0 %v3594
        %v3626 = vpop.xlane.xlu0 %3625
        %3627 = vadd.xlane.f32.xlu0 %v3596
        %v3628 = vpop.xlane.xlu0 %3627
        %3629 = vadd.xlane.f32.xlu0 %v3598
        %v3630 = vpop.xlane.xlu0 %3629
        %3631 = vadd.xlane.f32.xlu0 %v3600
        %v3632 = vpop.xlane.xlu0 %3631
        %3633 = vadd.xlane.f32.xlu0 %v3602
        %v3634 = vpop.xlane.xlu0 %3633
        %3635 = vadd.xlane.f32.xlu0 %v3604
        %v3636 = vpop.xlane.xlu0 %3635
        %3637 = vadd.xlane.f32.xlu0 %v3606
        %v3638 = vpop.xlane.xlu0 %3637
        %3639 = vadd.xlane.f32.xlu0 %v3608
        %v3640 = vpop.xlane.xlu0 %3639
        %3641 = vadd.xlane.f32.xlu0 %v3610
        %v3642 = vpop.xlane.xlu0 %3641
        %3643 = vadd.xlane.f32.xlu0 %v3612
        %v3644 = vpop.xlane.xlu0 %3643
        %3645 = vadd.xlane.f32.xlu0 %v3614
        %v3646 = vpop.xlane.xlu0 %3645
        %3647 = vadd.xlane.f32.xlu0 %v3616
        %v3648 = vpop.xlane.xlu0 %3647
        %3649 = vadd.xlane.f32.xlu0 %v3618
        %v3650 = vpop.xlane.xlu0 %3649
        %3651 = vadd.xlane.f32.xlu0 %v3620
        %v3652 = vpop.xlane.xlu0 %3651
        %3653 = vadd.xlane.f32.xlu0 %v3622
        %v3654 = vpop.xlane.xlu0 %3653
        %v3655 = vrcp.pop %v3624
        %v3656 = vrcp.pop %v3626
        %v3657 = vrcp.pop %v3628
        %v3658 = vrcp.pop %v3630
        %v3659 = vrcp.pop %v3632
        %v3660 = vrcp.pop %v3634
        %v3661 = vrcp.pop %v3636
        %v3662 = vrcp.pop %v3638
        %v3663 = vrcp.pop %v3640
        %v3664 = vrcp.pop %v3642
        %v3665 = vrcp.pop %v3644
        %v3666 = vrcp.pop %v3646
        %v3667 = vrcp.pop %v3648
        %v3668 = vrcp.pop %v3650
        %v3669 = vrcp.pop %v3652
        %v3670 = vrcp.pop %v3654
        %v3671 = vmul.f32 %v3592, %v3655
        %v3672 = vmul.f32 %v3594, %v3656
        %v3673 = vmul.f32 %v3596, %v3657
        %v3674 = vmul.f32 %v3598, %v3658
        %v3675 = vmul.f32 %v3600, %v3659
        %v3676 = vmul.f32 %v3602, %v3660
        %v3677 = vmul.f32 %v3604, %v3661
        %v3678 = vmul.f32 %v3606, %v3662
        %v3679 = vmul.f32 %v3608, %v3663
        %v3680 = vmul.f32 %v3610, %v3664
        %v3681 = vmul.f32 %v3612, %v3665
        %v3682 = vmul.f32 %v3614, %v3666
        %v3683 = vmul.f32 %v3616, %v3667
        %v3684 = vmul.f32 %v3618, %v3668
        %v3685 = vmul.f32 %v3620, %v3669
        %v3686 = vmul.f32 %v3622, %v3670
        %v3687 = vpack.c.bf16 %v3672, %v3671
        %v3688 = vpack.c.bf16 %v3674, %v3673
        %v3689 = vpack.c.bf16 %v3676, %v3675
        %v3690 = vpack.c.bf16 %v3678, %v3677
        %v3691 = vpack.c.bf16 %v3680, %v3679
        %v3692 = vpack.c.bf16 %v3682, %v3681
        %v3693 = vpack.c.bf16 %v3684, %v3683
        %v3694 = vpack.c.bf16 %v3686, %v3685
        %v3703 = vunpack.c.l.b16 %v3687
        %v3704 = vunpack.c.h.b16 %v3687
        %v3705 = vunpack.c.l.b16 %v3688
        %v3706 = vunpack.c.h.b16 %v3688
        %v3707 = vunpack.c.l.b16 %v3689
        %v3708 = vunpack.c.h.b16 %v3689
        %v3709 = vunpack.c.l.b16 %v3690
        %v3710 = vunpack.c.h.b16 %v3690
        %v3711 = vunpack.c.l.b16 %v3691
        %v3712 = vunpack.c.h.b16 %v3691
        %v3713 = vunpack.c.l.b16 %v3692
        %v3714 = vunpack.c.h.b16 %v3692
        %v3715 = vunpack.c.l.b16 %v3693
        %v3716 = vunpack.c.h.b16 %v3693
        %v3717 = vunpack.c.l.b16 %v3694
        %v3718 = vunpack.c.h.b16 %v3694
        %v3719 = vpack.c.b16 %v3703, %v3703
        %v3720 = vpack.c.b16 %v3704, %v3704
        %v3721 = vpack.c.b16 %v3705, %v3705
        %v3722 = vpack.c.b16 %v3706, %v3706
        %v3723 = vpack.c.b16 %v3707, %v3707
        %v3724 = vpack.c.b16 %v3708, %v3708
        %v3725 = vpack.c.b16 %v3709, %v3709
        %v3726 = vpack.c.b16 %v3710, %v3710
        %v3727 = vpack.c.b16 %v3711, %v3711
        %v3728 = vpack.c.b16 %v3712, %v3712
        %v3729 = vpack.c.b16 %v3713, %v3713
        %v3730 = vpack.c.b16 %v3714, %v3714
        %v3731 = vpack.c.b16 %v3715, %v3715
        %v3732 = vpack.c.b16 %v3716, %v3716
        %v3733 = vpack.c.b16 %v3717, %v3717
        %v3734 = vpack.c.b16 %v3718, %v3718
        %s3751 = scalar_lea.vmem %s599, 256 [#allocation7]
        %3752 = vst [vmem:[%s3751] sm:$0xf] %v3719
        %3753 = vst [vmem:[%s3751 + $0x4] sm:$0xf] %v3720
        %3754 = vst [vmem:[%s3751 + $0x8] sm:$0xf] %v3721
        %3755 = vst [vmem:[%s3751 + $0xc] sm:$0xf] %v3722
        %3756 = vst [vmem:[%s3751 + $0x10] sm:$0xf] %v3723
        %3757 = vst [vmem:[%s3751 + $0x14] sm:$0xf] %v3724
        %3758 = vst [vmem:[%s3751 + $0x18] sm:$0xf] %v3725
        %3759 = vst [vmem:[%s3751 + $0x1c] sm:$0xf] %v3726
        %3760 = vst [vmem:[%s3751 + $0x20] sm:$0xf] %v3727
        %3761 = vst [vmem:[%s3751 + $0x24] sm:$0xf] %v3728
        %3762 = vst [vmem:[%s3751 + $0x28] sm:$0xf] %v3729
        %3763 = vst [vmem:[%s3751 + $0x2c] sm:$0xf] %v3730
        %3764 = vst [vmem:[%s3751 + $0x30] sm:$0xf] %v3731
        %3765 = vst [vmem:[%s3751 + $0x34] sm:$0xf] %v3732
        %3766 = vst [vmem:[%s3751 + $0x38] sm:$0xf] %v3733
        %3767 = vst [vmem:[%s3751 + $0x3c] sm:$0xf] %v3734
        %3768 = vmatprep.subr.bf16.mxu0 0
        %3769 = vmatpush1.bf16.msra.mxu0 %v3411
        %3770 = vmatprep.subr.bf16.mxu0 0
        %3771 = vmatpush1.bf16.msra.mxu0 %v3412
        %3772 = vmatprep.subr.bf16.mxu0 0
        %3773 = vmatpush1.bf16.msra.mxu0 %v3413
        %3774 = vmatprep.subr.bf16.mxu0 0
        %3775 = vmatpush1.bf16.msra.mxu0 %v3414
        %3776 = vmatprep.subr.bf16.mxu0 0
        %3777 = vmatpush1.bf16.msra.mxu0 %v3415
        %3778 = vmatprep.subr.bf16.mxu0 0
        %3779 = vmatpush1.bf16.msra.mxu0 %v3416
        %3780 = vmatprep.subr.bf16.mxu0 0
        %3781 = vmatpush1.bf16.msra.mxu0 %v3417
        %3782 = vmatprep.subr.bf16.mxu0 0
        %3783 = vmatpush1.bf16.msra.mxu0 %v3418
        %3784 = vmatprep.subr.bf16.mxu0 0
        %3785 = vmatpush1.bf16.msra.mxu0 0
        %3786 = vmatprep.subr.bf16.mxu0 0
        %3787 = vmatpush1.bf16.msra.mxu0 0
        %3788 = vmatprep.subr.bf16.mxu0 0
        %3789 = vmatpush1.bf16.msra.mxu0 0
        %3790 = vmatprep.subr.bf16.mxu0 0
        %3791 = vmatpush1.bf16.msra.mxu0 0
        %3792 = vmatprep.subr.bf16.mxu0 0
        %3793 = vmatpush1.bf16.msra.mxu0 0
        %3794 = vmatprep.subr.bf16.mxu0 0
        %3795 = vmatpush1.bf16.msra.mxu0 0
        %3796 = vmatprep.subr.bf16.mxu0 0
        %3797 = vmatpush1.bf16.msra.mxu0 0
        %3798 = vmatprep.subr.bf16.mxu0 0
        %3799 = vmatpush1.bf16.msra.mxu0 0
        %3800 = vmatprep.mubr.bf16.mxu0 0
        %3801 = vmatmul.mubr.bf16.gmra.mrb[0].mxu0 %v3687
        %v3802 = vpop.f32.mrb[0].mxu0
        %v3803 = vadd.f32 0.0, %v3802
        %v3804 = vpop.f32.mrb[0].mxu0
        %v3805 = vpop.f32.mrb[0].mxu0
        %v3806 = vadd.f32 0.0, %v3805
        %v3807 = vpop.f32.mrb[0].mxu0
        %3808 = vmatprep.mubr.bf16.mxu0 0
        %3809 = vmatmul.mubr.bf16.gmra.mrb[0].mxu0 %v3688
        %v3810 = vpop.f32.mrb[0].mxu0
        %v3811 = vadd.f32 0.0, %v3810
        %v3812 = vpop.f32.mrb[0].mxu0
        %v3813 = vpop.f32.mrb[0].mxu0
        %v3814 = vadd.f32 0.0, %v3813
        %v3815 = vpop.f32.mrb[0].mxu0
        %3816 = vmatprep.mubr.bf16.mxu0 0
        %3817 = vmatmul.mubr.bf16.gmra.mrb[0].mxu0 %v3689
        %v3818 = vpop.f32.mrb[0].mxu0
        %v3819 = vadd.f32 0.0, %v3818
        %v3820 = vpop.f32.mrb[0].mxu0
        %v3821 = vpop.f32.mrb[0].mxu0
        %v3822 = vadd.f32 0.0, %v3821
        %v3823 = vpop.f32.mrb[0].mxu0
        %3824 = vmatprep.mubr.bf16.mxu0 0
        %3825 = vmatmul.mubr.bf16.gmra.mrb[0].mxu0 %v3690
        %v3826 = vpop.f32.mrb[0].mxu0
        %v3827 = vadd.f32 0.0, %v3826
        %v3828 = vpop.f32.mrb[0].mxu0
        %v3829 = vpop.f32.mrb[0].mxu0
        %v3830 = vadd.f32 0.0, %v3829
        %v3831 = vpop.f32.mrb[0].mxu0
        %3832 = vmatprep.mubr.bf16.mxu0 0
        %3833 = vmatmul.mubr.bf16.gmra.mrb[0].mxu0 %v3691
        %v3834 = vpop.f32.mrb[0].mxu0
        %v3835 = vadd.f32 0.0, %v3834
        %v3836 = vpop.f32.mrb[0].mxu0
        %v3837 = vpop.f32.mrb[0].mxu0
        %v3838 = vadd.f32 0.0, %v3837
        %v3839 = vpop.f32.mrb[0].mxu0
        %3840 = vmatprep.mubr.bf16.mxu0 0
        %3841 = vmatmul.mubr.bf16.gmra.mrb[0].mxu0 %v3692
        %v3842 = vpop.f32.mrb[0].mxu0
        %v3843 = vadd.f32 0.0, %v3842
        %v3844 = vpop.f32.mrb[0].mxu0
        %v3845 = vpop.f32.mrb[0].mxu0
        %v3846 = vadd.f32 0.0, %v3845
        %v3847 = vpop.f32.mrb[0].mxu0
        %3848 = vmatprep.mubr.bf16.mxu0 0
        %3849 = vmatmul.mubr.bf16.gmra.mrb[0].mxu0 %v3693
        %v3850 = vpop.f32.mrb[0].mxu0
        %v3851 = vadd.f32 0.0, %v3850
        %v3852 = vpop.f32.mrb[0].mxu0
        %v3853 = vpop.f32.mrb[0].mxu0
        %v3854 = vadd.f32 0.0, %v3853
        %v3855 = vpop.f32.mrb[0].mxu0
        %3856 = vmatprep.mubr.bf16.mxu0 0
        %3857 = vmatmul.mubr.bf16.gmra.mrb[0].mxu0 %v3694
        %v3858 = vpop.f32.mrb[0].mxu0
        %v3859 = vadd.f32 0.0, %v3858
        %v3860 = vpop.f32.mrb[0].mxu0
        %v3861 = vpop.f32.mrb[0].mxu0
        %v3862 = vadd.f32 0.0, %v3861
        %v3863 = vpop.f32.mrb[0].mxu0
        %3864 = vdwg.mxu0
        %3865 = vst.msk [vmem:[#allocation2 + $0x80] sm:$0xff] %vm1051, %v3803
        %3866 = vst.msk [vmem:[#allocation2 + $0x88] sm:$0xff] %vm1051, %v3806
        %3867 = vst.msk [vmem:[#allocation2 + $0x90] sm:$0xff] %vm1051, %v3811
        %3868 = vst.msk [vmem:[#allocation2 + $0x98] sm:$0xff] %vm1051, %v3814
        %3869 = vst.msk [vmem:[#allocation2 + $0xa0] sm:$0xff] %vm1051, %v3819
        %3870 = vst.msk [vmem:[#allocation2 + $0xa8] sm:$0xff] %vm1051, %v3822
        %3871 = vst.msk [vmem:[#allocation2 + $0xb0] sm:$0xff] %vm1051, %v3827
        %3872 = vst.msk [vmem:[#allocation2 + $0xb8] sm:$0xff] %vm1051, %v3830
        %3873 = vst.msk [vmem:[#allocation2 + $0xc0] sm:$0xff] %vm1051, %v3835
        %3874 = vst.msk [vmem:[#allocation2 + $0xc8] sm:$0xff] %vm1051, %v3838
        %3875 = vst.msk [vmem:[#allocation2 + $0xd0] sm:$0xff] %vm1051, %v3843
        %3876 = vst.msk [vmem:[#allocation2 + $0xd8] sm:$0xff] %vm1051, %v3846
        %3877 = vst.msk [vmem:[#allocation2 + $0xe0] sm:$0xff] %vm1051, %v3851
        %3878 = vst.msk [vmem:[#allocation2 + $0xe8] sm:$0xff] %vm1051, %v3854
        %3879 = vst.msk [vmem:[#allocation2 + $0xf0] sm:$0xff] %vm1051, %v3859
        %3880 = vst.msk [vmem:[#allocation2 + $0xf8] sm:$0xff] %vm1051, %v3862
        %3881 = vxpose.xlu0.b32.start [1/16] %v716, 128
        %3882 = vxpose.xlu0.b32.cont [2/16] 0.0, 128
        %3883 = vxpose.xlu0.b32.cont [3/16] 0.0, 128
        %3884 = vxpose.xlu0.b32.cont [4/16] 0.0, 128
        %3885 = vxpose.xlu0.b32.cont [5/16] 0.0, 128
        %3886 = vxpose.xlu0.b32.cont [6/16] 0.0, 128
        %3887 = vxpose.xlu0.b32.cont [7/16] 0.0, 128
        %3888 = vxpose.xlu0.b32.cont [8/16] 0.0, 128
        %3889 = vxpose.xlu0.b32.cont [9/16] 0.0, 128
        %3890 = vxpose.xlu0.b32.cont [10/16] 0.0, 128
        %3891 = vxpose.xlu0.b32.cont [11/16] 0.0, 128
        %3892 = vxpose.xlu0.b32.cont [12/16] 0.0, 128
        %3893 = vxpose.xlu0.b32.cont [13/16] 0.0, 128
        %3894 = vxpose.xlu0.b32.cont [14/16] 0.0, 128
        %3895 = vxpose.xlu0.b32.cont [15/16] 0.0, 128
        %3896 = vxpose.xlu0.b32.end [16/16] 0.0, 128
        %v3897 = vpop.trf.xlu0
        %v3898 = vpop.trf.xlu0
        %v3899 = vpop.trf.xlu0
        %v3900 = vpop.trf.xlu0
        %v3901 = vpop.trf.xlu0
        %v3902 = vpop.trf.xlu0
        %v3903 = vpop.trf.xlu0
        %v3904 = vpop.trf.xlu0
        %v3905 = vpop.trf.xlu0
        %v3906 = vpop.trf.xlu0
        %v3907 = vpop.trf.xlu0
        %v3908 = vpop.trf.xlu0
        %v3909 = vpop.trf.xlu0
        %v3910 = vpop.trf.xlu0
        %v3911 = vpop.trf.xlu0
        %v3912 = vpop.trf.xlu0
        %v3913 = vpack.c.bf16 %v3898, %v3897
        %v3914 = vpack.c.bf16 %v3900, %v3899
        %v3915 = vpack.c.bf16 %v3902, %v3901
        %v3916 = vpack.c.bf16 %v3904, %v3903
        %v3917 = vpack.c.bf16 %v3906, %v3905
        %v3918 = vpack.c.bf16 %v3908, %v3907
        %v3919 = vpack.c.bf16 %v3910, %v3909
        %v3920 = vpack.c.bf16 %v3912, %v3911
        %v3921 = vpack.c.bf16 %v837, %v837
        %3922 = vxpose.xlu0.b32.start [1/16] %v958, 128
        %3923 = vxpose.xlu0.b32.cont [2/16] 0.0, 128
        %3924 = vxpose.xlu0.b32.cont [3/16] 0.0, 128
        %3925 = vxpose.xlu0.b32.cont [4/16] 0.0, 128
        %3926 = vxpose.xlu0.b32.cont [5/16] 0.0, 128
        %3927 = vxpose.xlu0.b32.cont [6/16] 0.0, 128
        %3928 = vxpose.xlu0.b32.cont [7/16] 0.0, 128
        %3929 = vxpose.xlu0.b32.cont [8/16] 0.0, 128
        %3930 = vxpose.xlu0.b32.cont [9/16] 0.0, 128
        %3931 = vxpose.xlu0.b32.cont [10/16] 0.0, 128
        %3932 = vxpose.xlu0.b32.cont [11/16] 0.0, 128
        %3933 = vxpose.xlu0.b32.cont [12/16] 0.0, 128
        %3934 = vxpose.xlu0.b32.cont [13/16] 0.0, 128
        %3935 = vxpose.xlu0.b32.cont [14/16] 0.0, 128
        %3936 = vxpose.xlu0.b32.cont [15/16] 0.0, 128
        %3937 = vxpose.xlu0.b32.end [16/16] 0.0, 128
        %v3938 = vpop.trf.xlu0
        %v3939 = vpop.trf.xlu0
        %v3940 = vpop.trf.xlu0
        %v3941 = vpop.trf.xlu0
        %v3942 = vpop.trf.xlu0
        %v3943 = vpop.trf.xlu0
        %v3944 = vpop.trf.xlu0
        %v3945 = vpop.trf.xlu0
        %v3946 = vpop.trf.xlu0
        %v3947 = vpop.trf.xlu0
        %v3948 = vpop.trf.xlu0
        %v3949 = vpop.trf.xlu0
        %v3950 = vpop.trf.xlu0
        %v3951 = vpop.trf.xlu0
        %v3952 = vpop.trf.xlu0
        %v3953 = vpop.trf.xlu0
        %v3954 = vpack.c.bf16 %v3939, %v3938
        %v3955 = vpack.c.bf16 %v3941, %v3940
        %v3956 = vpack.c.bf16 %v3943, %v3942
        %v3957 = vpack.c.bf16 %v3945, %v3944
        %v3958 = vpack.c.bf16 %v3947, %v3946
        %v3959 = vpack.c.bf16 %v3949, %v3948
        %v3960 = vpack.c.bf16 %v3951, %v3950
        %v3961 = vpack.c.bf16 %v3953, %v3952
        %v3963 = vsel %vm1051, %v3913, 0
        %v3966 = vsel %vm1051, %v3914, 0
        %v3969 = vsel %vm1051, %v3915, 0
        %v3972 = vsel %vm1051, %v3916, 0
        %v3975 = vsel %vm1051, %v3917, 0
        %v3978 = vsel %vm1051, %v3918, 0
        %v3981 = vsel %vm1051, %v3919, 0
        %v3984 = vsel %vm1051, %v3920, 0
        %v3987 = vsel %vm1076, %v3921, 0
        %3989 = vmatprep.subr.bf16.mxu0 0
        %3990 = vmatpush1.bf16.msra.mxu0 %v3987
        %3991 = vmatprep.subr.bf16.mxu0 0
        %3992 = vmatpush1.bf16.msra.mxu0 0
        %3993 = vmatprep.subr.bf16.mxu0 0
        %3994 = vmatpush1.bf16.msra.mxu0 0
        %3995 = vmatprep.subr.bf16.mxu0 0
        %3996 = vmatpush1.bf16.msra.mxu0 0
        %3997 = vmatprep.subr.bf16.mxu0 0
        %3998 = vmatpush1.bf16.msra.mxu0 0
        %3999 = vmatprep.subr.bf16.mxu0 0
        %4000 = vmatpush1.bf16.msra.mxu0 0
        %4001 = vmatprep.subr.bf16.mxu0 0
        %4002 = vmatpush1.bf16.msra.mxu0 0
        %4003 = vmatprep.subr.bf16.mxu0 0
        %4004 = vmatpush1.bf16.msra.mxu0 0
        %4005 = vmatprep.subr.bf16.mxu0 0
        %4006 = vmatpush1.bf16.msra.mxu0 0
        %4007 = vmatprep.subr.bf16.mxu0 0
        %4008 = vmatpush1.bf16.msra.mxu0 0
        %4009 = vmatprep.subr.bf16.mxu0 0
        %4010 = vmatpush1.bf16.msra.mxu0 0
        %4011 = vmatprep.subr.bf16.mxu0 0
        %4012 = vmatpush1.bf16.msra.mxu0 0
        %4013 = vmatprep.subr.bf16.mxu0 0
        %4014 = vmatpush1.bf16.msra.mxu0 0
        %4015 = vmatprep.subr.bf16.mxu0 0
        %4016 = vmatpush1.bf16.msra.mxu0 0
        %4017 = vmatprep.subr.bf16.mxu0 0
        %4018 = vmatpush1.bf16.msra.mxu0 0
        %4019 = vmatprep.subr.bf16.mxu0 0
        %4020 = vmatpush1.bf16.msra.mxu0 0
        %4021 = vmatprep.mubr.bf16.mxu0 0
        %4022 = vmatmul.mubr.bf16.gmra.mrb[0].mxu0 %v3963
        %v4023 = vpop.f32.mrb[0].mxu0
        %v4024 = vadd.f32 0.0, %v4023
        %v4025 = vpop.f32.mrb[0].mxu0
        %v4026 = vpop.f32.mrb[0].mxu0
        %v4027 = vadd.f32 0.0, %v4026
        %v4028 = vpop.f32.mrb[0].mxu0
        %4029 = vmatprep.mubr.bf16.mxu0 0
        %4030 = vmatmul.mubr.bf16.gmra.mrb[0].mxu0 %v3966
        %v4031 = vpop.f32.mrb[0].mxu0
        %v4032 = vadd.f32 0.0, %v4031
        %v4033 = vpop.f32.mrb[0].mxu0
        %v4034 = vpop.f32.mrb[0].mxu0
        %v4035 = vadd.f32 0.0, %v4034
        %v4036 = vpop.f32.mrb[0].mxu0
        %4037 = vmatprep.mubr.bf16.mxu0 0
        %4038 = vmatmul.mubr.bf16.gmra.mrb[0].mxu0 %v3969
        %v4039 = vpop.f32.mrb[0].mxu0
        %v4040 = vadd.f32 0.0, %v4039
        %v4041 = vpop.f32.mrb[0].mxu0
        %v4042 = vpop.f32.mrb[0].mxu0
        %v4043 = vadd.f32 0.0, %v4042
        %v4044 = vpop.f32.mrb[0].mxu0
        %4045 = vmatprep.mubr.bf16.mxu0 0
        %4046 = vmatmul.mubr.bf16.gmra.mrb[0].mxu0 %v3972
        %v4047 = vpop.f32.mrb[0].mxu0
        %v4048 = vadd.f32 0.0, %v4047
        %v4049 = vpop.f32.mrb[0].mxu0
        %v4050 = vpop.f32.mrb[0].mxu0
        %v4051 = vadd.f32 0.0, %v4050
        %v4052 = vpop.f32.mrb[0].mxu0
        %4053 = vmatprep.mubr.bf16.mxu0 0
        %4054 = vmatmul.mubr.bf16.gmra.mrb[0].mxu0 %v3975
        %v4055 = vpop.f32.mrb[0].mxu0
        %v4056 = vadd.f32 0.0, %v4055
        %v4057 = vpop.f32.mrb[0].mxu0
        %v4058 = vpop.f32.mrb[0].mxu0
        %v4059 = vadd.f32 0.0, %v4058
        %v4060 = vpop.f32.mrb[0].mxu0
        %4061 = vmatprep.mubr.bf16.mxu0 0
        %4062 = vmatmul.mubr.bf16.gmra.mrb[0].mxu0 %v3978
        %v4063 = vpop.f32.mrb[0].mxu0
        %v4064 = vadd.f32 0.0, %v4063
        %v4065 = vpop.f32.mrb[0].mxu0
        %v4066 = vpop.f32.mrb[0].mxu0
        %v4067 = vadd.f32 0.0, %v4066
        %v4068 = vpop.f32.mrb[0].mxu0
        %4069 = vmatprep.mubr.bf16.mxu0 0
        %4070 = vmatmul.mubr.bf16.gmra.mrb[0].mxu0 %v3981
        %v4071 = vpop.f32.mrb[0].mxu0
        %v4072 = vadd.f32 0.0, %v4071
        %v4073 = vpop.f32.mrb[0].mxu0
        %v4074 = vpop.f32.mrb[0].mxu0
        %v4075 = vadd.f32 0.0, %v4074
        %v4076 = vpop.f32.mrb[0].mxu0
        %4077 = vmatprep.mubr.bf16.mxu0 0
        %4078 = vmatmul.mubr.bf16.gmra.mrb[0].mxu0 %v3984
        %v4079 = vpop.f32.mrb[0].mxu0
        %v4080 = vadd.f32 0.0, %v4079
        %v4081 = vpop.f32.mrb[0].mxu0
        %v4082 = vpop.f32.mrb[0].mxu0
        %v4083 = vadd.f32 0.0, %v4082
        %v4084 = vpop.f32.mrb[0].mxu0
        %4085 = vdwg.mxu0
        %4086 = vmax.xlane.f32.xlu0 %v4024
        %v4087 = vpop.xlane.xlu0 %4086
        %4088 = vmax.xlane.f32.xlu0 %v4027
        %v4089 = vpop.xlane.xlu0 %4088
        %4090 = vmax.xlane.f32.xlu0 %v4032
        %v4091 = vpop.xlane.xlu0 %4090
        %4092 = vmax.xlane.f32.xlu0 %v4035
        %v4093 = vpop.xlane.xlu0 %4092
        %4094 = vmax.xlane.f32.xlu0 %v4040
        %v4095 = vpop.xlane.xlu0 %4094
        %4096 = vmax.xlane.f32.xlu0 %v4043
        %v4097 = vpop.xlane.xlu0 %4096
        %4098 = vmax.xlane.f32.xlu0 %v4048
        %v4099 = vpop.xlane.xlu0 %4098
        %4100 = vmax.xlane.f32.xlu0 %v4051
        %v4101 = vpop.xlane.xlu0 %4100
        %4102 = vmax.xlane.f32.xlu0 %v4056
        %v4103 = vpop.xlane.xlu0 %4102
        %4104 = vmax.xlane.f32.xlu0 %v4059
        %v4105 = vpop.xlane.xlu0 %4104
        %4106 = vmax.xlane.f32.xlu0 %v4064
        %v4107 = vpop.xlane.xlu0 %4106
        %4108 = vmax.xlane.f32.xlu0 %v4067
        %v4109 = vpop.xlane.xlu0 %4108
        %4110 = vmax.xlane.f32.xlu0 %v4072
        %v4111 = vpop.xlane.xlu0 %4110
        %4112 = vmax.xlane.f32.xlu0 %v4075
        %v4113 = vpop.xlane.xlu0 %4112
        %4114 = vmax.xlane.f32.xlu0 %v4080
        %v4115 = vpop.xlane.xlu0 %4114
        %4116 = vmax.xlane.f32.xlu0 %v4083
        %v4117 = vpop.xlane.xlu0 %4116
        %v4118 = vsub.f32 %v4024, %v4087
        %v4119 = vsub.f32 %v4027, %v4089
        %v4120 = vsub.f32 %v4032, %v4091
        %v4121 = vsub.f32 %v4035, %v4093
        %v4122 = vsub.f32 %v4040, %v4095
        %v4123 = vsub.f32 %v4043, %v4097
        %v4124 = vsub.f32 %v4048, %v4099
        %v4125 = vsub.f32 %v4051, %v4101
        %v4126 = vsub.f32 %v4056, %v4103
        %v4127 = vsub.f32 %v4059, %v4105
        %v4128 = vsub.f32 %v4064, %v4107
        %v4129 = vsub.f32 %v4067, %v4109
        %v4130 = vsub.f32 %v4072, %v4111
        %v4131 = vsub.f32 %v4075, %v4113
        %v4132 = vsub.f32 %v4080, %v4115
        %v4133 = vsub.f32 %v4083, %v4117
        %v4134 = vmul.f32 %v4118, 1.442695
        %v4135 = vpow.pop %v4134
        %v4136 = vmul.f32 %v4119, 1.442695
        %v4137 = vpow.pop %v4136
        %v4138 = vmul.f32 %v4120, 1.442695
        %v4139 = vpow.pop %v4138
        %v4140 = vmul.f32 %v4121, 1.442695
        %v4141 = vpow.pop %v4140
        %v4142 = vmul.f32 %v4122, 1.442695
        %v4143 = vpow.pop %v4142
        %v4144 = vmul.f32 %v4123, 1.442695
        %v4145 = vpow.pop %v4144
        %v4146 = vmul.f32 %v4124, 1.442695
        %v4147 = vpow.pop %v4146
        %v4148 = vmul.f32 %v4125, 1.442695
        %v4149 = vpow.pop %v4148
        %v4150 = vmul.f32 %v4126, 1.442695
        %v4151 = vpow.pop %v4150
        %v4152 = vmul.f32 %v4127, 1.442695
        %v4153 = vpow.pop %v4152
        %v4154 = vmul.f32 %v4128, 1.442695
        %v4155 = vpow.pop %v4154
        %v4156 = vmul.f32 %v4129, 1.442695
        %v4157 = vpow.pop %v4156
        %v4158 = vmul.f32 %v4130, 1.442695
        %v4159 = vpow.pop %v4158
        %v4160 = vmul.f32 %v4131, 1.442695
        %v4161 = vpow.pop %v4160
        %v4162 = vmul.f32 %v4132, 1.442695
        %v4163 = vpow.pop %v4162
        %v4164 = vmul.f32 %v4133, 1.442695
        %v4165 = vpow.pop %v4164
        %4166 = vadd.xlane.f32.xlu0 %v4135
        %v4167 = vpop.xlane.xlu0 %4166
        %4168 = vadd.xlane.f32.xlu0 %v4137
        %v4169 = vpop.xlane.xlu0 %4168
        %4170 = vadd.xlane.f32.xlu0 %v4139
        %v4171 = vpop.xlane.xlu0 %4170
        %4172 = vadd.xlane.f32.xlu0 %v4141
        %v4173 = vpop.xlane.xlu0 %4172
        %4174 = vadd.xlane.f32.xlu0 %v4143
        %v4175 = vpop.xlane.xlu0 %4174
        %4176 = vadd.xlane.f32.xlu0 %v4145
        %v4177 = vpop.xlane.xlu0 %4176
        %4178 = vadd.xlane.f32.xlu0 %v4147
        %v4179 = vpop.xlane.xlu0 %4178
        %4180 = vadd.xlane.f32.xlu0 %v4149
        %v4181 = vpop.xlane.xlu0 %4180
        %4182 = vadd.xlane.f32.xlu0 %v4151
        %v4183 = vpop.xlane.xlu0 %4182
        %4184 = vadd.xlane.f32.xlu0 %v4153
        %v4185 = vpop.xlane.xlu0 %4184
        %4186 = vadd.xlane.f32.xlu0 %v4155
        %v4187 = vpop.xlane.xlu0 %4186
        %4188 = vadd.xlane.f32.xlu0 %v4157
        %v4189 = vpop.xlane.xlu0 %4188
        %4190 = vadd.xlane.f32.xlu0 %v4159
        %v4191 = vpop.xlane.xlu0 %4190
        %4192 = vadd.xlane.f32.xlu0 %v4161
        %v4193 = vpop.xlane.xlu0 %4192
        %4194 = vadd.xlane.f32.xlu0 %v4163
        %v4195 = vpop.xlane.xlu0 %4194
        %4196 = vadd.xlane.f32.xlu0 %v4165
        %v4197 = vpop.xlane.xlu0 %4196
        %v4198 = vrcp.pop %v4167
        %v4199 = vrcp.pop %v4169
        %v4200 = vrcp.pop %v4171
        %v4201 = vrcp.pop %v4173
        %v4202 = vrcp.pop %v4175
        %v4203 = vrcp.pop %v4177
        %v4204 = vrcp.pop %v4179
        %v4205 = vrcp.pop %v4181
        %v4206 = vrcp.pop %v4183
        %v4207 = vrcp.pop %v4185
        %v4208 = vrcp.pop %v4187
        %v4209 = vrcp.pop %v4189
        %v4210 = vrcp.pop %v4191
        %v4211 = vrcp.pop %v4193
        %v4212 = vrcp.pop %v4195
        %v4213 = vrcp.pop %v4197
        %v4214 = vmul.f32 %v4135, %v4198
        %v4215 = vmul.f32 %v4137, %v4199
        %v4216 = vmul.f32 %v4139, %v4200
        %v4217 = vmul.f32 %v4141, %v4201
        %v4218 = vmul.f32 %v4143, %v4202
        %v4219 = vmul.f32 %v4145, %v4203
        %v4220 = vmul.f32 %v4147, %v4204
        %v4221 = vmul.f32 %v4149, %v4205
        %v4222 = vmul.f32 %v4151, %v4206
        %v4223 = vmul.f32 %v4153, %v4207
        %v4224 = vmul.f32 %v4155, %v4208
        %v4225 = vmul.f32 %v4157, %v4209
        %v4226 = vmul.f32 %v4159, %v4210
        %v4227 = vmul.f32 %v4161, %v4211
        %v4228 = vmul.f32 %v4163, %v4212
        %v4229 = vmul.f32 %v4165, %v4213
        %v4230 = vpack.c.bf16 %v4215, %v4214
        %v4231 = vpack.c.bf16 %v4217, %v4216
        %v4232 = vpack.c.bf16 %v4219, %v4218
        %v4233 = vpack.c.bf16 %v4221, %v4220
        %v4234 = vpack.c.bf16 %v4223, %v4222
        %v4235 = vpack.c.bf16 %v4225, %v4224
        %v4236 = vpack.c.bf16 %v4227, %v4226
        %v4237 = vpack.c.bf16 %v4229, %v4228
        %v4246 = vunpack.c.l.b16 %v4230
        %v4247 = vunpack.c.h.b16 %v4230
        %v4248 = vunpack.c.l.b16 %v4231
        %v4249 = vunpack.c.h.b16 %v4231
        %v4250 = vunpack.c.l.b16 %v4232
        %v4251 = vunpack.c.h.b16 %v4232
        %v4252 = vunpack.c.l.b16 %v4233
        %v4253 = vunpack.c.h.b16 %v4233
        %v4254 = vunpack.c.l.b16 %v4234
        %v4255 = vunpack.c.h.b16 %v4234
        %v4256 = vunpack.c.l.b16 %v4235
        %v4257 = vunpack.c.h.b16 %v4235
        %v4258 = vunpack.c.l.b16 %v4236
        %v4259 = vunpack.c.h.b16 %v4236
        %v4260 = vunpack.c.l.b16 %v4237
        %v4261 = vunpack.c.h.b16 %v4237
        %v4262 = vpack.c.b16 %v4246, %v4246
        %v4263 = vpack.c.b16 %v4247, %v4247
        %v4264 = vpack.c.b16 %v4248, %v4248
        %v4265 = vpack.c.b16 %v4249, %v4249
        %v4266 = vpack.c.b16 %v4250, %v4250
        %v4267 = vpack.c.b16 %v4251, %v4251
        %v4268 = vpack.c.b16 %v4252, %v4252
        %v4269 = vpack.c.b16 %v4253, %v4253
        %v4270 = vpack.c.b16 %v4254, %v4254
        %v4271 = vpack.c.b16 %v4255, %v4255
        %v4272 = vpack.c.b16 %v4256, %v4256
        %v4273 = vpack.c.b16 %v4257, %v4257
        %v4274 = vpack.c.b16 %v4258, %v4258
        %v4275 = vpack.c.b16 %v4259, %v4259
        %v4276 = vpack.c.b16 %v4260, %v4260
        %v4277 = vpack.c.b16 %v4261, %v4261
        %s4294 = scalar_lea.vmem %s599, 320 [#allocation7]
        %4295 = vst [vmem:[%s4294] sm:$0xf] %v4262
        %4296 = vst [vmem:[%s4294 + $0x4] sm:$0xf] %v4263
        %4297 = vst [vmem:[%s4294 + $0x8] sm:$0xf] %v4264
        %4298 = vst [vmem:[%s4294 + $0xc] sm:$0xf] %v4265
        %4299 = vst [vmem:[%s4294 + $0x10] sm:$0xf] %v4266
        %4300 = vst [vmem:[%s4294 + $0x14] sm:$0xf] %v4267
        %4301 = vst [vmem:[%s4294 + $0x18] sm:$0xf] %v4268
        %4302 = vst [vmem:[%s4294 + $0x1c] sm:$0xf] %v4269
        %4303 = vst [vmem:[%s4294 + $0x20] sm:$0xf] %v4270
        %4304 = vst [vmem:[%s4294 + $0x24] sm:$0xf] %v4271
        %4305 = vst [vmem:[%s4294 + $0x28] sm:$0xf] %v4272
        %4306 = vst [vmem:[%s4294 + $0x2c] sm:$0xf] %v4273
        %4307 = vst [vmem:[%s4294 + $0x30] sm:$0xf] %v4274
        %4308 = vst [vmem:[%s4294 + $0x34] sm:$0xf] %v4275
        %4309 = vst [vmem:[%s4294 + $0x38] sm:$0xf] %v4276
        %4310 = vst [vmem:[%s4294 + $0x3c] sm:$0xf] %v4277
        %4311 = vmatprep.subr.bf16.mxu0 0
        %4312 = vmatpush1.bf16.msra.mxu0 %v3954
        %4313 = vmatprep.subr.bf16.mxu0 0
        %4314 = vmatpush1.bf16.msra.mxu0 %v3955
        %4315 = vmatprep.subr.bf16.mxu0 0
        %4316 = vmatpush1.bf16.msra.mxu0 %v3956
        %4317 = vmatprep.subr.bf16.mxu0 0
        %4318 = vmatpush1.bf16.msra.mxu0 %v3957
        %4319 = vmatprep.subr.bf16.mxu0 0
        %4320 = vmatpush1.bf16.msra.mxu0 %v3958
        %4321 = vmatprep.subr.bf16.mxu0 0
        %4322 = vmatpush1.bf16.msra.mxu0 %v3959
        %4323 = vmatprep.subr.bf16.mxu0 0
        %4324 = vmatpush1.bf16.msra.mxu0 %v3960
        %4325 = vmatprep.subr.bf16.mxu0 0
        %4326 = vmatpush1.bf16.msra.mxu0 %v3961
        %4327 = vmatprep.subr.bf16.mxu0 0
        %4328 = vmatpush1.bf16.msra.mxu0 0
        %4329 = vmatprep.subr.bf16.mxu0 0
        %4330 = vmatpush1.bf16.msra.mxu0 0
        %4331 = vmatprep.subr.bf16.mxu0 0
        %4332 = vmatpush1.bf16.msra.mxu0 0
        %4333 = vmatprep.subr.bf16.mxu0 0
        %4334 = vmatpush1.bf16.msra.mxu0 0
        %4335 = vmatprep.subr.bf16.mxu0 0
        %4336 = vmatpush1.bf16.msra.mxu0 0
        %4337 = vmatprep.subr.bf16.mxu0 0
        %4338 = vmatpush1.bf16.msra.mxu0 0
        %4339 = vmatprep.subr.bf16.mxu0 0
        %4340 = vmatpush1.bf16.msra.mxu0 0
        %4341 = vmatprep.subr.bf16.mxu0 0
        %4342 = vmatpush1.bf16.msra.mxu0 0
        %4343 = vmatprep.mubr.bf16.mxu0 0
        %4344 = vmatmul.mubr.bf16.gmra.mrb[0].mxu0 %v4230
        %v4345 = vpop.f32.mrb[0].mxu0
        %v4346 = vadd.f32 0.0, %v4345
        %v4347 = vpop.f32.mrb[0].mxu0
        %v4348 = vpop.f32.mrb[0].mxu0
        %v4349 = vadd.f32 0.0, %v4348
        %v4350 = vpop.f32.mrb[0].mxu0
        %4351 = vmatprep.mubr.bf16.mxu0 0
        %4352 = vmatmul.mubr.bf16.gmra.mrb[0].mxu0 %v4231
        %v4353 = vpop.f32.mrb[0].mxu0
        %v4354 = vadd.f32 0.0, %v4353
        %v4355 = vpop.f32.mrb[0].mxu0
        %v4356 = vpop.f32.mrb[0].mxu0
        %v4357 = vadd.f32 0.0, %v4356
        %v4358 = vpop.f32.mrb[0].mxu0
        %4359 = vmatprep.mubr.bf16.mxu0 0
        %4360 = vmatmul.mubr.bf16.gmra.mrb[0].mxu0 %v4232
        %v4361 = vpop.f32.mrb[0].mxu0
        %v4362 = vadd.f32 0.0, %v4361
        %v4363 = vpop.f32.mrb[0].mxu0
        %v4364 = vpop.f32.mrb[0].mxu0
        %v4365 = vadd.f32 0.0, %v4364
        %v4366 = vpop.f32.mrb[0].mxu0
        %4367 = vmatprep.mubr.bf16.mxu0 0
        %4368 = vmatmul.mubr.bf16.gmra.mrb[0].mxu0 %v4233
        %v4369 = vpop.f32.mrb[0].mxu0
        %v4370 = vadd.f32 0.0, %v4369
        %v4371 = vpop.f32.mrb[0].mxu0
        %v4372 = vpop.f32.mrb[0].mxu0
        %v4373 = vadd.f32 0.0, %v4372
        %v4374 = vpop.f32.mrb[0].mxu0
        %4375 = vmatprep.mubr.bf16.mxu0 0
        %4376 = vmatmul.mubr.bf16.gmra.mrb[0].mxu0 %v4234
        %v4377 = vpop.f32.mrb[0].mxu0
        %v4378 = vadd.f32 0.0, %v4377
        %v4379 = vpop.f32.mrb[0].mxu0
        %v4380 = vpop.f32.mrb[0].mxu0
        %v4381 = vadd.f32 0.0, %v4380
        %v4382 = vpop.f32.mrb[0].mxu0
        %4383 = vmatprep.mubr.bf16.mxu0 0
        %4384 = vmatmul.mubr.bf16.gmra.mrb[0].mxu0 %v4235
        %v4385 = vpop.f32.mrb[0].mxu0
        %v4386 = vadd.f32 0.0, %v4385
        %v4387 = vpop.f32.mrb[0].mxu0
        %v4388 = vpop.f32.mrb[0].mxu0
        %v4389 = vadd.f32 0.0, %v4388
        %v4390 = vpop.f32.mrb[0].mxu0
        %4391 = vmatprep.mubr.bf16.mxu0 0
        %4392 = vmatmul.mubr.bf16.gmra.mrb[0].mxu0 %v4236
        %v4393 = vpop.f32.mrb[0].mxu0
        %v4394 = vadd.f32 0.0, %v4393
        %v4395 = vpop.f32.mrb[0].mxu0
        %v4396 = vpop.f32.mrb[0].mxu0
        %v4397 = vadd.f32 0.0, %v4396
        %v4398 = vpop.f32.mrb[0].mxu0
        %4399 = vmatprep.mubr.bf16.mxu0 0
        %4400 = vmatmul.mubr.bf16.gmra.mrb[0].mxu0 %v4237
        %v4401 = vpop.f32.mrb[0].mxu0
        %v4402 = vadd.f32 0.0, %v4401
        %v4403 = vpop.f32.mrb[0].mxu0
        %v4404 = vpop.f32.mrb[0].mxu0
        %v4405 = vadd.f32 0.0, %v4404
        %v4406 = vpop.f32.mrb[0].mxu0
        %4407 = vdwg.mxu0
        %4424 = vrot.lane.b32.xlu0 %v4346, 8
        %v4425 = vpop.permute.xlu0 %4424
        %4426 = vrot.lane.b32.xlu0 %v4349, 8
        %v4427 = vpop.permute.xlu0 %4426
        %4428 = vrot.lane.b32.xlu0 %v4354, 8
        %v4429 = vpop.permute.xlu0 %4428
        %4430 = vrot.lane.b32.xlu0 %v4357, 8
        %v4431 = vpop.permute.xlu0 %4430
        %4432 = vrot.lane.b32.xlu0 %v4362, 8
        %v4433 = vpop.permute.xlu0 %4432
        %4434 = vrot.lane.b32.xlu0 %v4365, 8
        %v4435 = vpop.permute.xlu0 %4434
        %4436 = vrot.lane.b32.xlu0 %v4370, 8
        %v4437 = vpop.permute.xlu0 %4436
        %4438 = vrot.lane.b32.xlu0 %v4373, 8
        %v4439 = vpop.permute.xlu0 %4438
        %4440 = vrot.lane.b32.xlu0 %v4378, 8
        %v4441 = vpop.permute.xlu0 %4440
        %4442 = vrot.lane.b32.xlu0 %v4381, 8
        %v4443 = vpop.permute.xlu0 %4442
        %4444 = vrot.lane.b32.xlu0 %v4386, 8
        %v4445 = vpop.permute.xlu0 %4444
        %4446 = vrot.lane.b32.xlu0 %v4389, 8
        %v4447 = vpop.permute.xlu0 %4446
        %4448 = vrot.lane.b32.xlu0 %v4394, 8
        %v4449 = vpop.permute.xlu0 %4448
        %4450 = vrot.lane.b32.xlu0 %v4397, 8
        %v4451 = vpop.permute.xlu0 %4450
        %4452 = vrot.lane.b32.xlu0 %v4402, 8
        %v4453 = vpop.permute.xlu0 %4452
        %4454 = vrot.lane.b32.xlu0 %v4405, 8
        %v4455 = vpop.permute.xlu0 %4454
        %4472 = vst.msk [vmem:[#allocation2 + $0x80] sm:$0xff] %vm2105, %v4425
        %4473 = vst.msk [vmem:[#allocation2 + $0x88] sm:$0xff] %vm2105, %v4427
        %4474 = vst.msk [vmem:[#allocation2 + $0x90] sm:$0xff] %vm2105, %v4429
        %4475 = vst.msk [vmem:[#allocation2 + $0x98] sm:$0xff] %vm2105, %v4431
        %4476 = vst.msk [vmem:[#allocation2 + $0xa0] sm:$0xff] %vm2105, %v4433
        %4477 = vst.msk [vmem:[#allocation2 + $0xa8] sm:$0xff] %vm2105, %v4435
        %4478 = vst.msk [vmem:[#allocation2 + $0xb0] sm:$0xff] %vm2105, %v4437
        %4479 = vst.msk [vmem:[#allocation2 + $0xb8] sm:$0xff] %vm2105, %v4439
        %4480 = vst.msk [vmem:[#allocation2 + $0xc0] sm:$0xff] %vm2105, %v4441
        %4481 = vst.msk [vmem:[#allocation2 + $0xc8] sm:$0xff] %vm2105, %v4443
        %4482 = vst.msk [vmem:[#allocation2 + $0xd0] sm:$0xff] %vm2105, %v4445
        %4483 = vst.msk [vmem:[#allocation2 + $0xd8] sm:$0xff] %vm2105, %v4447
        %4484 = vst.msk [vmem:[#allocation2 + $0xe0] sm:$0xff] %vm2105, %v4449
        %4485 = vst.msk [vmem:[#allocation2 + $0xe8] sm:$0xff] %vm2105, %v4451
        %4486 = vst.msk [vmem:[#allocation2 + $0xf0] sm:$0xff] %vm2105, %v4453
        %4487 = vst.msk [vmem:[#allocation2 + $0xf8] sm:$0xff] %vm2105, %v4455
        %4488 = vxpose.xlu0.b32.start [1/16] %v722, 128
        %4489 = vxpose.xlu0.b32.cont [2/16] 0.0, 128
        %4490 = vxpose.xlu0.b32.cont [3/16] 0.0, 128
        %4491 = vxpose.xlu0.b32.cont [4/16] 0.0, 128
        %4492 = vxpose.xlu0.b32.cont [5/16] 0.0, 128
        %4493 = vxpose.xlu0.b32.cont [6/16] 0.0, 128
        %4494 = vxpose.xlu0.b32.cont [7/16] 0.0, 128
        %4495 = vxpose.xlu0.b32.cont [8/16] 0.0, 128
        %4496 = vxpose.xlu0.b32.cont [9/16] 0.0, 128
        %4497 = vxpose.xlu0.b32.cont [10/16] 0.0, 128
        %4498 = vxpose.xlu0.b32.cont [11/16] 0.0, 128
        %4499 = vxpose.xlu0.b32.cont [12/16] 0.0, 128
        %4500 = vxpose.xlu0.b32.cont [13/16] 0.0, 128
        %4501 = vxpose.xlu0.b32.cont [14/16] 0.0, 128
        %4502 = vxpose.xlu0.b32.cont [15/16] 0.0, 128
        %4503 = vxpose.xlu0.b32.end [16/16] 0.0, 128
        %v4504 = vpop.trf.xlu0
        %v4505 = vpop.trf.xlu0
        %v4506 = vpop.trf.xlu0
        %v4507 = vpop.trf.xlu0
        %v4508 = vpop.trf.xlu0
        %v4509 = vpop.trf.xlu0
        %v4510 = vpop.trf.xlu0
        %v4511 = vpop.trf.xlu0
        %v4512 = vpop.trf.xlu0
        %v4513 = vpop.trf.xlu0
        %v4514 = vpop.trf.xlu0
        %v4515 = vpop.trf.xlu0
        %v4516 = vpop.trf.xlu0
        %v4517 = vpop.trf.xlu0
        %v4518 = vpop.trf.xlu0
        %v4519 = vpop.trf.xlu0
        %v4520 = vpack.c.bf16 %v4505, %v4504
        %v4521 = vpack.c.bf16 %v4507, %v4506
        %v4522 = vpack.c.bf16 %v4509, %v4508
        %v4523 = vpack.c.bf16 %v4511, %v4510
        %v4524 = vpack.c.bf16 %v4513, %v4512
        %v4525 = vpack.c.bf16 %v4515, %v4514
        %v4526 = vpack.c.bf16 %v4517, %v4516
        %v4527 = vpack.c.bf16 %v4519, %v4518
        %v4528 = vpack.c.bf16 %v843, %v843
        %4529 = vxpose.xlu0.b32.start [1/16] %v964, 128
        %4530 = vxpose.xlu0.b32.cont [2/16] 0.0, 128
        %4531 = vxpose.xlu0.b32.cont [3/16] 0.0, 128
        %4532 = vxpose.xlu0.b32.cont [4/16] 0.0, 128
        %4533 = vxpose.xlu0.b32.cont [5/16] 0.0, 128
        %4534 = vxpose.xlu0.b32.cont [6/16] 0.0, 128
        %4535 = vxpose.xlu0.b32.cont [7/16] 0.0, 128
        %4536 = vxpose.xlu0.b32.cont [8/16] 0.0, 128
        %4537 = vxpose.xlu0.b32.cont [9/16] 0.0, 128
        %4538 = vxpose.xlu0.b32.cont [10/16] 0.0, 128
        %4539 = vxpose.xlu0.b32.cont [11/16] 0.0, 128
        %4540 = vxpose.xlu0.b32.cont [12/16] 0.0, 128
        %4541 = vxpose.xlu0.b32.cont [13/16] 0.0, 128
        %4542 = vxpose.xlu0.b32.cont [14/16] 0.0, 128
        %4543 = vxpose.xlu0.b32.cont [15/16] 0.0, 128
        %4544 = vxpose.xlu0.b32.end [16/16] 0.0, 128
        %v4545 = vpop.trf.xlu0
        %v4546 = vpop.trf.xlu0
        %v4547 = vpop.trf.xlu0
        %v4548 = vpop.trf.xlu0
        %v4549 = vpop.trf.xlu0
        %v4550 = vpop.trf.xlu0
        %v4551 = vpop.trf.xlu0
        %v4552 = vpop.trf.xlu0
        %v4553 = vpop.trf.xlu0
        %v4554 = vpop.trf.xlu0
        %v4555 = vpop.trf.xlu0
        %v4556 = vpop.trf.xlu0
        %v4557 = vpop.trf.xlu0
        %v4558 = vpop.trf.xlu0
        %v4559 = vpop.trf.xlu0
        %v4560 = vpop.trf.xlu0
        %v4561 = vpack.c.bf16 %v4546, %v4545
        %v4562 = vpack.c.bf16 %v4548, %v4547
        %v4563 = vpack.c.bf16 %v4550, %v4549
        %v4564 = vpack.c.bf16 %v4552, %v4551
        %v4565 = vpack.c.bf16 %v4554, %v4553
        %v4566 = vpack.c.bf16 %v4556, %v4555
        %v4567 = vpack.c.bf16 %v4558, %v4557
        %v4568 = vpack.c.bf16 %v4560, %v4559
        %v4570 = vsel %vm1051, %v4520, 0
        %v4573 = vsel %vm1051, %v4521, 0
        %v4576 = vsel %vm1051, %v4522, 0
        %v4579 = vsel %vm1051, %v4523, 0
        %v4582 = vsel %vm1051, %v4524, 0
        %v4585 = vsel %vm1051, %v4525, 0
        %v4588 = vsel %vm1051, %v4526, 0
        %v4591 = vsel %vm1051, %v4527, 0
        %v4594 = vsel %vm1076, %v4528, 0
        %4596 = vmatprep.subr.bf16.mxu0 0
        %4597 = vmatpush1.bf16.msra.mxu0 %v4594
        %4598 = vmatprep.subr.bf16.mxu0 0
        %4599 = vmatpush1.bf16.msra.mxu0 0
        %4600 = vmatprep.subr.bf16.mxu0 0
        %4601 = vmatpush1.bf16.msra.mxu0 0
        %4602 = vmatprep.subr.bf16.mxu0 0
        %4603 = vmatpush1.bf16.msra.mxu0 0
        %4604 = vmatprep.subr.bf16.mxu0 0
        %4605 = vmatpush1.bf16.msra.mxu0 0
        %4606 = vmatprep.subr.bf16.mxu0 0
        %4607 = vmatpush1.bf16.msra.mxu0 0
        %4608 = vmatprep.subr.bf16.mxu0 0
        %4609 = vmatpush1.bf16.msra.mxu0 0
        %4610 = vmatprep.subr.bf16.mxu0 0
        %4611 = vmatpush1.bf16.msra.mxu0 0
        %4612 = vmatprep.subr.bf16.mxu0 0
        %4613 = vmatpush1.bf16.msra.mxu0 0
        %4614 = vmatprep.subr.bf16.mxu0 0
        %4615 = vmatpush1.bf16.msra.mxu0 0
        %4616 = vmatprep.subr.bf16.mxu0 0
        %4617 = vmatpush1.bf16.msra.mxu0 0
        %4618 = vmatprep.subr.bf16.mxu0 0
        %4619 = vmatpush1.bf16.msra.mxu0 0
        %4620 = vmatprep.subr.bf16.mxu0 0
        %4621 = vmatpush1.bf16.msra.mxu0 0
        %4622 = vmatprep.subr.bf16.mxu0 0
        %4623 = vmatpush1.bf16.msra.mxu0 0
        %4624 = vmatprep.subr.bf16.mxu0 0
        %4625 = vmatpush1.bf16.msra.mxu0 0
        %4626 = vmatprep.subr.bf16.mxu0 0
        %4627 = vmatpush1.bf16.msra.mxu0 0
        %4628 = vmatprep.mubr.bf16.mxu0 0
        %4629 = vmatmul.mubr.bf16.gmra.mrb[0].mxu0 %v4570
        %v4630 = vpop.f32.mrb[0].mxu0
        %v4631 = vadd.f32 0.0, %v4630
        %v4632 = vpop.f32.mrb[0].mxu0
        %v4633 = vpop.f32.mrb[0].mxu0
        %v4634 = vadd.f32 0.0, %v4633
        %v4635 = vpop.f32.mrb[0].mxu0
        %4636 = vmatprep.mubr.bf16.mxu0 0
        %4637 = vmatmul.mubr.bf16.gmra.mrb[0].mxu0 %v4573
        %v4638 = vpop.f32.mrb[0].mxu0
        %v4639 = vadd.f32 0.0, %v4638
        %v4640 = vpop.f32.mrb[0].mxu0
        %v4641 = vpop.f32.mrb[0].mxu0
        %v4642 = vadd.f32 0.0, %v4641
        %v4643 = vpop.f32.mrb[0].mxu0
        %4644 = vmatprep.mubr.bf16.mxu0 0
        %4645 = vmatmul.mubr.bf16.gmra.mrb[0].mxu0 %v4576
        %v4646 = vpop.f32.mrb[0].mxu0
        %v4647 = vadd.f32 0.0, %v4646
        %v4648 = vpop.f32.mrb[0].mxu0
        %v4649 = vpop.f32.mrb[0].mxu0
        %v4650 = vadd.f32 0.0, %v4649
        %v4651 = vpop.f32.mrb[0].mxu0
        %4652 = vmatprep.mubr.bf16.mxu0 0
        %4653 = vmatmul.mubr.bf16.gmra.mrb[0].mxu0 %v4579
        %v4654 = vpop.f32.mrb[0].mxu0
        %v4655 = vadd.f32 0.0, %v4654
        %v4656 = vpop.f32.mrb[0].mxu0
        %v4657 = vpop.f32.mrb[0].mxu0
        %v4658 = vadd.f32 0.0, %v4657
        %v4659 = vpop.f32.mrb[0].mxu0
        %4660 = vmatprep.mubr.bf16.mxu0 0
        %4661 = vmatmul.mubr.bf16.gmra.mrb[0].mxu0 %v4582
        %v4662 = vpop.f32.mrb[0].mxu0
        %v4663 = vadd.f32 0.0, %v4662
        %v4664 = vpop.f32.mrb[0].mxu0
        %v4665 = vpop.f32.mrb[0].mxu0
        %v4666 = vadd.f32 0.0, %v4665
        %v4667 = vpop.f32.mrb[0].mxu0
        %4668 = vmatprep.mubr.bf16.mxu0 0
        %4669 = vmatmul.mubr.bf16.gmra.mrb[0].mxu0 %v4585
        %v4670 = vpop.f32.mrb[0].mxu0
        %v4671 = vadd.f32 0.0, %v4670
        %v4672 = vpop.f32.mrb[0].mxu0
        %v4673 = vpop.f32.mrb[0].mxu0
        %v4674 = vadd.f32 0.0, %v4673
        %v4675 = vpop.f32.mrb[0].mxu0
        %4676 = vmatprep.mubr.bf16.mxu0 0
        %4677 = vmatmul.mubr.bf16.gmra.mrb[0].mxu0 %v4588
        %v4678 = vpop.f32.mrb[0].mxu0
        %v4679 = vadd.f32 0.0, %v4678
        %v4680 = vpop.f32.mrb[0].mxu0
        %v4681 = vpop.f32.mrb[0].mxu0
        %v4682 = vadd.f32 0.0, %v4681
        %v4683 = vpop.f32.mrb[0].mxu0
        %4684 = vmatprep.mubr.bf16.mxu0 0
        %4685 = vmatmul.mubr.bf16.gmra.mrb[0].mxu0 %v4591
        %v4686 = vpop.f32.mrb[0].mxu0
        %v4687 = vadd.f32 0.0, %v4686
        %v4688 = vpop.f32.mrb[0].mxu0
        %v4689 = vpop.f32.mrb[0].mxu0
        %v4690 = vadd.f32 0.0, %v4689
        %v4691 = vpop.f32.mrb[0].mxu0
        %4692 = vdwg.mxu0
        %4693 = vmax.xlane.f32.xlu0 %v4631
        %v4694 = vpop.xlane.xlu0 %4693
        %4695 = vmax.xlane.f32.xlu0 %v4634
        %v4696 = vpop.xlane.xlu0 %4695
        %4697 = vmax.xlane.f32.xlu0 %v4639
        %v4698 = vpop.xlane.xlu0 %4697
        %4699 = vmax.xlane.f32.xlu0 %v4642
        %v4700 = vpop.xlane.xlu0 %4699
        %4701 = vmax.xlane.f32.xlu0 %v4647
        %v4702 = vpop.xlane.xlu0 %4701
        %4703 = vmax.xlane.f32.xlu0 %v4650
        %v4704 = vpop.xlane.xlu0 %4703
        %4705 = vmax.xlane.f32.xlu0 %v4655
        %v4706 = vpop.xlane.xlu0 %4705
        %4707 = vmax.xlane.f32.xlu0 %v4658
        %v4708 = vpop.xlane.xlu0 %4707
        %4709 = vmax.xlane.f32.xlu0 %v4663
        %v4710 = vpop.xlane.xlu0 %4709
        %4711 = vmax.xlane.f32.xlu0 %v4666
        %v4712 = vpop.xlane.xlu0 %4711
        %4713 = vmax.xlane.f32.xlu0 %v4671
        %v4714 = vpop.xlane.xlu0 %4713
        %4715 = vmax.xlane.f32.xlu0 %v4674
        %v4716 = vpop.xlane.xlu0 %4715
        %4717 = vmax.xlane.f32.xlu0 %v4679
        %v4718 = vpop.xlane.xlu0 %4717
        %4719 = vmax.xlane.f32.xlu0 %v4682
        %v4720 = vpop.xlane.xlu0 %4719
        %4721 = vmax.xlane.f32.xlu0 %v4687
        %v4722 = vpop.xlane.xlu0 %4721
        %4723 = vmax.xlane.f32.xlu0 %v4690
        %v4724 = vpop.xlane.xlu0 %4723
        %v4725 = vsub.f32 %v4631, %v4694
        %v4726 = vsub.f32 %v4634, %v4696
        %v4727 = vsub.f32 %v4639, %v4698
        %v4728 = vsub.f32 %v4642, %v4700
        %v4729 = vsub.f32 %v4647, %v4702
        %v4730 = vsub.f32 %v4650, %v4704
        %v4731 = vsub.f32 %v4655, %v4706
        %v4732 = vsub.f32 %v4658, %v4708
        %v4733 = vsub.f32 %v4663, %v4710
        %v4734 = vsub.f32 %v4666, %v4712
        %v4735 = vsub.f32 %v4671, %v4714
        %v4736 = vsub.f32 %v4674, %v4716
        %v4737 = vsub.f32 %v4679, %v4718
        %v4738 = vsub.f32 %v4682, %v4720
        %v4739 = vsub.f32 %v4687, %v4722
        %v4740 = vsub.f32 %v4690, %v4724
        %v4741 = vmul.f32 %v4725, 1.442695
        %v4742 = vpow.pop %v4741
        %v4743 = vmul.f32 %v4726, 1.442695
        %v4744 = vpow.pop %v4743
        %v4745 = vmul.f32 %v4727, 1.442695
        %v4746 = vpow.pop %v4745
        %v4747 = vmul.f32 %v4728, 1.442695
        %v4748 = vpow.pop %v4747
        %v4749 = vmul.f32 %v4729, 1.442695
        %v4750 = vpow.pop %v4749
        %v4751 = vmul.f32 %v4730, 1.442695
        %v4752 = vpow.pop %v4751
        %v4753 = vmul.f32 %v4731, 1.442695
        %v4754 = vpow.pop %v4753
        %v4755 = vmul.f32 %v4732, 1.442695
        %v4756 = vpow.pop %v4755
        %v4757 = vmul.f32 %v4733, 1.442695
        %v4758 = vpow.pop %v4757
        %v4759 = vmul.f32 %v4734, 1.442695
        %v4760 = vpow.pop %v4759
        %v4761 = vmul.f32 %v4735, 1.442695
        %v4762 = vpow.pop %v4761
        %v4763 = vmul.f32 %v4736, 1.442695
        %v4764 = vpow.pop %v4763
        %v4765 = vmul.f32 %v4737, 1.442695
        %v4766 = vpow.pop %v4765
        %v4767 = vmul.f32 %v4738, 1.442695
        %v4768 = vpow.pop %v4767
        %v4769 = vmul.f32 %v4739, 1.442695
        %v4770 = vpow.pop %v4769
        %v4771 = vmul.f32 %v4740, 1.442695
        %v4772 = vpow.pop %v4771
        %4773 = vadd.xlane.f32.xlu0 %v4742
        %v4774 = vpop.xlane.xlu0 %4773
        %4775 = vadd.xlane.f32.xlu0 %v4744
        %v4776 = vpop.xlane.xlu0 %4775
        %4777 = vadd.xlane.f32.xlu0 %v4746
        %v4778 = vpop.xlane.xlu0 %4777
        %4779 = vadd.xlane.f32.xlu0 %v4748
        %v4780 = vpop.xlane.xlu0 %4779
        %4781 = vadd.xlane.f32.xlu0 %v4750
        %v4782 = vpop.xlane.xlu0 %4781
        %4783 = vadd.xlane.f32.xlu0 %v4752
        %v4784 = vpop.xlane.xlu0 %4783
        %4785 = vadd.xlane.f32.xlu0 %v4754
        %v4786 = vpop.xlane.xlu0 %4785
        %4787 = vadd.xlane.f32.xlu0 %v4756
        %v4788 = vpop.xlane.xlu0 %4787
        %4789 = vadd.xlane.f32.xlu0 %v4758
        %v4790 = vpop.xlane.xlu0 %4789
        %4791 = vadd.xlane.f32.xlu0 %v4760
        %v4792 = vpop.xlane.xlu0 %4791
        %4793 = vadd.xlane.f32.xlu0 %v4762
        %v4794 = vpop.xlane.xlu0 %4793
        %4795 = vadd.xlane.f32.xlu0 %v4764
        %v4796 = vpop.xlane.xlu0 %4795
        %4797 = vadd.xlane.f32.xlu0 %v4766
        %v4798 = vpop.xlane.xlu0 %4797
        %4799 = vadd.xlane.f32.xlu0 %v4768
        %v4800 = vpop.xlane.xlu0 %4799
        %4801 = vadd.xlane.f32.xlu0 %v4770
        %v4802 = vpop.xlane.xlu0 %4801
        %4803 = vadd.xlane.f32.xlu0 %v4772
        %v4804 = vpop.xlane.xlu0 %4803
        %v4805 = vrcp.pop %v4774
        %v4806 = vrcp.pop %v4776
        %v4807 = vrcp.pop %v4778
        %v4808 = vrcp.pop %v4780
        %v4809 = vrcp.pop %v4782
        %v4810 = vrcp.pop %v4784
        %v4811 = vrcp.pop %v4786
        %v4812 = vrcp.pop %v4788
        %v4813 = vrcp.pop %v4790
        %v4814 = vrcp.pop %v4792
        %v4815 = vrcp.pop %v4794
        %v4816 = vrcp.pop %v4796
        %v4817 = vrcp.pop %v4798
        %v4818 = vrcp.pop %v4800
        %v4819 = vrcp.pop %v4802
        %v4820 = vrcp.pop %v4804
        %v4821 = vmul.f32 %v4742, %v4805
        %v4822 = vmul.f32 %v4744, %v4806
        %v4823 = vmul.f32 %v4746, %v4807
        %v4824 = vmul.f32 %v4748, %v4808
        %v4825 = vmul.f32 %v4750, %v4809
        %v4826 = vmul.f32 %v4752, %v4810
        %v4827 = vmul.f32 %v4754, %v4811
        %v4828 = vmul.f32 %v4756, %v4812
        %v4829 = vmul.f32 %v4758, %v4813
        %v4830 = vmul.f32 %v4760, %v4814
        %v4831 = vmul.f32 %v4762, %v4815
        %v4832 = vmul.f32 %v4764, %v4816
        %v4833 = vmul.f32 %v4766, %v4817
        %v4834 = vmul.f32 %v4768, %v4818
        %v4835 = vmul.f32 %v4770, %v4819
        %v4836 = vmul.f32 %v4772, %v4820
        %v4837 = vpack.c.bf16 %v4822, %v4821
        %v4838 = vpack.c.bf16 %v4824, %v4823
        %v4839 = vpack.c.bf16 %v4826, %v4825
        %v4840 = vpack.c.bf16 %v4828, %v4827
        %v4841 = vpack.c.bf16 %v4830, %v4829
        %v4842 = vpack.c.bf16 %v4832, %v4831
        %v4843 = vpack.c.bf16 %v4834, %v4833
        %v4844 = vpack.c.bf16 %v4836, %v4835
        %v4853 = vunpack.c.l.b16 %v4837
        %v4854 = vunpack.c.h.b16 %v4837
        %v4855 = vunpack.c.l.b16 %v4838
        %v4856 = vunpack.c.h.b16 %v4838
        %v4857 = vunpack.c.l.b16 %v4839
        %v4858 = vunpack.c.h.b16 %v4839
        %v4859 = vunpack.c.l.b16 %v4840
        %v4860 = vunpack.c.h.b16 %v4840
        %v4861 = vunpack.c.l.b16 %v4841
        %v4862 = vunpack.c.h.b16 %v4841
        %v4863 = vunpack.c.l.b16 %v4842
        %v4864 = vunpack.c.h.b16 %v4842
        %v4865 = vunpack.c.l.b16 %v4843
        %v4866 = vunpack.c.h.b16 %v4843
        %v4867 = vunpack.c.l.b16 %v4844
        %v4868 = vunpack.c.h.b16 %v4844
        %v4869 = vpack.c.b16 %v4853, %v4853
        %v4870 = vpack.c.b16 %v4854, %v4854
        %v4871 = vpack.c.b16 %v4855, %v4855
        %v4872 = vpack.c.b16 %v4856, %v4856
        %v4873 = vpack.c.b16 %v4857, %v4857
        %v4874 = vpack.c.b16 %v4858, %v4858
        %v4875 = vpack.c.b16 %v4859, %v4859
        %v4876 = vpack.c.b16 %v4860, %v4860
        %v4877 = vpack.c.b16 %v4861, %v4861
        %v4878 = vpack.c.b16 %v4862, %v4862
        %v4879 = vpack.c.b16 %v4863, %v4863
        %v4880 = vpack.c.b16 %v4864, %v4864
        %v4881 = vpack.c.b16 %v4865, %v4865
        %v4882 = vpack.c.b16 %v4866, %v4866
        %v4883 = vpack.c.b16 %v4867, %v4867
        %v4884 = vpack.c.b16 %v4868, %v4868
        %s4901 = scalar_lea.vmem %s599, 384 [#allocation7]
        %4902 = vst [vmem:[%s4901] sm:$0xf] %v4869
        %4903 = vst [vmem:[%s4901 + $0x4] sm:$0xf] %v4870
        %4904 = vst [vmem:[%s4901 + $0x8] sm:$0xf] %v4871
        %4905 = vst [vmem:[%s4901 + $0xc] sm:$0xf] %v4872
        %4906 = vst [vmem:[%s4901 + $0x10] sm:$0xf] %v4873
        %4907 = vst [vmem:[%s4901 + $0x14] sm:$0xf] %v4874
        %4908 = vst [vmem:[%s4901 + $0x18] sm:$0xf] %v4875
        %4909 = vst [vmem:[%s4901 + $0x1c] sm:$0xf] %v4876
        %4910 = vst [vmem:[%s4901 + $0x20] sm:$0xf] %v4877
        %4911 = vst [vmem:[%s4901 + $0x24] sm:$0xf] %v4878
        %4912 = vst [vmem:[%s4901 + $0x28] sm:$0xf] %v4879
        %4913 = vst [vmem:[%s4901 + $0x2c] sm:$0xf] %v4880
        %4914 = vst [vmem:[%s4901 + $0x30] sm:$0xf] %v4881
        %4915 = vst [vmem:[%s4901 + $0x34] sm:$0xf] %v4882
        %4916 = vst [vmem:[%s4901 + $0x38] sm:$0xf] %v4883
        %4917 = vst [vmem:[%s4901 + $0x3c] sm:$0xf] %v4884
        %4918 = vmatprep.subr.bf16.mxu0 0
        %4919 = vmatpush1.bf16.msra.mxu0 %v4561
        %4920 = vmatprep.subr.bf16.mxu0 0
        %4921 = vmatpush1.bf16.msra.mxu0 %v4562
        %4922 = vmatprep.subr.bf16.mxu0 0
        %4923 = vmatpush1.bf16.msra.mxu0 %v4563
        %4924 = vmatprep.subr.bf16.mxu0 0
        %4925 = vmatpush1.bf16.msra.mxu0 %v4564
        %4926 = vmatprep.subr.bf16.mxu0 0
        %4927 = vmatpush1.bf16.msra.mxu0 %v4565
        %4928 = vmatprep.subr.bf16.mxu0 0
        %4929 = vmatpush1.bf16.msra.mxu0 %v4566
        %4930 = vmatprep.subr.bf16.mxu0 0
        %4931 = vmatpush1.bf16.msra.mxu0 %v4567
        %4932 = vmatprep.subr.bf16.mxu0 0
        %4933 = vmatpush1.bf16.msra.mxu0 %v4568
        %4934 = vmatprep.subr.bf16.mxu0 0
        %4935 = vmatpush1.bf16.msra.mxu0 0
        %4936 = vmatprep.subr.bf16.mxu0 0
        %4937 = vmatpush1.bf16.msra.mxu0 0
        %4938 = vmatprep.subr.bf16.mxu0 0
        %4939 = vmatpush1.bf16.msra.mxu0 0
        %4940 = vmatprep.subr.bf16.mxu0 0
        %4941 = vmatpush1.bf16.msra.mxu0 0
        %4942 = vmatprep.subr.bf16.mxu0 0
        %4943 = vmatpush1.bf16.msra.mxu0 0
        %4944 = vmatprep.subr.bf16.mxu0 0
        %4945 = vmatpush1.bf16.msra.mxu0 0
        %4946 = vmatprep.subr.bf16.mxu0 0
        %4947 = vmatpush1.bf16.msra.mxu0 0
        %4948 = vmatprep.subr.bf16.mxu0 0
        %4949 = vmatpush1.bf16.msra.mxu0 0
        %4950 = vmatprep.mubr.bf16.mxu0 0
        %4951 = vmatmul.mubr.bf16.gmra.mrb[0].mxu0 %v4837
        %v4952 = vpop.f32.mrb[0].mxu0
        %v4953 = vadd.f32 0.0, %v4952
        %v4954 = vpop.f32.mrb[0].mxu0
        %v4955 = vpop.f32.mrb[0].mxu0
        %v4956 = vadd.f32 0.0, %v4955
        %v4957 = vpop.f32.mrb[0].mxu0
        %4958 = vmatprep.mubr.bf16.mxu0 0
        %4959 = vmatmul.mubr.bf16.gmra.mrb[0].mxu0 %v4838
        %v4960 = vpop.f32.mrb[0].mxu0
        %v4961 = vadd.f32 0.0, %v4960
        %v4962 = vpop.f32.mrb[0].mxu0
        %v4963 = vpop.f32.mrb[0].mxu0
        %v4964 = vadd.f32 0.0, %v4963
        %v4965 = vpop.f32.mrb[0].mxu0
        %4966 = vmatprep.mubr.bf16.mxu0 0
        %4967 = vmatmul.mubr.bf16.gmra.mrb[0].mxu0 %v4839
        %v4968 = vpop.f32.mrb[0].mxu0
        %v4969 = vadd.f32 0.0, %v4968
        %v4970 = vpop.f32.mrb[0].mxu0
        %v4971 = vpop.f32.mrb[0].mxu0
        %v4972 = vadd.f32 0.0, %v4971
        %v4973 = vpop.f32.mrb[0].mxu0
        %4974 = vmatprep.mubr.bf16.mxu0 0
        %4975 = vmatmul.mubr.bf16.gmra.mrb[0].mxu0 %v4840
        %v4976 = vpop.f32.mrb[0].mxu0
        %v4977 = vadd.f32 0.0, %v4976
        %v4978 = vpop.f32.mrb[0].mxu0
        %v4979 = vpop.f32.mrb[0].mxu0
        %v4980 = vadd.f32 0.0, %v4979
        %v4981 = vpop.f32.mrb[0].mxu0
        %4982 = vmatprep.mubr.bf16.mxu0 0
        %4983 = vmatmul.mubr.bf16.gmra.mrb[0].mxu0 %v4841
        %v4984 = vpop.f32.mrb[0].mxu0
        %v4985 = vadd.f32 0.0, %v4984
        %v4986 = vpop.f32.mrb[0].mxu0
        %v4987 = vpop.f32.mrb[0].mxu0
        %v4988 = vadd.f32 0.0, %v4987
        %v4989 = vpop.f32.mrb[0].mxu0
        %4990 = vmatprep.mubr.bf16.mxu0 0
        %4991 = vmatmul.mubr.bf16.gmra.mrb[0].mxu0 %v4842
        %v4992 = vpop.f32.mrb[0].mxu0
        %v4993 = vadd.f32 0.0, %v4992
        %v4994 = vpop.f32.mrb[0].mxu0
        %v4995 = vpop.f32.mrb[0].mxu0
        %v4996 = vadd.f32 0.0, %v4995
        %v4997 = vpop.f32.mrb[0].mxu0
        %4998 = vmatprep.mubr.bf16.mxu0 0
        %4999 = vmatmul.mubr.bf16.gmra.mrb[0].mxu0 %v4843
        %v5000 = vpop.f32.mrb[0].mxu0
        %v5001 = vadd.f32 0.0, %v5000
        %v5002 = vpop.f32.mrb[0].mxu0
        %v5003 = vpop.f32.mrb[0].mxu0
        %v5004 = vadd.f32 0.0, %v5003
        %v5005 = vpop.f32.mrb[0].mxu0
        %5006 = vmatprep.mubr.bf16.mxu0 0
        %5007 = vmatmul.mubr.bf16.gmra.mrb[0].mxu0 %v4844
        %v5008 = vpop.f32.mrb[0].mxu0
        %v5009 = vadd.f32 0.0, %v5008
        %v5010 = vpop.f32.mrb[0].mxu0
        %v5011 = vpop.f32.mrb[0].mxu0
        %v5012 = vadd.f32 0.0, %v5011
        %v5013 = vpop.f32.mrb[0].mxu0
        %5014 = vdwg.mxu0
        %5031 = vrot.lane.b32.xlu0 %v4953, 16
        %v5032 = vpop.permute.xlu0 %5031
        %5033 = vrot.lane.b32.xlu0 %v4956, 16
        %v5034 = vpop.permute.xlu0 %5033
        %5035 = vrot.lane.b32.xlu0 %v4961, 16
        %v5036 = vpop.permute.xlu0 %5035
        %5037 = vrot.lane.b32.xlu0 %v4964, 16
        %v5038 = vpop.permute.xlu0 %5037
        %5039 = vrot.lane.b32.xlu0 %v4969, 16
        %v5040 = vpop.permute.xlu0 %5039
        %5041 = vrot.lane.b32.xlu0 %v4972, 16
        %v5042 = vpop.permute.xlu0 %5041
        %5043 = vrot.lane.b32.xlu0 %v4977, 16
        %v5044 = vpop.permute.xlu0 %5043
        %5045 = vrot.lane.b32.xlu0 %v4980, 16
        %v5046 = vpop.permute.xlu0 %5045
        %5047 = vrot.lane.b32.xlu0 %v4985, 16
        %v5048 = vpop.permute.xlu0 %5047
        %5049 = vrot.lane.b32.xlu0 %v4988, 16
        %v5050 = vpop.permute.xlu0 %5049
        %5051 = vrot.lane.b32.xlu0 %v4993, 16
        %v5052 = vpop.permute.xlu0 %5051
        %5053 = vrot.lane.b32.xlu0 %v4996, 16
        %v5054 = vpop.permute.xlu0 %5053
        %5055 = vrot.lane.b32.xlu0 %v5001, 16
        %v5056 = vpop.permute.xlu0 %5055
        %5057 = vrot.lane.b32.xlu0 %v5004, 16
        %v5058 = vpop.permute.xlu0 %5057
        %5059 = vrot.lane.b32.xlu0 %v5009, 16
        %v5060 = vpop.permute.xlu0 %5059
        %5061 = vrot.lane.b32.xlu0 %v5012, 16
        %v5062 = vpop.permute.xlu0 %5061
        %5079 = vst.msk [vmem:[#allocation2 + $0x80] sm:$0xff] %vm2713, %v5032
        %5080 = vst.msk [vmem:[#allocation2 + $0x88] sm:$0xff] %vm2713, %v5034
        %5081 = vst.msk [vmem:[#allocation2 + $0x90] sm:$0xff] %vm2713, %v5036
        %5082 = vst.msk [vmem:[#allocation2 + $0x98] sm:$0xff] %vm2713, %v5038
        %5083 = vst.msk [vmem:[#allocation2 + $0xa0] sm:$0xff] %vm2713, %v5040
        %5084 = vst.msk [vmem:[#allocation2 + $0xa8] sm:$0xff] %vm2713, %v5042
        %5085 = vst.msk [vmem:[#allocation2 + $0xb0] sm:$0xff] %vm2713, %v5044
        %5086 = vst.msk [vmem:[#allocation2 + $0xb8] sm:$0xff] %vm2713, %v5046
        %5087 = vst.msk [vmem:[#allocation2 + $0xc0] sm:$0xff] %vm2713, %v5048
        %5088 = vst.msk [vmem:[#allocation2 + $0xc8] sm:$0xff] %vm2713, %v5050
        %5089 = vst.msk [vmem:[#allocation2 + $0xd0] sm:$0xff] %vm2713, %v5052
        %5090 = vst.msk [vmem:[#allocation2 + $0xd8] sm:$0xff] %vm2713, %v5054
        %5091 = vst.msk [vmem:[#allocation2 + $0xe0] sm:$0xff] %vm2713, %v5056
        %5092 = vst.msk [vmem:[#allocation2 + $0xe8] sm:$0xff] %vm2713, %v5058
        %5093 = vst.msk [vmem:[#allocation2 + $0xf0] sm:$0xff] %vm2713, %v5060
        %5094 = vst.msk [vmem:[#allocation2 + $0xf8] sm:$0xff] %vm2713, %v5062
        %5095 = vxpose.xlu0.b32.start [1/16] %v726, 128
        %5096 = vxpose.xlu0.b32.cont [2/16] 0.0, 128
        %5097 = vxpose.xlu0.b32.cont [3/16] 0.0, 128
        %5098 = vxpose.xlu0.b32.cont [4/16] 0.0, 128
        %5099 = vxpose.xlu0.b32.cont [5/16] 0.0, 128
        %5100 = vxpose.xlu0.b32.cont [6/16] 0.0, 128
        %5101 = vxpose.xlu0.b32.cont [7/16] 0.0, 128
        %5102 = vxpose.xlu0.b32.cont [8/16] 0.0, 128
        %5103 = vxpose.xlu0.b32.cont [9/16] 0.0, 128
        %5104 = vxpose.xlu0.b32.cont [10/16] 0.0, 128
        %5105 = vxpose.xlu0.b32.cont [11/16] 0.0, 128
        %5106 = vxpose.xlu0.b32.cont [12/16] 0.0, 128
        %5107 = vxpose.xlu0.b32.cont [13/16] 0.0, 128
        %5108 = vxpose.xlu0.b32.cont [14/16] 0.0, 128
        %5109 = vxpose.xlu0.b32.cont [15/16] 0.0, 128
        %5110 = vxpose.xlu0.b32.end [16/16] 0.0, 128
        %v5111 = vpop.trf.xlu0
        %v5112 = vpop.trf.xlu0
        %v5113 = vpop.trf.xlu0
        %v5114 = vpop.trf.xlu0
        %v5115 = vpop.trf.xlu0
        %v5116 = vpop.trf.xlu0
        %v5117 = vpop.trf.xlu0
        %v5118 = vpop.trf.xlu0
        %v5119 = vpop.trf.xlu0
        %v5120 = vpop.trf.xlu0
        %v5121 = vpop.trf.xlu0
        %v5122 = vpop.trf.xlu0
        %v5123 = vpop.trf.xlu0
        %v5124 = vpop.trf.xlu0
        %v5125 = vpop.trf.xlu0
        %v5126 = vpop.trf.xlu0
        %v5127 = vpack.c.bf16 %v5112, %v5111
        %v5128 = vpack.c.bf16 %v5114, %v5113
        %v5129 = vpack.c.bf16 %v5116, %v5115
        %v5130 = vpack.c.bf16 %v5118, %v5117
        %v5131 = vpack.c.bf16 %v5120, %v5119
        %v5132 = vpack.c.bf16 %v5122, %v5121
        %v5133 = vpack.c.bf16 %v5124, %v5123
        %v5134 = vpack.c.bf16 %v5126, %v5125
        %v5135 = vpack.c.bf16 %v847, %v847
        %5136 = vxpose.xlu0.b32.start [1/16] %v968, 128
        %5137 = vxpose.xlu0.b32.cont [2/16] 0.0, 128
        %5138 = vxpose.xlu0.b32.cont [3/16] 0.0, 128
        %5139 = vxpose.xlu0.b32.cont [4/16] 0.0, 128
        %5140 = vxpose.xlu0.b32.cont [5/16] 0.0, 128
        %5141 = vxpose.xlu0.b32.cont [6/16] 0.0, 128
        %5142 = vxpose.xlu0.b32.cont [7/16] 0.0, 128
        %5143 = vxpose.xlu0.b32.cont [8/16] 0.0, 128
        %5144 = vxpose.xlu0.b32.cont [9/16] 0.0, 128
        %5145 = vxpose.xlu0.b32.cont [10/16] 0.0, 128
        %5146 = vxpose.xlu0.b32.cont [11/16] 0.0, 128
        %5147 = vxpose.xlu0.b32.cont [12/16] 0.0, 128
        %5148 = vxpose.xlu0.b32.cont [13/16] 0.0, 128
        %5149 = vxpose.xlu0.b32.cont [14/16] 0.0, 128
        %5150 = vxpose.xlu0.b32.cont [15/16] 0.0, 128
        %5151 = vxpose.xlu0.b32.end [16/16] 0.0, 128
        %v5152 = vpop.trf.xlu0
        %v5153 = vpop.trf.xlu0
        %v5154 = vpop.trf.xlu0
        %v5155 = vpop.trf.xlu0
        %v5156 = vpop.trf.xlu0
        %v5157 = vpop.trf.xlu0
        %v5158 = vpop.trf.xlu0
        %v5159 = vpop.trf.xlu0
        %v5160 = vpop.trf.xlu0
        %v5161 = vpop.trf.xlu0
        %v5162 = vpop.trf.xlu0
        %v5163 = vpop.trf.xlu0
        %v5164 = vpop.trf.xlu0
        %v5165 = vpop.trf.xlu0
        %v5166 = vpop.trf.xlu0
        %v5167 = vpop.trf.xlu0
        %v5168 = vpack.c.bf16 %v5153, %v5152
        %v5169 = vpack.c.bf16 %v5155, %v5154
        %v5170 = vpack.c.bf16 %v5157, %v5156
        %v5171 = vpack.c.bf16 %v5159, %v5158
        %v5172 = vpack.c.bf16 %v5161, %v5160
        %v5173 = vpack.c.bf16 %v5163, %v5162
        %v5174 = vpack.c.bf16 %v5165, %v5164
        %v5175 = vpack.c.bf16 %v5167, %v5166
        %v5177 = vsel %vm1051, %v5127, 0
        %v5180 = vsel %vm1051, %v5128, 0
        %v5183 = vsel %vm1051, %v5129, 0
        %v5186 = vsel %vm1051, %v5130, 0
        %v5189 = vsel %vm1051, %v5131, 0
        %v5192 = vsel %vm1051, %v5132, 0
        %v5195 = vsel %vm1051, %v5133, 0
        %v5198 = vsel %vm1051, %v5134, 0
        %v5201 = vsel %vm1076, %v5135, 0
        %5203 = vmatprep.subr.bf16.mxu0 0
        %5204 = vmatpush1.bf16.msra.mxu0 %v5201
        %5205 = vmatprep.subr.bf16.mxu0 0
        %5206 = vmatpush1.bf16.msra.mxu0 0
        %5207 = vmatprep.subr.bf16.mxu0 0
        %5208 = vmatpush1.bf16.msra.mxu0 0
        %5209 = vmatprep.subr.bf16.mxu0 0
        %5210 = vmatpush1.bf16.msra.mxu0 0
        %5211 = vmatprep.subr.bf16.mxu0 0
        %5212 = vmatpush1.bf16.msra.mxu0 0
        %5213 = vmatprep.subr.bf16.mxu0 0
        %5214 = vmatpush1.bf16.msra.mxu0 0
        %5215 = vmatprep.subr.bf16.mxu0 0
        %5216 = vmatpush1.bf16.msra.mxu0 0
        %5217 = vmatprep.subr.bf16.mxu0 0
        %5218 = vmatpush1.bf16.msra.mxu0 0
        %5219 = vmatprep.subr.bf16.mxu0 0
        %5220 = vmatpush1.bf16.msra.mxu0 0
        %5221 = vmatprep.subr.bf16.mxu0 0
        %5222 = vmatpush1.bf16.msra.mxu0 0
        %5223 = vmatprep.subr.bf16.mxu0 0
        %5224 = vmatpush1.bf16.msra.mxu0 0
        %5225 = vmatprep.subr.bf16.mxu0 0
        %5226 = vmatpush1.bf16.msra.mxu0 0
        %5227 = vmatprep.subr.bf16.mxu0 0
        %5228 = vmatpush1.bf16.msra.mxu0 0
        %5229 = vmatprep.subr.bf16.mxu0 0
        %5230 = vmatpush1.bf16.msra.mxu0 0
        %5231 = vmatprep.subr.bf16.mxu0 0
        %5232 = vmatpush1.bf16.msra.mxu0 0
        %5233 = vmatprep.subr.bf16.mxu0 0
        %5234 = vmatpush1.bf16.msra.mxu0 0
        %5235 = vmatprep.mubr.bf16.mxu0 0
        %5236 = vmatmul.mubr.bf16.gmra.mrb[0].mxu0 %v5177
        %v5237 = vpop.f32.mrb[0].mxu0
        %v5238 = vadd.f32 0.0, %v5237
        %v5239 = vpop.f32.mrb[0].mxu0
        %v5240 = vpop.f32.mrb[0].mxu0
        %v5241 = vadd.f32 0.0, %v5240
        %v5242 = vpop.f32.mrb[0].mxu0
        %5243 = vmatprep.mubr.bf16.mxu0 0
        %5244 = vmatmul.mubr.bf16.gmra.mrb[0].mxu0 %v5180
        %v5245 = vpop.f32.mrb[0].mxu0
        %v5246 = vadd.f32 0.0, %v5245
        %v5247 = vpop.f32.mrb[0].mxu0
        %v5248 = vpop.f32.mrb[0].mxu0
        %v5249 = vadd.f32 0.0, %v5248
        %v5250 = vpop.f32.mrb[0].mxu0
        %5251 = vmatprep.mubr.bf16.mxu0 0
        %5252 = vmatmul.mubr.bf16.gmra.mrb[0].mxu0 %v5183
        %v5253 = vpop.f32.mrb[0].mxu0
        %v5254 = vadd.f32 0.0, %v5253
        %v5255 = vpop.f32.mrb[0].mxu0
        %v5256 = vpop.f32.mrb[0].mxu0
        %v5257 = vadd.f32 0.0, %v5256
        %v5258 = vpop.f32.mrb[0].mxu0
        %5259 = vmatprep.mubr.bf16.mxu0 0
        %5260 = vmatmul.mubr.bf16.gmra.mrb[0].mxu0 %v5186
        %v5261 = vpop.f32.mrb[0].mxu0
        %v5262 = vadd.f32 0.0, %v5261
        %v5263 = vpop.f32.mrb[0].mxu0
        %v5264 = vpop.f32.mrb[0].mxu0
        %v5265 = vadd.f32 0.0, %v5264
        %v5266 = vpop.f32.mrb[0].mxu0
        %5267 = vmatprep.mubr.bf16.mxu0 0
        %5268 = vmatmul.mubr.bf16.gmra.mrb[0].mxu0 %v5189
        %v5269 = vpop.f32.mrb[0].mxu0
        %v5270 = vadd.f32 0.0, %v5269
        %v5271 = vpop.f32.mrb[0].mxu0
        %v5272 = vpop.f32.mrb[0].mxu0
        %v5273 = vadd.f32 0.0, %v5272
        %v5274 = vpop.f32.mrb[0].mxu0
        %5275 = vmatprep.mubr.bf16.mxu0 0
        %5276 = vmatmul.mubr.bf16.gmra.mrb[0].mxu0 %v5192
        %v5277 = vpop.f32.mrb[0].mxu0
        %v5278 = vadd.f32 0.0, %v5277
        %v5279 = vpop.f32.mrb[0].mxu0
        %v5280 = vpop.f32.mrb[0].mxu0
        %v5281 = vadd.f32 0.0, %v5280
        %v5282 = vpop.f32.mrb[0].mxu0
        %5283 = vmatprep.mubr.bf16.mxu0 0
        %5284 = vmatmul.mubr.bf16.gmra.mrb[0].mxu0 %v5195
        %v5285 = vpop.f32.mrb[0].mxu0
        %v5286 = vadd.f32 0.0, %v5285
        %v5287 = vpop.f32.mrb[0].mxu0
        %v5288 = vpop.f32.mrb[0].mxu0
        %v5289 = vadd.f32 0.0, %v5288
        %v5290 = vpop.f32.mrb[0].mxu0
        %5291 = vmatprep.mubr.bf16.mxu0 0
        %5292 = vmatmul.mubr.bf16.gmra.mrb[0].mxu0 %v5198
        %v5293 = vpop.f32.mrb[0].mxu0
        %v5294 = vadd.f32 0.0, %v5293
        %v5295 = vpop.f32.mrb[0].mxu0
        %v5296 = vpop.f32.mrb[0].mxu0
        %v5297 = vadd.f32 0.0, %v5296
        %v5298 = vpop.f32.mrb[0].mxu0
        %5299 = vdwg.mxu0
        %5300 = vmax.xlane.f32.xlu0 %v5238
        %v5301 = vpop.xlane.xlu0 %5300
        %5302 = vmax.xlane.f32.xlu0 %v5241
        %v5303 = vpop.xlane.xlu0 %5302
        %5304 = vmax.xlane.f32.xlu0 %v5246
        %v5305 = vpop.xlane.xlu0 %5304
        %5306 = vmax.xlane.f32.xlu0 %v5249
        %v5307 = vpop.xlane.xlu0 %5306
        %5308 = vmax.xlane.f32.xlu0 %v5254
        %v5309 = vpop.xlane.xlu0 %5308
        %5310 = vmax.xlane.f32.xlu0 %v5257
        %v5311 = vpop.xlane.xlu0 %5310
        %5312 = vmax.xlane.f32.xlu0 %v5262
        %v5313 = vpop.xlane.xlu0 %5312
        %5314 = vmax.xlane.f32.xlu0 %v5265
        %v5315 = vpop.xlane.xlu0 %5314
        %5316 = vmax.xlane.f32.xlu0 %v5270
        %v5317 = vpop.xlane.xlu0 %5316
        %5318 = vmax.xlane.f32.xlu0 %v5273
        %v5319 = vpop.xlane.xlu0 %5318
        %5320 = vmax.xlane.f32.xlu0 %v5278
        %v5321 = vpop.xlane.xlu0 %5320
        %5322 = vmax.xlane.f32.xlu0 %v5281
        %v5323 = vpop.xlane.xlu0 %5322
        %5324 = vmax.xlane.f32.xlu0 %v5286
        %v5325 = vpop.xlane.xlu0 %5324
        %5326 = vmax.xlane.f32.xlu0 %v5289
        %v5327 = vpop.xlane.xlu0 %5326
        %5328 = vmax.xlane.f32.xlu0 %v5294
        %v5329 = vpop.xlane.xlu0 %5328
        %5330 = vmax.xlane.f32.xlu0 %v5297
        %v5331 = vpop.xlane.xlu0 %5330
        %v5332 = vsub.f32 %v5238, %v5301
        %v5333 = vsub.f32 %v5241, %v5303
        %v5334 = vsub.f32 %v5246, %v5305
        %v5335 = vsub.f32 %v5249, %v5307
        %v5336 = vsub.f32 %v5254, %v5309
        %v5337 = vsub.f32 %v5257, %v5311
        %v5338 = vsub.f32 %v5262, %v5313
        %v5339 = vsub.f32 %v5265, %v5315
        %v5340 = vsub.f32 %v5270, %v5317
        %v5341 = vsub.f32 %v5273, %v5319
        %v5342 = vsub.f32 %v5278, %v5321
        %v5343 = vsub.f32 %v5281, %v5323
        %v5344 = vsub.f32 %v5286, %v5325
        %v5345 = vsub.f32 %v5289, %v5327
        %v5346 = vsub.f32 %v5294, %v5329
        %v5347 = vsub.f32 %v5297, %v5331
        %v5348 = vmul.f32 %v5332, 1.442695
        %v5349 = vpow.pop %v5348
        %v5350 = vmul.f32 %v5333, 1.442695
        %v5351 = vpow.pop %v5350
        %v5352 = vmul.f32 %v5334, 1.442695
        %v5353 = vpow.pop %v5352
        %v5354 = vmul.f32 %v5335, 1.442695
        %v5355 = vpow.pop %v5354
        %v5356 = vmul.f32 %v5336, 1.442695
        %v5357 = vpow.pop %v5356
        %v5358 = vmul.f32 %v5337, 1.442695
        %v5359 = vpow.pop %v5358
        %v5360 = vmul.f32 %v5338, 1.442695
        %v5361 = vpow.pop %v5360
        %v5362 = vmul.f32 %v5339, 1.442695
        %v5363 = vpow.pop %v5362
        %v5364 = vmul.f32 %v5340, 1.442695
        %v5365 = vpow.pop %v5364
        %v5366 = vmul.f32 %v5341, 1.442695
        %v5367 = vpow.pop %v5366
        %v5368 = vmul.f32 %v5342, 1.442695
        %v5369 = vpow.pop %v5368
        %v5370 = vmul.f32 %v5343, 1.442695
        %v5371 = vpow.pop %v5370
        %v5372 = vmul.f32 %v5344, 1.442695
        %v5373 = vpow.pop %v5372
        %v5374 = vmul.f32 %v5345, 1.442695
        %v5375 = vpow.pop %v5374
        %v5376 = vmul.f32 %v5346, 1.442695
        %v5377 = vpow.pop %v5376
        %v5378 = vmul.f32 %v5347, 1.442695
        %v5379 = vpow.pop %v5378
        %5380 = vadd.xlane.f32.xlu0 %v5349
        %v5381 = vpop.xlane.xlu0 %5380
        %5382 = vadd.xlane.f32.xlu0 %v5351
        %v5383 = vpop.xlane.xlu0 %5382
        %5384 = vadd.xlane.f32.xlu0 %v5353
        %v5385 = vpop.xlane.xlu0 %5384
        %5386 = vadd.xlane.f32.xlu0 %v5355
        %v5387 = vpop.xlane.xlu0 %5386
        %5388 = vadd.xlane.f32.xlu0 %v5357
        %v5389 = vpop.xlane.xlu0 %5388
        %5390 = vadd.xlane.f32.xlu0 %v5359
        %v5391 = vpop.xlane.xlu0 %5390
        %5392 = vadd.xlane.f32.xlu0 %v5361
        %v5393 = vpop.xlane.xlu0 %5392
        %5394 = vadd.xlane.f32.xlu0 %v5363
        %v5395 = vpop.xlane.xlu0 %5394
        %5396 = vadd.xlane.f32.xlu0 %v5365
        %v5397 = vpop.xlane.xlu0 %5396
        %5398 = vadd.xlane.f32.xlu0 %v5367
        %v5399 = vpop.xlane.xlu0 %5398
        %5400 = vadd.xlane.f32.xlu0 %v5369
        %v5401 = vpop.xlane.xlu0 %5400
        %5402 = vadd.xlane.f32.xlu0 %v5371
        %v5403 = vpop.xlane.xlu0 %5402
        %5404 = vadd.xlane.f32.xlu0 %v5373
        %v5405 = vpop.xlane.xlu0 %5404
        %5406 = vadd.xlane.f32.xlu0 %v5375
        %v5407 = vpop.xlane.xlu0 %5406
        %5408 = vadd.xlane.f32.xlu0 %v5377
        %v5409 = vpop.xlane.xlu0 %5408
        %5410 = vadd.xlane.f32.xlu0 %v5379
        %v5411 = vpop.xlane.xlu0 %5410
        %v5412 = vrcp.pop %v5381
        %v5413 = vrcp.pop %v5383
        %v5414 = vrcp.pop %v5385
        %v5415 = vrcp.pop %v5387
        %v5416 = vrcp.pop %v5389
        %v5417 = vrcp.pop %v5391
        %v5418 = vrcp.pop %v5393
        %v5419 = vrcp.pop %v5395
        %v5420 = vrcp.pop %v5397
        %v5421 = vrcp.pop %v5399
        %v5422 = vrcp.pop %v5401
        %v5423 = vrcp.pop %v5403
        %v5424 = vrcp.pop %v5405
        %v5425 = vrcp.pop %v5407
        %v5426 = vrcp.pop %v5409
        %v5427 = vrcp.pop %v5411
        %v5428 = vmul.f32 %v5349, %v5412
        %v5429 = vmul.f32 %v5351, %v5413
        %v5430 = vmul.f32 %v5353, %v5414
        %v5431 = vmul.f32 %v5355, %v5415
        %v5432 = vmul.f32 %v5357, %v5416
        %v5433 = vmul.f32 %v5359, %v5417
        %v5434 = vmul.f32 %v5361, %v5418
        %v5435 = vmul.f32 %v5363, %v5419
        %v5436 = vmul.f32 %v5365, %v5420
        %v5437 = vmul.f32 %v5367, %v5421
        %v5438 = vmul.f32 %v5369, %v5422
        %v5439 = vmul.f32 %v5371, %v5423
        %v5440 = vmul.f32 %v5373, %v5424
        %v5441 = vmul.f32 %v5375, %v5425
        %v5442 = vmul.f32 %v5377, %v5426
        %v5443 = vmul.f32 %v5379, %v5427
        %v5444 = vpack.c.bf16 %v5429, %v5428
        %v5445 = vpack.c.bf16 %v5431, %v5430
        %v5446 = vpack.c.bf16 %v5433, %v5432
        %v5447 = vpack.c.bf16 %v5435, %v5434
        %v5448 = vpack.c.bf16 %v5437, %v5436
        %v5449 = vpack.c.bf16 %v5439, %v5438
        %v5450 = vpack.c.bf16 %v5441, %v5440
        %v5451 = vpack.c.bf16 %v5443, %v5442
        %v5460 = vunpack.c.l.b16 %v5444
        %v5461 = vunpack.c.h.b16 %v5444
        %v5462 = vunpack.c.l.b16 %v5445
        %v5463 = vunpack.c.h.b16 %v5445
        %v5464 = vunpack.c.l.b16 %v5446
        %v5465 = vunpack.c.h.b16 %v5446
        %v5466 = vunpack.c.l.b16 %v5447
        %v5467 = vunpack.c.h.b16 %v5447
        %v5468 = vunpack.c.l.b16 %v5448
        %v5469 = vunpack.c.h.b16 %v5448
        %v5470 = vunpack.c.l.b16 %v5449
        %v5471 = vunpack.c.h.b16 %v5449
        %v5472 = vunpack.c.l.b16 %v5450
        %v5473 = vunpack.c.h.b16 %v5450
        %v5474 = vunpack.c.l.b16 %v5451
        %v5475 = vunpack.c.h.b16 %v5451
        %v5476 = vpack.c.b16 %v5460, %v5460
        %v5477 = vpack.c.b16 %v5461, %v5461
        %v5478 = vpack.c.b16 %v5462, %v5462
        %v5479 = vpack.c.b16 %v5463, %v5463
        %v5480 = vpack.c.b16 %v5464, %v5464
        %v5481 = vpack.c.b16 %v5465, %v5465
        %v5482 = vpack.c.b16 %v5466, %v5466
        %v5483 = vpack.c.b16 %v5467, %v5467
        %v5484 = vpack.c.b16 %v5468, %v5468
        %v5485 = vpack.c.b16 %v5469, %v5469
        %v5486 = vpack.c.b16 %v5470, %v5470
        %v5487 = vpack.c.b16 %v5471, %v5471
        %v5488 = vpack.c.b16 %v5472, %v5472
        %v5489 = vpack.c.b16 %v5473, %v5473
        %v5490 = vpack.c.b16 %v5474, %v5474
        %v5491 = vpack.c.b16 %v5475, %v5475
        %s5508 = scalar_lea.vmem %s599, 448 [#allocation7]
        %5509 = vst [vmem:[%s5508] sm:$0xf] %v5476
        %5510 = vst [vmem:[%s5508 + $0x4] sm:$0xf] %v5477
        %5511 = vst [vmem:[%s5508 + $0x8] sm:$0xf] %v5478
        %5512 = vst [vmem:[%s5508 + $0xc] sm:$0xf] %v5479
        %5513 = vst [vmem:[%s5508 + $0x10] sm:$0xf] %v5480
        %5514 = vst [vmem:[%s5508 + $0x14] sm:$0xf] %v5481
        %5515 = vst [vmem:[%s5508 + $0x18] sm:$0xf] %v5482
        %5516 = vst [vmem:[%s5508 + $0x1c] sm:$0xf] %v5483
        %5517 = vst [vmem:[%s5508 + $0x20] sm:$0xf] %v5484
        %5518 = vst [vmem:[%s5508 + $0x24] sm:$0xf] %v5485
        %5519 = vst [vmem:[%s5508 + $0x28] sm:$0xf] %v5486
        %5520 = vst [vmem:[%s5508 + $0x2c] sm:$0xf] %v5487
        %5521 = vst [vmem:[%s5508 + $0x30] sm:$0xf] %v5488
        %5522 = vst [vmem:[%s5508 + $0x34] sm:$0xf] %v5489
        %5523 = vst [vmem:[%s5508 + $0x38] sm:$0xf] %v5490
        %5524 = vst [vmem:[%s5508 + $0x3c] sm:$0xf] %v5491
        %5525 = vmatprep.subr.bf16.mxu0 0
        %5526 = vmatpush1.bf16.msra.mxu0 %v5168
        %5527 = vmatprep.subr.bf16.mxu0 0
        %5528 = vmatpush1.bf16.msra.mxu0 %v5169
        %5529 = vmatprep.subr.bf16.mxu0 0
        %5530 = vmatpush1.bf16.msra.mxu0 %v5170
        %5531 = vmatprep.subr.bf16.mxu0 0
        %5532 = vmatpush1.bf16.msra.mxu0 %v5171
        %5533 = vmatprep.subr.bf16.mxu0 0
        %5534 = vmatpush1.bf16.msra.mxu0 %v5172
        %5535 = vmatprep.subr.bf16.mxu0 0
        %5536 = vmatpush1.bf16.msra.mxu0 %v5173
        %5537 = vmatprep.subr.bf16.mxu0 0
        %5538 = vmatpush1.bf16.msra.mxu0 %v5174
        %5539 = vmatprep.subr.bf16.mxu0 0
        %5540 = vmatpush1.bf16.msra.mxu0 %v5175
        %5541 = vmatprep.subr.bf16.mxu0 0
        %5542 = vmatpush1.bf16.msra.mxu0 0
        %5543 = vmatprep.subr.bf16.mxu0 0
        %5544 = vmatpush1.bf16.msra.mxu0 0
        %5545 = vmatprep.subr.bf16.mxu0 0
        %5546 = vmatpush1.bf16.msra.mxu0 0
        %5547 = vmatprep.subr.bf16.mxu0 0
        %5548 = vmatpush1.bf16.msra.mxu0 0
        %5549 = vmatprep.subr.bf16.mxu0 0
        %5550 = vmatpush1.bf16.msra.mxu0 0
        %5551 = vmatprep.subr.bf16.mxu0 0
        %5552 = vmatpush1.bf16.msra.mxu0 0
        %5553 = vmatprep.subr.bf16.mxu0 0
        %5554 = vmatpush1.bf16.msra.mxu0 0
        %5555 = vmatprep.subr.bf16.mxu0 0
        %5556 = vmatpush1.bf16.msra.mxu0 0
        %5557 = vmatprep.mubr.bf16.mxu0 0
        %5558 = vmatmul.mubr.bf16.gmra.mrb[0].mxu0 %v5444
        %v5559 = vpop.f32.mrb[0].mxu0
        %v5560 = vadd.f32 0.0, %v5559
        %v5561 = vpop.f32.mrb[0].mxu0
        %v5562 = vpop.f32.mrb[0].mxu0
        %v5563 = vadd.f32 0.0, %v5562
        %v5564 = vpop.f32.mrb[0].mxu0
        %5565 = vmatprep.mubr.bf16.mxu0 0
        %5566 = vmatmul.mubr.bf16.gmra.mrb[0].mxu0 %v5445
        %v5567 = vpop.f32.mrb[0].mxu0
        %v5568 = vadd.f32 0.0, %v5567
        %v5569 = vpop.f32.mrb[0].mxu0
        %v5570 = vpop.f32.mrb[0].mxu0
        %v5571 = vadd.f32 0.0, %v5570
        %v5572 = vpop.f32.mrb[0].mxu0
        %5573 = vmatprep.mubr.bf16.mxu0 0
        %5574 = vmatmul.mubr.bf16.gmra.mrb[0].mxu0 %v5446
        %v5575 = vpop.f32.mrb[0].mxu0
        %v5576 = vadd.f32 0.0, %v5575
        %v5577 = vpop.f32.mrb[0].mxu0
        %v5578 = vpop.f32.mrb[0].mxu0
        %v5579 = vadd.f32 0.0, %v5578
        %v5580 = vpop.f32.mrb[0].mxu0
        %5581 = vmatprep.mubr.bf16.mxu0 0
        %5582 = vmatmul.mubr.bf16.gmra.mrb[0].mxu0 %v5447
        %v5583 = vpop.f32.mrb[0].mxu0
        %v5584 = vadd.f32 0.0, %v5583
        %v5585 = vpop.f32.mrb[0].mxu0
        %v5586 = vpop.f32.mrb[0].mxu0
        %v5587 = vadd.f32 0.0, %v5586
        %v5588 = vpop.f32.mrb[0].mxu0
        %5589 = vmatprep.mubr.bf16.mxu0 0
        %5590 = vmatmul.mubr.bf16.gmra.mrb[0].mxu0 %v5448
        %v5591 = vpop.f32.mrb[0].mxu0
        %v5592 = vadd.f32 0.0, %v5591
        %v5593 = vpop.f32.mrb[0].mxu0
        %v5594 = vpop.f32.mrb[0].mxu0
        %v5595 = vadd.f32 0.0, %v5594
        %v5596 = vpop.f32.mrb[0].mxu0
        %5597 = vmatprep.mubr.bf16.mxu0 0
        %5598 = vmatmul.mubr.bf16.gmra.mrb[0].mxu0 %v5449
        %v5599 = vpop.f32.mrb[0].mxu0
        %v5600 = vadd.f32 0.0, %v5599
        %v5601 = vpop.f32.mrb[0].mxu0
        %v5602 = vpop.f32.mrb[0].mxu0
        %v5603 = vadd.f32 0.0, %v5602
        %v5604 = vpop.f32.mrb[0].mxu0
        %5605 = vmatprep.mubr.bf16.mxu0 0
        %5606 = vmatmul.mubr.bf16.gmra.mrb[0].mxu0 %v5450
        %v5607 = vpop.f32.mrb[0].mxu0
        %v5608 = vadd.f32 0.0, %v5607
        %v5609 = vpop.f32.mrb[0].mxu0
        %v5610 = vpop.f32.mrb[0].mxu0
        %v5611 = vadd.f32 0.0, %v5610
        %v5612 = vpop.f32.mrb[0].mxu0
        %5613 = vmatprep.mubr.bf16.mxu0 0
        %5614 = vmatmul.mubr.bf16.gmra.mrb[0].mxu0 %v5451
        %v5615 = vpop.f32.mrb[0].mxu0
        %v5616 = vadd.f32 0.0, %v5615
        %v5617 = vpop.f32.mrb[0].mxu0
        %v5618 = vpop.f32.mrb[0].mxu0
        %v5619 = vadd.f32 0.0, %v5618
        %v5620 = vpop.f32.mrb[0].mxu0
        %5621 = vdwg.mxu0
        %5638 = vrot.lane.b32.xlu0 %v5560, 24
        %v5639 = vpop.permute.xlu0 %5638
        %5640 = vrot.lane.b32.xlu0 %v5563, 24
        %v5641 = vpop.permute.xlu0 %5640
        %5642 = vrot.lane.b32.xlu0 %v5568, 24
        %v5643 = vpop.permute.xlu0 %5642
        %5644 = vrot.lane.b32.xlu0 %v5571, 24
        %v5645 = vpop.permute.xlu0 %5644
        %5646 = vrot.lane.b32.xlu0 %v5576, 24
        %v5647 = vpop.permute.xlu0 %5646
        %5648 = vrot.lane.b32.xlu0 %v5579, 24
        %v5649 = vpop.permute.xlu0 %5648
        %5650 = vrot.lane.b32.xlu0 %v5584, 24
        %v5651 = vpop.permute.xlu0 %5650
        %5652 = vrot.lane.b32.xlu0 %v5587, 24
        %v5653 = vpop.permute.xlu0 %5652
        %5654 = vrot.lane.b32.xlu0 %v5592, 24
        %v5655 = vpop.permute.xlu0 %5654
        %5656 = vrot.lane.b32.xlu0 %v5595, 24
        %v5657 = vpop.permute.xlu0 %5656
        %5658 = vrot.lane.b32.xlu0 %v5600, 24
        %v5659 = vpop.permute.xlu0 %5658
        %5660 = vrot.lane.b32.xlu0 %v5603, 24
        %v5661 = vpop.permute.xlu0 %5660
        %5662 = vrot.lane.b32.xlu0 %v5608, 24
        %v5663 = vpop.permute.xlu0 %5662
        %5664 = vrot.lane.b32.xlu0 %v5611, 24
        %v5665 = vpop.permute.xlu0 %5664
        %5666 = vrot.lane.b32.xlu0 %v5616, 24
        %v5667 = vpop.permute.xlu0 %5666
        %5668 = vrot.lane.b32.xlu0 %v5619, 24
        %v5669 = vpop.permute.xlu0 %5668
        %5686 = vst.msk [vmem:[#allocation2 + $0x80] sm:$0xff] %vm3321, %v5639
        %5687 = vst.msk [vmem:[#allocation2 + $0x88] sm:$0xff] %vm3321, %v5641
        %5688 = vst.msk [vmem:[#allocation2 + $0x90] sm:$0xff] %vm3321, %v5643
        %5689 = vst.msk [vmem:[#allocation2 + $0x98] sm:$0xff] %vm3321, %v5645
        %5690 = vst.msk [vmem:[#allocation2 + $0xa0] sm:$0xff] %vm3321, %v5647
        %5691 = vst.msk [vmem:[#allocation2 + $0xa8] sm:$0xff] %vm3321, %v5649
        %5692 = vst.msk [vmem:[#allocation2 + $0xb0] sm:$0xff] %vm3321, %v5651
        %5693 = vst.msk [vmem:[#allocation2 + $0xb8] sm:$0xff] %vm3321, %v5653
        %5694 = vst.msk [vmem:[#allocation2 + $0xc0] sm:$0xff] %vm3321, %v5655
        %5695 = vst.msk [vmem:[#allocation2 + $0xc8] sm:$0xff] %vm3321, %v5657
        %5696 = vst.msk [vmem:[#allocation2 + $0xd0] sm:$0xff] %vm3321, %v5659
        %5697 = vst.msk [vmem:[#allocation2 + $0xd8] sm:$0xff] %vm3321, %v5661
        %5698 = vst.msk [vmem:[#allocation2 + $0xe0] sm:$0xff] %vm3321, %v5663
        %5699 = vst.msk [vmem:[#allocation2 + $0xe8] sm:$0xff] %vm3321, %v5665
        %5700 = vst.msk [vmem:[#allocation2 + $0xf0] sm:$0xff] %vm3321, %v5667
        %5701 = vst.msk [vmem:[#allocation2 + $0xf8] sm:$0xff] %vm3321, %v5669
        %v5702 = vld [vmem:[#allocation2] sm:$0xff]
        %v5703 = vld [vmem:[#allocation2 + $0x8] sm:$0xff]
        %v5704 = vld [vmem:[#allocation2 + $0x10] sm:$0xff]
        %v5705 = vld [vmem:[#allocation2 + $0x18] sm:$0xff]
        %v5706 = vld [vmem:[#allocation2 + $0x20] sm:$0xff]
        %v5707 = vld [vmem:[#allocation2 + $0x28] sm:$0xff]
        %v5708 = vld [vmem:[#allocation2 + $0x30] sm:$0xff]
        %v5709 = vld [vmem:[#allocation2 + $0x38] sm:$0xff]
        %v5710 = vld [vmem:[#allocation2 + $0x40] sm:$0xff]
        %v5711 = vld [vmem:[#allocation2 + $0x48] sm:$0xff]
        %v5712 = vld [vmem:[#allocation2 + $0x50] sm:$0xff]
        %v5713 = vld [vmem:[#allocation2 + $0x58] sm:$0xff]
        %v5714 = vld [vmem:[#allocation2 + $0x60] sm:$0xff]
        %v5715 = vld [vmem:[#allocation2 + $0x68] sm:$0xff]
        %v5716 = vld [vmem:[#allocation2 + $0x70] sm:$0xff]
        %v5717 = vld [vmem:[#allocation2 + $0x78] sm:$0xff]
        %v5718 = vld [vmem:[#allocation2 + $0x80] sm:$0xff]
        %v5719 = vld [vmem:[#allocation2 + $0x88] sm:$0xff]
        %v5720 = vld [vmem:[#allocation2 + $0x90] sm:$0xff]
        %v5721 = vld [vmem:[#allocation2 + $0x98] sm:$0xff]
        %v5722 = vld [vmem:[#allocation2 + $0xa0] sm:$0xff]
        %v5723 = vld [vmem:[#allocation2 + $0xa8] sm:$0xff]
        %v5724 = vld [vmem:[#allocation2 + $0xb0] sm:$0xff]
        %v5725 = vld [vmem:[#allocation2 + $0xb8] sm:$0xff]
        %v5726 = vld [vmem:[#allocation2 + $0xc0] sm:$0xff]
        %v5727 = vld [vmem:[#allocation2 + $0xc8] sm:$0xff]
        %v5728 = vld [vmem:[#allocation2 + $0xd0] sm:$0xff]
        %v5729 = vld [vmem:[#allocation2 + $0xd8] sm:$0xff]
        %v5730 = vld [vmem:[#allocation2 + $0xe0] sm:$0xff]
        %v5731 = vld [vmem:[#allocation2 + $0xe8] sm:$0xff]
        %v5732 = vld [vmem:[#allocation2 + $0xf0] sm:$0xff]
        %v5733 = vld [vmem:[#allocation2 + $0xf8] sm:$0xff]
        %v5734 = vpack.c.bf16 %v5703, %v5702
        %v5735 = vpack.c.bf16 %v5705, %v5704
        %v5736 = vpack.c.bf16 %v5707, %v5706
        %v5737 = vpack.c.bf16 %v5709, %v5708
        %v5738 = vpack.c.bf16 %v5711, %v5710
        %v5739 = vpack.c.bf16 %v5713, %v5712
        %v5740 = vpack.c.bf16 %v5715, %v5714
        %v5741 = vpack.c.bf16 %v5717, %v5716
        %v5742 = vpack.c.bf16 %v5719, %v5718
        %v5743 = vpack.c.bf16 %v5721, %v5720
        %v5744 = vpack.c.bf16 %v5723, %v5722
        %v5745 = vpack.c.bf16 %v5725, %v5724
        %v5746 = vpack.c.bf16 %v5727, %v5726
        %v5747 = vpack.c.bf16 %v5729, %v5728
        %v5748 = vpack.c.bf16 %v5731, %v5730
        %v5749 = vpack.c.bf16 %v5733, %v5732
        %v5750 = vld [vmem:[%s9] sm:$0xf]
        %v5751 = vld [vmem:[%s9 + $0x4] sm:$0xf]
        %v5752 = vld [vmem:[%s9 + $0x8] sm:$0xf]
        %v5753 = vld [vmem:[%s9 + $0xc] sm:$0xf]
        %v5754 = vld [vmem:[%s10] sm:$0xff]
        %v5755 = vld [vmem:[%s10 + $0x8] sm:$0xff]
        %v5756 = vld [vmem:[%s10 + $0x10] sm:$0xff]
        %v5757 = vld [vmem:[%s10 + $0x18] sm:$0xff]
        %5759 = vset.pattern.permute.xlu0 0
        %5760 = vperm.xlu0 %5759, %v5754
        %v5761 = vpop.permute.xlu0 %5760
        %5764 = vset.pattern.permute.xlu0 0
        %5765 = vperm.xlu0 %5764, %v5755
        %v5766 = vpop.permute.xlu0 %5765
        %5769 = vset.pattern.permute.xlu0 0
        %5770 = vperm.xlu0 %5769, %v5756
        %v5771 = vpop.permute.xlu0 %5770
        %5774 = vset.pattern.permute.xlu0 0
        %5775 = vperm.xlu0 %5774, %v5757
        %v5776 = vpop.permute.xlu0 %5775
        %v5782 = vunpack.c.l.b16 %v5750
        %v5783 = vunpack.c.l.b16 %v5751
        %v5784 = vunpack.c.l.b16 %v5752
        %v5785 = vunpack.c.l.b16 %v5753
        %v5786 = vpack.c.b16 %v5783, %v5782
        %v5787 = vpack.c.b16 %v5785, %v5784
        %v5789 = vsel %vm668, %v5786, 0
        %v5792 = vsel %vm668, %v5787, 0
        %v5795 = vsel %vm668, %v5734, 0
        %v5798 = vsel %vm668, %v5735, 0
        %v5801 = vsel %vm668, %v5736, 0
        %v5804 = vsel %vm668, %v5737, 0
        %v5807 = vsel %vm668, %v5738, 0
        %v5810 = vsel %vm668, %v5739, 0
        %v5813 = vsel %vm668, %v5740, 0
        %v5816 = vsel %vm668, %v5741, 0
        %v5819 = vsel %vm668, %v5742, 0
        %v5822 = vsel %vm668, %v5743, 0
        %v5825 = vsel %vm668, %v5744, 0
        %v5828 = vsel %vm668, %v5745, 0
        %v5831 = vsel %vm668, %v5746, 0
        %v5834 = vsel %vm668, %v5747, 0
        %v5837 = vsel %vm668, %v5748, 0
        %v5840 = vsel %vm668, %v5749, 0
        %5842 = vmatprep.subr.bf16.mxu0 0
        %5843 = vmatpush1.bf16.xpose.msra.mxu0 %v5795
        %5844 = vmatprep.subr.bf16.mxu0 0
        %5845 = vmatpush1.bf16.xpose.msra.mxu0 %v5798
        %5846 = vmatprep.subr.bf16.mxu0 0
        %5847 = vmatpush1.bf16.xpose.msra.mxu0 %v5801
        %5848 = vmatprep.subr.bf16.mxu0 0
        %5849 = vmatpush1.bf16.xpose.msra.mxu0 %v5804
        %5850 = vmatprep.subr.bf16.mxu0 0
        %5851 = vmatpush1.bf16.xpose.msra.mxu0 %v5807
        %5852 = vmatprep.subr.bf16.mxu0 0
        %5853 = vmatpush1.bf16.xpose.msra.mxu0 %v5810
        %5854 = vmatprep.subr.bf16.mxu0 0
        %5855 = vmatpush1.bf16.xpose.msra.mxu0 %v5813
        %5856 = vmatprep.subr.bf16.mxu0 0
        %5857 = vmatpush1.bf16.xpose.msra.mxu0 %v5816
        %5858 = vmatprep.subr.bf16.mxu0 0
        %5859 = vmatpush1.bf16.xpose.msra.mxu0 %v5819
        %5860 = vmatprep.subr.bf16.mxu0 0
        %5861 = vmatpush1.bf16.xpose.msra.mxu0 %v5822
        %5862 = vmatprep.subr.bf16.mxu0 0
        %5863 = vmatpush1.bf16.xpose.msra.mxu0 %v5825
        %5864 = vmatprep.subr.bf16.mxu0 0
        %5865 = vmatpush1.bf16.xpose.msra.mxu0 %v5828
        %5866 = vmatprep.subr.bf16.mxu0 0
        %5867 = vmatpush1.bf16.xpose.msra.mxu0 %v5831
        %5868 = vmatprep.subr.bf16.mxu0 0
        %5869 = vmatpush1.bf16.xpose.msra.mxu0 %v5834
        %5870 = vmatprep.subr.bf16.mxu0 0
        %5871 = vmatpush1.bf16.xpose.msra.mxu0 %v5837
        %5872 = vmatprep.subr.bf16.mxu0 0
        %5873 = vmatpush1.bf16.xpose.msra.mxu0 %v5840
        %5874 = vmatprep.mubr.bf16.mxu0 0
        %5875 = vmatmul.mubr.bf16.gmra.mrb[0].mxu0 %v5789
        %v5876 = vpop.f32.mrb[0].mxu0
        %v5877 = vadd.f32 %v5761, %v5876
        %v5878 = vpop.f32.mrb[0].mxu0
        %v5879 = vadd.f32 %v5761, %v5878
        %v5880 = vpop.f32.mrb[0].mxu0
        %v5881 = vadd.f32 %v5766, %v5880
        %v5882 = vpop.f32.mrb[0].mxu0
        %v5883 = vadd.f32 %v5766, %v5882
        %5884 = vmatprep.mubr.bf16.mxu0 0
        %5885 = vmatmul.mubr.bf16.gmra.mrb[0].mxu0 %v5792
        %v5886 = vpop.f32.mrb[0].mxu0
        %v5887 = vadd.f32 %v5771, %v5886
        %v5888 = vpop.f32.mrb[0].mxu0
        %v5889 = vadd.f32 %v5771, %v5888
        %v5890 = vpop.f32.mrb[0].mxu0
        %v5891 = vadd.f32 %v5776, %v5890
        %v5892 = vpop.f32.mrb[0].mxu0
        %v5893 = vadd.f32 %v5776, %v5892
        %5894 = vdwg.mxu0
        %5895 = vst [vmem:[%s592] sm:$0xff] %v5877
        %5896 = vst [vmem:[%s592 + $0x8] sm:$0xff] %v5879
        %5897 = vst [vmem:[%s592 + $0x10] sm:$0xff] %v5881
        %5898 = vst [vmem:[%s592 + $0x18] sm:$0xff] %v5883
        %5899 = vst [vmem:[%s592 + $0x20] sm:$0xff] %v5887
        %5900 = vst [vmem:[%s592 + $0x28] sm:$0xff] %v5889
        %5901 = vst [vmem:[%s592 + $0x30] sm:$0xff] %v5891
        %5902 = vst [vmem:[%s592 + $0x38] sm:$0xff] %v5893
        %s5903 = sand.u32 %s281, 1
        %s5904 = sand.u32 %s281, 1
        %s5905 = smul.addr %s5904, 64
        %s5906 = scalar_lea.vmem [#allocation6], %s5905
        %s5907 = sand.u32 %s307, 1
        %s5908 = scalar_lea.sflag [#allocation8], %s5907
        %s5909 = sand.u32 %s307, 1
        %s5910 = smul.addr %s5909, 512
        %s5911 = scalar_lea.vmem [#allocation7], %s5910
        // Predicated region
        $region179: #{multihead_attention.1} parent=165 // pred_check
          %p5912 = pneg %p291
        $region180: #{multihead_attention.1} parent=165 // pred_check_branch
          %5914 = sbr.rel (%p5912) target = $region182
        $region181: #{multihead_attention.1} parent=165 // pred_region
          %s5915 = smul.u32 2, %s27
          %s5916 = smul.addr %s5915, 8
          %s5917 = scalar_lea.vmem %s11, %s5916
          // Predicated region
          $region183: #{multihead_attention.1} parent=181 // pred_check
            _
          $region184: #{multihead_attention.1} parent=181 // pred_check_branch
            %5919 = sbr.rel (0) target = $region186
          $region185: #{multihead_attention.1} parent=181 // pred_region
            // Predicated region
            $region187: #{multihead_attention.1} parent=185 // pred_check
              _
            $region188: #{multihead_attention.1} parent=185 // pred_check_branch
              %5921 = sbr.rel (0) target = $region190
            $region189: #{multihead_attention.1} parent=185 // pred_region
              loop: start=0, step=1, limit=1
              $region191: #{multihead_attention.1} parent=189 // loop_pre_header
                _
              $region192: #{multihead_attention.1} parent=189 // loop_header
                %s5923 = sphi 0, %s5927
                %p5924 = scmp.ge.s32.totalorder %s5923, 1
                %s5928 = sphi %s5906, %s5906
                %s5929 = sphi %s5917, %s5917
              $region193: #{multihead_attention.1} parent=189 // loop_header_branch
                %5926 = sbr.rel (%p5924) target = $region197
              $region194: #{multihead_attention.1} parent=189 // loop_body
                %v5930 = vld [vmem:[%s5928] sm:$0xff]
                %5931 = vst [vmem:[%s5929] sm:$0xff] %v5930
                %v5932 = vld [vmem:[%s5928 + $0x8] sm:$0xff]
                %5933 = vst [vmem:[%s5929 + $0x8] sm:$0xff] %v5932
                %v5934 = vld [vmem:[%s5928 + $0x10] sm:$0xff]
                %5935 = vst [vmem:[%s5929 + $0x20] sm:$0xff] %v5934
                %v5936 = vld [vmem:[%s5928 + $0x18] sm:$0xff]
                %5937 = vst [vmem:[%s5929 + $0x28] sm:$0xff] %v5936
                %v5938 = vld [vmem:[%s5928 + $0x20] sm:$0xff]
                %5939 = vst [vmem:[%s5929 + $0x40] sm:$0xff] %v5938
                %v5940 = vld [vmem:[%s5928 + $0x28] sm:$0xff]
                %5941 = vst [vmem:[%s5929 + $0x48] sm:$0xff] %v5940
                %v5942 = vld [vmem:[%s5928 + $0x30] sm:$0xff]
                %5943 = vst [vmem:[%s5929 + $0x60] sm:$0xff] %v5942
                %v5944 = vld [vmem:[%s5928 + $0x38] sm:$0xff]
                %5945 = vst [vmem:[%s5929 + $0x68] sm:$0xff] %v5944
              $region195: #{multihead_attention.1} parent=189 // loop_footer
                %s5927 = sadd.s32 1, %s5923
              $region196: #{multihead_attention.1} parent=189 // loop_footer_branch
                %5922 = sbr.rel target = $region192
              $region197: #{multihead_attention.1} parent=189 // loop_exit
                _
            $region190: #{multihead_attention.1} parent=185 // pred_fallthru
              _
            // Predicated region
            $region198: #{multihead_attention.1} parent=185 // pred_check
              _
            $region199: #{multihead_attention.1} parent=185 // pred_check_branch
              %5947 = sbr.rel target = $region201
            $region200: #{multihead_attention.1} parent=185 // pred_region
              _
            $region201: #{multihead_attention.1} parent=185 // pred_fallthru
              _
          $region186: #{multihead_attention.1} parent=181 // pred_fallthru
            _
          %5948 = vnop
        $region182: #{multihead_attention.1} parent=165 // pred_fallthru
          _
        // Predicated region
        $region202: #{multihead_attention.1} parent=165 // pred_check
          %p5949 = pneg %p317
        $region203: #{multihead_attention.1} parent=165 // pred_check_branch
          %5951 = sbr.rel (%p5949) target = $region205
        $region204: #{multihead_attention.1} parent=165 // pred_region
          %s5952 = smul.u32 2, %s27
          %s5954 = ssub.s32 8192, 8192
          %5955 = vsyncadd %s5908, %s5954
          %s5956 = smul.addr %s5952, 64
          %s5957 = smul.addr %s5956, 64
          %s5958 = scalar_lea.hbm %s12, %s5957
          %s5959 = sshll.u32 %s5911, 4
          %s5960 = int_to_ptr.vmem [resolvable:$true] %s5959
          %5965 = dma.vmem_to_hbm [thread:$0]  %s5960, 8192, %s5958, %s5908, 64, 64, 4
        $region205: #{multihead_attention.1} parent=165 // pred_fallthru
          _
      $region166: #{multihead_attention.1} parent=5 // pred_fallthru
        _
      %p5966 = scmp.le.s32.totalorder 2, %s22
      // Predicated region
      $region206: #{multihead_attention.1} parent=5 // pred_check
        %p5967 = pneg %p5966
      $region207: #{multihead_attention.1} parent=5 // pred_check_branch
        %5969 = sbr.rel (%p5967) target = $region209
      $region208: #{multihead_attention.1} parent=5 // pred_region
        %s5970 = ssub.s32 %s22, 2
        // Predicated region
        $region210: #{multihead_attention.1} parent=208 // pred_check
          %p5971 = pneg %p297
        $region211: #{multihead_attention.1} parent=208 // pred_check_branch
          %5973 = sbr.rel (%p5971) target = $region213
        $region212: #{multihead_attention.1} parent=208 // pred_region
          %s5974 = sand.u32 %s282, 1
          %s5975 = sand.u32 %s282, 1
          %s5976 = smul.addr %s5975, 64
          %s5977 = scalar_lea.vmem [#allocation6], %s5976
        $region213: #{multihead_attention.1} parent=208 // pred_fallthru
          _
        // Predicated region
        $region214: #{multihead_attention.1} parent=208 // pred_check
          %p5978 = pneg %p323
        $region215: #{multihead_attention.1} parent=208 // pred_check_branch
          %5980 = sbr.rel (%p5978) target = $region217
        $region216: #{multihead_attention.1} parent=208 // pred_region
          %s5981 = sand.u32 %s308, 1
          %s5982 = scalar_lea.sflag [#allocation8], %s5981
          %s5983 = sand.u32 %s308, 1
          %s5984 = smul.addr %s5983, 512
          %s5985 = scalar_lea.vmem [#allocation7], %s5984
          %5986 = dma.done %s5982, 8192
        $region217: #{multihead_attention.1} parent=208 // pred_fallthru
          _
      $region209: #{multihead_attention.1} parent=5 // pred_fallthru
        _
    $region6: #{multihead_attention.1} parent=1 // loop_footer
      %s26 = sadd.s32 1, %s22
    $region7: #{multihead_attention.1} parent=1 // loop_footer_branch
      %21 = sbr.rel target = $region3
    $region8: #{multihead_attention.1} parent=1 // loop_exit
      _
    %5987 = vsyncpa [#allocation8], 1
    %s5988 = scalar_lea.sflag [#allocation8], 1
    %5989 = vsyncpa %s5988, 1

</llo_original>
